<compile_context>
chip_gen: v5e
topology: v5e:2x2
jax: 0.10.0
libtpu: 0.0.40
codegen_flags: <defaults>
</compile_context>

<pallas_src>
import functools

import jax
import jax.numpy as jnp
from jax.experimental import pallas as pl
from jax.experimental.pallas import tpu as pltpu


def _round_up(x, m):
    return (x + m - 1) // m * m


def _pick_tile_h(H, W, target_rows=128):
    """Largest divisor of H whose output-pixel tile TH*W stays <= target_rows."""
    best = 1
    for th in range(1, H + 1):
        if H % th == 0 and th * W <= target_rows:
            best = th
    return best


def classifier_kernel(x_hbm, w_ref, b_ref, out_ref, xwin_ref, acc_ref, sem_ref,
                      *, dilations, pad_max):
    """One (batch, H-tile) step of the fused ASPP classifier head.

    x_hbm    : (N, H+2D, W+2D, Cin)      bf16, zero-padded NHWC, stays in HBM
    w_ref    : (nb, 3, 3, Cin, Cpad)     bf16
    b_ref    : (1, Cpad)                 f32, sum of per-branch biases
    out_ref  : (1, TH, W, Cpad)          f32
    xwin_ref : (TH + 2D, W + 2D, Cin)    bf16 VMEM scratch (halo row window)
    acc_ref  : (TH*W, Cpad)              f32 VMEM scratch accumulator
    sem_ref  : DMA semaphore, shape (1,)
    """
    D = pad_max
    _, TH, W, Cpad = out_ref.shape
    Cin = xwin_ref.shape[-1]

    n = pl.program_id(0)
    ht = pl.program_id(1)
    row0 = pl.multiple_of(ht * TH, TH)

    # Manual DMA of just this tile's halo row window (the array is already
    # zero-padded in HBM, so no in-kernel memset is ever needed).
    cp = pltpu.make_async_copy(
        x_hbm.at[n, pl.ds(row0, TH + 2 * D)], xwin_ref, sem_ref.at[0])
    cp.start()

    # Bias-initialized accumulator: one broadcast, no separate bias-add pass.
    acc_ref[...] = jnp.broadcast_to(b_ref[...], acc_ref.shape)

    cp.wait()

    # Per-tap K=Cin matmuls accumulated into the VMEM-scratch accumulator.
    # (No 9-way concat: avoids 9x activation copies / unaligned big patches.)
    for kb, d in enumerate(dilations):
        for kh in range(3):
            rs = D + (kh - 1) * d
            for kw in range(3):
                cs = D + (kw - 1) * d
                tap = xwin_ref[pl.ds(rs, TH), pl.ds(cs, W), :]
                tap = tap.reshape(TH * W, Cin)
                acc_ref[...] += jnp.dot(tap, w_ref[kb, kh, kw],
                                        preferred_element_type=jnp.float32)

    out_ref[0] = acc_ref[...].reshape(TH, W, Cpad).astype(out_ref.dtype)


@functools.partial(jax.jit, static_argnames=("dilations", "paddings"))
def classifier_module_forward(x_nchw, weights, biases, dilations, paddings):
    """PyTorch-parity entry point.

    x_nchw  : (N, Cin, H, W)        f32, NCHW (PyTorch layout)
    weights : (nb, nc, Cin, 3, 3)   f32, torch OIHW per branch
    biases  : (nb, nc)              f32
    Returns (N, nc, H, W) f32.
    """
    assert tuple(paddings) == tuple(dilations), (
        "only padding == dilation (DeepLabV2 config) is supported")
    nb, nc, Cin, kh, kw = weights.shape
    assert (kh, kw) == (3, 3)
    N, _, H, W = x_nchw.shape
    D = max(dilations)
    Cpad = _round_up(max(nc, 128), 128)      # lane-dense output channels
    TH = _pick_tile_h(H, W, target_rows=128)  # ~128 output pixels per MXU M-tile
    HT = H // TH

    # NCHW -> NHWC + bf16 cast + spatial zero-pad, fused into one wrapper pass.
    x = jnp.transpose(x_nchw, (0, 2, 3, 1)).astype(jnp.bfloat16)
    x = jnp.pad(x, ((0, 0), (D, D), (D, D), (0, 0)))       # (N, H+2D, W+2D, Cin)

    # (nb, O, I, 3, 3) -> (nb, 3, 3, I, Cpad) bf16.
    w = jnp.transpose(weights, (0, 3, 4, 2, 1))
    w = jnp.pad(w, ((0, 0), (0, 0), (0, 0), (0, 0), (0, Cpad - nc)))
    w = w.astype(jnp.bfloat16)

    # The module sums branch outputs, so the biases sum too.
    b = jnp.pad(jnp.sum(biases.astype(jnp.float32), axis=0), (0, Cpad - nc))
    b = b[None, :]                                          # (1, Cpad) f32

    kernel = functools.partial(
        classifier_kernel, dilations=tuple(dilations), pad_max=D)

    # Per-step working set (bytes) -> VMEM budget (re-derived, not hard-coded).
    win_bytes = (TH + 2 * D) * (W + 2 * D) * Cin * 2
    w_bytes = nb * 9 * Cin * Cpad * 2
    acc_bytes = TH * W * Cpad * 4
    out_tile_bytes = TH * W * Cpad * 4
    need = 2 * w_bytes + 2 * out_tile_bytes + win_bytes + acc_bytes + (1 << 20)
    vmem_limit = int(min(max(2 * need, 32 << 20), 100 << 20))

    flops = int(2 * N * H * W * nb * 9 * Cin * Cpad)
    bytes_accessed = int(N * HT * win_bytes          # halo windows (incl. re-read halo)
                         + w_bytes                    # weights resident across grid
                         + b.size * 4
                         + N * H * W * Cpad * 4)      # output writeback

    out = pl.pallas_call(
        kernel,
        out_shape=jax.ShapeDtypeStruct((N, H, W, Cpad), jnp.float32),
        grid=(N, HT),
        in_specs=[
            pl.BlockSpec(memory_space=pl.ANY),                           # x (HBM)
            pl.BlockSpec((nb, 3, 3, Cin, Cpad), lambda n, h: (0, 0, 0, 0, 0)),
            pl.BlockSpec((1, Cpad), lambda n, h: (0, 0)),
        ],
        out_specs=pl.BlockSpec((1, TH, W, Cpad), lambda n, h: (n, h, 0, 0)),
        scratch_shapes=[
            pltpu.VMEM((TH + 2 * D, W + 2 * D, Cin), jnp.bfloat16),      # halo window
            pltpu.VMEM((TH * W, Cpad), jnp.float32),                     # accumulator
            pltpu.SemaphoreType.DMA((1,)),
        ],
        compiler_params=pltpu.CompilerParams(
            dimension_semantics=("parallel", "parallel"),
            vmem_limit_bytes=vmem_limit),
        cost_estimate=pl.CostEstimate(flops=flops, transcendentals=0,
                                      bytes_accessed=bytes_accessed),
    )(x, w, b)

    out = out[..., :nc]                                     # drop lane padding
    return jnp.transpose(out, (0, 3, 1, 2))                 # NHWC -> NCHW


def reference_forward(x_nchw, weights, biases, dilations):
    """Pure-JAX reference (lax conv) for correctness checking."""
    x = jnp.transpose(x_nchw, (0, 2, 3, 1)).astype(jnp.float32)
    out = None
    for k, d in enumerate(dilations):
        w_hwio = jnp.transpose(weights[k], (2, 3, 1, 0)).astype(jnp.float32)
        y = jax.lax.conv_general_dilated(
            x, w_hwio, window_strides=(1, 1),
            padding=[(d, d), (d, d)], rhs_dilation=(d, d),
            dimension_numbers=("NHWC", "HWIO", "NHWC"),
            precision=jax.lax.Precision.HIGHEST)
        y = y + biases[k][None, None, None, :]
        out = y if out is None else out + y
    return jnp.transpose(out, (0, 3, 1, 2))


if __name__ == "__main__":
    # Small test config consistent with the module (real DeepLabV2 uses
    # inplanes=2048, num_classes=21, dilation_series=padding_series=[6,12,18,24]).
    N, Cin, H, W = 2, 128, 16, 16
    num_classes = 21
    dilations = (2, 4, 6, 8)
    paddings = (2, 4, 6, 8)
    nb = len(dilations)

    key = jax.random.PRNGKey(0)
    kx, kw_, kb_ = jax.random.split(key, 3)
    x = jax.random.normal(kx, (N, Cin, H, W), jnp.float32)                 # NCHW
    weights = 0.01 * jax.random.normal(kw_, (nb, num_classes, Cin, 3, 3),
                                       jnp.float32)                       # OIHW per branch
    biases = 0.05 * jax.random.normal(kb_, (nb, num_classes), jnp.float32)

    out = classifier_module_forward(x, weights, biases, dilations, paddings)
    out = jax.block_until_ready(out)
    assert out.shape == (N, num_classes, H, W), out.shape

    # Reference on bf16-rounded inputs (the kernel feeds the MXU bf16 operands
    # with f32 accumulation), so only accumulation order differs.
    x_r = x.astype(jnp.bfloat16).astype(jnp.float32)
    w_r = weights.astype(jnp.bfloat16).astype(jnp.float32)
    ref = reference_forward(x_r, w_r, biases, dilations)
    max_err = jnp.max(jnp.abs(out - ref))
    assert jnp.allclose(out, ref, atol=2e-3, rtol=2e-3), f"max abs err {max_err}"

    print("KERNEL_OK")
</pallas_src>

<mosaic_0001>
module attributes {stable_mosaic.version = 11 : i64} {
  func.func @classifier_kernel(%arg0: i32, %arg1: i32, %arg2: memref<2x32x32x128xbf16, #tpu.memory_space<any>>, %arg3: memref<4x3x3x128x128xbf16, #tpu.memory_space<vmem>>, %arg4: memref<1x128xf32, #tpu.memory_space<vmem>>, %arg5: memref<1x8x16x128xf32, #tpu.memory_space<vmem>>, %arg6: memref<24x32x128xbf16, #tpu.memory_space<vmem>>, %arg7: memref<128x128xf32, #tpu.memory_space<vmem>>, %arg8: memref<1x!tpu.dma_semaphore, #tpu.memory_space<semaphore_mem>>) attributes {dimension_semantics = [#tpu.dimension_semantics<parallel>, #tpu.dimension_semantics<parallel>], iteration_bounds = array<i64: 2, 2>, scalar_prefetch = 0 : i64, scratch_operands = 3 : i64, tpu.core_type = #tpu.core_type<tc>, window_params = [{}, {pipeline_mode = #tpu.pipeline_mode<synchronous>, transform_indices = @transform_1, window_bounds = array<i64: 4, 3, 3, 128, 128>}, {pipeline_mode = #tpu.pipeline_mode<synchronous>, transform_indices = @transform_2, window_bounds = array<i64: 1, 128>}, {transform_indices = @transform_3, window_bounds = array<i64: 1, 8, 16, 128>}]} {
    %c8_i32 = arith.constant 8 : i32
    %0 = arith.muli %arg1, %c8_i32 : i32
    %1 = tpu.assume_multiple %0, 8 : i32
    %c0_i32 = arith.constant 0 : i32
    %c0_i32_0 = arith.constant 0 : i32
    %c0_i32_1 = arith.constant 0 : i32
    %2 = tpu.memref_slice %arg2[%arg0, %1, %c0_i32_0, %c0_i32_1] : memref<2x32x32x128xbf16, #tpu.memory_space<any>> -> memref<1x24x32x128xbf16, #tpu.memory_space<any>>
    %3 = tpu.memref_squeeze %2 : memref<1x24x32x128xbf16, #tpu.memory_space<any>> -> memref<24x32x128xbf16, #tpu.memory_space<any>>
    %4 = tpu.memref_slice %arg8[%c0_i32] : memref<1x!tpu.dma_semaphore, #tpu.memory_space<semaphore_mem>> -> memref<1x!tpu.dma_semaphore, #tpu.memory_space<semaphore_mem>>
    %5 = tpu.memref_squeeze %4 : memref<1x!tpu.dma_semaphore, #tpu.memory_space<semaphore_mem>> -> memref<!tpu.dma_semaphore, #tpu.memory_space<semaphore_mem>>
    tpu.enqueue_dma source(%3 : memref<24x32x128xbf16, #tpu.memory_space<any>>) target(%arg6 : memref<24x32x128xbf16, #tpu.memory_space<vmem>>) target_semaphore(%5 : memref<!tpu.dma_semaphore, #tpu.memory_space<semaphore_mem>>)
    %c0 = arith.constant 0 : index
    %c0_2 = arith.constant 0 : index
    %6 = vector.load %arg4[%c0, %c0_2] : memref<1x128xf32, #tpu.memory_space<vmem>>, vector<1x128xf32>
    %7 = vector.shape_cast %6 : vector<1x128xf32> to vector<1x128xf32>
    %8 = vector.broadcast %7 : vector<1x128xf32> to vector<128x128xf32>
    %c0_3 = arith.constant 0 : index
    %c0_4 = arith.constant 0 : index
    %9 = vector.load %arg7[%c0_3, %c0_4] : memref<128x128xf32, #tpu.memory_space<vmem>>, vector<128x128xf32>
    tpu.vector_store %arg7[%c0_3, %c0_4], %8 {strides = array<i32>} : memref<128x128xf32, #tpu.memory_space<vmem>>, vector<128x128xf32>,
    %c0_i32_5 = arith.constant 0 : i32
    %c0_i32_6 = arith.constant 0 : i32
    %c0_i32_7 = arith.constant 0 : i32
    %10 = tpu.memref_slice %arg2[%arg0, %1, %c0_i32_6, %c0_i32_7] : memref<2x32x32x128xbf16, #tpu.memory_space<any>> -> memref<1x24x32x128xbf16, #tpu.memory_space<any>>
    %11 = tpu.memref_squeeze %10 : memref<1x24x32x128xbf16, #tpu.memory_space<any>> -> memref<24x32x128xbf16, #tpu.memory_space<any>>
    %12 = tpu.memref_slice %arg8[%c0_i32_5] : memref<1x!tpu.dma_semaphore, #tpu.memory_space<semaphore_mem>> -> memref<1x!tpu.dma_semaphore, #tpu.memory_space<semaphore_mem>>
    %13 = tpu.memref_squeeze %12 : memref<1x!tpu.dma_semaphore, #tpu.memory_space<semaphore_mem>> -> memref<!tpu.dma_semaphore, #tpu.memory_space<semaphore_mem>>
    tpu.wait_dma2 semaphore(%13 : memref<!tpu.dma_semaphore, #tpu.memory_space<semaphore_mem>>) src(%11 : memref<24x32x128xbf16, #tpu.memory_space<any>>) dst(%arg6 : memref<24x32x128xbf16, #tpu.memory_space<vmem>>)
    %c6 = arith.constant 6 : index
    %c6_8 = arith.constant 6 : index
    %c0_9 = arith.constant 0 : index
    %14 = vector.load %arg6[%c6, %c6_8, %c0_9] : memref<24x32x128xbf16, #tpu.memory_space<vmem>>, vector<8x16x128xbf16>
    %15 = vector.shape_cast %14 : vector<8x16x128xbf16> to vector<128x128xbf16>
    %c0_10 = arith.constant 0 : index
    %c0_11 = arith.constant 0 : index
    %16 = vector.load %arg7[%c0_10, %c0_11] : memref<128x128xf32, #tpu.memory_space<vmem>>, vector<128x128xf32>
    %c0_12 = arith.constant 0 : index
    %c0_13 = arith.constant 0 : index
    %c0_14 = arith.constant 0 : index
    %c0_15 = arith.constant 0 : index
    %c0_16 = arith.constant 0 : index
    %17 = vector.load %arg3[%c0_12, %c0_13, %c0_14, %c0_15, %c0_16] : memref<4x3x3x128x128xbf16, #tpu.memory_space<vmem>>, vector<1x1x1x128x128xbf16>
    %18 = vector.shape_cast %17 : vector<1x1x1x128x128xbf16> to vector<128x128xbf16>
    %cst = arith.constant dense<0.000000e+00> : vector<128x128xf32>
    %19 = tpu.matmul %15, %18, %cst {dimension_numbers = #tpu.dot_dimension_numbers<[1], [0], [0], [1], [0, 0, 1, 1], [], []>} : vector<128x128xbf16>, vector<128x128xbf16>, vector<128x128xf32> -> vector<128x128xf32>
    %20 = arith.addf %16, %19 : vector<128x128xf32>
    %c0_17 = arith.constant 0 : index
    %c0_18 = arith.constant 0 : index
    %21 = vector.load %arg7[%c0_17, %c0_18] : memref<128x128xf32, #tpu.memory_space<vmem>>, vector<128x128xf32>
    tpu.vector_store %arg7[%c0_17, %c0_18], %20 {strides = array<i32>} : memref<128x128xf32, #tpu.memory_space<vmem>>, vector<128x128xf32>,
    %c6_19 = arith.constant 6 : index
    %c8 = arith.constant 8 : index
    %c0_20 = arith.constant 0 : index
    %22 = vector.load %arg6[%c6_19, %c8, %c0_20] : memref<24x32x128xbf16, #tpu.memory_space<vmem>>, vector<8x16x128xbf16>
    %23 = vector.shape_cast %22 : vector<8x16x128xbf16> to vector<128x128xbf16>
    %c0_21 = arith.constant 0 : index
    %c0_22 = arith.constant 0 : index
    %24 = vector.load %arg7[%c0_21, %c0_22] : memref<128x128xf32, #tpu.memory_space<vmem>>, vector<128x128xf32>
    %c0_23 = arith.constant 0 : index
    %c0_24 = arith.constant 0 : index
    %c1 = arith.constant 1 : index
    %c0_25 = arith.constant 0 : index
    %c0_26 = arith.constant 0 : index
    %25 = vector.load %arg3[%c0_23, %c0_24, %c1, %c0_25, %c0_26] : memref<4x3x3x128x128xbf16, #tpu.memory_space<vmem>>, vector<1x1x1x128x128xbf16>
    %26 = vector.shape_cast %25 : vector<1x1x1x128x128xbf16> to vector<128x128xbf16>
    %cst_27 = arith.constant dense<0.000000e+00> : vector<128x128xf32>
    %27 = tpu.matmul %23, %26, %cst_27 {dimension_numbers = #tpu.dot_dimension_numbers<[1], [0], [0], [1], [0, 0, 1, 1], [], []>} : vector<128x128xbf16>, vector<128x128xbf16>, vector<128x128xf32> -> vector<128x128xf32>
    %28 = arith.addf %24, %27 : vector<128x128xf32>
    %c0_28 = arith.constant 0 : index
    %c0_29 = arith.constant 0 : index
    %29 = vector.load %arg7[%c0_28, %c0_29] : memref<128x128xf32, #tpu.memory_space<vmem>>, vector<128x128xf32>
    tpu.vector_store %arg7[%c0_28, %c0_29], %28 {strides = array<i32>} : memref<128x128xf32, #tpu.memory_space<vmem>>, vector<128x128xf32>,
    %c6_30 = arith.constant 6 : index
    %c10 = arith.constant 10 : index
    %c0_31 = arith.constant 0 : index
    %30 = vector.load %arg6[%c6_30, %c10, %c0_31] : memref<24x32x128xbf16, #tpu.memory_space<vmem>>, vector<8x16x128xbf16>
    %31 = vector.shape_cast %30 : vector<8x16x128xbf16> to vector<128x128xbf16>
    %c0_32 = arith.constant 0 : index
    %c0_33 = arith.constant 0 : index
    %32 = vector.load %arg7[%c0_32, %c0_33] : memref<128x128xf32, #tpu.memory_space<vmem>>, vector<128x128xf32>
    %c0_34 = arith.constant 0 : index
    %c0_35 = arith.constant 0 : index
    %c2 = arith.constant 2 : index
    %c0_36 = arith.constant 0 : index
    %c0_37 = arith.constant 0 : index
    %33 = vector.load %arg3[%c0_34, %c0_35, %c2, %c0_36, %c0_37] : memref<4x3x3x128x128xbf16, #tpu.memory_space<vmem>>, vector<1x1x1x128x128xbf16>
    %34 = vector.shape_cast %33 : vector<1x1x1x128x128xbf16> to vector<128x128xbf16>
    %cst_38 = arith.constant dense<0.000000e+00> : vector<128x128xf32>
    %35 = tpu.matmul %31, %34, %cst_38 {dimension_numbers = #tpu.dot_dimension_numbers<[1], [0], [0], [1], [0, 0, 1, 1], [], []>} : vector<128x128xbf16>, vector<128x128xbf16>, vector<128x128xf32> -> vector<128x128xf32>
    %36 = arith.addf %32, %35 : vector<128x128xf32>
    %c0_39 = arith.constant 0 : index
    %c0_40 = arith.constant 0 : index
    %37 = vector.load %arg7[%c0_39, %c0_40] : memref<128x128xf32, #tpu.memory_space<vmem>>, vector<128x128xf32>
    tpu.vector_store %arg7[%c0_39, %c0_40], %36 {strides = array<i32>} : memref<128x128xf32, #tpu.memory_space<vmem>>, vector<128x128xf32>,
    %c8_41 = arith.constant 8 : index
    %c6_42 = arith.constant 6 : index
    %c0_43 = arith.constant 0 : index
    %38 = vector.load %arg6[%c8_41, %c6_42, %c0_43] : memref<24x32x128xbf16, #tpu.memory_space<vmem>>, vector<8x16x128xbf16>
    %39 = vector.shape_cast %38 : vector<8x16x128xbf16> to vector<128x128xbf16>
    %c0_44 = arith.constant 0 : index
    %c0_45 = arith.constant 0 : index
    %40 = vector.load %arg7[%c0_44, %c0_45] : memref<128x128xf32, #tpu.memory_space<vmem>>, vector<128x128xf32>
    %c0_46 = arith.constant 0 : index
    %c1_47 = arith.constant 1 : index
    %c0_48 = arith.constant 0 : index
    %c0_49 = arith.constant 0 : index
    %c0_50 = arith.constant 0 : index
    %41 = vector.load %arg3[%c0_46, %c1_47, %c0_48, %c0_49, %c0_50] : memref<4x3x3x128x128xbf16, #tpu.memory_space<vmem>>, vector<1x1x1x128x128xbf16>
    %42 = vector.shape_cast %41 : vector<1x1x1x128x128xbf16> to vector<128x128xbf16>
    %cst_51 = arith.constant dense<0.000000e+00> : vector<128x128xf32>
    %43 = tpu.matmul %39, %42, %cst_51 {dimension_numbers = #tpu.dot_dimension_numbers<[1], [0], [0], [1], [0, 0, 1, 1], [], []>} : vector<128x128xbf16>, vector<128x128xbf16>, vector<128x128xf32> -> vector<128x128xf32>
    %44 = arith.addf %40, %43 : vector<128x128xf32>
    %c0_52 = arith.constant 0 : index
    %c0_53 = arith.constant 0 : index
    %45 = vector.load %arg7[%c0_52, %c0_53] : memref<128x128xf32, #tpu.memory_space<vmem>>, vector<128x128xf32>
    tpu.vector_store %arg7[%c0_52, %c0_53], %44 {strides = array<i32>} : memref<128x128xf32, #tpu.memory_space<vmem>>, vector<128x128xf32>,
    %c8_54 = arith.constant 8 : index
    %c8_55 = arith.constant 8 : index
    %c0_56 = arith.constant 0 : index
    %46 = vector.load %arg6[%c8_54, %c8_55, %c0_56] : memref<24x32x128xbf16, #tpu.memory_space<vmem>>, vector<8x16x128xbf16>
    %47 = vector.shape_cast %46 : vector<8x16x128xbf16> to vector<128x128xbf16>
    %c0_57 = arith.constant 0 : index
    %c0_58 = arith.constant 0 : index
    %48 = vector.load %arg7[%c0_57, %c0_58] : memref<128x128xf32, #tpu.memory_space<vmem>>, vector<128x128xf32>
    %c0_59 = arith.constant 0 : index
    %c1_60 = arith.constant 1 : index
    %c1_61 = arith.constant 1 : index
    %c0_62 = arith.constant 0 : index
    %c0_63 = arith.constant 0 : index
    %49 = vector.load %arg3[%c0_59, %c1_60, %c1_61, %c0_62, %c0_63] : memref<4x3x3x128x128xbf16, #tpu.memory_space<vmem>>, vector<1x1x1x128x128xbf16>
    %50 = vector.shape_cast %49 : vector<1x1x1x128x128xbf16> to vector<128x128xbf16>
    %cst_64 = arith.constant dense<0.000000e+00> : vector<128x128xf32>
    %51 = tpu.matmul %47, %50, %cst_64 {dimension_numbers = #tpu.dot_dimension_numbers<[1], [0], [0], [1], [0, 0, 1, 1], [], []>} : vector<128x128xbf16>, vector<128x128xbf16>, vector<128x128xf32> -> vector<128x128xf32>
    %52 = arith.addf %48, %51 : vector<128x128xf32>
    %c0_65 = arith.constant 0 : index
    %c0_66 = arith.constant 0 : index
    %53 = vector.load %arg7[%c0_65, %c0_66] : memref<128x128xf32, #tpu.memory_space<vmem>>, vector<128x128xf32>
    tpu.vector_store %arg7[%c0_65, %c0_66], %52 {strides = array<i32>} : memref<128x128xf32, #tpu.memory_space<vmem>>, vector<128x128xf32>,
    %c8_67 = arith.constant 8 : index
    %c10_68 = arith.constant 10 : index
    %c0_69 = arith.constant 0 : index
    %54 = vector.load %arg6[%c8_67, %c10_68, %c0_69] : memref<24x32x128xbf16, #tpu.memory_space<vmem>>, vector<8x16x128xbf16>
    %55 = vector.shape_cast %54 : vector<8x16x128xbf16> to vector<128x128xbf16>
    %c0_70 = arith.constant 0 : index
    %c0_71 = arith.constant 0 : index
    %56 = vector.load %arg7[%c0_70, %c0_71] : memref<128x128xf32, #tpu.memory_space<vmem>>, vector<128x128xf32>
    %c0_72 = arith.constant 0 : index
    %c1_73 = arith.constant 1 : index
    %c2_74 = arith.constant 2 : index
    %c0_75 = arith.constant 0 : index
    %c0_76 = arith.constant 0 : index
    %57 = vector.load %arg3[%c0_72, %c1_73, %c2_74, %c0_75, %c0_76] : memref<4x3x3x128x128xbf16, #tpu.memory_space<vmem>>, vector<1x1x1x128x128xbf16>
    %58 = vector.shape_cast %57 : vector<1x1x1x128x128xbf16> to vector<128x128xbf16>
    %cst_77 = arith.constant dense<0.000000e+00> : vector<128x128xf32>
    %59 = tpu.matmul %55, %58, %cst_77 {dimension_numbers = #tpu.dot_dimension_numbers<[1], [0], [0], [1], [0, 0, 1, 1], [], []>} : vector<128x128xbf16>, vector<128x128xbf16>, vector<128x128xf32> -> vector<128x128xf32>
    %60 = arith.addf %56, %59 : vector<128x128xf32>
    %c0_78 = arith.constant 0 : index
    %c0_79 = arith.constant 0 : index
    %61 = vector.load %arg7[%c0_78, %c0_79] : memref<128x128xf32, #tpu.memory_space<vmem>>, vector<128x128xf32>
    tpu.vector_store %arg7[%c0_78, %c0_79], %60 {strides = array<i32>} : memref<128x128xf32, #tpu.memory_space<vmem>>, vector<128x128xf32>,
    %c10_80 = arith.constant 10 : index
    %c6_81 = arith.constant 6 : index
    %c0_82 = arith.constant 0 : index
    %62 = vector.load %arg6[%c10_80, %c6_81, %c0_82] : memref<24x32x128xbf16, #tpu.memory_space<vmem>>, vector<8x16x128xbf16>
    %63 = vector.shape_cast %62 : vector<8x16x128xbf16> to vector<128x128xbf16>
    %c0_83 = arith.constant 0 : index
    %c0_84 = arith.constant 0 : index
    %64 = vector.load %arg7[%c0_83, %c0_84] : memref<128x128xf32, #tpu.memory_space<vmem>>, vector<128x128xf32>
    %c0_85 = arith.constant 0 : index
    %c2_86 = arith.constant 2 : index
    %c0_87 = arith.constant 0 : index
    %c0_88 = arith.constant 0 : index
    %c0_89 = arith.constant 0 : index
    %65 = vector.load %arg3[%c0_85, %c2_86, %c0_87, %c0_88, %c0_89] : memref<4x3x3x128x128xbf16, #tpu.memory_space<vmem>>, vector<1x1x1x128x128xbf16>
    %66 = vector.shape_cast %65 : vector<1x1x1x128x128xbf16> to vector<128x128xbf16>
    %cst_90 = arith.constant dense<0.000000e+00> : vector<128x128xf32>
    %67 = tpu.matmul %63, %66, %cst_90 {dimension_numbers = #tpu.dot_dimension_numbers<[1], [0], [0], [1], [0, 0, 1, 1], [], []>} : vector<128x128xbf16>, vector<128x128xbf16>, vector<128x128xf32> -> vector<128x128xf32>
    %68 = arith.addf %64, %67 : vector<128x128xf32>
    %c0_91 = arith.constant 0 : index
    %c0_92 = arith.constant 0 : index
    %69 = vector.load %arg7[%c0_91, %c0_92] : memref<128x128xf32, #tpu.memory_space<vmem>>, vector<128x128xf32>
    tpu.vector_store %arg7[%c0_91, %c0_92], %68 {strides = array<i32>} : memref<128x128xf32, #tpu.memory_space<vmem>>, vector<128x128xf32>,
    %c10_93 = arith.constant 10 : index
    %c8_94 = arith.constant 8 : index
    %c0_95 = arith.constant 0 : index
    %70 = vector.load %arg6[%c10_93, %c8_94, %c0_95] : memref<24x32x128xbf16, #tpu.memory_space<vmem>>, vector<8x16x128xbf16>
    %71 = vector.shape_cast %70 : vector<8x16x128xbf16> to vector<128x128xbf16>
    %c0_96 = arith.constant 0 : index
    %c0_97 = arith.constant 0 : index
    %72 = vector.load %arg7[%c0_96, %c0_97] : memref<128x128xf32, #tpu.memory_space<vmem>>, vector<128x128xf32>
    %c0_98 = arith.constant 0 : index
    %c2_99 = arith.constant 2 : index
    %c1_100 = arith.constant 1 : index
    %c0_101 = arith.constant 0 : index
    %c0_102 = arith.constant 0 : index
    %73 = vector.load %arg3[%c0_98, %c2_99, %c1_100, %c0_101, %c0_102] : memref<4x3x3x128x128xbf16, #tpu.memory_space<vmem>>, vector<1x1x1x128x128xbf16>
    %74 = vector.shape_cast %73 : vector<1x1x1x128x128xbf16> to vector<128x128xbf16>
    %cst_103 = arith.constant dense<0.000000e+00> : vector<128x128xf32>
    %75 = tpu.matmul %71, %74, %cst_103 {dimension_numbers = #tpu.dot_dimension_numbers<[1], [0], [0], [1], [0, 0, 1, 1], [], []>} : vector<128x128xbf16>, vector<128x128xbf16>, vector<128x128xf32> -> vector<128x128xf32>
    %76 = arith.addf %72, %75 : vector<128x128xf32>
    %c0_104 = arith.constant 0 : index
    %c0_105 = arith.constant 0 : index
    %77 = vector.load %arg7[%c0_104, %c0_105] : memref<128x128xf32, #tpu.memory_space<vmem>>, vector<128x128xf32>
    tpu.vector_store %arg7[%c0_104, %c0_105], %76 {strides = array<i32>} : memref<128x128xf32, #tpu.memory_space<vmem>>, vector<128x128xf32>,
    %c10_106 = arith.constant 10 : index
    %c10_107 = arith.constant 10 : index
    %c0_108 = arith.constant 0 : index
    %78 = vector.load %arg6[%c10_106, %c10_107, %c0_108] : memref<24x32x128xbf16, #tpu.memory_space<vmem>>, vector<8x16x128xbf16>
    %79 = vector.shape_cast %78 : vector<8x16x128xbf16> to vector<128x128xbf16>
    %c0_109 = arith.constant 0 : index
    %c0_110 = arith.constant 0 : index
    %80 = vector.load %arg7[%c0_109, %c0_110] : memref<128x128xf32, #tpu.memory_space<vmem>>, vector<128x128xf32>
    %c0_111 = arith.constant 0 : index
    %c2_112 = arith.constant 2 : index
    %c2_113 = arith.constant 2 : index
    %c0_114 = arith.constant 0 : index
    %c0_115 = arith.constant 0 : index
    %81 = vector.load %arg3[%c0_111, %c2_112, %c2_113, %c0_114, %c0_115] : memref<4x3x3x128x128xbf16, #tpu.memory_space<vmem>>, vector<1x1x1x128x128xbf16>
    %82 = vector.shape_cast %81 : vector<1x1x1x128x128xbf16> to vector<128x128xbf16>
    %cst_116 = arith.constant dense<0.000000e+00> : vector<128x128xf32>
    %83 = tpu.matmul %79, %82, %cst_116 {dimension_numbers = #tpu.dot_dimension_numbers<[1], [0], [0], [1], [0, 0, 1, 1], [], []>} : vector<128x128xbf16>, vector<128x128xbf16>, vector<128x128xf32> -> vector<128x128xf32>
    %84 = arith.addf %80, %83 : vector<128x128xf32>
    %c0_117 = arith.constant 0 : index
    %c0_118 = arith.constant 0 : index
    %85 = vector.load %arg7[%c0_117, %c0_118] : memref<128x128xf32, #tpu.memory_space<vmem>>, vector<128x128xf32>
    tpu.vector_store %arg7[%c0_117, %c0_118], %84 {strides = array<i32>} : memref<128x128xf32, #tpu.memory_space<vmem>>, vector<128x128xf32>,
    %c4 = arith.constant 4 : index
    %c4_119 = arith.constant 4 : index
    %c0_120 = arith.constant 0 : index
    %86 = vector.load %arg6[%c4, %c4_119, %c0_120] : memref<24x32x128xbf16, #tpu.memory_space<vmem>>, vector<8x16x128xbf16>
    %87 = vector.shape_cast %86 : vector<8x16x128xbf16> to vector<128x128xbf16>
    %c0_121 = arith.constant 0 : index
    %c0_122 = arith.constant 0 : index
    %88 = vector.load %arg7[%c0_121, %c0_122] : memref<128x128xf32, #tpu.memory_space<vmem>>, vector<128x128xf32>
    %c1_123 = arith.constant 1 : index
    %c0_124 = arith.constant 0 : index
    %c0_125 = arith.constant 0 : index
    %c0_126 = arith.constant 0 : index
    %c0_127 = arith.constant 0 : index
    %89 = vector.load %arg3[%c1_123, %c0_124, %c0_125, %c0_126, %c0_127] : memref<4x3x3x128x128xbf16, #tpu.memory_space<vmem>>, vector<1x1x1x128x128xbf16>
    %90 = vector.shape_cast %89 : vector<1x1x1x128x128xbf16> to vector<128x128xbf16>
    %cst_128 = arith.constant dense<0.000000e+00> : vector<128x128xf32>
    %91 = tpu.matmul %87, %90, %cst_128 {dimension_numbers = #tpu.dot_dimension_numbers<[1], [0], [0], [1], [0, 0, 1, 1], [], []>} : vector<128x128xbf16>, vector<128x128xbf16>, vector<128x128xf32> -> vector<128x128xf32>
    %92 = arith.addf %88, %91 : vector<128x128xf32>
    %c0_129 = arith.constant 0 : index
    %c0_130 = arith.constant 0 : index
    %93 = vector.load %arg7[%c0_129, %c0_130] : memref<128x128xf32, #tpu.memory_space<vmem>>, vector<128x128xf32>
    tpu.vector_store %arg7[%c0_129, %c0_130], %92 {strides = array<i32>} : memref<128x128xf32, #tpu.memory_space<vmem>>, vector<128x128xf32>,
    %c4_131 = arith.constant 4 : index
    %c8_132 = arith.constant 8 : index
    %c0_133 = arith.constant 0 : index
    %94 = vector.load %arg6[%c4_131, %c8_132, %c0_133] : memref<24x32x128xbf16, #tpu.memory_space<vmem>>, vector<8x16x128xbf16>
    %95 = vector.shape_cast %94 : vector<8x16x128xbf16> to vector<128x128xbf16>
    %c0_134 = arith.constant 0 : index
    %c0_135 = arith.constant 0 : index
    %96 = vector.load %arg7[%c0_134, %c0_135] : memref<128x128xf32, #tpu.memory_space<vmem>>, vector<128x128xf32>
    %c1_136 = arith.constant 1 : index
    %c0_137 = arith.constant 0 : index
    %c1_138 = arith.constant 1 : index
    %c0_139 = arith.constant 0 : index
    %c0_140 = arith.constant 0 : index
    %97 = vector.load %arg3[%c1_136, %c0_137, %c1_138, %c0_139, %c0_140] : memref<4x3x3x128x128xbf16, #tpu.memory_space<vmem>>, vector<1x1x1x128x128xbf16>
    %98 = vector.shape_cast %97 : vector<1x1x1x128x128xbf16> to vector<128x128xbf16>
    %cst_141 = arith.constant dense<0.000000e+00> : vector<128x128xf32>
    %99 = tpu.matmul %95, %98, %cst_141 {dimension_numbers = #tpu.dot_dimension_numbers<[1], [0], [0], [1], [0, 0, 1, 1], [], []>} : vector<128x128xbf16>, vector<128x128xbf16>, vector<128x128xf32> -> vector<128x128xf32>
    %100 = arith.addf %96, %99 : vector<128x128xf32>
    %c0_142 = arith.constant 0 : index
    %c0_143 = arith.constant 0 : index
    %101 = vector.load %arg7[%c0_142, %c0_143] : memref<128x128xf32, #tpu.memory_space<vmem>>, vector<128x128xf32>
    tpu.vector_store %arg7[%c0_142, %c0_143], %100 {strides = array<i32>} : memref<128x128xf32, #tpu.memory_space<vmem>>, vector<128x128xf32>,
    %c4_144 = arith.constant 4 : index
    %c12 = arith.constant 12 : index
    %c0_145 = arith.constant 0 : index
    %102 = vector.load %arg6[%c4_144, %c12, %c0_145] : memref<24x32x128xbf16, #tpu.memory_space<vmem>>, vector<8x16x128xbf16>
    %103 = vector.shape_cast %102 : vector<8x16x128xbf16> to vector<128x128xbf16>
    %c0_146 = arith.constant 0 : index
    %c0_147 = arith.constant 0 : index
    %104 = vector.load %arg7[%c0_146, %c0_147] : memref<128x128xf32, #tpu.memory_space<vmem>>, vector<128x128xf32>
    %c1_148 = arith.constant 1 : index
    %c0_149 = arith.constant 0 : index
    %c2_150 = arith.constant 2 : index
    %c0_151 = arith.constant 0 : index
    %c0_152 = arith.constant 0 : index
    %105 = vector.load %arg3[%c1_148, %c0_149, %c2_150, %c0_151, %c0_152] : memref<4x3x3x128x128xbf16, #tpu.memory_space<vmem>>, vector<1x1x1x128x128xbf16>
    %106 = vector.shape_cast %105 : vector<1x1x1x128x128xbf16> to vector<128x128xbf16>
    %cst_153 = arith.constant dense<0.000000e+00> : vector<128x128xf32>
    %107 = tpu.matmul %103, %106, %cst_153 {dimension_numbers = #tpu.dot_dimension_numbers<[1], [0], [0], [1], [0, 0, 1, 1], [], []>} : vector<128x128xbf16>, vector<128x128xbf16>, vector<128x128xf32> -> vector<128x128xf32>
    %108 = arith.addf %104, %107 : vector<128x128xf32>
    %c0_154 = arith.constant 0 : index
    %c0_155 = arith.constant 0 : index
    %109 = vector.load %arg7[%c0_154, %c0_155] : memref<128x128xf32, #tpu.memory_space<vmem>>, vector<128x128xf32>
    tpu.vector_store %arg7[%c0_154, %c0_155], %108 {strides = array<i32>} : memref<128x128xf32, #tpu.memory_space<vmem>>, vector<128x128xf32>,
    %c8_156 = arith.constant 8 : index
    %c4_157 = arith.constant 4 : index
    %c0_158 = arith.constant 0 : index
    %110 = vector.load %arg6[%c8_156, %c4_157, %c0_158] : memref<24x32x128xbf16, #tpu.memory_space<vmem>>, vector<8x16x128xbf16>
    %111 = vector.shape_cast %110 : vector<8x16x128xbf16> to vector<128x128xbf16>
    %c0_159 = arith.constant 0 : index
    %c0_160 = arith.constant 0 : index
    %112 = vector.load %arg7[%c0_159, %c0_160] : memref<128x128xf32, #tpu.memory_space<vmem>>, vector<128x128xf32>
    %c1_161 = arith.constant 1 : index
    %c1_162 = arith.constant 1 : index
    %c0_163 = arith.constant 0 : index
    %c0_164 = arith.constant 0 : index
    %c0_165 = arith.constant 0 : index
    %113 = vector.load %arg3[%c1_161, %c1_162, %c0_163, %c0_164, %c0_165] : memref<4x3x3x128x128xbf16, #tpu.memory_space<vmem>>, vector<1x1x1x128x128xbf16>
    %114 = vector.shape_cast %113 : vector<1x1x1x128x128xbf16> to vector<128x128xbf16>
    %cst_166 = arith.constant dense<0.000000e+00> : vector<128x128xf32>
    %115 = tpu.matmul %111, %114, %cst_166 {dimension_numbers = #tpu.dot_dimension_numbers<[1], [0], [0], [1], [0, 0, 1, 1], [], []>} : vector<128x128xbf16>, vector<128x128xbf16>, vector<128x128xf32> -> vector<128x128xf32>
    %116 = arith.addf %112, %115 : vector<128x128xf32>
    %c0_167 = arith.constant 0 : index
    %c0_168 = arith.constant 0 : index
    %117 = vector.load %arg7[%c0_167, %c0_168] : memref<128x128xf32, #tpu.memory_space<vmem>>, vector<128x128xf32>
    tpu.vector_store %arg7[%c0_167, %c0_168], %116 {strides = array<i32>} : memref<128x128xf32, #tpu.memory_space<vmem>>, vector<128x128xf32>,
    %c8_169 = arith.constant 8 : index
    %c8_170 = arith.constant 8 : index
    %c0_171 = arith.constant 0 : index
    %118 = vector.load %arg6[%c8_169, %c8_170, %c0_171] : memref<24x32x128xbf16, #tpu.memory_space<vmem>>, vector<8x16x128xbf16>
    %119 = vector.shape_cast %118 : vector<8x16x128xbf16> to vector<128x128xbf16>
    %c0_172 = arith.constant 0 : index
    %c0_173 = arith.constant 0 : index
    %120 = vector.load %arg7[%c0_172, %c0_173] : memref<128x128xf32, #tpu.memory_space<vmem>>, vector<128x128xf32>
    %c1_174 = arith.constant 1 : index
    %c1_175 = arith.constant 1 : index
    %c1_176 = arith.constant 1 : index
    %c0_177 = arith.constant 0 : index
    %c0_178 = arith.constant 0 : index
    %121 = vector.load %arg3[%c1_174, %c1_175, %c1_176, %c0_177, %c0_178] : memref<4x3x3x128x128xbf16, #tpu.memory_space<vmem>>, vector<1x1x1x128x128xbf16>
    %122 = vector.shape_cast %121 : vector<1x1x1x128x128xbf16> to vector<128x128xbf16>
    %cst_179 = arith.constant dense<0.000000e+00> : vector<128x128xf32>
    %123 = tpu.matmul %119, %122, %cst_179 {dimension_numbers = #tpu.dot_dimension_numbers<[1], [0], [0], [1], [0, 0, 1, 1], [], []>} : vector<128x128xbf16>, vector<128x128xbf16>, vector<128x128xf32> -> vector<128x128xf32>
    %124 = arith.addf %120, %123 : vector<128x128xf32>
    %c0_180 = arith.constant 0 : index
    %c0_181 = arith.constant 0 : index
    %125 = vector.load %arg7[%c0_180, %c0_181] : memref<128x128xf32, #tpu.memory_space<vmem>>, vector<128x128xf32>
    tpu.vector_store %arg7[%c0_180, %c0_181], %124 {strides = array<i32>} : memref<128x128xf32, #tpu.memory_space<vmem>>, vector<128x128xf32>,
    %c8_182 = arith.constant 8 : index
    %c12_183 = arith.constant 12 : index
    %c0_184 = arith.constant 0 : index
    %126 = vector.load %arg6[%c8_182, %c12_183, %c0_184] : memref<24x32x128xbf16, #tpu.memory_space<vmem>>, vector<8x16x128xbf16>
    %127 = vector.shape_cast %126 : vector<8x16x128xbf16> to vector<128x128xbf16>
    %c0_185 = arith.constant 0 : index
    %c0_186 = arith.constant 0 : index
    %128 = vector.load %arg7[%c0_185, %c0_186] : memref<128x128xf32, #tpu.memory_space<vmem>>, vector<128x128xf32>
    %c1_187 = arith.constant 1 : index
    %c1_188 = arith.constant 1 : index
    %c2_189 = arith.constant 2 : index
    %c0_190 = arith.constant 0 : index
    %c0_191 = arith.constant 0 : index
    %129 = vector.load %arg3[%c1_187, %c1_188, %c2_189, %c0_190, %c0_191] : memref<4x3x3x128x128xbf16, #tpu.memory_space<vmem>>, vector<1x1x1x128x128xbf16>
    %130 = vector.shape_cast %129 : vector<1x1x1x128x128xbf16> to vector<128x128xbf16>
    %cst_192 = arith.constant dense<0.000000e+00> : vector<128x128xf32>
    %131 = tpu.matmul %127, %130, %cst_192 {dimension_numbers = #tpu.dot_dimension_numbers<[1], [0], [0], [1], [0, 0, 1, 1], [], []>} : vector<128x128xbf16>, vector<128x128xbf16>, vector<128x128xf32> -> vector<128x128xf32>
    %132 = arith.addf %128, %131 : vector<128x128xf32>
    %c0_193 = arith.constant 0 : index
    %c0_194 = arith.constant 0 : index
    %133 = vector.load %arg7[%c0_193, %c0_194] : memref<128x128xf32, #tpu.memory_space<vmem>>, vector<128x128xf32>
    tpu.vector_store %arg7[%c0_193, %c0_194], %132 {strides = array<i32>} : memref<128x128xf32, #tpu.memory_space<vmem>>, vector<128x128xf32>,
    %c12_195 = arith.constant 12 : index
    %c4_196 = arith.constant 4 : index
    %c0_197 = arith.constant 0 : index
    %134 = vector.load %arg6[%c12_195, %c4_196, %c0_197] : memref<24x32x128xbf16, #tpu.memory_space<vmem>>, vector<8x16x128xbf16>
    %135 = vector.shape_cast %134 : vector<8x16x128xbf16> to vector<128x128xbf16>
    %c0_198 = arith.constant 0 : index
    %c0_199 = arith.constant 0 : index
    %136 = vector.load %arg7[%c0_198, %c0_199] : memref<128x128xf32, #tpu.memory_space<vmem>>, vector<128x128xf32>
    %c1_200 = arith.constant 1 : index
    %c2_201 = arith.constant 2 : index
    %c0_202 = arith.constant 0 : index
    %c0_203 = arith.constant 0 : index
    %c0_204 = arith.constant 0 : index
    %137 = vector.load %arg3[%c1_200, %c2_201, %c0_202, %c0_203, %c0_204] : memref<4x3x3x128x128xbf16, #tpu.memory_space<vmem>>, vector<1x1x1x128x128xbf16>
    %138 = vector.shape_cast %137 : vector<1x1x1x128x128xbf16> to vector<128x128xbf16>
    %cst_205 = arith.constant dense<0.000000e+00> : vector<128x128xf32>
    %139 = tpu.matmul %135, %138, %cst_205 {dimension_numbers = #tpu.dot_dimension_numbers<[1], [0], [0], [1], [0, 0, 1, 1], [], []>} : vector<128x128xbf16>, vector<128x128xbf16>, vector<128x128xf32> -> vector<128x128xf32>
    %140 = arith.addf %136, %139 : vector<128x128xf32>
    %c0_206 = arith.constant 0 : index
    %c0_207 = arith.constant 0 : index
    %141 = vector.load %arg7[%c0_206, %c0_207] : memref<128x128xf32, #tpu.memory_space<vmem>>, vector<128x128xf32>
    tpu.vector_store %arg7[%c0_206, %c0_207], %140 {strides = array<i32>} : memref<128x128xf32, #tpu.memory_space<vmem>>, vector<128x128xf32>,
    %c12_208 = arith.constant 12 : index
    %c8_209 = arith.constant 8 : index
    %c0_210 = arith.constant 0 : index
    %142 = vector.load %arg6[%c12_208, %c8_209, %c0_210] : memref<24x32x128xbf16, #tpu.memory_space<vmem>>, vector<8x16x128xbf16>
    %143 = vector.shape_cast %142 : vector<8x16x128xbf16> to vector<128x128xbf16>
    %c0_211 = arith.constant 0 : index
    %c0_212 = arith.constant 0 : index
    %144 = vector.load %arg7[%c0_211, %c0_212] : memref<128x128xf32, #tpu.memory_space<vmem>>, vector<128x128xf32>
    %c1_213 = arith.constant 1 : index
    %c2_214 = arith.constant 2 : index
    %c1_215 = arith.constant 1 : index
    %c0_216 = arith.constant 0 : index
    %c0_217 = arith.constant 0 : index
    %145 = vector.load %arg3[%c1_213, %c2_214, %c1_215, %c0_216, %c0_217] : memref<4x3x3x128x128xbf16, #tpu.memory_space<vmem>>, vector<1x1x1x128x128xbf16>
    %146 = vector.shape_cast %145 : vector<1x1x1x128x128xbf16> to vector<128x128xbf16>
    %cst_218 = arith.constant dense<0.000000e+00> : vector<128x128xf32>
    %147 = tpu.matmul %143, %146, %cst_218 {dimension_numbers = #tpu.dot_dimension_numbers<[1], [0], [0], [1], [0, 0, 1, 1], [], []>} : vector<128x128xbf16>, vector<128x128xbf16>, vector<128x128xf32> -> vector<128x128xf32>
    %148 = arith.addf %144, %147 : vector<128x128xf32>
    %c0_219 = arith.constant 0 : index
    %c0_220 = arith.constant 0 : index
    %149 = vector.load %arg7[%c0_219, %c0_220] : memref<128x128xf32, #tpu.memory_space<vmem>>, vector<128x128xf32>
    tpu.vector_store %arg7[%c0_219, %c0_220], %148 {strides = array<i32>} : memref<128x128xf32, #tpu.memory_space<vmem>>, vector<128x128xf32>,
    %c12_221 = arith.constant 12 : index
    %c12_222 = arith.constant 12 : index
    %c0_223 = arith.constant 0 : index
    %150 = vector.load %arg6[%c12_221, %c12_222, %c0_223] : memref<24x32x128xbf16, #tpu.memory_space<vmem>>, vector<8x16x128xbf16>
    %151 = vector.shape_cast %150 : vector<8x16x128xbf16> to vector<128x128xbf16>
    %c0_224 = arith.constant 0 : index
    %c0_225 = arith.constant 0 : index
    %152 = vector.load %arg7[%c0_224, %c0_225] : memref<128x128xf32, #tpu.memory_space<vmem>>, vector<128x128xf32>
    %c1_226 = arith.constant 1 : index
    %c2_227 = arith.constant 2 : index
    %c2_228 = arith.constant 2 : index
    %c0_229 = arith.constant 0 : index
    %c0_230 = arith.constant 0 : index
    %153 = vector.load %arg3[%c1_226, %c2_227, %c2_228, %c0_229, %c0_230] : memref<4x3x3x128x128xbf16, #tpu.memory_space<vmem>>, vector<1x1x1x128x128xbf16>
    %154 = vector.shape_cast %153 : vector<1x1x1x128x128xbf16> to vector<128x128xbf16>
    %cst_231 = arith.constant dense<0.000000e+00> : vector<128x128xf32>
    %155 = tpu.matmul %151, %154, %cst_231 {dimension_numbers = #tpu.dot_dimension_numbers<[1], [0], [0], [1], [0, 0, 1, 1], [], []>} : vector<128x128xbf16>, vector<128x128xbf16>, vector<128x128xf32> -> vector<128x128xf32>
    %156 = arith.addf %152, %155 : vector<128x128xf32>
    %c0_232 = arith.constant 0 : index
    %c0_233 = arith.constant 0 : index
    %157 = vector.load %arg7[%c0_232, %c0_233] : memref<128x128xf32, #tpu.memory_space<vmem>>, vector<128x128xf32>
    tpu.vector_store %arg7[%c0_232, %c0_233], %156 {strides = array<i32>} : memref<128x128xf32, #tpu.memory_space<vmem>>, vector<128x128xf32>,
    %c2_234 = arith.constant 2 : index
    %c2_235 = arith.constant 2 : index
    %c0_236 = arith.constant 0 : index
    %158 = vector.load %arg6[%c2_234, %c2_235, %c0_236] : memref<24x32x128xbf16, #tpu.memory_space<vmem>>, vector<8x16x128xbf16>
    %159 = vector.shape_cast %158 : vector<8x16x128xbf16> to vector<128x128xbf16>
    %c0_237 = arith.constant 0 : index
    %c0_238 = arith.constant 0 : index
    %160 = vector.load %arg7[%c0_237, %c0_238] : memref<128x128xf32, #tpu.memory_space<vmem>>, vector<128x128xf32>
    %c2_239 = arith.constant 2 : index
    %c0_240 = arith.constant 0 : index
    %c0_241 = arith.constant 0 : index
    %c0_242 = arith.constant 0 : index
    %c0_243 = arith.constant 0 : index
    %161 = vector.load %arg3[%c2_239, %c0_240, %c0_241, %c0_242, %c0_243] : memref<4x3x3x128x128xbf16, #tpu.memory_space<vmem>>, vector<1x1x1x128x128xbf16>
    %162 = vector.shape_cast %161 : vector<1x1x1x128x128xbf16> to vector<128x128xbf16>
    %cst_244 = arith.constant dense<0.000000e+00> : vector<128x128xf32>
    %163 = tpu.matmul %159, %162, %cst_244 {dimension_numbers = #tpu.dot_dimension_numbers<[1], [0], [0], [1], [0, 0, 1, 1], [], []>} : vector<128x128xbf16>, vector<128x128xbf16>, vector<128x128xf32> -> vector<128x128xf32>
    %164 = arith.addf %160, %163 : vector<128x128xf32>
    %c0_245 = arith.constant 0 : index
    %c0_246 = arith.constant 0 : index
    %165 = vector.load %arg7[%c0_245, %c0_246] : memref<128x128xf32, #tpu.memory_space<vmem>>, vector<128x128xf32>
    tpu.vector_store %arg7[%c0_245, %c0_246], %164 {strides = array<i32>} : memref<128x128xf32, #tpu.memory_space<vmem>>, vector<128x128xf32>,
    %c2_247 = arith.constant 2 : index
    %c8_248 = arith.constant 8 : index
    %c0_249 = arith.constant 0 : index
    %166 = vector.load %arg6[%c2_247, %c8_248, %c0_249] : memref<24x32x128xbf16, #tpu.memory_space<vmem>>, vector<8x16x128xbf16>
    %167 = vector.shape_cast %166 : vector<8x16x128xbf16> to vector<128x128xbf16>
    %c0_250 = arith.constant 0 : index
    %c0_251 = arith.constant 0 : index
    %168 = vector.load %arg7[%c0_250, %c0_251] : memref<128x128xf32, #tpu.memory_space<vmem>>, vector<128x128xf32>
    %c2_252 = arith.constant 2 : index
    %c0_253 = arith.constant 0 : index
    %c1_254 = arith.constant 1 : index
    %c0_255 = arith.constant 0 : index
    %c0_256 = arith.constant 0 : index
    %169 = vector.load %arg3[%c2_252, %c0_253, %c1_254, %c0_255, %c0_256] : memref<4x3x3x128x128xbf16, #tpu.memory_space<vmem>>, vector<1x1x1x128x128xbf16>
    %170 = vector.shape_cast %169 : vector<1x1x1x128x128xbf16> to vector<128x128xbf16>
    %cst_257 = arith.constant dense<0.000000e+00> : vector<128x128xf32>
    %171 = tpu.matmul %167, %170, %cst_257 {dimension_numbers = #tpu.dot_dimension_numbers<[1], [0], [0], [1], [0, 0, 1, 1], [], []>} : vector<128x128xbf16>, vector<128x128xbf16>, vector<128x128xf32> -> vector<128x128xf32>
    %172 = arith.addf %168, %171 : vector<128x128xf32>
    %c0_258 = arith.constant 0 : index
    %c0_259 = arith.constant 0 : index
    %173 = vector.load %arg7[%c0_258, %c0_259] : memref<128x128xf32, #tpu.memory_space<vmem>>, vector<128x128xf32>
    tpu.vector_store %arg7[%c0_258, %c0_259], %172 {strides = array<i32>} : memref<128x128xf32, #tpu.memory_space<vmem>>, vector<128x128xf32>,
    %c2_260 = arith.constant 2 : index
    %c14 = arith.constant 14 : index
    %c0_261 = arith.constant 0 : index
    %174 = vector.load %arg6[%c2_260, %c14, %c0_261] : memref<24x32x128xbf16, #tpu.memory_space<vmem>>, vector<8x16x128xbf16>
    %175 = vector.shape_cast %174 : vector<8x16x128xbf16> to vector<128x128xbf16>
    %c0_262 = arith.constant 0 : index
    %c0_263 = arith.constant 0 : index
    %176 = vector.load %arg7[%c0_262, %c0_263] : memref<128x128xf32, #tpu.memory_space<vmem>>, vector<128x128xf32>
    %c2_264 = arith.constant 2 : index
    %c0_265 = arith.constant 0 : index
    %c2_266 = arith.constant 2 : index
    %c0_267 = arith.constant 0 : index
    %c0_268 = arith.constant 0 : index
    %177 = vector.load %arg3[%c2_264, %c0_265, %c2_266, %c0_267, %c0_268] : memref<4x3x3x128x128xbf16, #tpu.memory_space<vmem>>, vector<1x1x1x128x128xbf16>
    %178 = vector.shape_cast %177 : vector<1x1x1x128x128xbf16> to vector<128x128xbf16>
    %cst_269 = arith.constant dense<0.000000e+00> : vector<128x128xf32>
    %179 = tpu.matmul %175, %178, %cst_269 {dimension_numbers = #tpu.dot_dimension_numbers<[1], [0], [0], [1], [0, 0, 1, 1], [], []>} : vector<128x128xbf16>, vector<128x128xbf16>, vector<128x128xf32> -> vector<128x128xf32>
    %180 = arith.addf %176, %179 : vector<128x128xf32>
    %c0_270 = arith.constant 0 : index
    %c0_271 = arith.constant 0 : index
    %181 = vector.load %arg7[%c0_270, %c0_271] : memref<128x128xf32, #tpu.memory_space<vmem>>, vector<128x128xf32>
    tpu.vector_store %arg7[%c0_270, %c0_271], %180 {strides = array<i32>} : memref<128x128xf32, #tpu.memory_space<vmem>>, vector<128x128xf32>,
    %c8_272 = arith.constant 8 : index
    %c2_273 = arith.constant 2 : index
    %c0_274 = arith.constant 0 : index
    %182 = vector.load %arg6[%c8_272, %c2_273, %c0_274] : memref<24x32x128xbf16, #tpu.memory_space<vmem>>, vector<8x16x128xbf16>
    %183 = vector.shape_cast %182 : vector<8x16x128xbf16> to vector<128x128xbf16>
    %c0_275 = arith.constant 0 : index
    %c0_276 = arith.constant 0 : index
    %184 = vector.load %arg7[%c0_275, %c0_276] : memref<128x128xf32, #tpu.memory_space<vmem>>, vector<128x128xf32>
    %c2_277 = arith.constant 2 : index
    %c1_278 = arith.constant 1 : index
    %c0_279 = arith.constant 0 : index
    %c0_280 = arith.constant 0 : index
    %c0_281 = arith.constant 0 : index
    %185 = vector.load %arg3[%c2_277, %c1_278, %c0_279, %c0_280, %c0_281] : memref<4x3x3x128x128xbf16, #tpu.memory_space<vmem>>, vector<1x1x1x128x128xbf16>
    %186 = vector.shape_cast %185 : vector<1x1x1x128x128xbf16> to vector<128x128xbf16>
    %cst_282 = arith.constant dense<0.000000e+00> : vector<128x128xf32>
    %187 = tpu.matmul %183, %186, %cst_282 {dimension_numbers = #tpu.dot_dimension_numbers<[1], [0], [0], [1], [0, 0, 1, 1], [], []>} : vector<128x128xbf16>, vector<128x128xbf16>, vector<128x128xf32> -> vector<128x128xf32>
    %188 = arith.addf %184, %187 : vector<128x128xf32>
    %c0_283 = arith.constant 0 : index
    %c0_284 = arith.constant 0 : index
    %189 = vector.load %arg7[%c0_283, %c0_284] : memref<128x128xf32, #tpu.memory_space<vmem>>, vector<128x128xf32>
    tpu.vector_store %arg7[%c0_283, %c0_284], %188 {strides = array<i32>} : memref<128x128xf32, #tpu.memory_space<vmem>>, vector<128x128xf32>,
    %c8_285 = arith.constant 8 : index
    %c8_286 = arith.constant 8 : index
    %c0_287 = arith.constant 0 : index
    %190 = vector.load %arg6[%c8_285, %c8_286, %c0_287] : memref<24x32x128xbf16, #tpu.memory_space<vmem>>, vector<8x16x128xbf16>
    %191 = vector.shape_cast %190 : vector<8x16x128xbf16> to vector<128x128xbf16>
    %c0_288 = arith.constant 0 : index
    %c0_289 = arith.constant 0 : index
    %192 = vector.load %arg7[%c0_288, %c0_289] : memref<128x128xf32, #tpu.memory_space<vmem>>, vector<128x128xf32>
    %c2_290 = arith.constant 2 : index
    %c1_291 = arith.constant 1 : index
    %c1_292 = arith.constant 1 : index
    %c0_293 = arith.constant 0 : index
    %c0_294 = arith.constant 0 : index
    %193 = vector.load %arg3[%c2_290, %c1_291, %c1_292, %c0_293, %c0_294] : memref<4x3x3x128x128xbf16, #tpu.memory_space<vmem>>, vector<1x1x1x128x128xbf16>
    %194 = vector.shape_cast %193 : vector<1x1x1x128x128xbf16> to vector<128x128xbf16>
    %cst_295 = arith.constant dense<0.000000e+00> : vector<128x128xf32>
    %195 = tpu.matmul %191, %194, %cst_295 {dimension_numbers = #tpu.dot_dimension_numbers<[1], [0], [0], [1], [0, 0, 1, 1], [], []>} : vector<128x128xbf16>, vector<128x128xbf16>, vector<128x128xf32> -> vector<128x128xf32>
    %196 = arith.addf %192, %195 : vector<128x128xf32>
    %c0_296 = arith.constant 0 : index
    %c0_297 = arith.constant 0 : index
    %197 = vector.load %arg7[%c0_296, %c0_297] : memref<128x128xf32, #tpu.memory_space<vmem>>, vector<128x128xf32>
    tpu.vector_store %arg7[%c0_296, %c0_297], %196 {strides = array<i32>} : memref<128x128xf32, #tpu.memory_space<vmem>>, vector<128x128xf32>,
    %c8_298 = arith.constant 8 : index
    %c14_299 = arith.constant 14 : index
    %c0_300 = arith.constant 0 : index
    %198 = vector.load %arg6[%c8_298, %c14_299, %c0_300] : memref<24x32x128xbf16, #tpu.memory_space<vmem>>, vector<8x16x128xbf16>
    %199 = vector.shape_cast %198 : vector<8x16x128xbf16> to vector<128x128xbf16>
    %c0_301 = arith.constant 0 : index
    %c0_302 = arith.constant 0 : index
    %200 = vector.load %arg7[%c0_301, %c0_302] : memref<128x128xf32, #tpu.memory_space<vmem>>, vector<128x128xf32>
    %c2_303 = arith.constant 2 : index
    %c1_304 = arith.constant 1 : index
    %c2_305 = arith.constant 2 : index
    %c0_306 = arith.constant 0 : index
    %c0_307 = arith.constant 0 : index
    %201 = vector.load %arg3[%c2_303, %c1_304, %c2_305, %c0_306, %c0_307] : memref<4x3x3x128x128xbf16, #tpu.memory_space<vmem>>, vector<1x1x1x128x128xbf16>
    %202 = vector.shape_cast %201 : vector<1x1x1x128x128xbf16> to vector<128x128xbf16>
    %cst_308 = arith.constant dense<0.000000e+00> : vector<128x128xf32>
    %203 = tpu.matmul %199, %202, %cst_308 {dimension_numbers = #tpu.dot_dimension_numbers<[1], [0], [0], [1], [0, 0, 1, 1], [], []>} : vector<128x128xbf16>, vector<128x128xbf16>, vector<128x128xf32> -> vector<128x128xf32>
    %204 = arith.addf %200, %203 : vector<128x128xf32>
    %c0_309 = arith.constant 0 : index
    %c0_310 = arith.constant 0 : index
    %205 = vector.load %arg7[%c0_309, %c0_310] : memref<128x128xf32, #tpu.memory_space<vmem>>, vector<128x128xf32>
    tpu.vector_store %arg7[%c0_309, %c0_310], %204 {strides = array<i32>} : memref<128x128xf32, #tpu.memory_space<vmem>>, vector<128x128xf32>,
    %c14_311 = arith.constant 14 : index
    %c2_312 = arith.constant 2 : index
    %c0_313 = arith.constant 0 : index
    %206 = vector.load %arg6[%c14_311, %c2_312, %c0_313] : memref<24x32x128xbf16, #tpu.memory_space<vmem>>, vector<8x16x128xbf16>
    %207 = vector.shape_cast %206 : vector<8x16x128xbf16> to vector<128x128xbf16>
    %c0_314 = arith.constant 0 : index
    %c0_315 = arith.constant 0 : index
    %208 = vector.load %arg7[%c0_314, %c0_315] : memref<128x128xf32, #tpu.memory_space<vmem>>, vector<128x128xf32>
    %c2_316 = arith.constant 2 : index
    %c2_317 = arith.constant 2 : index
    %c0_318 = arith.constant 0 : index
    %c0_319 = arith.constant 0 : index
    %c0_320 = arith.constant 0 : index
    %209 = vector.load %arg3[%c2_316, %c2_317, %c0_318, %c0_319, %c0_320] : memref<4x3x3x128x128xbf16, #tpu.memory_space<vmem>>, vector<1x1x1x128x128xbf16>
    %210 = vector.shape_cast %209 : vector<1x1x1x128x128xbf16> to vector<128x128xbf16>
    %cst_321 = arith.constant dense<0.000000e+00> : vector<128x128xf32>
    %211 = tpu.matmul %207, %210, %cst_321 {dimension_numbers = #tpu.dot_dimension_numbers<[1], [0], [0], [1], [0, 0, 1, 1], [], []>} : vector<128x128xbf16>, vector<128x128xbf16>, vector<128x128xf32> -> vector<128x128xf32>
    %212 = arith.addf %208, %211 : vector<128x128xf32>
    %c0_322 = arith.constant 0 : index
    %c0_323 = arith.constant 0 : index
    %213 = vector.load %arg7[%c0_322, %c0_323] : memref<128x128xf32, #tpu.memory_space<vmem>>, vector<128x128xf32>
    tpu.vector_store %arg7[%c0_322, %c0_323], %212 {strides = array<i32>} : memref<128x128xf32, #tpu.memory_space<vmem>>, vector<128x128xf32>,
    %c14_324 = arith.constant 14 : index
    %c8_325 = arith.constant 8 : index
    %c0_326 = arith.constant 0 : index
    %214 = vector.load %arg6[%c14_324, %c8_325, %c0_326] : memref<24x32x128xbf16, #tpu.memory_space<vmem>>, vector<8x16x128xbf16>
    %215 = vector.shape_cast %214 : vector<8x16x128xbf16> to vector<128x128xbf16>
    %c0_327 = arith.constant 0 : index
    %c0_328 = arith.constant 0 : index
    %216 = vector.load %arg7[%c0_327, %c0_328] : memref<128x128xf32, #tpu.memory_space<vmem>>, vector<128x128xf32>
    %c2_329 = arith.constant 2 : index
    %c2_330 = arith.constant 2 : index
    %c1_331 = arith.constant 1 : index
    %c0_332 = arith.constant 0 : index
    %c0_333 = arith.constant 0 : index
    %217 = vector.load %arg3[%c2_329, %c2_330, %c1_331, %c0_332, %c0_333] : memref<4x3x3x128x128xbf16, #tpu.memory_space<vmem>>, vector<1x1x1x128x128xbf16>
    %218 = vector.shape_cast %217 : vector<1x1x1x128x128xbf16> to vector<128x128xbf16>
    %cst_334 = arith.constant dense<0.000000e+00> : vector<128x128xf32>
    %219 = tpu.matmul %215, %218, %cst_334 {dimension_numbers = #tpu.dot_dimension_numbers<[1], [0], [0], [1], [0, 0, 1, 1], [], []>} : vector<128x128xbf16>, vector<128x128xbf16>, vector<128x128xf32> -> vector<128x128xf32>
    %220 = arith.addf %216, %219 : vector<128x128xf32>
    %c0_335 = arith.constant 0 : index
    %c0_336 = arith.constant 0 : index
    %221 = vector.load %arg7[%c0_335, %c0_336] : memref<128x128xf32, #tpu.memory_space<vmem>>, vector<128x128xf32>
    tpu.vector_store %arg7[%c0_335, %c0_336], %220 {strides = array<i32>} : memref<128x128xf32, #tpu.memory_space<vmem>>, vector<128x128xf32>,
    %c14_337 = arith.constant 14 : index
    %c14_338 = arith.constant 14 : index
    %c0_339 = arith.constant 0 : index
    %222 = vector.load %arg6[%c14_337, %c14_338, %c0_339] : memref<24x32x128xbf16, #tpu.memory_space<vmem>>, vector<8x16x128xbf16>
    %223 = vector.shape_cast %222 : vector<8x16x128xbf16> to vector<128x128xbf16>
    %c0_340 = arith.constant 0 : index
    %c0_341 = arith.constant 0 : index
    %224 = vector.load %arg7[%c0_340, %c0_341] : memref<128x128xf32, #tpu.memory_space<vmem>>, vector<128x128xf32>
    %c2_342 = arith.constant 2 : index
    %c2_343 = arith.constant 2 : index
    %c2_344 = arith.constant 2 : index
    %c0_345 = arith.constant 0 : index
    %c0_346 = arith.constant 0 : index
    %225 = vector.load %arg3[%c2_342, %c2_343, %c2_344, %c0_345, %c0_346] : memref<4x3x3x128x128xbf16, #tpu.memory_space<vmem>>, vector<1x1x1x128x128xbf16>
    %226 = vector.shape_cast %225 : vector<1x1x1x128x128xbf16> to vector<128x128xbf16>
    %cst_347 = arith.constant dense<0.000000e+00> : vector<128x128xf32>
    %227 = tpu.matmul %223, %226, %cst_347 {dimension_numbers = #tpu.dot_dimension_numbers<[1], [0], [0], [1], [0, 0, 1, 1], [], []>} : vector<128x128xbf16>, vector<128x128xbf16>, vector<128x128xf32> -> vector<128x128xf32>
    %228 = arith.addf %224, %227 : vector<128x128xf32>
    %c0_348 = arith.constant 0 : index
    %c0_349 = arith.constant 0 : index
    %229 = vector.load %arg7[%c0_348, %c0_349] : memref<128x128xf32, #tpu.memory_space<vmem>>, vector<128x128xf32>
    tpu.vector_store %arg7[%c0_348, %c0_349], %228 {strides = array<i32>} : memref<128x128xf32, #tpu.memory_space<vmem>>, vector<128x128xf32>,
    %c0_350 = arith.constant 0 : index
    %c0_351 = arith.constant 0 : index
    %c0_352 = arith.constant 0 : index
    %230 = vector.load %arg6[%c0_350, %c0_351, %c0_352] : memref<24x32x128xbf16, #tpu.memory_space<vmem>>, vector<8x16x128xbf16>
    %231 = vector.shape_cast %230 : vector<8x16x128xbf16> to vector<128x128xbf16>
    %c0_353 = arith.constant 0 : index
    %c0_354 = arith.constant 0 : index
    %232 = vector.load %arg7[%c0_353, %c0_354] : memref<128x128xf32, #tpu.memory_space<vmem>>, vector<128x128xf32>
    %c3 = arith.constant 3 : index
    %c0_355 = arith.constant 0 : index
    %c0_356 = arith.constant 0 : index
    %c0_357 = arith.constant 0 : index
    %c0_358 = arith.constant 0 : index
    %233 = vector.load %arg3[%c3, %c0_355, %c0_356, %c0_357, %c0_358] : memref<4x3x3x128x128xbf16, #tpu.memory_space<vmem>>, vector<1x1x1x128x128xbf16>
    %234 = vector.shape_cast %233 : vector<1x1x1x128x128xbf16> to vector<128x128xbf16>
    %cst_359 = arith.constant dense<0.000000e+00> : vector<128x128xf32>
    %235 = tpu.matmul %231, %234, %cst_359 {dimension_numbers = #tpu.dot_dimension_numbers<[1], [0], [0], [1], [0, 0, 1, 1], [], []>} : vector<128x128xbf16>, vector<128x128xbf16>, vector<128x128xf32> -> vector<128x128xf32>
    %236 = arith.addf %232, %235 : vector<128x128xf32>
    %c0_360 = arith.constant 0 : index
    %c0_361 = arith.constant 0 : index
    %237 = vector.load %arg7[%c0_360, %c0_361] : memref<128x128xf32, #tpu.memory_space<vmem>>, vector<128x128xf32>
    tpu.vector_store %arg7[%c0_360, %c0_361], %236 {strides = array<i32>} : memref<128x128xf32, #tpu.memory_space<vmem>>, vector<128x128xf32>,
    %c0_362 = arith.constant 0 : index
    %c8_363 = arith.constant 8 : index
    %c0_364 = arith.constant 0 : index
    %238 = vector.load %arg6[%c0_362, %c8_363, %c0_364] : memref<24x32x128xbf16, #tpu.memory_space<vmem>>, vector<8x16x128xbf16>
    %239 = vector.shape_cast %238 : vector<8x16x128xbf16> to vector<128x128xbf16>
    %c0_365 = arith.constant 0 : index
    %c0_366 = arith.constant 0 : index
    %240 = vector.load %arg7[%c0_365, %c0_366] : memref<128x128xf32, #tpu.memory_space<vmem>>, vector<128x128xf32>
    %c3_367 = arith.constant 3 : index
    %c0_368 = arith.constant 0 : index
    %c1_369 = arith.constant 1 : index
    %c0_370 = arith.constant 0 : index
    %c0_371 = arith.constant 0 : index
    %241 = vector.load %arg3[%c3_367, %c0_368, %c1_369, %c0_370, %c0_371] : memref<4x3x3x128x128xbf16, #tpu.memory_space<vmem>>, vector<1x1x1x128x128xbf16>
    %242 = vector.shape_cast %241 : vector<1x1x1x128x128xbf16> to vector<128x128xbf16>
    %cst_372 = arith.constant dense<0.000000e+00> : vector<128x128xf32>
    %243 = tpu.matmul %239, %242, %cst_372 {dimension_numbers = #tpu.dot_dimension_numbers<[1], [0], [0], [1], [0, 0, 1, 1], [], []>} : vector<128x128xbf16>, vector<128x128xbf16>, vector<128x128xf32> -> vector<128x128xf32>
    %244 = arith.addf %240, %243 : vector<128x128xf32>
    %c0_373 = arith.constant 0 : index
    %c0_374 = arith.constant 0 : index
    %245 = vector.load %arg7[%c0_373, %c0_374] : memref<128x128xf32, #tpu.memory_space<vmem>>, vector<128x128xf32>
    tpu.vector_store %arg7[%c0_373, %c0_374], %244 {strides = array<i32>} : memref<128x128xf32, #tpu.memory_space<vmem>>, vector<128x128xf32>,
    %c0_375 = arith.constant 0 : index
    %c16 = arith.constant 16 : index
    %c0_376 = arith.constant 0 : index
    %246 = vector.load %arg6[%c0_375, %c16, %c0_376] : memref<24x32x128xbf16, #tpu.memory_space<vmem>>, vector<8x16x128xbf16>
    %247 = vector.shape_cast %246 : vector<8x16x128xbf16> to vector<128x128xbf16>
    %c0_377 = arith.constant 0 : index
    %c0_378 = arith.constant 0 : index
    %248 = vector.load %arg7[%c0_377, %c0_378] : memref<128x128xf32, #tpu.memory_space<vmem>>, vector<128x128xf32>
    %c3_379 = arith.constant 3 : index
    %c0_380 = arith.constant 0 : index
    %c2_381 = arith.constant 2 : index
    %c0_382 = arith.constant 0 : index
    %c0_383 = arith.constant 0 : index
    %249 = vector.load %arg3[%c3_379, %c0_380, %c2_381, %c0_382, %c0_383] : memref<4x3x3x128x128xbf16, #tpu.memory_space<vmem>>, vector<1x1x1x128x128xbf16>
    %250 = vector.shape_cast %249 : vector<1x1x1x128x128xbf16> to vector<128x128xbf16>
    %cst_384 = arith.constant dense<0.000000e+00> : vector<128x128xf32>
    %251 = tpu.matmul %247, %250, %cst_384 {dimension_numbers = #tpu.dot_dimension_numbers<[1], [0], [0], [1], [0, 0, 1, 1], [], []>} : vector<128x128xbf16>, vector<128x128xbf16>, vector<128x128xf32> -> vector<128x128xf32>
    %252 = arith.addf %248, %251 : vector<128x128xf32>
    %c0_385 = arith.constant 0 : index
    %c0_386 = arith.constant 0 : index
    %253 = vector.load %arg7[%c0_385, %c0_386] : memref<128x128xf32, #tpu.memory_space<vmem>>, vector<128x128xf32>
    tpu.vector_store %arg7[%c0_385, %c0_386], %252 {strides = array<i32>} : memref<128x128xf32, #tpu.memory_space<vmem>>, vector<128x128xf32>,
    %c8_387 = arith.constant 8 : index
    %c0_388 = arith.constant 0 : index
    %c0_389 = arith.constant 0 : index
    %254 = vector.load %arg6[%c8_387, %c0_388, %c0_389] : memref<24x32x128xbf16, #tpu.memory_space<vmem>>, vector<8x16x128xbf16>
    %255 = vector.shape_cast %254 : vector<8x16x128xbf16> to vector<128x128xbf16>
    %c0_390 = arith.constant 0 : index
    %c0_391 = arith.constant 0 : index
    %256 = vector.load %arg7[%c0_390, %c0_391] : memref<128x128xf32, #tpu.memory_space<vmem>>, vector<128x128xf32>
    %c3_392 = arith.constant 3 : index
    %c1_393 = arith.constant 1 : index
    %c0_394 = arith.constant 0 : index
    %c0_395 = arith.constant 0 : index
    %c0_396 = arith.constant 0 : index
    %257 = vector.load %arg3[%c3_392, %c1_393, %c0_394, %c0_395, %c0_396] : memref<4x3x3x128x128xbf16, #tpu.memory_space<vmem>>, vector<1x1x1x128x128xbf16>
    %258 = vector.shape_cast %257 : vector<1x1x1x128x128xbf16> to vector<128x128xbf16>
    %cst_397 = arith.constant dense<0.000000e+00> : vector<128x128xf32>
    %259 = tpu.matmul %255, %258, %cst_397 {dimension_numbers = #tpu.dot_dimension_numbers<[1], [0], [0], [1], [0, 0, 1, 1], [], []>} : vector<128x128xbf16>, vector<128x128xbf16>, vector<128x128xf32> -> vector<128x128xf32>
    %260 = arith.addf %256, %259 : vector<128x128xf32>
    %c0_398 = arith.constant 0 : index
    %c0_399 = arith.constant 0 : index
    %261 = vector.load %arg7[%c0_398, %c0_399] : memref<128x128xf32, #tpu.memory_space<vmem>>, vector<128x128xf32>
    tpu.vector_store %arg7[%c0_398, %c0_399], %260 {strides = array<i32>} : memref<128x128xf32, #tpu.memory_space<vmem>>, vector<128x128xf32>,
    %c8_400 = arith.constant 8 : index
    %c8_401 = arith.constant 8 : index
    %c0_402 = arith.constant 0 : index
    %262 = vector.load %arg6[%c8_400, %c8_401, %c0_402] : memref<24x32x128xbf16, #tpu.memory_space<vmem>>, vector<8x16x128xbf16>
    %263 = vector.shape_cast %262 : vector<8x16x128xbf16> to vector<128x128xbf16>
    %c0_403 = arith.constant 0 : index
    %c0_404 = arith.constant 0 : index
    %264 = vector.load %arg7[%c0_403, %c0_404] : memref<128x128xf32, #tpu.memory_space<vmem>>, vector<128x128xf32>
    %c3_405 = arith.constant 3 : index
    %c1_406 = arith.constant 1 : index
    %c1_407 = arith.constant 1 : index
    %c0_408 = arith.constant 0 : index
    %c0_409 = arith.constant 0 : index
    %265 = vector.load %arg3[%c3_405, %c1_406, %c1_407, %c0_408, %c0_409] : memref<4x3x3x128x128xbf16, #tpu.memory_space<vmem>>, vector<1x1x1x128x128xbf16>
    %266 = vector.shape_cast %265 : vector<1x1x1x128x128xbf16> to vector<128x128xbf16>
    %cst_410 = arith.constant dense<0.000000e+00> : vector<128x128xf32>
    %267 = tpu.matmul %263, %266, %cst_410 {dimension_numbers = #tpu.dot_dimension_numbers<[1], [0], [0], [1], [0, 0, 1, 1], [], []>} : vector<128x128xbf16>, vector<128x128xbf16>, vector<128x128xf32> -> vector<128x128xf32>
    %268 = arith.addf %264, %267 : vector<128x128xf32>
    %c0_411 = arith.constant 0 : index
    %c0_412 = arith.constant 0 : index
    %269 = vector.load %arg7[%c0_411, %c0_412] : memref<128x128xf32, #tpu.memory_space<vmem>>, vector<128x128xf32>
    tpu.vector_store %arg7[%c0_411, %c0_412], %268 {strides = array<i32>} : memref<128x128xf32, #tpu.memory_space<vmem>>, vector<128x128xf32>,
    %c8_413 = arith.constant 8 : index
    %c16_414 = arith.constant 16 : index
    %c0_415 = arith.constant 0 : index
    %270 = vector.load %arg6[%c8_413, %c16_414, %c0_415] : memref<24x32x128xbf16, #tpu.memory_space<vmem>>, vector<8x16x128xbf16>
    %271 = vector.shape_cast %270 : vector<8x16x128xbf16> to vector<128x128xbf16>
    %c0_416 = arith.constant 0 : index
    %c0_417 = arith.constant 0 : index
    %272 = vector.load %arg7[%c0_416, %c0_417] : memref<128x128xf32, #tpu.memory_space<vmem>>, vector<128x128xf32>
    %c3_418 = arith.constant 3 : index
    %c1_419 = arith.constant 1 : index
    %c2_420 = arith.constant 2 : index
    %c0_421 = arith.constant 0 : index
    %c0_422 = arith.constant 0 : index
    %273 = vector.load %arg3[%c3_418, %c1_419, %c2_420, %c0_421, %c0_422] : memref<4x3x3x128x128xbf16, #tpu.memory_space<vmem>>, vector<1x1x1x128x128xbf16>
    %274 = vector.shape_cast %273 : vector<1x1x1x128x128xbf16> to vector<128x128xbf16>
    %cst_423 = arith.constant dense<0.000000e+00> : vector<128x128xf32>
    %275 = tpu.matmul %271, %274, %cst_423 {dimension_numbers = #tpu.dot_dimension_numbers<[1], [0], [0], [1], [0, 0, 1, 1], [], []>} : vector<128x128xbf16>, vector<128x128xbf16>, vector<128x128xf32> -> vector<128x128xf32>
    %276 = arith.addf %272, %275 : vector<128x128xf32>
    %c0_424 = arith.constant 0 : index
    %c0_425 = arith.constant 0 : index
    %277 = vector.load %arg7[%c0_424, %c0_425] : memref<128x128xf32, #tpu.memory_space<vmem>>, vector<128x128xf32>
    tpu.vector_store %arg7[%c0_424, %c0_425], %276 {strides = array<i32>} : memref<128x128xf32, #tpu.memory_space<vmem>>, vector<128x128xf32>,
    %c16_426 = arith.constant 16 : index
    %c0_427 = arith.constant 0 : index
    %c0_428 = arith.constant 0 : index
    %278 = vector.load %arg6[%c16_426, %c0_427, %c0_428] : memref<24x32x128xbf16, #tpu.memory_space<vmem>>, vector<8x16x128xbf16>
    %279 = vector.shape_cast %278 : vector<8x16x128xbf16> to vector<128x128xbf16>
    %c0_429 = arith.constant 0 : index
    %c0_430 = arith.constant 0 : index
    %280 = vector.load %arg7[%c0_429, %c0_430] : memref<128x128xf32, #tpu.memory_space<vmem>>, vector<128x128xf32>
    %c3_431 = arith.constant 3 : index
    %c2_432 = arith.constant 2 : index
    %c0_433 = arith.constant 0 : index
    %c0_434 = arith.constant 0 : index
    %c0_435 = arith.constant 0 : index
    %281 = vector.load %arg3[%c3_431, %c2_432, %c0_433, %c0_434, %c0_435] : memref<4x3x3x128x128xbf16, #tpu.memory_space<vmem>>, vector<1x1x1x128x128xbf16>
    %282 = vector.shape_cast %281 : vector<1x1x1x128x128xbf16> to vector<128x128xbf16>
    %cst_436 = arith.constant dense<0.000000e+00> : vector<128x128xf32>
    %283 = tpu.matmul %279, %282, %cst_436 {dimension_numbers = #tpu.dot_dimension_numbers<[1], [0], [0], [1], [0, 0, 1, 1], [], []>} : vector<128x128xbf16>, vector<128x128xbf16>, vector<128x128xf32> -> vector<128x128xf32>
    %284 = arith.addf %280, %283 : vector<128x128xf32>
    %c0_437 = arith.constant 0 : index
    %c0_438 = arith.constant 0 : index
    %285 = vector.load %arg7[%c0_437, %c0_438] : memref<128x128xf32, #tpu.memory_space<vmem>>, vector<128x128xf32>
    tpu.vector_store %arg7[%c0_437, %c0_438], %284 {strides = array<i32>} : memref<128x128xf32, #tpu.memory_space<vmem>>, vector<128x128xf32>,
    %c16_439 = arith.constant 16 : index
    %c8_440 = arith.constant 8 : index
    %c0_441 = arith.constant 0 : index
    %286 = vector.load %arg6[%c16_439, %c8_440, %c0_441] : memref<24x32x128xbf16, #tpu.memory_space<vmem>>, vector<8x16x128xbf16>
    %287 = vector.shape_cast %286 : vector<8x16x128xbf16> to vector<128x128xbf16>
    %c0_442 = arith.constant 0 : index
    %c0_443 = arith.constant 0 : index
    %288 = vector.load %arg7[%c0_442, %c0_443] : memref<128x128xf32, #tpu.memory_space<vmem>>, vector<128x128xf32>
    %c3_444 = arith.constant 3 : index
    %c2_445 = arith.constant 2 : index
    %c1_446 = arith.constant 1 : index
    %c0_447 = arith.constant 0 : index
    %c0_448 = arith.constant 0 : index
    %289 = vector.load %arg3[%c3_444, %c2_445, %c1_446, %c0_447, %c0_448] : memref<4x3x3x128x128xbf16, #tpu.memory_space<vmem>>, vector<1x1x1x128x128xbf16>
    %290 = vector.shape_cast %289 : vector<1x1x1x128x128xbf16> to vector<128x128xbf16>
    %cst_449 = arith.constant dense<0.000000e+00> : vector<128x128xf32>
    %291 = tpu.matmul %287, %290, %cst_449 {dimension_numbers = #tpu.dot_dimension_numbers<[1], [0], [0], [1], [0, 0, 1, 1], [], []>} : vector<128x128xbf16>, vector<128x128xbf16>, vector<128x128xf32> -> vector<128x128xf32>
    %292 = arith.addf %288, %291 : vector<128x128xf32>
    %c0_450 = arith.constant 0 : index
    %c0_451 = arith.constant 0 : index
    %293 = vector.load %arg7[%c0_450, %c0_451] : memref<128x128xf32, #tpu.memory_space<vmem>>, vector<128x128xf32>
    tpu.vector_store %arg7[%c0_450, %c0_451], %292 {strides = array<i32>} : memref<128x128xf32, #tpu.memory_space<vmem>>, vector<128x128xf32>,
    %c16_452 = arith.constant 16 : index
    %c16_453 = arith.constant 16 : index
    %c0_454 = arith.constant 0 : index
    %294 = vector.load %arg6[%c16_452, %c16_453, %c0_454] : memref<24x32x128xbf16, #tpu.memory_space<vmem>>, vector<8x16x128xbf16>
    %295 = vector.shape_cast %294 : vector<8x16x128xbf16> to vector<128x128xbf16>
    %c0_455 = arith.constant 0 : index
    %c0_456 = arith.constant 0 : index
    %296 = vector.load %arg7[%c0_455, %c0_456] : memref<128x128xf32, #tpu.memory_space<vmem>>, vector<128x128xf32>
    %c3_457 = arith.constant 3 : index
    %c2_458 = arith.constant 2 : index
    %c2_459 = arith.constant 2 : index
    %c0_460 = arith.constant 0 : index
    %c0_461 = arith.constant 0 : index
    %297 = vector.load %arg3[%c3_457, %c2_458, %c2_459, %c0_460, %c0_461] : memref<4x3x3x128x128xbf16, #tpu.memory_space<vmem>>, vector<1x1x1x128x128xbf16>
    %298 = vector.shape_cast %297 : vector<1x1x1x128x128xbf16> to vector<128x128xbf16>
    %cst_462 = arith.constant dense<0.000000e+00> : vector<128x128xf32>
    %299 = tpu.matmul %295, %298, %cst_462 {dimension_numbers = #tpu.dot_dimension_numbers<[1], [0], [0], [1], [0, 0, 1, 1], [], []>} : vector<128x128xbf16>, vector<128x128xbf16>, vector<128x128xf32> -> vector<128x128xf32>
    %300 = arith.addf %296, %299 : vector<128x128xf32>
    %c0_463 = arith.constant 0 : index
    %c0_464 = arith.constant 0 : index
    %301 = vector.load %arg7[%c0_463, %c0_464] : memref<128x128xf32, #tpu.memory_space<vmem>>, vector<128x128xf32>
    tpu.vector_store %arg7[%c0_463, %c0_464], %300 {strides = array<i32>} : memref<128x128xf32, #tpu.memory_space<vmem>>, vector<128x128xf32>,
    %c0_465 = arith.constant 0 : index
    %c0_466 = arith.constant 0 : index
    %302 = vector.load %arg7[%c0_465, %c0_466] : memref<128x128xf32, #tpu.memory_space<vmem>>, vector<128x128xf32>
    %303 = vector.shape_cast %302 : vector<128x128xf32> to vector<8x16x128xf32>
    %c0_467 = arith.constant 0 : index
    %c0_468 = arith.constant 0 : index
    %c0_469 = arith.constant 0 : index
    %c0_470 = arith.constant 0 : index
    %304 = vector.load %arg5[%c0_467, %c0_468, %c0_469, %c0_470] : memref<1x8x16x128xf32, #tpu.memory_space<vmem>>, vector<1x8x16x128xf32>
    %305 = vector.shape_cast %304 : vector<1x8x16x128xf32> to vector<8x16x128xf32>
    %306 = vector.shape_cast %303 : vector<8x16x128xf32> to vector<1x8x16x128xf32>
    tpu.vector_store %arg5[%c0_467, %c0_468, %c0_469, %c0_470], %306 {strides = array<i32>} : memref<1x8x16x128xf32, #tpu.memory_space<vmem>>, vector<1x8x16x128xf32>,
    return
  }
  func.func @transform_1(%arg0: i32, %arg1: i32) -> (i32, i32, i32, i32, i32) {
    %c0_i32 = arith.constant 0 : i32
    %c0_i32_0 = arith.constant 0 : i32
    %c0_i32_1 = arith.constant 0 : i32
    %c0_i32_2 = arith.constant 0 : i32
    %c0_i32_3 = arith.constant 0 : i32
    %c0_i32_4 = arith.constant 0 : i32
    return %c0_i32, %c0_i32_0, %c0_i32_1, %c0_i32_2, %c0_i32_3 : i32, i32, i32, i32, i32
  }
  func.func @transform_2(%arg0: i32, %arg1: i32) -> (i32, i32) {
    %c0_i32 = arith.constant 0 : i32
    %c0_i32_0 = arith.constant 0 : i32
    %c0_i32_1 = arith.constant 0 : i32
    return %c0_i32, %c0_i32_0 : i32, i32
  }
  func.func @transform_3(%arg0: i32, %arg1: i32) -> (i32, i32, i32, i32) {
    %c0_i32 = arith.constant 0 : i32
    %c0_i32_0 = arith.constant 0 : i32
    %c0_i32_1 = arith.constant 0 : i32
    return %arg0, %arg1, %c0_i32, %c0_i32_0 : i32, i32, i32, i32
  }
}

</mosaic_0001>

<llo_original>
// kernel: classifier_module_forward.1
$region0: #{classifier_module_forward.1}
  #allocation0 [shape = 'u32[]', space=smem, size = 0x4, offset = 0x4, fixed_abs, tag = 'smem constant byte address 0x4 - core index']
  #allocation1 [shape = 'u32[72,128]{1,0:T(1,128)}', space=vmem, size = 0x9000, scoped, tag = 'internal scratch']
  #allocation2 [shape = 'bf16[24,32,128]{2,1,0:T(8,128)(2,1)}', space=vmem, size = 0x30000, scoped, tag = 'scratch operand']
  #allocation3 [shape = 'f32[128,128]{1,0:T(8,128)}', space=vmem, size = 0x10000, scoped, tag = 'scratch operand']
  #allocation4 [shape = 's32[1]{0}', space=sflag, size = 0x4, scoped, tag = 'scratch operand']
  #allocation5 [shape = 's32[]', space=sflag, size = 0x4, offset = 0, fixed_abs, tag = 'sflag constant byte address 0x0 - dummy sync flag']
  %s0 = inlined_call_operand.vmem [shape: bf16[2,32,32,128], index: 0, kind: input, shape index: {}]
  %s1 = inlined_call_operand.vmem [shape: bf16[4,3,3,128,128], index: 1, kind: input, shape index: {}]
  %s2 = inlined_call_operand.vmem [shape: f32[1,128], index: 2, kind: input, shape index: {}]
  %s3 = inlined_call_operand.vmem [shape: f32[2,16,16,128], index: 3, kind: output, shape index: {}]
  %s4 = sld [smem:[#allocation0]]
  $region60: #{classifier_module_forward.1} parent=0
    _
  %s6 = ssub.s32 1, %s4
  %s7 = scalar_select 0, %s6, %s4
  loop: start=0, step=1, limit=6
  $region2: #{classifier_module_forward.1} parent=0 // loop_pre_header
    _
  $region3: #{classifier_module_forward.1} parent=0 // loop_header
    %s9 = sphi 0, %s13
    %p10 = scmp.ge.s32.totalorder %s9, 6
    %s16 = sphi 0, %s28
    %s17 = sphi 0, %s24
    %s18 = sphi 0, %s16
    %s19 = sphi 0, %s17
    %s20 = sphi 0, %s18
    %s21 = sphi 0, %s19
    %s29 = sphi 0, %s29
    %s31 = sphi 0, %s29
    %s32 = sphi 0, %s31
    %s46 = sphi 0, %s32
    %s50 = sphi 0, %s50
    %s52 = sphi 0, %s50
    %s53 = sphi 0, %s52
    %s67 = sphi 0, %s53
    %s75 = sphi 0, %s77
    %s78 = sphi 0, %s75
    %s79 = sphi 0, %s78
    %s95 = sphi 0, %s79
  $region4: #{classifier_module_forward.1} parent=0 // loop_header_branch
    %12 = sbr.rel (%p10) target = $region8
  $region5: #{classifier_module_forward.1} parent=0 // loop_body
    %s14 = ssub.s32 %s9, 1
    %s15 = ssub.s32 %s9, 2
    %s22 = sadd.s32 1, %s17
    %p23 = scmp.ge.s32.totalorder %s22, 2
    %s24 = scalar_select %p23, 0, %s22
    %s25 = sadd.s32 1, %s16
    %s26 = scalar_select %p23, %s25, %s16
    %p27 = scmp.ge.s32.totalorder %s26, 2
    %s28 = scalar_select %p27, 0, %s26
    %s30 = sadd.s32 %s29, 1
    %p33 = scmp.eq.s32.totalorder %s9, 3
    %p34 = scmp.ne.s32.totalorder %s29, %s31
    %p35 = scmp.eq.s32.totalorder %s9, 0
    %p36 = por %p34, %p35
    %p37 = scmp.ne.s32.totalorder %s29, %s31
    %p38 = scmp.eq.s32.totalorder %s14, 3
    %p39 = por %p37, %p38
    %p40 = scmp.ne.s32.totalorder %s31, %s32
    %p41 = scmp.eq.s32.totalorder %s14, 0
    %p42 = por %p40, %p41
    %p43 = scmp.ne.s32.totalorder %s31, %s32
    %p44 = scmp.eq.s32.totalorder %s15, 3
    %p45 = por %p43, %p44
    %p47 = scmp.ne.s32.totalorder %s32, %s46
    %p48 = scmp.eq.s32.totalorder %s15, 0
    %p49 = por %p47, %p48
    %s51 = sadd.s32 %s50, 1
    %p54 = scmp.eq.s32.totalorder %s9, 3
    %p55 = scmp.ne.s32.totalorder %s50, %s52
    %p56 = scmp.eq.s32.totalorder %s9, 0
    %p57 = por %p55, %p56
    %p58 = scmp.ne.s32.totalorder %s50, %s52
    %p59 = scmp.eq.s32.totalorder %s14, 3
    %p60 = por %p58, %p59
    %p61 = scmp.ne.s32.totalorder %s52, %s53
    %p62 = scmp.eq.s32.totalorder %s14, 0
    %p63 = por %p61, %p62
    %p64 = scmp.ne.s32.totalorder %s52, %s53
    %p65 = scmp.eq.s32.totalorder %s15, 3
    %p66 = por %p64, %p65
    %p68 = scmp.ne.s32.totalorder %s53, %s67
    %p69 = scmp.eq.s32.totalorder %s15, 0
    %p70 = por %p68, %p69
    %s71 = ssub.s32 %s16, %s28
    %s72 = ssub.s32 %s17, %s24
    %s73 = sor.u32 %s71, %s72
    %p74 = scmp.eq.s32.totalorder %s73, 0
    %s76 = sadd.s32 %s75, 1
    %s77 = scalar_select %p74, %s75, %s76
    %p80 = pneg %p74
    %p81 = scmp.eq.s32.totalorder %s9, 3
    %p82 = por %p80, %p81
    %p83 = scmp.ne.s32.totalorder %s75, %s78
    %p84 = scmp.eq.s32.totalorder %s9, 0
    %p85 = por %p83, %p84
    %p86 = scmp.ne.s32.totalorder %s75, %s78
    %p87 = scmp.eq.s32.totalorder %s14, 3
    %p88 = por %p86, %p87
    %p89 = scmp.ne.s32.totalorder %s78, %s79
    %p90 = scmp.eq.s32.totalorder %s14, 0
    %p91 = por %p89, %p90
    %p92 = scmp.ne.s32.totalorder %s78, %s79
    %p93 = scmp.eq.s32.totalorder %s15, 3
    %p94 = por %p92, %p93
    %p96 = scmp.ne.s32.totalorder %s79, %s95
    %p97 = scmp.eq.s32.totalorder %s15, 0
    %p98 = por %p96, %p97
    %p99 = scmp.le.s32.totalorder 1, %s9
    %p100 = scmp.lt.s32.totalorder %s9, 5
    %p101 = pnand %p99, %p100
    %p102 = pneg %p101
    // Predicated region
    $region9: #{classifier_module_forward.1} parent=5 // pred_check
      _
    $region10: #{classifier_module_forward.1} parent=5 // pred_check_branch
      %104 = sbr.rel (%p101) target = $region12
    $region11: #{classifier_module_forward.1} parent=5 // pred_region
      %s105 = ssub.s32 %s9, 1
      // Predicated region
      $region13: #{classifier_module_forward.1} parent=11 // pred_check
        %p106 = pneg %p42
      $region14: #{classifier_module_forward.1} parent=11 // pred_check_branch
        %108 = sbr.rel (%p106) target = $region16
      $region15: #{classifier_module_forward.1} parent=11 // pred_region
        _
      $region16: #{classifier_module_forward.1} parent=11 // pred_fallthru
        _
      // Predicated region
      $region17: #{classifier_module_forward.1} parent=11 // pred_check
        %p109 = pneg %p63
      $region18: #{classifier_module_forward.1} parent=11 // pred_check_branch
        %111 = sbr.rel (%p109) target = $region20
      $region19: #{classifier_module_forward.1} parent=11 // pred_region
        _
      $region20: #{classifier_module_forward.1} parent=11 // pred_fallthru
        _
    $region12: #{classifier_module_forward.1} parent=5 // pred_fallthru
      _
    %p112 = scmp.lt.s32.totalorder %s9, 4
    // Predicated region
    $region21: #{classifier_module_forward.1} parent=5 // pred_check
      %p113 = pneg %p112
    $region22: #{classifier_module_forward.1} parent=5 // pred_check_branch
      %115 = sbr.rel (%p113) target = $region24
    $region23: #{classifier_module_forward.1} parent=5 // pred_region
      _
    $region24: #{classifier_module_forward.1} parent=5 // pred_fallthru
      _
    %p116 = scmp.le.s32.totalorder 1, %s9
    %p117 = scmp.lt.s32.totalorder %s9, 5
    %p118 = pnand %p116, %p117
    %p119 = pneg %p118
    // Predicated region
    $region25: #{classifier_module_forward.1} parent=5 // pred_check
      _
    $region26: #{classifier_module_forward.1} parent=5 // pred_check_branch
      %121 = sbr.rel (%p118) target = $region28
    $region27: #{classifier_module_forward.1} parent=5 // pred_region
      %s122 = ssub.s32 %s9, 1
      %p123 = pneg %p42
      %p124 = pneg %p39
      %p125 = pneg %p63
      %p126 = pneg %p60
      %p127 = pneg %p91
      %p128 = pneg %p88
      %s129 = smul.u32 8, %s19
      %p130 = scmp.lt.s32.totalorder %s18, 1
      %s131 = scalar_select %p130, %s18, 1
      %p132 = scmp.lt.s32.totalorder %s129, 15
      %s133 = scalar_select %p132, %s129, 15
      %s134 = smul.addr %s133, 2
      %s135 = smul.addr %s131, 32
      %s136 = sadd.s32 %s134, %s135
      %s137 = smul.addr %s136, 8
      %s138 = scalar_lea.vmem %s3, %s137
      %s139 = smul.u32 8, %s19
      %p140 = scmp.lt.s32.totalorder %s18, 1
      %s141 = scalar_select %p140, %s18, 1
      %p142 = scmp.lt.s32.totalorder %s139, 15
      %s143 = scalar_select %p142, %s139, 15
      %s144 = smul.addr %s143, 2
      %s145 = smul.addr %s141, 32
      %s146 = sadd.s32 %s144, %s145
      %s147 = smul.addr %s146, 8
      %s148 = scalar_lea.vmem %s3, %s147
      %s149 = smul.u32 8, %s19
      %s150 = smul.u32 %s19, 8
      %s151 = smul.u32 %s150, 4
      %s152 = smul.u32 %s18, 128
      %s153 = sadd.s32 %s151, %s152
      %s154 = smul.addr %s153, 4
      %s155 = scalar_lea.vmem %s0, %s154
      // Predicated region
      $region29: #{classifier_module_forward.1} parent=27 // pred_check
        _
      $region30: #{classifier_module_forward.1} parent=27 // pred_check_branch
        %157 = sbr.rel (0) target = $region32
      $region31: #{classifier_module_forward.1} parent=27 // pred_region
        loop: start=0, step=1, limit=1
        $region33: #{classifier_module_forward.1} parent=31 // loop_pre_header
          _
        $region34: #{classifier_module_forward.1} parent=31 // loop_header
          %s159 = sphi 0, %s163
          %p160 = scmp.ge.s32.totalorder %s159, 1
          %s164 = sphi %s155, %s155
          %s165 = sphi [#allocation2], [#allocation2]
        $region35: #{classifier_module_forward.1} parent=31 // loop_header_branch
          %162 = sbr.rel (%p160) target = $region39
        $region36: #{classifier_module_forward.1} parent=31 // loop_body
          %v166 = vld [vmem:[%s164] sm:$0xff]
          %167 = vst [vmem:[%s165] sm:$0xff] %v166
          %v168 = vld [vmem:[%s164 + $0x8] sm:$0xff]
          %169 = vst [vmem:[%s165 + $0x8] sm:$0xff] %v168
          %v170 = vld [vmem:[%s164 + $0x10] sm:$0xff]
          %171 = vst [vmem:[%s165 + $0x10] sm:$0xff] %v170
          %v172 = vld [vmem:[%s164 + $0x18] sm:$0xff]
          %173 = vst [vmem:[%s165 + $0x18] sm:$0xff] %v172
          %v174 = vld [vmem:[%s164 + $0x20] sm:$0xff]
          %175 = vst [vmem:[%s165 + $0x20] sm:$0xff] %v174
          %v176 = vld [vmem:[%s164 + $0x28] sm:$0xff]
          %177 = vst [vmem:[%s165 + $0x28] sm:$0xff] %v176
          %v178 = vld [vmem:[%s164 + $0x30] sm:$0xff]
          %179 = vst [vmem:[%s165 + $0x30] sm:$0xff] %v178
          %v180 = vld [vmem:[%s164 + $0x38] sm:$0xff]
          %181 = vst [vmem:[%s165 + $0x38] sm:$0xff] %v180
          %v182 = vld [vmem:[%s164 + $0x40] sm:$0xff]
          %183 = vst [vmem:[%s165 + $0x40] sm:$0xff] %v182
          %v184 = vld [vmem:[%s164 + $0x48] sm:$0xff]
          %185 = vst [vmem:[%s165 + $0x48] sm:$0xff] %v184
          %v186 = vld [vmem:[%s164 + $0x50] sm:$0xff]
          %187 = vst [vmem:[%s165 + $0x50] sm:$0xff] %v186
          %v188 = vld [vmem:[%s164 + $0x58] sm:$0xff]
          %189 = vst [vmem:[%s165 + $0x58] sm:$0xff] %v188
          %v190 = vld [vmem:[%s164 + $0x60] sm:$0xff]
          %191 = vst [vmem:[%s165 + $0x60] sm:$0xff] %v190
          %v192 = vld [vmem:[%s164 + $0x68] sm:$0xff]
          %193 = vst [vmem:[%s165 + $0x68] sm:$0xff] %v192
          %v194 = vld [vmem:[%s164 + $0x70] sm:$0xff]
          %195 = vst [vmem:[%s165 + $0x70] sm:$0xff] %v194
          %v196 = vld [vmem:[%s164 + $0x78] sm:$0xff]
          %197 = vst [vmem:[%s165 + $0x78] sm:$0xff] %v196
          %v198 = vld [vmem:[%s164 + $0x80] sm:$0xff]
          %199 = vst [vmem:[%s165 + $0x80] sm:$0xff] %v198
          %v200 = vld [vmem:[%s164 + $0x88] sm:$0xff]
          %201 = vst [vmem:[%s165 + $0x88] sm:$0xff] %v200
          %v202 = vld [vmem:[%s164 + $0x90] sm:$0xff]
          %203 = vst [vmem:[%s165 + $0x90] sm:$0xff] %v202
          %v204 = vld [vmem:[%s164 + $0x98] sm:$0xff]
          %205 = vst [vmem:[%s165 + $0x98] sm:$0xff] %v204
          %v206 = vld [vmem:[%s164 + $0xa0] sm:$0xff]
          %207 = vst [vmem:[%s165 + $0xa0] sm:$0xff] %v206
          %v208 = vld [vmem:[%s164 + $0xa8] sm:$0xff]
          %209 = vst [vmem:[%s165 + $0xa8] sm:$0xff] %v208
          %v210 = vld [vmem:[%s164 + $0xb0] sm:$0xff]
          %211 = vst [vmem:[%s165 + $0xb0] sm:$0xff] %v210
          %v212 = vld [vmem:[%s164 + $0xb8] sm:$0xff]
          %213 = vst [vmem:[%s165 + $0xb8] sm:$0xff] %v212
          %v214 = vld [vmem:[%s164 + $0xc0] sm:$0xff]
          %215 = vst [vmem:[%s165 + $0xc0] sm:$0xff] %v214
          %v216 = vld [vmem:[%s164 + $0xc8] sm:$0xff]
          %217 = vst [vmem:[%s165 + $0xc8] sm:$0xff] %v216
          %v218 = vld [vmem:[%s164 + $0xd0] sm:$0xff]
          %219 = vst [vmem:[%s165 + $0xd0] sm:$0xff] %v218
          %v220 = vld [vmem:[%s164 + $0xd8] sm:$0xff]
          %221 = vst [vmem:[%s165 + $0xd8] sm:$0xff] %v220
          %v222 = vld [vmem:[%s164 + $0xe0] sm:$0xff]
          %223 = vst [vmem:[%s165 + $0xe0] sm:$0xff] %v222
          %v224 = vld [vmem:[%s164 + $0xe8] sm:$0xff]
          %225 = vst [vmem:[%s165 + $0xe8] sm:$0xff] %v224
          %v226 = vld [vmem:[%s164 + $0xf0] sm:$0xff]
          %227 = vst [vmem:[%s165 + $0xf0] sm:$0xff] %v226
          %v228 = vld [vmem:[%s164 + $0xf8] sm:$0xff]
          %229 = vst [vmem:[%s165 + $0xf8] sm:$0xff] %v228
          %v230 = vld [vmem:[%s164 + $0x100] sm:$0xff]
          %231 = vst [vmem:[%s165 + $0x100] sm:$0xff] %v230
          %v232 = vld [vmem:[%s164 + $0x108] sm:$0xff]
          %233 = vst [vmem:[%s165 + $0x108] sm:$0xff] %v232
          %v234 = vld [vmem:[%s164 + $0x110] sm:$0xff]
          %235 = vst [vmem:[%s165 + $0x110] sm:$0xff] %v234
          %v236 = vld [vmem:[%s164 + $0x118] sm:$0xff]
          %237 = vst [vmem:[%s165 + $0x118] sm:$0xff] %v236
          %v238 = vld [vmem:[%s164 + $0x120] sm:$0xff]
          %239 = vst [vmem:[%s165 + $0x120] sm:$0xff] %v238
          %v240 = vld [vmem:[%s164 + $0x128] sm:$0xff]
          %241 = vst [vmem:[%s165 + $0x128] sm:$0xff] %v240
          %v242 = vld [vmem:[%s164 + $0x130] sm:$0xff]
          %243 = vst [vmem:[%s165 + $0x130] sm:$0xff] %v242
          %v244 = vld [vmem:[%s164 + $0x138] sm:$0xff]
          %245 = vst [vmem:[%s165 + $0x138] sm:$0xff] %v244
          %v246 = vld [vmem:[%s164 + $0x140] sm:$0xff]
          %247 = vst [vmem:[%s165 + $0x140] sm:$0xff] %v246
          %v248 = vld [vmem:[%s164 + $0x148] sm:$0xff]
          %249 = vst [vmem:[%s165 + $0x148] sm:$0xff] %v248
          %v250 = vld [vmem:[%s164 + $0x150] sm:$0xff]
          %251 = vst [vmem:[%s165 + $0x150] sm:$0xff] %v250
          %v252 = vld [vmem:[%s164 + $0x158] sm:$0xff]
          %253 = vst [vmem:[%s165 + $0x158] sm:$0xff] %v252
          %v254 = vld [vmem:[%s164 + $0x160] sm:$0xff]
          %255 = vst [vmem:[%s165 + $0x160] sm:$0xff] %v254
          %v256 = vld [vmem:[%s164 + $0x168] sm:$0xff]
          %257 = vst [vmem:[%s165 + $0x168] sm:$0xff] %v256
          %v258 = vld [vmem:[%s164 + $0x170] sm:$0xff]
          %259 = vst [vmem:[%s165 + $0x170] sm:$0xff] %v258
          %v260 = vld [vmem:[%s164 + $0x178] sm:$0xff]
          %261 = vst [vmem:[%s165 + $0x178] sm:$0xff] %v260
        $region37: #{classifier_module_forward.1} parent=31 // loop_footer
          %s163 = sadd.s32 1, %s159
        $region38: #{classifier_module_forward.1} parent=31 // loop_footer_branch
          %158 = sbr.rel target = $region34
        $region39: #{classifier_module_forward.1} parent=31 // loop_exit
          _
      $region32: #{classifier_module_forward.1} parent=27 // pred_fallthru
        _
      // Predicated region
      $region40: #{classifier_module_forward.1} parent=27 // pred_check
        _
      $region41: #{classifier_module_forward.1} parent=27 // pred_check_branch
        %263 = sbr.rel target = $region43
      $region42: #{classifier_module_forward.1} parent=27 // pred_region
        _
      $region43: #{classifier_module_forward.1} parent=27 // pred_fallthru
        _
      // Predicated region
      $region44: #{classifier_module_forward.1} parent=27 // pred_check
        _
      $region45: #{classifier_module_forward.1} parent=27 // pred_check_branch
        %266 = sbr.rel (0) target = $region47
      $region46: #{classifier_module_forward.1} parent=27 // pred_region
        %267 = vsyncadd [#allocation4], 6144
      $region47: #{classifier_module_forward.1} parent=27 // pred_fallthru
        _
      %v268 = vld [vmem:[%s2] sm:$0x1]
      %v270 = vperm.slane %v268, 0
      %272 = vst [vmem:[#allocation3] sm:$0xff] %v270
      %273 = vst [vmem:[#allocation3 + $0x8] sm:$0xff] %v270
      %274 = vst [vmem:[#allocation3 + $0x10] sm:$0xff] %v270
      %275 = vst [vmem:[#allocation3 + $0x18] sm:$0xff] %v270
      %276 = vst [vmem:[#allocation3 + $0x20] sm:$0xff] %v270
      %277 = vst [vmem:[#allocation3 + $0x28] sm:$0xff] %v270
      %278 = vst [vmem:[#allocation3 + $0x30] sm:$0xff] %v270
      %279 = vst [vmem:[#allocation3 + $0x38] sm:$0xff] %v270
      %280 = vst [vmem:[#allocation3 + $0x40] sm:$0xff] %v270
      %281 = vst [vmem:[#allocation3 + $0x48] sm:$0xff] %v270
      %282 = vst [vmem:[#allocation3 + $0x50] sm:$0xff] %v270
      %283 = vst [vmem:[#allocation3 + $0x58] sm:$0xff] %v270
      %284 = vst [vmem:[#allocation3 + $0x60] sm:$0xff] %v270
      %285 = vst [vmem:[#allocation3 + $0x68] sm:$0xff] %v270
      %286 = vst [vmem:[#allocation3 + $0x70] sm:$0xff] %v270
      %287 = vst [vmem:[#allocation3 + $0x78] sm:$0xff] %v270
      %s288 = smul.u32 4, 24
      %s289 = smul.u32 %s288, 4
      %s290 = smul.u32 %s289, 1
      %s291 = sshll.u32 %s290, 4
      %292 = dma.done [#allocation4], %s291
      %s293 = scalar_lea.vmem [#allocation2], 96
      %v294 = vld [vmem:[%s293] sm:$0x8]
      %v295 = vld [vmem:[%s293 + $0x4] sm:$0xf]
      %v296 = vld [vmem:[%s293 + $0x8] sm:$0x7]
      %v297 = vld [vmem:[%s293 + $0x10] sm:$0x8]
      %v298 = vld [vmem:[%s293 + $0x14] sm:$0xf]
      %v299 = vld [vmem:[%s293 + $0x18] sm:$0x7]
      %v300 = vld [vmem:[%s293 + $0x20] sm:$0x8]
      %v301 = vld [vmem:[%s293 + $0x24] sm:$0xf]
      %v302 = vld [vmem:[%s293 + $0x28] sm:$0x7]
      %v303 = vld [vmem:[%s293 + $0x30] sm:$0x8]
      %v304 = vld [vmem:[%s293 + $0x34] sm:$0xf]
      %v305 = vld [vmem:[%s293 + $0x38] sm:$0x7]
      %v306 = vld [vmem:[%s293 + $0x40] sm:$0x8]
      %v307 = vld [vmem:[%s293 + $0x44] sm:$0xf]
      %v308 = vld [vmem:[%s293 + $0x48] sm:$0x7]
      %v309 = vld [vmem:[%s293 + $0x50] sm:$0x8]
      %v310 = vld [vmem:[%s293 + $0x54] sm:$0xf]
      %v311 = vld [vmem:[%s293 + $0x58] sm:$0x7]
      %v312 = vld [vmem:[%s293 + $0x60] sm:$0x8]
      %v313 = vld [vmem:[%s293 + $0x64] sm:$0xf]
      %v314 = vld [vmem:[%s293 + $0x68] sm:$0x7]
      %v315 = vld [vmem:[%s293 + $0x70] sm:$0x8]
      %v316 = vld [vmem:[%s293 + $0x74] sm:$0xf]
      %v317 = vld [vmem:[%s293 + $0x78] sm:$0x7]
      %vm342 = vcmask 1040384
      %vm343 = vcmask 1044484
      %vm344 = vmor %vm342, %vm343
      %v345 = vrot.slane %v294, 7
      %v346 = vrot.slane %v345, 4
      %v347 = vrot.slane %v295, 7
      %v348 = vsel %vm344, %v346, %v347
      %v349 = vrot.slane %v347, 4
      %v350 = vrot.slane %v296, 7
      %v351 = vsel %vm344, %v349, %v350
      %v352 = vrot.slane %v297, 7
      %v353 = vrot.slane %v352, 4
      %v354 = vrot.slane %v298, 7
      %v355 = vsel %vm344, %v353, %v354
      %v356 = vrot.slane %v354, 4
      %v357 = vrot.slane %v299, 7
      %v358 = vsel %vm344, %v356, %v357
      %v359 = vrot.slane %v300, 7
      %v360 = vrot.slane %v359, 4
      %v361 = vrot.slane %v301, 7
      %v362 = vsel %vm344, %v360, %v361
      %v363 = vrot.slane %v361, 4
      %v364 = vrot.slane %v302, 7
      %v365 = vsel %vm344, %v363, %v364
      %v366 = vrot.slane %v303, 7
      %v367 = vrot.slane %v366, 4
      %v368 = vrot.slane %v304, 7
      %v369 = vsel %vm344, %v367, %v368
      %v370 = vrot.slane %v368, 4
      %v371 = vrot.slane %v305, 7
      %v372 = vsel %vm344, %v370, %v371
      %v373 = vrot.slane %v306, 7
      %v374 = vrot.slane %v373, 4
      %v375 = vrot.slane %v307, 7
      %v376 = vsel %vm344, %v374, %v375
      %v377 = vrot.slane %v375, 4
      %v378 = vrot.slane %v308, 7
      %v379 = vsel %vm344, %v377, %v378
      %v380 = vrot.slane %v309, 7
      %v381 = vrot.slane %v380, 4
      %v382 = vrot.slane %v310, 7
      %v383 = vsel %vm344, %v381, %v382
      %v384 = vrot.slane %v382, 4
      %v385 = vrot.slane %v311, 7
      %v386 = vsel %vm344, %v384, %v385
      %v387 = vrot.slane %v312, 7
      %v388 = vrot.slane %v387, 4
      %v389 = vrot.slane %v313, 7
      %v390 = vsel %vm344, %v388, %v389
      %v391 = vrot.slane %v389, 4
      %v392 = vrot.slane %v314, 7
      %v393 = vsel %vm344, %v391, %v392
      %v394 = vrot.slane %v315, 7
      %v395 = vrot.slane %v394, 4
      %v396 = vrot.slane %v316, 7
      %v397 = vsel %vm344, %v395, %v396
      %v398 = vrot.slane %v396, 4
      %v399 = vrot.slane %v317, 7
      %v400 = vsel %vm344, %v398, %v399
      %v401 = vld [vmem:[#allocation3] sm:$0xff]
      %v402 = vld [vmem:[#allocation3 + $0x8] sm:$0xff]
      %v403 = vld [vmem:[#allocation3 + $0x10] sm:$0xff]
      %v404 = vld [vmem:[#allocation3 + $0x18] sm:$0xff]
      %v405 = vld [vmem:[#allocation3 + $0x20] sm:$0xff]
      %v406 = vld [vmem:[#allocation3 + $0x28] sm:$0xff]
      %v407 = vld [vmem:[#allocation3 + $0x30] sm:$0xff]
      %v408 = vld [vmem:[#allocation3 + $0x38] sm:$0xff]
      %v409 = vld [vmem:[#allocation3 + $0x40] sm:$0xff]
      %v410 = vld [vmem:[#allocation3 + $0x48] sm:$0xff]
      %v411 = vld [vmem:[#allocation3 + $0x50] sm:$0xff]
      %v412 = vld [vmem:[#allocation3 + $0x58] sm:$0xff]
      %v413 = vld [vmem:[#allocation3 + $0x60] sm:$0xff]
      %v414 = vld [vmem:[#allocation3 + $0x68] sm:$0xff]
      %v415 = vld [vmem:[#allocation3 + $0x70] sm:$0xff]
      %v416 = vld [vmem:[#allocation3 + $0x78] sm:$0xff]
      %v417 = vld [vmem:[%s1] sm:$0xf]
      %v418 = vld [vmem:[%s1 + $0x4] sm:$0xf]
      %v419 = vld [vmem:[%s1 + $0x8] sm:$0xf]
      %v420 = vld [vmem:[%s1 + $0xc] sm:$0xf]
      %v421 = vld [vmem:[%s1 + $0x10] sm:$0xf]
      %v422 = vld [vmem:[%s1 + $0x14] sm:$0xf]
      %v423 = vld [vmem:[%s1 + $0x18] sm:$0xf]
      %v424 = vld [vmem:[%s1 + $0x1c] sm:$0xf]
      %v425 = vld [vmem:[%s1 + $0x20] sm:$0xf]
      %v426 = vld [vmem:[%s1 + $0x24] sm:$0xf]
      %v427 = vld [vmem:[%s1 + $0x28] sm:$0xf]
      %v428 = vld [vmem:[%s1 + $0x2c] sm:$0xf]
      %v429 = vld [vmem:[%s1 + $0x30] sm:$0xf]
      %v430 = vld [vmem:[%s1 + $0x34] sm:$0xf]
      %v431 = vld [vmem:[%s1 + $0x38] sm:$0xf]
      %v432 = vld [vmem:[%s1 + $0x3c] sm:$0xf]
      %v433 = vunpack.c.l.b16 %v348
      %v434 = vunpack.c.l.b16 %v351
      %v435 = vunpack.c.l.b16 %v355
      %v436 = vunpack.c.l.b16 %v358
      %v437 = vunpack.c.l.b16 %v362
      %v438 = vunpack.c.l.b16 %v365
      %v439 = vunpack.c.l.b16 %v369
      %v440 = vunpack.c.l.b16 %v372
      %v441 = vunpack.c.l.b16 %v376
      %v442 = vunpack.c.l.b16 %v379
      %v443 = vunpack.c.l.b16 %v383
      %v444 = vunpack.c.l.b16 %v386
      %v445 = vunpack.c.l.b16 %v390
      %v446 = vunpack.c.l.b16 %v393
      %v447 = vunpack.c.l.b16 %v397
      %v448 = vunpack.c.l.b16 %v400
      %v449 = vpack.c.b16 %v434, %v433
      %v450 = vpack.c.b16 %v436, %v435
      %v451 = vpack.c.b16 %v438, %v437
      %v452 = vpack.c.b16 %v440, %v439
      %v453 = vpack.c.b16 %v442, %v441
      %v454 = vpack.c.b16 %v444, %v443
      %v455 = vpack.c.b16 %v446, %v445
      %v456 = vpack.c.b16 %v448, %v447
      %v481 = vunpack.c.l.b16 %v417
      %v482 = vunpack.c.l.b16 %v418
      %v483 = vunpack.c.l.b16 %v419
      %v484 = vunpack.c.l.b16 %v420
      %v485 = vunpack.c.l.b16 %v421
      %v486 = vunpack.c.l.b16 %v422
      %v487 = vunpack.c.l.b16 %v423
      %v488 = vunpack.c.l.b16 %v424
      %v489 = vunpack.c.l.b16 %v425
      %v490 = vunpack.c.l.b16 %v426
      %v491 = vunpack.c.l.b16 %v427
      %v492 = vunpack.c.l.b16 %v428
      %v493 = vunpack.c.l.b16 %v429
      %v494 = vunpack.c.l.b16 %v430
      %v495 = vunpack.c.l.b16 %v431
      %v496 = vunpack.c.l.b16 %v432
      %v497 = vpack.c.b16 %v482, %v481
      %v498 = vpack.c.b16 %v484, %v483
      %v499 = vpack.c.b16 %v486, %v485
      %v500 = vpack.c.b16 %v488, %v487
      %v501 = vpack.c.b16 %v490, %v489
      %v502 = vpack.c.b16 %v492, %v491
      %v503 = vpack.c.b16 %v494, %v493
      %v504 = vpack.c.b16 %v496, %v495
      %513 = vmatpush.bf16.msra.mxu0 %v504
      %514 = vmatpush.bf16.msra.mxu0 %v503
      %515 = vmatpush.bf16.msra.mxu0 %v502
      %516 = vmatpush.bf16.msra.mxu0 %v501
      %517 = vmatpush.bf16.msra.mxu0 %v500
      %518 = vmatpush.bf16.msra.mxu0 %v499
      %519 = vmatpush.bf16.msra.mxu0 %v498
      %520 = vmatpush.bf16.msra.mxu0 %v497
      %521 = vmatmul.bf16.gmra.mxu0 %v449
      %v522 = vpop.f32.mrf.mxu0
      %v523 = vadd.f32 0.0, %v522
      %v524 = vpop.f32.mrf.mxu0
      %v525 = vadd.f32 0.0, %v524
      %526 = vmatmul.bf16.gmra.mxu0 %v450
      %v527 = vpop.f32.mrf.mxu0
      %v528 = vadd.f32 0.0, %v527
      %v529 = vpop.f32.mrf.mxu0
      %v530 = vadd.f32 0.0, %v529
      %531 = vmatmul.bf16.gmra.mxu0 %v451
      %v532 = vpop.f32.mrf.mxu0
      %v533 = vadd.f32 0.0, %v532
      %v534 = vpop.f32.mrf.mxu0
      %v535 = vadd.f32 0.0, %v534
      %536 = vmatmul.bf16.gmra.mxu0 %v452
      %v537 = vpop.f32.mrf.mxu0
      %v538 = vadd.f32 0.0, %v537
      %v539 = vpop.f32.mrf.mxu0
      %v540 = vadd.f32 0.0, %v539
      %541 = vmatmul.bf16.gmra.mxu0 %v453
      %v542 = vpop.f32.mrf.mxu0
      %v543 = vadd.f32 0.0, %v542
      %v544 = vpop.f32.mrf.mxu0
      %v545 = vadd.f32 0.0, %v544
      %546 = vmatmul.bf16.gmra.mxu0 %v454
      %v547 = vpop.f32.mrf.mxu0
      %v548 = vadd.f32 0.0, %v547
      %v549 = vpop.f32.mrf.mxu0
      %v550 = vadd.f32 0.0, %v549
      %551 = vmatmul.bf16.gmra.mxu0 %v455
      %v552 = vpop.f32.mrf.mxu0
      %v553 = vadd.f32 0.0, %v552
      %v554 = vpop.f32.mrf.mxu0
      %v555 = vadd.f32 0.0, %v554
      %556 = vmatmul.bf16.gmra.mxu0 %v456
      %v557 = vpop.f32.mrf.mxu0
      %v558 = vadd.f32 0.0, %v557
      %v559 = vpop.f32.mrf.mxu0
      %v560 = vadd.f32 0.0, %v559
      %561 = vdwg.mxu0
      %v562 = vadd.f32 %v401, %v523
      %v563 = vadd.f32 %v402, %v525
      %v564 = vadd.f32 %v403, %v528
      %v565 = vadd.f32 %v404, %v530
      %v566 = vadd.f32 %v405, %v533
      %v567 = vadd.f32 %v406, %v535
      %v568 = vadd.f32 %v407, %v538
      %v569 = vadd.f32 %v408, %v540
      %v570 = vadd.f32 %v409, %v543
      %v571 = vadd.f32 %v410, %v545
      %v572 = vadd.f32 %v411, %v548
      %v573 = vadd.f32 %v412, %v550
      %v574 = vadd.f32 %v413, %v553
      %v575 = vadd.f32 %v414, %v555
      %v576 = vadd.f32 %v415, %v558
      %v577 = vadd.f32 %v416, %v560
      %578 = vst [vmem:[#allocation3] sm:$0xff] %v562
      %579 = vst [vmem:[#allocation3 + $0x8] sm:$0xff] %v563
      %580 = vst [vmem:[#allocation3 + $0x10] sm:$0xff] %v564
      %581 = vst [vmem:[#allocation3 + $0x18] sm:$0xff] %v565
      %582 = vst [vmem:[#allocation3 + $0x20] sm:$0xff] %v566
      %583 = vst [vmem:[#allocation3 + $0x28] sm:$0xff] %v567
      %584 = vst [vmem:[#allocation3 + $0x30] sm:$0xff] %v568
      %585 = vst [vmem:[#allocation3 + $0x38] sm:$0xff] %v569
      %586 = vst [vmem:[#allocation3 + $0x40] sm:$0xff] %v570
      %587 = vst [vmem:[#allocation3 + $0x48] sm:$0xff] %v571
      %588 = vst [vmem:[#allocation3 + $0x50] sm:$0xff] %v572
      %589 = vst [vmem:[#allocation3 + $0x58] sm:$0xff] %v573
      %590 = vst [vmem:[#allocation3 + $0x60] sm:$0xff] %v574
      %591 = vst [vmem:[#allocation3 + $0x68] sm:$0xff] %v575
      %592 = vst [vmem:[#allocation3 + $0x70] sm:$0xff] %v576
      %593 = vst [vmem:[#allocation3 + $0x78] sm:$0xff] %v577
      %v594 = vld [vmem:[%s293 + $0x4] sm:$0xf]
      %v595 = vld [vmem:[%s293 + $0x8] sm:$0xf]
      %v596 = vld [vmem:[%s293 + $0x14] sm:$0xf]
      %v597 = vld [vmem:[%s293 + $0x18] sm:$0xf]
      %v598 = vld [vmem:[%s293 + $0x24] sm:$0xf]
      %v599 = vld [vmem:[%s293 + $0x28] sm:$0xf]
      %v600 = vld [vmem:[%s293 + $0x34] sm:$0xf]
      %v601 = vld [vmem:[%s293 + $0x38] sm:$0xf]
      %v602 = vld [vmem:[%s293 + $0x44] sm:$0xf]
      %v603 = vld [vmem:[%s293 + $0x48] sm:$0xf]
      %v604 = vld [vmem:[%s293 + $0x54] sm:$0xf]
      %v605 = vld [vmem:[%s293 + $0x58] sm:$0xf]
      %v606 = vld [vmem:[%s293 + $0x64] sm:$0xf]
      %v607 = vld [vmem:[%s293 + $0x68] sm:$0xf]
      %v608 = vld [vmem:[%s293 + $0x74] sm:$0xf]
      %v609 = vld [vmem:[%s293 + $0x78] sm:$0xf]
      %v610 = vld [vmem:[#allocation3] sm:$0xff]
      %v611 = vld [vmem:[#allocation3 + $0x8] sm:$0xff]
      %v612 = vld [vmem:[#allocation3 + $0x10] sm:$0xff]
      %v613 = vld [vmem:[#allocation3 + $0x18] sm:$0xff]
      %v614 = vld [vmem:[#allocation3 + $0x20] sm:$0xff]
      %v615 = vld [vmem:[#allocation3 + $0x28] sm:$0xff]
      %v616 = vld [vmem:[#allocation3 + $0x30] sm:$0xff]
      %v617 = vld [vmem:[#allocation3 + $0x38] sm:$0xff]
      %v618 = vld [vmem:[#allocation3 + $0x40] sm:$0xff]
      %v619 = vld [vmem:[#allocation3 + $0x48] sm:$0xff]
      %v620 = vld [vmem:[#allocation3 + $0x50] sm:$0xff]
      %v621 = vld [vmem:[#allocation3 + $0x58] sm:$0xff]
      %v622 = vld [vmem:[#allocation3 + $0x60] sm:$0xff]
      %v623 = vld [vmem:[#allocation3 + $0x68] sm:$0xff]
      %v624 = vld [vmem:[#allocation3 + $0x70] sm:$0xff]
      %v625 = vld [vmem:[#allocation3 + $0x78] sm:$0xff]
      %s626 = scalar_lea.vmem %s1, 64
      %v627 = vld [vmem:[%s626] sm:$0xf]
      %v628 = vld [vmem:[%s626 + $0x4] sm:$0xf]
      %v629 = vld [vmem:[%s626 + $0x8] sm:$0xf]
      %v630 = vld [vmem:[%s626 + $0xc] sm:$0xf]
      %v631 = vld [vmem:[%s626 + $0x10] sm:$0xf]
      %v632 = vld [vmem:[%s626 + $0x14] sm:$0xf]
      %v633 = vld [vmem:[%s626 + $0x18] sm:$0xf]
      %v634 = vld [vmem:[%s626 + $0x1c] sm:$0xf]
      %v635 = vld [vmem:[%s626 + $0x20] sm:$0xf]
      %v636 = vld [vmem:[%s626 + $0x24] sm:$0xf]
      %v637 = vld [vmem:[%s626 + $0x28] sm:$0xf]
      %v638 = vld [vmem:[%s626 + $0x2c] sm:$0xf]
      %v639 = vld [vmem:[%s626 + $0x30] sm:$0xf]
      %v640 = vld [vmem:[%s626 + $0x34] sm:$0xf]
      %v641 = vld [vmem:[%s626 + $0x38] sm:$0xf]
      %v642 = vld [vmem:[%s626 + $0x3c] sm:$0xf]
      %v659 = vunpack.c.l.b16 %v594
      %v660 = vunpack.c.l.b16 %v595
      %v661 = vunpack.c.l.b16 %v596
      %v662 = vunpack.c.l.b16 %v597
      %v663 = vunpack.c.l.b16 %v598
      %v664 = vunpack.c.l.b16 %v599
      %v665 = vunpack.c.l.b16 %v600
      %v666 = vunpack.c.l.b16 %v601
      %v667 = vunpack.c.l.b16 %v602
      %v668 = vunpack.c.l.b16 %v603
      %v669 = vunpack.c.l.b16 %v604
      %v670 = vunpack.c.l.b16 %v605
      %v671 = vunpack.c.l.b16 %v606
      %v672 = vunpack.c.l.b16 %v607
      %v673 = vunpack.c.l.b16 %v608
      %v674 = vunpack.c.l.b16 %v609
      %v675 = vpack.c.b16 %v660, %v659
      %v676 = vpack.c.b16 %v662, %v661
      %v677 = vpack.c.b16 %v664, %v663
      %v678 = vpack.c.b16 %v666, %v665
      %v679 = vpack.c.b16 %v668, %v667
      %v680 = vpack.c.b16 %v670, %v669
      %v681 = vpack.c.b16 %v672, %v671
      %v682 = vpack.c.b16 %v674, %v673
      %v707 = vunpack.c.l.b16 %v627
      %v708 = vunpack.c.l.b16 %v628
      %v709 = vunpack.c.l.b16 %v629
      %v710 = vunpack.c.l.b16 %v630
      %v711 = vunpack.c.l.b16 %v631
      %v712 = vunpack.c.l.b16 %v632
      %v713 = vunpack.c.l.b16 %v633
      %v714 = vunpack.c.l.b16 %v634
      %v715 = vunpack.c.l.b16 %v635
      %v716 = vunpack.c.l.b16 %v636
      %v717 = vunpack.c.l.b16 %v637
      %v718 = vunpack.c.l.b16 %v638
      %v719 = vunpack.c.l.b16 %v639
      %v720 = vunpack.c.l.b16 %v640
      %v721 = vunpack.c.l.b16 %v641
      %v722 = vunpack.c.l.b16 %v642
      %v723 = vpack.c.b16 %v708, %v707
      %v724 = vpack.c.b16 %v710, %v709
      %v725 = vpack.c.b16 %v712, %v711
      %v726 = vpack.c.b16 %v714, %v713
      %v727 = vpack.c.b16 %v716, %v715
      %v728 = vpack.c.b16 %v718, %v717
      %v729 = vpack.c.b16 %v720, %v719
      %v730 = vpack.c.b16 %v722, %v721
      %739 = vmatpush.bf16.msra.mxu0 %v730
      %740 = vmatpush.bf16.msra.mxu0 %v729
      %741 = vmatpush.bf16.msra.mxu0 %v728
      %742 = vmatpush.bf16.msra.mxu0 %v727
      %743 = vmatpush.bf16.msra.mxu0 %v726
      %744 = vmatpush.bf16.msra.mxu0 %v725
      %745 = vmatpush.bf16.msra.mxu0 %v724
      %746 = vmatpush.bf16.msra.mxu0 %v723
      %747 = vmatmul.bf16.gmra.mxu0 %v675
      %v748 = vpop.f32.mrf.mxu0
      %v749 = vadd.f32 0.0, %v748
      %v750 = vpop.f32.mrf.mxu0
      %v751 = vadd.f32 0.0, %v750
      %752 = vmatmul.bf16.gmra.mxu0 %v676
      %v753 = vpop.f32.mrf.mxu0
      %v754 = vadd.f32 0.0, %v753
      %v755 = vpop.f32.mrf.mxu0
      %v756 = vadd.f32 0.0, %v755
      %757 = vmatmul.bf16.gmra.mxu0 %v677
      %v758 = vpop.f32.mrf.mxu0
      %v759 = vadd.f32 0.0, %v758
      %v760 = vpop.f32.mrf.mxu0
      %v761 = vadd.f32 0.0, %v760
      %762 = vmatmul.bf16.gmra.mxu0 %v678
      %v763 = vpop.f32.mrf.mxu0
      %v764 = vadd.f32 0.0, %v763
      %v765 = vpop.f32.mrf.mxu0
      %v766 = vadd.f32 0.0, %v765
      %767 = vmatmul.bf16.gmra.mxu0 %v679
      %v768 = vpop.f32.mrf.mxu0
      %v769 = vadd.f32 0.0, %v768
      %v770 = vpop.f32.mrf.mxu0
      %v771 = vadd.f32 0.0, %v770
      %772 = vmatmul.bf16.gmra.mxu0 %v680
      %v773 = vpop.f32.mrf.mxu0
      %v774 = vadd.f32 0.0, %v773
      %v775 = vpop.f32.mrf.mxu0
      %v776 = vadd.f32 0.0, %v775
      %777 = vmatmul.bf16.gmra.mxu0 %v681
      %v778 = vpop.f32.mrf.mxu0
      %v779 = vadd.f32 0.0, %v778
      %v780 = vpop.f32.mrf.mxu0
      %v781 = vadd.f32 0.0, %v780
      %782 = vmatmul.bf16.gmra.mxu0 %v682
      %v783 = vpop.f32.mrf.mxu0
      %v784 = vadd.f32 0.0, %v783
      %v785 = vpop.f32.mrf.mxu0
      %v786 = vadd.f32 0.0, %v785
      %787 = vdwg.mxu0
      %v788 = vadd.f32 %v610, %v749
      %v789 = vadd.f32 %v611, %v751
      %v790 = vadd.f32 %v612, %v754
      %v791 = vadd.f32 %v613, %v756
      %v792 = vadd.f32 %v614, %v759
      %v793 = vadd.f32 %v615, %v761
      %v794 = vadd.f32 %v616, %v764
      %v795 = vadd.f32 %v617, %v766
      %v796 = vadd.f32 %v618, %v769
      %v797 = vadd.f32 %v619, %v771
      %v798 = vadd.f32 %v620, %v774
      %v799 = vadd.f32 %v621, %v776
      %v800 = vadd.f32 %v622, %v779
      %v801 = vadd.f32 %v623, %v781
      %v802 = vadd.f32 %v624, %v784
      %v803 = vadd.f32 %v625, %v786
      %804 = vst [vmem:[#allocation3] sm:$0xff] %v788
      %805 = vst [vmem:[#allocation3 + $0x8] sm:$0xff] %v789
      %806 = vst [vmem:[#allocation3 + $0x10] sm:$0xff] %v790
      %807 = vst [vmem:[#allocation3 + $0x18] sm:$0xff] %v791
      %808 = vst [vmem:[#allocation3 + $0x20] sm:$0xff] %v792
      %809 = vst [vmem:[#allocation3 + $0x28] sm:$0xff] %v793
      %810 = vst [vmem:[#allocation3 + $0x30] sm:$0xff] %v794
      %811 = vst [vmem:[#allocation3 + $0x38] sm:$0xff] %v795
      %812 = vst [vmem:[#allocation3 + $0x40] sm:$0xff] %v796
      %813 = vst [vmem:[#allocation3 + $0x48] sm:$0xff] %v797
      %814 = vst [vmem:[#allocation3 + $0x50] sm:$0xff] %v798
      %815 = vst [vmem:[#allocation3 + $0x58] sm:$0xff] %v799
      %816 = vst [vmem:[#allocation3 + $0x60] sm:$0xff] %v800
      %817 = vst [vmem:[#allocation3 + $0x68] sm:$0xff] %v801
      %818 = vst [vmem:[#allocation3 + $0x70] sm:$0xff] %v802
      %819 = vst [vmem:[#allocation3 + $0x78] sm:$0xff] %v803
      %v820 = vld [vmem:[%s293 + $0x4] sm:$0xe]
      %v821 = vld [vmem:[%s293 + $0x8] sm:$0xf]
      %v822 = vld [vmem:[%s293 + $0xc] sm:$0x1]
      %v823 = vld [vmem:[%s293 + $0x14] sm:$0xe]
      %v824 = vld [vmem:[%s293 + $0x18] sm:$0xf]
      %v825 = vld [vmem:[%s293 + $0x1c] sm:$0x1]
      %v826 = vld [vmem:[%s293 + $0x24] sm:$0xe]
      %v827 = vld [vmem:[%s293 + $0x28] sm:$0xf]
      %v828 = vld [vmem:[%s293 + $0x2c] sm:$0x1]
      %v829 = vld [vmem:[%s293 + $0x34] sm:$0xe]
      %v830 = vld [vmem:[%s293 + $0x38] sm:$0xf]
      %v831 = vld [vmem:[%s293 + $0x3c] sm:$0x1]
      %v832 = vld [vmem:[%s293 + $0x44] sm:$0xe]
      %v833 = vld [vmem:[%s293 + $0x48] sm:$0xf]
      %v834 = vld [vmem:[%s293 + $0x4c] sm:$0x1]
      %v835 = vld [vmem:[%s293 + $0x54] sm:$0xe]
      %v836 = vld [vmem:[%s293 + $0x58] sm:$0xf]
      %v837 = vld [vmem:[%s293 + $0x5c] sm:$0x1]
      %v838 = vld [vmem:[%s293 + $0x64] sm:$0xe]
      %v839 = vld [vmem:[%s293 + $0x68] sm:$0xf]
      %v840 = vld [vmem:[%s293 + $0x6c] sm:$0x1]
      %v841 = vld [vmem:[%s293 + $0x74] sm:$0xe]
      %v842 = vld [vmem:[%s293 + $0x78] sm:$0xf]
      %v843 = vld [vmem:[%s293 + $0x7c] sm:$0x1]
      %vm868 = vcmask 1042432
      %vm869 = vcmask 1046532
      %vm870 = vmor %vm868, %vm869
      %v871 = vrot.slane %v820, 5
      %v872 = vrot.slane %v871, 4
      %v873 = vrot.slane %v821, 5
      %v874 = vsel %vm870, %v872, %v873
      %v875 = vrot.slane %v873, 4
      %v876 = vrot.slane %v822, 5
      %v877 = vsel %vm870, %v875, %v876
      %v878 = vrot.slane %v823, 5
      %v879 = vrot.slane %v878, 4
      %v880 = vrot.slane %v824, 5
      %v881 = vsel %vm870, %v879, %v880
      %v882 = vrot.slane %v880, 4
      %v883 = vrot.slane %v825, 5
      %v884 = vsel %vm870, %v882, %v883
      %v885 = vrot.slane %v826, 5
      %v886 = vrot.slane %v885, 4
      %v887 = vrot.slane %v827, 5
      %v888 = vsel %vm870, %v886, %v887
      %v889 = vrot.slane %v887, 4
      %v890 = vrot.slane %v828, 5
      %v891 = vsel %vm870, %v889, %v890
      %v892 = vrot.slane %v829, 5
      %v893 = vrot.slane %v892, 4
      %v894 = vrot.slane %v830, 5
      %v895 = vsel %vm870, %v893, %v894
      %v896 = vrot.slane %v894, 4
      %v897 = vrot.slane %v831, 5
      %v898 = vsel %vm870, %v896, %v897
      %v899 = vrot.slane %v832, 5
      %v900 = vrot.slane %v899, 4
      %v901 = vrot.slane %v833, 5
      %v902 = vsel %vm870, %v900, %v901
      %v903 = vrot.slane %v901, 4
      %v904 = vrot.slane %v834, 5
      %v905 = vsel %vm870, %v903, %v904
      %v906 = vrot.slane %v835, 5
      %v907 = vrot.slane %v906, 4
      %v908 = vrot.slane %v836, 5
      %v909 = vsel %vm870, %v907, %v908
      %v910 = vrot.slane %v908, 4
      %v911 = vrot.slane %v837, 5
      %v912 = vsel %vm870, %v910, %v911
      %v913 = vrot.slane %v838, 5
      %v914 = vrot.slane %v913, 4
      %v915 = vrot.slane %v839, 5
      %v916 = vsel %vm870, %v914, %v915
      %v917 = vrot.slane %v915, 4
      %v918 = vrot.slane %v840, 5
      %v919 = vsel %vm870, %v917, %v918
      %v920 = vrot.slane %v841, 5
      %v921 = vrot.slane %v920, 4
      %v922 = vrot.slane %v842, 5
      %v923 = vsel %vm870, %v921, %v922
      %v924 = vrot.slane %v922, 4
      %v925 = vrot.slane %v843, 5
      %v926 = vsel %vm870, %v924, %v925
      %v927 = vld [vmem:[#allocation3] sm:$0xff]
      %v928 = vld [vmem:[#allocation3 + $0x8] sm:$0xff]
      %v929 = vld [vmem:[#allocation3 + $0x10] sm:$0xff]
      %v930 = vld [vmem:[#allocation3 + $0x18] sm:$0xff]
      %v931 = vld [vmem:[#allocation3 + $0x20] sm:$0xff]
      %v932 = vld [vmem:[#allocation3 + $0x28] sm:$0xff]
      %v933 = vld [vmem:[#allocation3 + $0x30] sm:$0xff]
      %v934 = vld [vmem:[#allocation3 + $0x38] sm:$0xff]
      %v935 = vld [vmem:[#allocation3 + $0x40] sm:$0xff]
      %v936 = vld [vmem:[#allocation3 + $0x48] sm:$0xff]
      %v937 = vld [vmem:[#allocation3 + $0x50] sm:$0xff]
      %v938 = vld [vmem:[#allocation3 + $0x58] sm:$0xff]
      %v939 = vld [vmem:[#allocation3 + $0x60] sm:$0xff]
      %v940 = vld [vmem:[#allocation3 + $0x68] sm:$0xff]
      %v941 = vld [vmem:[#allocation3 + $0x70] sm:$0xff]
      %v942 = vld [vmem:[#allocation3 + $0x78] sm:$0xff]
      %s943 = scalar_lea.vmem %s1, 128
      %v944 = vld [vmem:[%s943] sm:$0xf]
      %v945 = vld [vmem:[%s943 + $0x4] sm:$0xf]
      %v946 = vld [vmem:[%s943 + $0x8] sm:$0xf]
      %v947 = vld [vmem:[%s943 + $0xc] sm:$0xf]
      %v948 = vld [vmem:[%s943 + $0x10] sm:$0xf]
      %v949 = vld [vmem:[%s943 + $0x14] sm:$0xf]
      %v950 = vld [vmem:[%s943 + $0x18] sm:$0xf]
      %v951 = vld [vmem:[%s943 + $0x1c] sm:$0xf]
      %v952 = vld [vmem:[%s943 + $0x20] sm:$0xf]
      %v953 = vld [vmem:[%s943 + $0x24] sm:$0xf]
      %v954 = vld [vmem:[%s943 + $0x28] sm:$0xf]
      %v955 = vld [vmem:[%s943 + $0x2c] sm:$0xf]
      %v956 = vld [vmem:[%s943 + $0x30] sm:$0xf]
      %v957 = vld [vmem:[%s943 + $0x34] sm:$0xf]
      %v958 = vld [vmem:[%s943 + $0x38] sm:$0xf]
      %v959 = vld [vmem:[%s943 + $0x3c] sm:$0xf]
      %v960 = vunpack.c.l.b16 %v874
      %v961 = vunpack.c.l.b16 %v877
      %v962 = vunpack.c.l.b16 %v881
      %v963 = vunpack.c.l.b16 %v884
      %v964 = vunpack.c.l.b16 %v888
      %v965 = vunpack.c.l.b16 %v891
      %v966 = vunpack.c.l.b16 %v895
      %v967 = vunpack.c.l.b16 %v898
      %v968 = vunpack.c.l.b16 %v902
      %v969 = vunpack.c.l.b16 %v905
      %v970 = vunpack.c.l.b16 %v909
      %v971 = vunpack.c.l.b16 %v912
      %v972 = vunpack.c.l.b16 %v916
      %v973 = vunpack.c.l.b16 %v919
      %v974 = vunpack.c.l.b16 %v923
      %v975 = vunpack.c.l.b16 %v926
      %v976 = vpack.c.b16 %v961, %v960
      %v977 = vpack.c.b16 %v963, %v962
      %v978 = vpack.c.b16 %v965, %v964
      %v979 = vpack.c.b16 %v967, %v966
      %v980 = vpack.c.b16 %v969, %v968
      %v981 = vpack.c.b16 %v971, %v970
      %v982 = vpack.c.b16 %v973, %v972
      %v983 = vpack.c.b16 %v975, %v974
      %v1008 = vunpack.c.l.b16 %v944
      %v1009 = vunpack.c.l.b16 %v945
      %v1010 = vunpack.c.l.b16 %v946
      %v1011 = vunpack.c.l.b16 %v947
      %v1012 = vunpack.c.l.b16 %v948
      %v1013 = vunpack.c.l.b16 %v949
      %v1014 = vunpack.c.l.b16 %v950
      %v1015 = vunpack.c.l.b16 %v951
      %v1016 = vunpack.c.l.b16 %v952
      %v1017 = vunpack.c.l.b16 %v953
      %v1018 = vunpack.c.l.b16 %v954
      %v1019 = vunpack.c.l.b16 %v955
      %v1020 = vunpack.c.l.b16 %v956
      %v1021 = vunpack.c.l.b16 %v957
      %v1022 = vunpack.c.l.b16 %v958
      %v1023 = vunpack.c.l.b16 %v959
      %v1024 = vpack.c.b16 %v1009, %v1008
      %v1025 = vpack.c.b16 %v1011, %v1010
      %v1026 = vpack.c.b16 %v1013, %v1012
      %v1027 = vpack.c.b16 %v1015, %v1014
      %v1028 = vpack.c.b16 %v1017, %v1016
      %v1029 = vpack.c.b16 %v1019, %v1018
      %v1030 = vpack.c.b16 %v1021, %v1020
      %v1031 = vpack.c.b16 %v1023, %v1022
      %1040 = vmatpush.bf16.msra.mxu0 %v1031
      %1041 = vmatpush.bf16.msra.mxu0 %v1030
      %1042 = vmatpush.bf16.msra.mxu0 %v1029
      %1043 = vmatpush.bf16.msra.mxu0 %v1028
      %1044 = vmatpush.bf16.msra.mxu0 %v1027
      %1045 = vmatpush.bf16.msra.mxu0 %v1026
      %1046 = vmatpush.bf16.msra.mxu0 %v1025
      %1047 = vmatpush.bf16.msra.mxu0 %v1024
      %1048 = vmatmul.bf16.gmra.mxu0 %v976
      %v1049 = vpop.f32.mrf.mxu0
      %v1050 = vadd.f32 0.0, %v1049
      %v1051 = vpop.f32.mrf.mxu0
      %v1052 = vadd.f32 0.0, %v1051
      %1053 = vmatmul.bf16.gmra.mxu0 %v977
      %v1054 = vpop.f32.mrf.mxu0
      %v1055 = vadd.f32 0.0, %v1054
      %v1056 = vpop.f32.mrf.mxu0
      %v1057 = vadd.f32 0.0, %v1056
      %1058 = vmatmul.bf16.gmra.mxu0 %v978
      %v1059 = vpop.f32.mrf.mxu0
      %v1060 = vadd.f32 0.0, %v1059
      %v1061 = vpop.f32.mrf.mxu0
      %v1062 = vadd.f32 0.0, %v1061
      %1063 = vmatmul.bf16.gmra.mxu0 %v979
      %v1064 = vpop.f32.mrf.mxu0
      %v1065 = vadd.f32 0.0, %v1064
      %v1066 = vpop.f32.mrf.mxu0
      %v1067 = vadd.f32 0.0, %v1066
      %1068 = vmatmul.bf16.gmra.mxu0 %v980
      %v1069 = vpop.f32.mrf.mxu0
      %v1070 = vadd.f32 0.0, %v1069
      %v1071 = vpop.f32.mrf.mxu0
      %v1072 = vadd.f32 0.0, %v1071
      %1073 = vmatmul.bf16.gmra.mxu0 %v981
      %v1074 = vpop.f32.mrf.mxu0
      %v1075 = vadd.f32 0.0, %v1074
      %v1076 = vpop.f32.mrf.mxu0
      %v1077 = vadd.f32 0.0, %v1076
      %1078 = vmatmul.bf16.gmra.mxu0 %v982
      %v1079 = vpop.f32.mrf.mxu0
      %v1080 = vadd.f32 0.0, %v1079
      %v1081 = vpop.f32.mrf.mxu0
      %v1082 = vadd.f32 0.0, %v1081
      %1083 = vmatmul.bf16.gmra.mxu0 %v983
      %v1084 = vpop.f32.mrf.mxu0
      %v1085 = vadd.f32 0.0, %v1084
      %v1086 = vpop.f32.mrf.mxu0
      %v1087 = vadd.f32 0.0, %v1086
      %1088 = vdwg.mxu0
      %v1089 = vadd.f32 %v927, %v1050
      %v1090 = vadd.f32 %v928, %v1052
      %v1091 = vadd.f32 %v929, %v1055
      %v1092 = vadd.f32 %v930, %v1057
      %v1093 = vadd.f32 %v931, %v1060
      %v1094 = vadd.f32 %v932, %v1062
      %v1095 = vadd.f32 %v933, %v1065
      %v1096 = vadd.f32 %v934, %v1067
      %v1097 = vadd.f32 %v935, %v1070
      %v1098 = vadd.f32 %v936, %v1072
      %v1099 = vadd.f32 %v937, %v1075
      %v1100 = vadd.f32 %v938, %v1077
      %v1101 = vadd.f32 %v939, %v1080
      %v1102 = vadd.f32 %v940, %v1082
      %v1103 = vadd.f32 %v941, %v1085
      %v1104 = vadd.f32 %v942, %v1087
      %1105 = vst [vmem:[#allocation3] sm:$0xff] %v1089
      %1106 = vst [vmem:[#allocation3 + $0x8] sm:$0xff] %v1090
      %1107 = vst [vmem:[#allocation3 + $0x10] sm:$0xff] %v1091
      %1108 = vst [vmem:[#allocation3 + $0x18] sm:$0xff] %v1092
      %1109 = vst [vmem:[#allocation3 + $0x20] sm:$0xff] %v1093
      %1110 = vst [vmem:[#allocation3 + $0x28] sm:$0xff] %v1094
      %1111 = vst [vmem:[#allocation3 + $0x30] sm:$0xff] %v1095
      %1112 = vst [vmem:[#allocation3 + $0x38] sm:$0xff] %v1096
      %1113 = vst [vmem:[#allocation3 + $0x40] sm:$0xff] %v1097
      %1114 = vst [vmem:[#allocation3 + $0x48] sm:$0xff] %v1098
      %1115 = vst [vmem:[#allocation3 + $0x50] sm:$0xff] %v1099
      %1116 = vst [vmem:[#allocation3 + $0x58] sm:$0xff] %v1100
      %1117 = vst [vmem:[#allocation3 + $0x60] sm:$0xff] %v1101
      %1118 = vst [vmem:[#allocation3 + $0x68] sm:$0xff] %v1102
      %1119 = vst [vmem:[#allocation3 + $0x70] sm:$0xff] %v1103
      %1120 = vst [vmem:[#allocation3 + $0x78] sm:$0xff] %v1104
      %s1121 = scalar_lea.vmem [#allocation2], 128
      %v1122 = vld [vmem:[%s1121] sm:$0x8]
      %v1123 = vld [vmem:[%s1121 + $0x4] sm:$0xf]
      %v1124 = vld [vmem:[%s1121 + $0x8] sm:$0x7]
      %v1125 = vld [vmem:[%s1121 + $0x10] sm:$0x8]
      %v1126 = vld [vmem:[%s1121 + $0x14] sm:$0xf]
      %v1127 = vld [vmem:[%s1121 + $0x18] sm:$0x7]
      %v1128 = vld [vmem:[%s1121 + $0x20] sm:$0x8]
      %v1129 = vld [vmem:[%s1121 + $0x24] sm:$0xf]
      %v1130 = vld [vmem:[%s1121 + $0x28] sm:$0x7]
      %v1131 = vld [vmem:[%s1121 + $0x30] sm:$0x8]
      %v1132 = vld [vmem:[%s1121 + $0x34] sm:$0xf]
      %v1133 = vld [vmem:[%s1121 + $0x38] sm:$0x7]
      %v1134 = vld [vmem:[%s1121 + $0x40] sm:$0x8]
      %v1135 = vld [vmem:[%s1121 + $0x44] sm:$0xf]
      %v1136 = vld [vmem:[%s1121 + $0x48] sm:$0x7]
      %v1137 = vld [vmem:[%s1121 + $0x50] sm:$0x8]
      %v1138 = vld [vmem:[%s1121 + $0x54] sm:$0xf]
      %v1139 = vld [vmem:[%s1121 + $0x58] sm:$0x7]
      %v1140 = vld [vmem:[%s1121 + $0x60] sm:$0x8]
      %v1141 = vld [vmem:[%s1121 + $0x64] sm:$0xf]
      %v1142 = vld [vmem:[%s1121 + $0x68] sm:$0x7]
      %v1143 = vld [vmem:[%s1121 + $0x70] sm:$0x8]
      %v1144 = vld [vmem:[%s1121 + $0x74] sm:$0xf]
      %v1145 = vld [vmem:[%s1121 + $0x78] sm:$0x7]
      %v1170 = vrot.slane %v1122, 7
      %v1171 = vrot.slane %v1170, 4
      %v1172 = vrot.slane %v1123, 7
      %v1173 = vsel %vm344, %v1171, %v1172
      %v1174 = vrot.slane %v1172, 4
      %v1175 = vrot.slane %v1124, 7
      %v1176 = vsel %vm344, %v1174, %v1175
      %v1177 = vrot.slane %v1125, 7
      %v1178 = vrot.slane %v1177, 4
      %v1179 = vrot.slane %v1126, 7
      %v1180 = vsel %vm344, %v1178, %v1179
      %v1181 = vrot.slane %v1179, 4
      %v1182 = vrot.slane %v1127, 7
      %v1183 = vsel %vm344, %v1181, %v1182
      %v1184 = vrot.slane %v1128, 7
      %v1185 = vrot.slane %v1184, 4
      %v1186 = vrot.slane %v1129, 7
      %v1187 = vsel %vm344, %v1185, %v1186
      %v1188 = vrot.slane %v1186, 4
      %v1189 = vrot.slane %v1130, 7
      %v1190 = vsel %vm344, %v1188, %v1189
      %v1191 = vrot.slane %v1131, 7
      %v1192 = vrot.slane %v1191, 4
      %v1193 = vrot.slane %v1132, 7
      %v1194 = vsel %vm344, %v1192, %v1193
      %v1195 = vrot.slane %v1193, 4
      %v1196 = vrot.slane %v1133, 7
      %v1197 = vsel %vm344, %v1195, %v1196
      %v1198 = vrot.slane %v1134, 7
      %v1199 = vrot.slane %v1198, 4
      %v1200 = vrot.slane %v1135, 7
      %v1201 = vsel %vm344, %v1199, %v1200
      %v1202 = vrot.slane %v1200, 4
      %v1203 = vrot.slane %v1136, 7
      %v1204 = vsel %vm344, %v1202, %v1203
      %v1205 = vrot.slane %v1137, 7
      %v1206 = vrot.slane %v1205, 4
      %v1207 = vrot.slane %v1138, 7
      %v1208 = vsel %vm344, %v1206, %v1207
      %v1209 = vrot.slane %v1207, 4
      %v1210 = vrot.slane %v1139, 7
      %v1211 = vsel %vm344, %v1209, %v1210
      %v1212 = vrot.slane %v1140, 7
      %v1213 = vrot.slane %v1212, 4
      %v1214 = vrot.slane %v1141, 7
      %v1215 = vsel %vm344, %v1213, %v1214
      %v1216 = vrot.slane %v1214, 4
      %v1217 = vrot.slane %v1142, 7
      %v1218 = vsel %vm344, %v1216, %v1217
      %v1219 = vrot.slane %v1143, 7
      %v1220 = vrot.slane %v1219, 4
      %v1221 = vrot.slane %v1144, 7
      %v1222 = vsel %vm344, %v1220, %v1221
      %v1223 = vrot.slane %v1221, 4
      %v1224 = vrot.slane %v1145, 7
      %v1225 = vsel %vm344, %v1223, %v1224
      %v1226 = vld [vmem:[#allocation3] sm:$0xff]
      %v1227 = vld [vmem:[#allocation3 + $0x8] sm:$0xff]
      %v1228 = vld [vmem:[#allocation3 + $0x10] sm:$0xff]
      %v1229 = vld [vmem:[#allocation3 + $0x18] sm:$0xff]
      %v1230 = vld [vmem:[#allocation3 + $0x20] sm:$0xff]
      %v1231 = vld [vmem:[#allocation3 + $0x28] sm:$0xff]
      %v1232 = vld [vmem:[#allocation3 + $0x30] sm:$0xff]
      %v1233 = vld [vmem:[#allocation3 + $0x38] sm:$0xff]
      %v1234 = vld [vmem:[#allocation3 + $0x40] sm:$0xff]
      %v1235 = vld [vmem:[#allocation3 + $0x48] sm:$0xff]
      %v1236 = vld [vmem:[#allocation3 + $0x50] sm:$0xff]
      %v1237 = vld [vmem:[#allocation3 + $0x58] sm:$0xff]
      %v1238 = vld [vmem:[#allocation3 + $0x60] sm:$0xff]
      %v1239 = vld [vmem:[#allocation3 + $0x68] sm:$0xff]
      %v1240 = vld [vmem:[#allocation3 + $0x70] sm:$0xff]
      %v1241 = vld [vmem:[#allocation3 + $0x78] sm:$0xff]
      %s1242 = scalar_lea.vmem %s1, 192
      %v1243 = vld [vmem:[%s1242] sm:$0xf]
      %v1244 = vld [vmem:[%s1242 + $0x4] sm:$0xf]
      %v1245 = vld [vmem:[%s1242 + $0x8] sm:$0xf]
      %v1246 = vld [vmem:[%s1242 + $0xc] sm:$0xf]
      %v1247 = vld [vmem:[%s1242 + $0x10] sm:$0xf]
      %v1248 = vld [vmem:[%s1242 + $0x14] sm:$0xf]
      %v1249 = vld [vmem:[%s1242 + $0x18] sm:$0xf]
      %v1250 = vld [vmem:[%s1242 + $0x1c] sm:$0xf]
      %v1251 = vld [vmem:[%s1242 + $0x20] sm:$0xf]
      %v1252 = vld [vmem:[%s1242 + $0x24] sm:$0xf]
      %v1253 = vld [vmem:[%s1242 + $0x28] sm:$0xf]
      %v1254 = vld [vmem:[%s1242 + $0x2c] sm:$0xf]
      %v1255 = vld [vmem:[%s1242 + $0x30] sm:$0xf]
      %v1256 = vld [vmem:[%s1242 + $0x34] sm:$0xf]
      %v1257 = vld [vmem:[%s1242 + $0x38] sm:$0xf]
      %v1258 = vld [vmem:[%s1242 + $0x3c] sm:$0xf]
      %v1259 = vunpack.c.l.b16 %v1173
      %v1260 = vunpack.c.l.b16 %v1176
      %v1261 = vunpack.c.l.b16 %v1180
      %v1262 = vunpack.c.l.b16 %v1183
      %v1263 = vunpack.c.l.b16 %v1187
      %v1264 = vunpack.c.l.b16 %v1190
      %v1265 = vunpack.c.l.b16 %v1194
      %v1266 = vunpack.c.l.b16 %v1197
      %v1267 = vunpack.c.l.b16 %v1201
      %v1268 = vunpack.c.l.b16 %v1204
      %v1269 = vunpack.c.l.b16 %v1208
      %v1270 = vunpack.c.l.b16 %v1211
      %v1271 = vunpack.c.l.b16 %v1215
      %v1272 = vunpack.c.l.b16 %v1218
      %v1273 = vunpack.c.l.b16 %v1222
      %v1274 = vunpack.c.l.b16 %v1225
      %v1275 = vpack.c.b16 %v1260, %v1259
      %v1276 = vpack.c.b16 %v1262, %v1261
      %v1277 = vpack.c.b16 %v1264, %v1263
      %v1278 = vpack.c.b16 %v1266, %v1265
      %v1279 = vpack.c.b16 %v1268, %v1267
      %v1280 = vpack.c.b16 %v1270, %v1269
      %v1281 = vpack.c.b16 %v1272, %v1271
      %v1282 = vpack.c.b16 %v1274, %v1273
      %v1307 = vunpack.c.l.b16 %v1243
      %v1308 = vunpack.c.l.b16 %v1244
      %v1309 = vunpack.c.l.b16 %v1245
      %v1310 = vunpack.c.l.b16 %v1246
      %v1311 = vunpack.c.l.b16 %v1247
      %v1312 = vunpack.c.l.b16 %v1248
      %v1313 = vunpack.c.l.b16 %v1249
      %v1314 = vunpack.c.l.b16 %v1250
      %v1315 = vunpack.c.l.b16 %v1251
      %v1316 = vunpack.c.l.b16 %v1252
      %v1317 = vunpack.c.l.b16 %v1253
      %v1318 = vunpack.c.l.b16 %v1254
      %v1319 = vunpack.c.l.b16 %v1255
      %v1320 = vunpack.c.l.b16 %v1256
      %v1321 = vunpack.c.l.b16 %v1257
      %v1322 = vunpack.c.l.b16 %v1258
      %v1323 = vpack.c.b16 %v1308, %v1307
      %v1324 = vpack.c.b16 %v1310, %v1309
      %v1325 = vpack.c.b16 %v1312, %v1311
      %v1326 = vpack.c.b16 %v1314, %v1313
      %v1327 = vpack.c.b16 %v1316, %v1315
      %v1328 = vpack.c.b16 %v1318, %v1317
      %v1329 = vpack.c.b16 %v1320, %v1319
      %v1330 = vpack.c.b16 %v1322, %v1321
      %1339 = vmatpush.bf16.msra.mxu0 %v1330
      %1340 = vmatpush.bf16.msra.mxu0 %v1329
      %1341 = vmatpush.bf16.msra.mxu0 %v1328
      %1342 = vmatpush.bf16.msra.mxu0 %v1327
      %1343 = vmatpush.bf16.msra.mxu0 %v1326
      %1344 = vmatpush.bf16.msra.mxu0 %v1325
      %1345 = vmatpush.bf16.msra.mxu0 %v1324
      %1346 = vmatpush.bf16.msra.mxu0 %v1323
      %1347 = vmatmul.bf16.gmra.mxu0 %v1275
      %v1348 = vpop.f32.mrf.mxu0
      %v1349 = vadd.f32 0.0, %v1348
      %v1350 = vpop.f32.mrf.mxu0
      %v1351 = vadd.f32 0.0, %v1350
      %1352 = vmatmul.bf16.gmra.mxu0 %v1276
      %v1353 = vpop.f32.mrf.mxu0
      %v1354 = vadd.f32 0.0, %v1353
      %v1355 = vpop.f32.mrf.mxu0
      %v1356 = vadd.f32 0.0, %v1355
      %1357 = vmatmul.bf16.gmra.mxu0 %v1277
      %v1358 = vpop.f32.mrf.mxu0
      %v1359 = vadd.f32 0.0, %v1358
      %v1360 = vpop.f32.mrf.mxu0
      %v1361 = vadd.f32 0.0, %v1360
      %1362 = vmatmul.bf16.gmra.mxu0 %v1278
      %v1363 = vpop.f32.mrf.mxu0
      %v1364 = vadd.f32 0.0, %v1363
      %v1365 = vpop.f32.mrf.mxu0
      %v1366 = vadd.f32 0.0, %v1365
      %1367 = vmatmul.bf16.gmra.mxu0 %v1279
      %v1368 = vpop.f32.mrf.mxu0
      %v1369 = vadd.f32 0.0, %v1368
      %v1370 = vpop.f32.mrf.mxu0
      %v1371 = vadd.f32 0.0, %v1370
      %1372 = vmatmul.bf16.gmra.mxu0 %v1280
      %v1373 = vpop.f32.mrf.mxu0
      %v1374 = vadd.f32 0.0, %v1373
      %v1375 = vpop.f32.mrf.mxu0
      %v1376 = vadd.f32 0.0, %v1375
      %1377 = vmatmul.bf16.gmra.mxu0 %v1281
      %v1378 = vpop.f32.mrf.mxu0
      %v1379 = vadd.f32 0.0, %v1378
      %v1380 = vpop.f32.mrf.mxu0
      %v1381 = vadd.f32 0.0, %v1380
      %1382 = vmatmul.bf16.gmra.mxu0 %v1282
      %v1383 = vpop.f32.mrf.mxu0
      %v1384 = vadd.f32 0.0, %v1383
      %v1385 = vpop.f32.mrf.mxu0
      %v1386 = vadd.f32 0.0, %v1385
      %1387 = vdwg.mxu0
      %v1388 = vadd.f32 %v1226, %v1349
      %v1389 = vadd.f32 %v1227, %v1351
      %v1390 = vadd.f32 %v1228, %v1354
      %v1391 = vadd.f32 %v1229, %v1356
      %v1392 = vadd.f32 %v1230, %v1359
      %v1393 = vadd.f32 %v1231, %v1361
      %v1394 = vadd.f32 %v1232, %v1364
      %v1395 = vadd.f32 %v1233, %v1366
      %v1396 = vadd.f32 %v1234, %v1369
      %v1397 = vadd.f32 %v1235, %v1371
      %v1398 = vadd.f32 %v1236, %v1374
      %v1399 = vadd.f32 %v1237, %v1376
      %v1400 = vadd.f32 %v1238, %v1379
      %v1401 = vadd.f32 %v1239, %v1381
      %v1402 = vadd.f32 %v1240, %v1384
      %v1403 = vadd.f32 %v1241, %v1386
      %1404 = vst [vmem:[#allocation3] sm:$0xff] %v1388
      %1405 = vst [vmem:[#allocation3 + $0x8] sm:$0xff] %v1389
      %1406 = vst [vmem:[#allocation3 + $0x10] sm:$0xff] %v1390
      %1407 = vst [vmem:[#allocation3 + $0x18] sm:$0xff] %v1391
      %1408 = vst [vmem:[#allocation3 + $0x20] sm:$0xff] %v1392
      %1409 = vst [vmem:[#allocation3 + $0x28] sm:$0xff] %v1393
      %1410 = vst [vmem:[#allocation3 + $0x30] sm:$0xff] %v1394
      %1411 = vst [vmem:[#allocation3 + $0x38] sm:$0xff] %v1395
      %1412 = vst [vmem:[#allocation3 + $0x40] sm:$0xff] %v1396
      %1413 = vst [vmem:[#allocation3 + $0x48] sm:$0xff] %v1397
      %1414 = vst [vmem:[#allocation3 + $0x50] sm:$0xff] %v1398
      %1415 = vst [vmem:[#allocation3 + $0x58] sm:$0xff] %v1399
      %1416 = vst [vmem:[#allocation3 + $0x60] sm:$0xff] %v1400
      %1417 = vst [vmem:[#allocation3 + $0x68] sm:$0xff] %v1401
      %1418 = vst [vmem:[#allocation3 + $0x70] sm:$0xff] %v1402
      %1419 = vst [vmem:[#allocation3 + $0x78] sm:$0xff] %v1403
      %v1420 = vld [vmem:[%s1121 + $0x4] sm:$0xf]
      %v1421 = vld [vmem:[%s1121 + $0x8] sm:$0xf]
      %v1422 = vld [vmem:[%s1121 + $0x14] sm:$0xf]
      %v1423 = vld [vmem:[%s1121 + $0x18] sm:$0xf]
      %v1424 = vld [vmem:[%s1121 + $0x24] sm:$0xf]
      %v1425 = vld [vmem:[%s1121 + $0x28] sm:$0xf]
      %v1426 = vld [vmem:[%s1121 + $0x34] sm:$0xf]
      %v1427 = vld [vmem:[%s1121 + $0x38] sm:$0xf]
      %v1428 = vld [vmem:[%s1121 + $0x44] sm:$0xf]
      %v1429 = vld [vmem:[%s1121 + $0x48] sm:$0xf]
      %v1430 = vld [vmem:[%s1121 + $0x54] sm:$0xf]
      %v1431 = vld [vmem:[%s1121 + $0x58] sm:$0xf]
      %v1432 = vld [vmem:[%s1121 + $0x64] sm:$0xf]
      %v1433 = vld [vmem:[%s1121 + $0x68] sm:$0xf]
      %v1434 = vld [vmem:[%s1121 + $0x74] sm:$0xf]
      %v1435 = vld [vmem:[%s1121 + $0x78] sm:$0xf]
      %v1436 = vld [vmem:[#allocation3] sm:$0xff]
      %v1437 = vld [vmem:[#allocation3 + $0x8] sm:$0xff]
      %v1438 = vld [vmem:[#allocation3 + $0x10] sm:$0xff]
      %v1439 = vld [vmem:[#allocation3 + $0x18] sm:$0xff]
      %v1440 = vld [vmem:[#allocation3 + $0x20] sm:$0xff]
      %v1441 = vld [vmem:[#allocation3 + $0x28] sm:$0xff]
      %v1442 = vld [vmem:[#allocation3 + $0x30] sm:$0xff]
      %v1443 = vld [vmem:[#allocation3 + $0x38] sm:$0xff]
      %v1444 = vld [vmem:[#allocation3 + $0x40] sm:$0xff]
      %v1445 = vld [vmem:[#allocation3 + $0x48] sm:$0xff]
      %v1446 = vld [vmem:[#allocation3 + $0x50] sm:$0xff]
      %v1447 = vld [vmem:[#allocation3 + $0x58] sm:$0xff]
      %v1448 = vld [vmem:[#allocation3 + $0x60] sm:$0xff]
      %v1449 = vld [vmem:[#allocation3 + $0x68] sm:$0xff]
      %v1450 = vld [vmem:[#allocation3 + $0x70] sm:$0xff]
      %v1451 = vld [vmem:[#allocation3 + $0x78] sm:$0xff]
      %s1452 = scalar_lea.vmem %s1, 256
      %v1453 = vld [vmem:[%s1452] sm:$0xf]
      %v1454 = vld [vmem:[%s1452 + $0x4] sm:$0xf]
      %v1455 = vld [vmem:[%s1452 + $0x8] sm:$0xf]
      %v1456 = vld [vmem:[%s1452 + $0xc] sm:$0xf]
      %v1457 = vld [vmem:[%s1452 + $0x10] sm:$0xf]
      %v1458 = vld [vmem:[%s1452 + $0x14] sm:$0xf]
      %v1459 = vld [vmem:[%s1452 + $0x18] sm:$0xf]
      %v1460 = vld [vmem:[%s1452 + $0x1c] sm:$0xf]
      %v1461 = vld [vmem:[%s1452 + $0x20] sm:$0xf]
      %v1462 = vld [vmem:[%s1452 + $0x24] sm:$0xf]
      %v1463 = vld [vmem:[%s1452 + $0x28] sm:$0xf]
      %v1464 = vld [vmem:[%s1452 + $0x2c] sm:$0xf]
      %v1465 = vld [vmem:[%s1452 + $0x30] sm:$0xf]
      %v1466 = vld [vmem:[%s1452 + $0x34] sm:$0xf]
      %v1467 = vld [vmem:[%s1452 + $0x38] sm:$0xf]
      %v1468 = vld [vmem:[%s1452 + $0x3c] sm:$0xf]
      %v1485 = vunpack.c.l.b16 %v1420
      %v1486 = vunpack.c.l.b16 %v1421
      %v1487 = vunpack.c.l.b16 %v1422
      %v1488 = vunpack.c.l.b16 %v1423
      %v1489 = vunpack.c.l.b16 %v1424
      %v1490 = vunpack.c.l.b16 %v1425
      %v1491 = vunpack.c.l.b16 %v1426
      %v1492 = vunpack.c.l.b16 %v1427
      %v1493 = vunpack.c.l.b16 %v1428
      %v1494 = vunpack.c.l.b16 %v1429
      %v1495 = vunpack.c.l.b16 %v1430
      %v1496 = vunpack.c.l.b16 %v1431
      %v1497 = vunpack.c.l.b16 %v1432
      %v1498 = vunpack.c.l.b16 %v1433
      %v1499 = vunpack.c.l.b16 %v1434
      %v1500 = vunpack.c.l.b16 %v1435
      %v1501 = vpack.c.b16 %v1486, %v1485
      %v1502 = vpack.c.b16 %v1488, %v1487
      %v1503 = vpack.c.b16 %v1490, %v1489
      %v1504 = vpack.c.b16 %v1492, %v1491
      %v1505 = vpack.c.b16 %v1494, %v1493
      %v1506 = vpack.c.b16 %v1496, %v1495
      %v1507 = vpack.c.b16 %v1498, %v1497
      %v1508 = vpack.c.b16 %v1500, %v1499
      %v1533 = vunpack.c.l.b16 %v1453
      %v1534 = vunpack.c.l.b16 %v1454
      %v1535 = vunpack.c.l.b16 %v1455
      %v1536 = vunpack.c.l.b16 %v1456
      %v1537 = vunpack.c.l.b16 %v1457
      %v1538 = vunpack.c.l.b16 %v1458
      %v1539 = vunpack.c.l.b16 %v1459
      %v1540 = vunpack.c.l.b16 %v1460
      %v1541 = vunpack.c.l.b16 %v1461
      %v1542 = vunpack.c.l.b16 %v1462
      %v1543 = vunpack.c.l.b16 %v1463
      %v1544 = vunpack.c.l.b16 %v1464
      %v1545 = vunpack.c.l.b16 %v1465
      %v1546 = vunpack.c.l.b16 %v1466
      %v1547 = vunpack.c.l.b16 %v1467
      %v1548 = vunpack.c.l.b16 %v1468
      %v1549 = vpack.c.b16 %v1534, %v1533
      %v1550 = vpack.c.b16 %v1536, %v1535
      %v1551 = vpack.c.b16 %v1538, %v1537
      %v1552 = vpack.c.b16 %v1540, %v1539
      %v1553 = vpack.c.b16 %v1542, %v1541
      %v1554 = vpack.c.b16 %v1544, %v1543
      %v1555 = vpack.c.b16 %v1546, %v1545
      %v1556 = vpack.c.b16 %v1548, %v1547
      %1565 = vmatpush.bf16.msra.mxu0 %v1556
      %1566 = vmatpush.bf16.msra.mxu0 %v1555
      %1567 = vmatpush.bf16.msra.mxu0 %v1554
      %1568 = vmatpush.bf16.msra.mxu0 %v1553
      %1569 = vmatpush.bf16.msra.mxu0 %v1552
      %1570 = vmatpush.bf16.msra.mxu0 %v1551
      %1571 = vmatpush.bf16.msra.mxu0 %v1550
      %1572 = vmatpush.bf16.msra.mxu0 %v1549
      %1573 = vmatmul.bf16.gmra.mxu0 %v1501
      %v1574 = vpop.f32.mrf.mxu0
      %v1575 = vadd.f32 0.0, %v1574
      %v1576 = vpop.f32.mrf.mxu0
      %v1577 = vadd.f32 0.0, %v1576
      %1578 = vmatmul.bf16.gmra.mxu0 %v1502
      %v1579 = vpop.f32.mrf.mxu0
      %v1580 = vadd.f32 0.0, %v1579
      %v1581 = vpop.f32.mrf.mxu0
      %v1582 = vadd.f32 0.0, %v1581
      %1583 = vmatmul.bf16.gmra.mxu0 %v1503
      %v1584 = vpop.f32.mrf.mxu0
      %v1585 = vadd.f32 0.0, %v1584
      %v1586 = vpop.f32.mrf.mxu0
      %v1587 = vadd.f32 0.0, %v1586
      %1588 = vmatmul.bf16.gmra.mxu0 %v1504
      %v1589 = vpop.f32.mrf.mxu0
      %v1590 = vadd.f32 0.0, %v1589
      %v1591 = vpop.f32.mrf.mxu0
      %v1592 = vadd.f32 0.0, %v1591
      %1593 = vmatmul.bf16.gmra.mxu0 %v1505
      %v1594 = vpop.f32.mrf.mxu0
      %v1595 = vadd.f32 0.0, %v1594
      %v1596 = vpop.f32.mrf.mxu0
      %v1597 = vadd.f32 0.0, %v1596
      %1598 = vmatmul.bf16.gmra.mxu0 %v1506
      %v1599 = vpop.f32.mrf.mxu0
      %v1600 = vadd.f32 0.0, %v1599
      %v1601 = vpop.f32.mrf.mxu0
      %v1602 = vadd.f32 0.0, %v1601
      %1603 = vmatmul.bf16.gmra.mxu0 %v1507
      %v1604 = vpop.f32.mrf.mxu0
      %v1605 = vadd.f32 0.0, %v1604
      %v1606 = vpop.f32.mrf.mxu0
      %v1607 = vadd.f32 0.0, %v1606
      %1608 = vmatmul.bf16.gmra.mxu0 %v1508
      %v1609 = vpop.f32.mrf.mxu0
      %v1610 = vadd.f32 0.0, %v1609
      %v1611 = vpop.f32.mrf.mxu0
      %v1612 = vadd.f32 0.0, %v1611
      %1613 = vdwg.mxu0
      %v1614 = vadd.f32 %v1436, %v1575
      %v1615 = vadd.f32 %v1437, %v1577
      %v1616 = vadd.f32 %v1438, %v1580
      %v1617 = vadd.f32 %v1439, %v1582
      %v1618 = vadd.f32 %v1440, %v1585
      %v1619 = vadd.f32 %v1441, %v1587
      %v1620 = vadd.f32 %v1442, %v1590
      %v1621 = vadd.f32 %v1443, %v1592
      %v1622 = vadd.f32 %v1444, %v1595
      %v1623 = vadd.f32 %v1445, %v1597
      %v1624 = vadd.f32 %v1446, %v1600
      %v1625 = vadd.f32 %v1447, %v1602
      %v1626 = vadd.f32 %v1448, %v1605
      %v1627 = vadd.f32 %v1449, %v1607
      %v1628 = vadd.f32 %v1450, %v1610
      %v1629 = vadd.f32 %v1451, %v1612
      %1630 = vst [vmem:[#allocation3] sm:$0xff] %v1614
      %1631 = vst [vmem:[#allocation3 + $0x8] sm:$0xff] %v1615
      %1632 = vst [vmem:[#allocation3 + $0x10] sm:$0xff] %v1616
      %1633 = vst [vmem:[#allocation3 + $0x18] sm:$0xff] %v1617
      %1634 = vst [vmem:[#allocation3 + $0x20] sm:$0xff] %v1618
      %1635 = vst [vmem:[#allocation3 + $0x28] sm:$0xff] %v1619
      %1636 = vst [vmem:[#allocation3 + $0x30] sm:$0xff] %v1620
      %1637 = vst [vmem:[#allocation3 + $0x38] sm:$0xff] %v1621
      %1638 = vst [vmem:[#allocation3 + $0x40] sm:$0xff] %v1622
      %1639 = vst [vmem:[#allocation3 + $0x48] sm:$0xff] %v1623
      %1640 = vst [vmem:[#allocation3 + $0x50] sm:$0xff] %v1624
      %1641 = vst [vmem:[#allocation3 + $0x58] sm:$0xff] %v1625
      %1642 = vst [vmem:[#allocation3 + $0x60] sm:$0xff] %v1626
      %1643 = vst [vmem:[#allocation3 + $0x68] sm:$0xff] %v1627
      %1644 = vst [vmem:[#allocation3 + $0x70] sm:$0xff] %v1628
      %1645 = vst [vmem:[#allocation3 + $0x78] sm:$0xff] %v1629
      %v1646 = vld [vmem:[%s1121 + $0x4] sm:$0xe]
      %v1647 = vld [vmem:[%s1121 + $0x8] sm:$0xf]
      %v1648 = vld [vmem:[%s1121 + $0xc] sm:$0x1]
      %v1649 = vld [vmem:[%s1121 + $0x14] sm:$0xe]
      %v1650 = vld [vmem:[%s1121 + $0x18] sm:$0xf]
      %v1651 = vld [vmem:[%s1121 + $0x1c] sm:$0x1]
      %v1652 = vld [vmem:[%s1121 + $0x24] sm:$0xe]
      %v1653 = vld [vmem:[%s1121 + $0x28] sm:$0xf]
      %v1654 = vld [vmem:[%s1121 + $0x2c] sm:$0x1]
      %v1655 = vld [vmem:[%s1121 + $0x34] sm:$0xe]
      %v1656 = vld [vmem:[%s1121 + $0x38] sm:$0xf]
      %v1657 = vld [vmem:[%s1121 + $0x3c] sm:$0x1]
      %v1658 = vld [vmem:[%s1121 + $0x44] sm:$0xe]
      %v1659 = vld [vmem:[%s1121 + $0x48] sm:$0xf]
      %v1660 = vld [vmem:[%s1121 + $0x4c] sm:$0x1]
      %v1661 = vld [vmem:[%s1121 + $0x54] sm:$0xe]
      %v1662 = vld [vmem:[%s1121 + $0x58] sm:$0xf]
      %v1663 = vld [vmem:[%s1121 + $0x5c] sm:$0x1]
      %v1664 = vld [vmem:[%s1121 + $0x64] sm:$0xe]
      %v1665 = vld [vmem:[%s1121 + $0x68] sm:$0xf]
      %v1666 = vld [vmem:[%s1121 + $0x6c] sm:$0x1]
      %v1667 = vld [vmem:[%s1121 + $0x74] sm:$0xe]
      %v1668 = vld [vmem:[%s1121 + $0x78] sm:$0xf]
      %v1669 = vld [vmem:[%s1121 + $0x7c] sm:$0x1]
      %v1694 = vrot.slane %v1646, 5
      %v1695 = vrot.slane %v1694, 4
      %v1696 = vrot.slane %v1647, 5
      %v1697 = vsel %vm870, %v1695, %v1696
      %v1698 = vrot.slane %v1696, 4
      %v1699 = vrot.slane %v1648, 5
      %v1700 = vsel %vm870, %v1698, %v1699
      %v1701 = vrot.slane %v1649, 5
      %v1702 = vrot.slane %v1701, 4
      %v1703 = vrot.slane %v1650, 5
      %v1704 = vsel %vm870, %v1702, %v1703
      %v1705 = vrot.slane %v1703, 4
      %v1706 = vrot.slane %v1651, 5
      %v1707 = vsel %vm870, %v1705, %v1706
      %v1708 = vrot.slane %v1652, 5
      %v1709 = vrot.slane %v1708, 4
      %v1710 = vrot.slane %v1653, 5
      %v1711 = vsel %vm870, %v1709, %v1710
      %v1712 = vrot.slane %v1710, 4
      %v1713 = vrot.slane %v1654, 5
      %v1714 = vsel %vm870, %v1712, %v1713
      %v1715 = vrot.slane %v1655, 5
      %v1716 = vrot.slane %v1715, 4
      %v1717 = vrot.slane %v1656, 5
      %v1718 = vsel %vm870, %v1716, %v1717
      %v1719 = vrot.slane %v1717, 4
      %v1720 = vrot.slane %v1657, 5
      %v1721 = vsel %vm870, %v1719, %v1720
      %v1722 = vrot.slane %v1658, 5
      %v1723 = vrot.slane %v1722, 4
      %v1724 = vrot.slane %v1659, 5
      %v1725 = vsel %vm870, %v1723, %v1724
      %v1726 = vrot.slane %v1724, 4
      %v1727 = vrot.slane %v1660, 5
      %v1728 = vsel %vm870, %v1726, %v1727
      %v1729 = vrot.slane %v1661, 5
      %v1730 = vrot.slane %v1729, 4
      %v1731 = vrot.slane %v1662, 5
      %v1732 = vsel %vm870, %v1730, %v1731
      %v1733 = vrot.slane %v1731, 4
      %v1734 = vrot.slane %v1663, 5
      %v1735 = vsel %vm870, %v1733, %v1734
      %v1736 = vrot.slane %v1664, 5
      %v1737 = vrot.slane %v1736, 4
      %v1738 = vrot.slane %v1665, 5
      %v1739 = vsel %vm870, %v1737, %v1738
      %v1740 = vrot.slane %v1738, 4
      %v1741 = vrot.slane %v1666, 5
      %v1742 = vsel %vm870, %v1740, %v1741
      %v1743 = vrot.slane %v1667, 5
      %v1744 = vrot.slane %v1743, 4
      %v1745 = vrot.slane %v1668, 5
      %v1746 = vsel %vm870, %v1744, %v1745
      %v1747 = vrot.slane %v1745, 4
      %v1748 = vrot.slane %v1669, 5
      %v1749 = vsel %vm870, %v1747, %v1748
      %v1750 = vld [vmem:[#allocation3] sm:$0xff]
      %v1751 = vld [vmem:[#allocation3 + $0x8] sm:$0xff]
      %v1752 = vld [vmem:[#allocation3 + $0x10] sm:$0xff]
      %v1753 = vld [vmem:[#allocation3 + $0x18] sm:$0xff]
      %v1754 = vld [vmem:[#allocation3 + $0x20] sm:$0xff]
      %v1755 = vld [vmem:[#allocation3 + $0x28] sm:$0xff]
      %v1756 = vld [vmem:[#allocation3 + $0x30] sm:$0xff]
      %v1757 = vld [vmem:[#allocation3 + $0x38] sm:$0xff]
      %v1758 = vld [vmem:[#allocation3 + $0x40] sm:$0xff]
      %v1759 = vld [vmem:[#allocation3 + $0x48] sm:$0xff]
      %v1760 = vld [vmem:[#allocation3 + $0x50] sm:$0xff]
      %v1761 = vld [vmem:[#allocation3 + $0x58] sm:$0xff]
      %v1762 = vld [vmem:[#allocation3 + $0x60] sm:$0xff]
      %v1763 = vld [vmem:[#allocation3 + $0x68] sm:$0xff]
      %v1764 = vld [vmem:[#allocation3 + $0x70] sm:$0xff]
      %v1765 = vld [vmem:[#allocation3 + $0x78] sm:$0xff]
      %s1766 = scalar_lea.vmem %s1, 320
      %v1767 = vld [vmem:[%s1766] sm:$0xf]
      %v1768 = vld [vmem:[%s1766 + $0x4] sm:$0xf]
      %v1769 = vld [vmem:[%s1766 + $0x8] sm:$0xf]
      %v1770 = vld [vmem:[%s1766 + $0xc] sm:$0xf]
      %v1771 = vld [vmem:[%s1766 + $0x10] sm:$0xf]
      %v1772 = vld [vmem:[%s1766 + $0x14] sm:$0xf]
      %v1773 = vld [vmem:[%s1766 + $0x18] sm:$0xf]
      %v1774 = vld [vmem:[%s1766 + $0x1c] sm:$0xf]
      %v1775 = vld [vmem:[%s1766 + $0x20] sm:$0xf]
      %v1776 = vld [vmem:[%s1766 + $0x24] sm:$0xf]
      %v1777 = vld [vmem:[%s1766 + $0x28] sm:$0xf]
      %v1778 = vld [vmem:[%s1766 + $0x2c] sm:$0xf]
      %v1779 = vld [vmem:[%s1766 + $0x30] sm:$0xf]
      %v1780 = vld [vmem:[%s1766 + $0x34] sm:$0xf]
      %v1781 = vld [vmem:[%s1766 + $0x38] sm:$0xf]
      %v1782 = vld [vmem:[%s1766 + $0x3c] sm:$0xf]
      %v1783 = vunpack.c.l.b16 %v1697
      %v1784 = vunpack.c.l.b16 %v1700
      %v1785 = vunpack.c.l.b16 %v1704
      %v1786 = vunpack.c.l.b16 %v1707
      %v1787 = vunpack.c.l.b16 %v1711
      %v1788 = vunpack.c.l.b16 %v1714
      %v1789 = vunpack.c.l.b16 %v1718
      %v1790 = vunpack.c.l.b16 %v1721
      %v1791 = vunpack.c.l.b16 %v1725
      %v1792 = vunpack.c.l.b16 %v1728
      %v1793 = vunpack.c.l.b16 %v1732
      %v1794 = vunpack.c.l.b16 %v1735
      %v1795 = vunpack.c.l.b16 %v1739
      %v1796 = vunpack.c.l.b16 %v1742
      %v1797 = vunpack.c.l.b16 %v1746
      %v1798 = vunpack.c.l.b16 %v1749
      %v1799 = vpack.c.b16 %v1784, %v1783
      %v1800 = vpack.c.b16 %v1786, %v1785
      %v1801 = vpack.c.b16 %v1788, %v1787
      %v1802 = vpack.c.b16 %v1790, %v1789
      %v1803 = vpack.c.b16 %v1792, %v1791
      %v1804 = vpack.c.b16 %v1794, %v1793
      %v1805 = vpack.c.b16 %v1796, %v1795
      %v1806 = vpack.c.b16 %v1798, %v1797
      %v1831 = vunpack.c.l.b16 %v1767
      %v1832 = vunpack.c.l.b16 %v1768
      %v1833 = vunpack.c.l.b16 %v1769
      %v1834 = vunpack.c.l.b16 %v1770
      %v1835 = vunpack.c.l.b16 %v1771
      %v1836 = vunpack.c.l.b16 %v1772
      %v1837 = vunpack.c.l.b16 %v1773
      %v1838 = vunpack.c.l.b16 %v1774
      %v1839 = vunpack.c.l.b16 %v1775
      %v1840 = vunpack.c.l.b16 %v1776
      %v1841 = vunpack.c.l.b16 %v1777
      %v1842 = vunpack.c.l.b16 %v1778
      %v1843 = vunpack.c.l.b16 %v1779
      %v1844 = vunpack.c.l.b16 %v1780
      %v1845 = vunpack.c.l.b16 %v1781
      %v1846 = vunpack.c.l.b16 %v1782
      %v1847 = vpack.c.b16 %v1832, %v1831
      %v1848 = vpack.c.b16 %v1834, %v1833
      %v1849 = vpack.c.b16 %v1836, %v1835
      %v1850 = vpack.c.b16 %v1838, %v1837
      %v1851 = vpack.c.b16 %v1840, %v1839
      %v1852 = vpack.c.b16 %v1842, %v1841
      %v1853 = vpack.c.b16 %v1844, %v1843
      %v1854 = vpack.c.b16 %v1846, %v1845
      %1863 = vmatpush.bf16.msra.mxu0 %v1854
      %1864 = vmatpush.bf16.msra.mxu0 %v1853
      %1865 = vmatpush.bf16.msra.mxu0 %v1852
      %1866 = vmatpush.bf16.msra.mxu0 %v1851
      %1867 = vmatpush.bf16.msra.mxu0 %v1850
      %1868 = vmatpush.bf16.msra.mxu0 %v1849
      %1869 = vmatpush.bf16.msra.mxu0 %v1848
      %1870 = vmatpush.bf16.msra.mxu0 %v1847
      %1871 = vmatmul.bf16.gmra.mxu0 %v1799
      %v1872 = vpop.f32.mrf.mxu0
      %v1873 = vadd.f32 0.0, %v1872
      %v1874 = vpop.f32.mrf.mxu0
      %v1875 = vadd.f32 0.0, %v1874
      %1876 = vmatmul.bf16.gmra.mxu0 %v1800
      %v1877 = vpop.f32.mrf.mxu0
      %v1878 = vadd.f32 0.0, %v1877
      %v1879 = vpop.f32.mrf.mxu0
      %v1880 = vadd.f32 0.0, %v1879
      %1881 = vmatmul.bf16.gmra.mxu0 %v1801
      %v1882 = vpop.f32.mrf.mxu0
      %v1883 = vadd.f32 0.0, %v1882
      %v1884 = vpop.f32.mrf.mxu0
      %v1885 = vadd.f32 0.0, %v1884
      %1886 = vmatmul.bf16.gmra.mxu0 %v1802
      %v1887 = vpop.f32.mrf.mxu0
      %v1888 = vadd.f32 0.0, %v1887
      %v1889 = vpop.f32.mrf.mxu0
      %v1890 = vadd.f32 0.0, %v1889
      %1891 = vmatmul.bf16.gmra.mxu0 %v1803
      %v1892 = vpop.f32.mrf.mxu0
      %v1893 = vadd.f32 0.0, %v1892
      %v1894 = vpop.f32.mrf.mxu0
      %v1895 = vadd.f32 0.0, %v1894
      %1896 = vmatmul.bf16.gmra.mxu0 %v1804
      %v1897 = vpop.f32.mrf.mxu0
      %v1898 = vadd.f32 0.0, %v1897
      %v1899 = vpop.f32.mrf.mxu0
      %v1900 = vadd.f32 0.0, %v1899
      %1901 = vmatmul.bf16.gmra.mxu0 %v1805
      %v1902 = vpop.f32.mrf.mxu0
      %v1903 = vadd.f32 0.0, %v1902
      %v1904 = vpop.f32.mrf.mxu0
      %v1905 = vadd.f32 0.0, %v1904
      %1906 = vmatmul.bf16.gmra.mxu0 %v1806
      %v1907 = vpop.f32.mrf.mxu0
      %v1908 = vadd.f32 0.0, %v1907
      %v1909 = vpop.f32.mrf.mxu0
      %v1910 = vadd.f32 0.0, %v1909
      %1911 = vdwg.mxu0
      %v1912 = vadd.f32 %v1750, %v1873
      %v1913 = vadd.f32 %v1751, %v1875
      %v1914 = vadd.f32 %v1752, %v1878
      %v1915 = vadd.f32 %v1753, %v1880
      %v1916 = vadd.f32 %v1754, %v1883
      %v1917 = vadd.f32 %v1755, %v1885
      %v1918 = vadd.f32 %v1756, %v1888
      %v1919 = vadd.f32 %v1757, %v1890
      %v1920 = vadd.f32 %v1758, %v1893
      %v1921 = vadd.f32 %v1759, %v1895
      %v1922 = vadd.f32 %v1760, %v1898
      %v1923 = vadd.f32 %v1761, %v1900
      %v1924 = vadd.f32 %v1762, %v1903
      %v1925 = vadd.f32 %v1763, %v1905
      %v1926 = vadd.f32 %v1764, %v1908
      %v1927 = vadd.f32 %v1765, %v1910
      %1928 = vst [vmem:[#allocation3] sm:$0xff] %v1912
      %1929 = vst [vmem:[#allocation3 + $0x8] sm:$0xff] %v1913
      %1930 = vst [vmem:[#allocation3 + $0x10] sm:$0xff] %v1914
      %1931 = vst [vmem:[#allocation3 + $0x18] sm:$0xff] %v1915
      %1932 = vst [vmem:[#allocation3 + $0x20] sm:$0xff] %v1916
      %1933 = vst [vmem:[#allocation3 + $0x28] sm:$0xff] %v1917
      %1934 = vst [vmem:[#allocation3 + $0x30] sm:$0xff] %v1918
      %1935 = vst [vmem:[#allocation3 + $0x38] sm:$0xff] %v1919
      %1936 = vst [vmem:[#allocation3 + $0x40] sm:$0xff] %v1920
      %1937 = vst [vmem:[#allocation3 + $0x48] sm:$0xff] %v1921
      %1938 = vst [vmem:[#allocation3 + $0x50] sm:$0xff] %v1922
      %1939 = vst [vmem:[#allocation3 + $0x58] sm:$0xff] %v1923
      %1940 = vst [vmem:[#allocation3 + $0x60] sm:$0xff] %v1924
      %1941 = vst [vmem:[#allocation3 + $0x68] sm:$0xff] %v1925
      %1942 = vst [vmem:[#allocation3 + $0x70] sm:$0xff] %v1926
      %1943 = vst [vmem:[#allocation3 + $0x78] sm:$0xff] %v1927
      %s1944 = scalar_lea.vmem [#allocation2], 160
      %v1945 = vld [vmem:[%s1944] sm:$0x8]
      %v1946 = vld [vmem:[%s1944 + $0x4] sm:$0xf]
      %v1947 = vld [vmem:[%s1944 + $0x8] sm:$0x7]
      %v1948 = vld [vmem:[%s1944 + $0x10] sm:$0x8]
      %v1949 = vld [vmem:[%s1944 + $0x14] sm:$0xf]
      %v1950 = vld [vmem:[%s1944 + $0x18] sm:$0x7]
      %v1951 = vld [vmem:[%s1944 + $0x20] sm:$0x8]
      %v1952 = vld [vmem:[%s1944 + $0x24] sm:$0xf]
      %v1953 = vld [vmem:[%s1944 + $0x28] sm:$0x7]
      %v1954 = vld [vmem:[%s1944 + $0x30] sm:$0x8]
      %v1955 = vld [vmem:[%s1944 + $0x34] sm:$0xf]
      %v1956 = vld [vmem:[%s1944 + $0x38] sm:$0x7]
      %v1957 = vld [vmem:[%s1944 + $0x40] sm:$0x8]
      %v1958 = vld [vmem:[%s1944 + $0x44] sm:$0xf]
      %v1959 = vld [vmem:[%s1944 + $0x48] sm:$0x7]
      %v1960 = vld [vmem:[%s1944 + $0x50] sm:$0x8]
      %v1961 = vld [vmem:[%s1944 + $0x54] sm:$0xf]
      %v1962 = vld [vmem:[%s1944 + $0x58] sm:$0x7]
      %v1963 = vld [vmem:[%s1944 + $0x60] sm:$0x8]
      %v1964 = vld [vmem:[%s1944 + $0x64] sm:$0xf]
      %v1965 = vld [vmem:[%s1944 + $0x68] sm:$0x7]
      %v1966 = vld [vmem:[%s1944 + $0x70] sm:$0x8]
      %v1967 = vld [vmem:[%s1944 + $0x74] sm:$0xf]
      %v1968 = vld [vmem:[%s1944 + $0x78] sm:$0x7]
      %v1993 = vrot.slane %v1945, 7
      %v1994 = vrot.slane %v1993, 4
      %v1995 = vrot.slane %v1946, 7
      %v1996 = vsel %vm344, %v1994, %v1995
      %v1997 = vrot.slane %v1995, 4
      %v1998 = vrot.slane %v1947, 7
      %v1999 = vsel %vm344, %v1997, %v1998
      %v2000 = vrot.slane %v1948, 7
      %v2001 = vrot.slane %v2000, 4
      %v2002 = vrot.slane %v1949, 7
      %v2003 = vsel %vm344, %v2001, %v2002
      %v2004 = vrot.slane %v2002, 4
      %v2005 = vrot.slane %v1950, 7
      %v2006 = vsel %vm344, %v2004, %v2005
      %v2007 = vrot.slane %v1951, 7
      %v2008 = vrot.slane %v2007, 4
      %v2009 = vrot.slane %v1952, 7
      %v2010 = vsel %vm344, %v2008, %v2009
      %v2011 = vrot.slane %v2009, 4
      %v2012 = vrot.slane %v1953, 7
      %v2013 = vsel %vm344, %v2011, %v2012
      %v2014 = vrot.slane %v1954, 7
      %v2015 = vrot.slane %v2014, 4
      %v2016 = vrot.slane %v1955, 7
      %v2017 = vsel %vm344, %v2015, %v2016
      %v2018 = vrot.slane %v2016, 4
      %v2019 = vrot.slane %v1956, 7
      %v2020 = vsel %vm344, %v2018, %v2019
      %v2021 = vrot.slane %v1957, 7
      %v2022 = vrot.slane %v2021, 4
      %v2023 = vrot.slane %v1958, 7
      %v2024 = vsel %vm344, %v2022, %v2023
      %v2025 = vrot.slane %v2023, 4
      %v2026 = vrot.slane %v1959, 7
      %v2027 = vsel %vm344, %v2025, %v2026
      %v2028 = vrot.slane %v1960, 7
      %v2029 = vrot.slane %v2028, 4
      %v2030 = vrot.slane %v1961, 7
      %v2031 = vsel %vm344, %v2029, %v2030
      %v2032 = vrot.slane %v2030, 4
      %v2033 = vrot.slane %v1962, 7
      %v2034 = vsel %vm344, %v2032, %v2033
      %v2035 = vrot.slane %v1963, 7
      %v2036 = vrot.slane %v2035, 4
      %v2037 = vrot.slane %v1964, 7
      %v2038 = vsel %vm344, %v2036, %v2037
      %v2039 = vrot.slane %v2037, 4
      %v2040 = vrot.slane %v1965, 7
      %v2041 = vsel %vm344, %v2039, %v2040
      %v2042 = vrot.slane %v1966, 7
      %v2043 = vrot.slane %v2042, 4
      %v2044 = vrot.slane %v1967, 7
      %v2045 = vsel %vm344, %v2043, %v2044
      %v2046 = vrot.slane %v2044, 4
      %v2047 = vrot.slane %v1968, 7
      %v2048 = vsel %vm344, %v2046, %v2047
      %v2049 = vld [vmem:[#allocation3] sm:$0xff]
      %v2050 = vld [vmem:[#allocation3 + $0x8] sm:$0xff]
      %v2051 = vld [vmem:[#allocation3 + $0x10] sm:$0xff]
      %v2052 = vld [vmem:[#allocation3 + $0x18] sm:$0xff]
      %v2053 = vld [vmem:[#allocation3 + $0x20] sm:$0xff]
      %v2054 = vld [vmem:[#allocation3 + $0x28] sm:$0xff]
      %v2055 = vld [vmem:[#allocation3 + $0x30] sm:$0xff]
      %v2056 = vld [vmem:[#allocation3 + $0x38] sm:$0xff]
      %v2057 = vld [vmem:[#allocation3 + $0x40] sm:$0xff]
      %v2058 = vld [vmem:[#allocation3 + $0x48] sm:$0xff]
      %v2059 = vld [vmem:[#allocation3 + $0x50] sm:$0xff]
      %v2060 = vld [vmem:[#allocation3 + $0x58] sm:$0xff]
      %v2061 = vld [vmem:[#allocation3 + $0x60] sm:$0xff]
      %v2062 = vld [vmem:[#allocation3 + $0x68] sm:$0xff]
      %v2063 = vld [vmem:[#allocation3 + $0x70] sm:$0xff]
      %v2064 = vld [vmem:[#allocation3 + $0x78] sm:$0xff]
      %s2065 = scalar_lea.vmem %s1, 384
      %v2066 = vld [vmem:[%s2065] sm:$0xf]
      %v2067 = vld [vmem:[%s2065 + $0x4] sm:$0xf]
      %v2068 = vld [vmem:[%s2065 + $0x8] sm:$0xf]
      %v2069 = vld [vmem:[%s2065 + $0xc] sm:$0xf]
      %v2070 = vld [vmem:[%s2065 + $0x10] sm:$0xf]
      %v2071 = vld [vmem:[%s2065 + $0x14] sm:$0xf]
      %v2072 = vld [vmem:[%s2065 + $0x18] sm:$0xf]
      %v2073 = vld [vmem:[%s2065 + $0x1c] sm:$0xf]
      %v2074 = vld [vmem:[%s2065 + $0x20] sm:$0xf]
      %v2075 = vld [vmem:[%s2065 + $0x24] sm:$0xf]
      %v2076 = vld [vmem:[%s2065 + $0x28] sm:$0xf]
      %v2077 = vld [vmem:[%s2065 + $0x2c] sm:$0xf]
      %v2078 = vld [vmem:[%s2065 + $0x30] sm:$0xf]
      %v2079 = vld [vmem:[%s2065 + $0x34] sm:$0xf]
      %v2080 = vld [vmem:[%s2065 + $0x38] sm:$0xf]
      %v2081 = vld [vmem:[%s2065 + $0x3c] sm:$0xf]
      %v2082 = vunpack.c.l.b16 %v1996
      %v2083 = vunpack.c.l.b16 %v1999
      %v2084 = vunpack.c.l.b16 %v2003
      %v2085 = vunpack.c.l.b16 %v2006
      %v2086 = vunpack.c.l.b16 %v2010
      %v2087 = vunpack.c.l.b16 %v2013
      %v2088 = vunpack.c.l.b16 %v2017
      %v2089 = vunpack.c.l.b16 %v2020
      %v2090 = vunpack.c.l.b16 %v2024
      %v2091 = vunpack.c.l.b16 %v2027
      %v2092 = vunpack.c.l.b16 %v2031
      %v2093 = vunpack.c.l.b16 %v2034
      %v2094 = vunpack.c.l.b16 %v2038
      %v2095 = vunpack.c.l.b16 %v2041
      %v2096 = vunpack.c.l.b16 %v2045
      %v2097 = vunpack.c.l.b16 %v2048
      %v2098 = vpack.c.b16 %v2083, %v2082
      %v2099 = vpack.c.b16 %v2085, %v2084
      %v2100 = vpack.c.b16 %v2087, %v2086
      %v2101 = vpack.c.b16 %v2089, %v2088
      %v2102 = vpack.c.b16 %v2091, %v2090
      %v2103 = vpack.c.b16 %v2093, %v2092
      %v2104 = vpack.c.b16 %v2095, %v2094
      %v2105 = vpack.c.b16 %v2097, %v2096
      %v2130 = vunpack.c.l.b16 %v2066
      %v2131 = vunpack.c.l.b16 %v2067
      %v2132 = vunpack.c.l.b16 %v2068
      %v2133 = vunpack.c.l.b16 %v2069
      %v2134 = vunpack.c.l.b16 %v2070
      %v2135 = vunpack.c.l.b16 %v2071
      %v2136 = vunpack.c.l.b16 %v2072
      %v2137 = vunpack.c.l.b16 %v2073
      %v2138 = vunpack.c.l.b16 %v2074
      %v2139 = vunpack.c.l.b16 %v2075
      %v2140 = vunpack.c.l.b16 %v2076
      %v2141 = vunpack.c.l.b16 %v2077
      %v2142 = vunpack.c.l.b16 %v2078
      %v2143 = vunpack.c.l.b16 %v2079
      %v2144 = vunpack.c.l.b16 %v2080
      %v2145 = vunpack.c.l.b16 %v2081
      %v2146 = vpack.c.b16 %v2131, %v2130
      %v2147 = vpack.c.b16 %v2133, %v2132
      %v2148 = vpack.c.b16 %v2135, %v2134
      %v2149 = vpack.c.b16 %v2137, %v2136
      %v2150 = vpack.c.b16 %v2139, %v2138
      %v2151 = vpack.c.b16 %v2141, %v2140
      %v2152 = vpack.c.b16 %v2143, %v2142
      %v2153 = vpack.c.b16 %v2145, %v2144
      %2162 = vmatpush.bf16.msra.mxu0 %v2153
      %2163 = vmatpush.bf16.msra.mxu0 %v2152
      %2164 = vmatpush.bf16.msra.mxu0 %v2151
      %2165 = vmatpush.bf16.msra.mxu0 %v2150
      %2166 = vmatpush.bf16.msra.mxu0 %v2149
      %2167 = vmatpush.bf16.msra.mxu0 %v2148
      %2168 = vmatpush.bf16.msra.mxu0 %v2147
      %2169 = vmatpush.bf16.msra.mxu0 %v2146
      %2170 = vmatmul.bf16.gmra.mxu0 %v2098
      %v2171 = vpop.f32.mrf.mxu0
      %v2172 = vadd.f32 0.0, %v2171
      %v2173 = vpop.f32.mrf.mxu0
      %v2174 = vadd.f32 0.0, %v2173
      %2175 = vmatmul.bf16.gmra.mxu0 %v2099
      %v2176 = vpop.f32.mrf.mxu0
      %v2177 = vadd.f32 0.0, %v2176
      %v2178 = vpop.f32.mrf.mxu0
      %v2179 = vadd.f32 0.0, %v2178
      %2180 = vmatmul.bf16.gmra.mxu0 %v2100
      %v2181 = vpop.f32.mrf.mxu0
      %v2182 = vadd.f32 0.0, %v2181
      %v2183 = vpop.f32.mrf.mxu0
      %v2184 = vadd.f32 0.0, %v2183
      %2185 = vmatmul.bf16.gmra.mxu0 %v2101
      %v2186 = vpop.f32.mrf.mxu0
      %v2187 = vadd.f32 0.0, %v2186
      %v2188 = vpop.f32.mrf.mxu0
      %v2189 = vadd.f32 0.0, %v2188
      %2190 = vmatmul.bf16.gmra.mxu0 %v2102
      %v2191 = vpop.f32.mrf.mxu0
      %v2192 = vadd.f32 0.0, %v2191
      %v2193 = vpop.f32.mrf.mxu0
      %v2194 = vadd.f32 0.0, %v2193
      %2195 = vmatmul.bf16.gmra.mxu0 %v2103
      %v2196 = vpop.f32.mrf.mxu0
      %v2197 = vadd.f32 0.0, %v2196
      %v2198 = vpop.f32.mrf.mxu0
      %v2199 = vadd.f32 0.0, %v2198
      %2200 = vmatmul.bf16.gmra.mxu0 %v2104
      %v2201 = vpop.f32.mrf.mxu0
      %v2202 = vadd.f32 0.0, %v2201
      %v2203 = vpop.f32.mrf.mxu0
      %v2204 = vadd.f32 0.0, %v2203
      %2205 = vmatmul.bf16.gmra.mxu0 %v2105
      %v2206 = vpop.f32.mrf.mxu0
      %v2207 = vadd.f32 0.0, %v2206
      %v2208 = vpop.f32.mrf.mxu0
      %v2209 = vadd.f32 0.0, %v2208
      %2210 = vdwg.mxu0
      %v2211 = vadd.f32 %v2049, %v2172
      %v2212 = vadd.f32 %v2050, %v2174
      %v2213 = vadd.f32 %v2051, %v2177
      %v2214 = vadd.f32 %v2052, %v2179
      %v2215 = vadd.f32 %v2053, %v2182
      %v2216 = vadd.f32 %v2054, %v2184
      %v2217 = vadd.f32 %v2055, %v2187
      %v2218 = vadd.f32 %v2056, %v2189
      %v2219 = vadd.f32 %v2057, %v2192
      %v2220 = vadd.f32 %v2058, %v2194
      %v2221 = vadd.f32 %v2059, %v2197
      %v2222 = vadd.f32 %v2060, %v2199
      %v2223 = vadd.f32 %v2061, %v2202
      %v2224 = vadd.f32 %v2062, %v2204
      %v2225 = vadd.f32 %v2063, %v2207
      %v2226 = vadd.f32 %v2064, %v2209
      %2227 = vst [vmem:[#allocation3] sm:$0xff] %v2211
      %2228 = vst [vmem:[#allocation3 + $0x8] sm:$0xff] %v2212
      %2229 = vst [vmem:[#allocation3 + $0x10] sm:$0xff] %v2213
      %2230 = vst [vmem:[#allocation3 + $0x18] sm:$0xff] %v2214
      %2231 = vst [vmem:[#allocation3 + $0x20] sm:$0xff] %v2215
      %2232 = vst [vmem:[#allocation3 + $0x28] sm:$0xff] %v2216
      %2233 = vst [vmem:[#allocation3 + $0x30] sm:$0xff] %v2217
      %2234 = vst [vmem:[#allocation3 + $0x38] sm:$0xff] %v2218
      %2235 = vst [vmem:[#allocation3 + $0x40] sm:$0xff] %v2219
      %2236 = vst [vmem:[#allocation3 + $0x48] sm:$0xff] %v2220
      %2237 = vst [vmem:[#allocation3 + $0x50] sm:$0xff] %v2221
      %2238 = vst [vmem:[#allocation3 + $0x58] sm:$0xff] %v2222
      %2239 = vst [vmem:[#allocation3 + $0x60] sm:$0xff] %v2223
      %2240 = vst [vmem:[#allocation3 + $0x68] sm:$0xff] %v2224
      %2241 = vst [vmem:[#allocation3 + $0x70] sm:$0xff] %v2225
      %2242 = vst [vmem:[#allocation3 + $0x78] sm:$0xff] %v2226
      %v2243 = vld [vmem:[%s1944 + $0x4] sm:$0xf]
      %v2244 = vld [vmem:[%s1944 + $0x8] sm:$0xf]
      %v2245 = vld [vmem:[%s1944 + $0x14] sm:$0xf]
      %v2246 = vld [vmem:[%s1944 + $0x18] sm:$0xf]
      %v2247 = vld [vmem:[%s1944 + $0x24] sm:$0xf]
      %v2248 = vld [vmem:[%s1944 + $0x28] sm:$0xf]
      %v2249 = vld [vmem:[%s1944 + $0x34] sm:$0xf]
      %v2250 = vld [vmem:[%s1944 + $0x38] sm:$0xf]
      %v2251 = vld [vmem:[%s1944 + $0x44] sm:$0xf]
      %v2252 = vld [vmem:[%s1944 + $0x48] sm:$0xf]
      %v2253 = vld [vmem:[%s1944 + $0x54] sm:$0xf]
      %v2254 = vld [vmem:[%s1944 + $0x58] sm:$0xf]
      %v2255 = vld [vmem:[%s1944 + $0x64] sm:$0xf]
      %v2256 = vld [vmem:[%s1944 + $0x68] sm:$0xf]
      %v2257 = vld [vmem:[%s1944 + $0x74] sm:$0xf]
      %v2258 = vld [vmem:[%s1944 + $0x78] sm:$0xf]
      %v2259 = vld [vmem:[#allocation3] sm:$0xff]
      %v2260 = vld [vmem:[#allocation3 + $0x8] sm:$0xff]
      %v2261 = vld [vmem:[#allocation3 + $0x10] sm:$0xff]
      %v2262 = vld [vmem:[#allocation3 + $0x18] sm:$0xff]
      %v2263 = vld [vmem:[#allocation3 + $0x20] sm:$0xff]
      %v2264 = vld [vmem:[#allocation3 + $0x28] sm:$0xff]
      %v2265 = vld [vmem:[#allocation3 + $0x30] sm:$0xff]
      %v2266 = vld [vmem:[#allocation3 + $0x38] sm:$0xff]
      %v2267 = vld [vmem:[#allocation3 + $0x40] sm:$0xff]
      %v2268 = vld [vmem:[#allocation3 + $0x48] sm:$0xff]
      %v2269 = vld [vmem:[#allocation3 + $0x50] sm:$0xff]
      %v2270 = vld [vmem:[#allocation3 + $0x58] sm:$0xff]
      %v2271 = vld [vmem:[#allocation3 + $0x60] sm:$0xff]
      %v2272 = vld [vmem:[#allocation3 + $0x68] sm:$0xff]
      %v2273 = vld [vmem:[#allocation3 + $0x70] sm:$0xff]
      %v2274 = vld [vmem:[#allocation3 + $0x78] sm:$0xff]
      %s2275 = scalar_lea.vmem %s1, 448
      %v2276 = vld [vmem:[%s2275] sm:$0xf]
      %v2277 = vld [vmem:[%s2275 + $0x4] sm:$0xf]
      %v2278 = vld [vmem:[%s2275 + $0x8] sm:$0xf]
      %v2279 = vld [vmem:[%s2275 + $0xc] sm:$0xf]
      %v2280 = vld [vmem:[%s2275 + $0x10] sm:$0xf]
      %v2281 = vld [vmem:[%s2275 + $0x14] sm:$0xf]
      %v2282 = vld [vmem:[%s2275 + $0x18] sm:$0xf]
      %v2283 = vld [vmem:[%s2275 + $0x1c] sm:$0xf]
      %v2284 = vld [vmem:[%s2275 + $0x20] sm:$0xf]
      %v2285 = vld [vmem:[%s2275 + $0x24] sm:$0xf]
      %v2286 = vld [vmem:[%s2275 + $0x28] sm:$0xf]
      %v2287 = vld [vmem:[%s2275 + $0x2c] sm:$0xf]
      %v2288 = vld [vmem:[%s2275 + $0x30] sm:$0xf]
      %v2289 = vld [vmem:[%s2275 + $0x34] sm:$0xf]
      %v2290 = vld [vmem:[%s2275 + $0x38] sm:$0xf]
      %v2291 = vld [vmem:[%s2275 + $0x3c] sm:$0xf]
      %v2308 = vunpack.c.l.b16 %v2243
      %v2309 = vunpack.c.l.b16 %v2244
      %v2310 = vunpack.c.l.b16 %v2245
      %v2311 = vunpack.c.l.b16 %v2246
      %v2312 = vunpack.c.l.b16 %v2247
      %v2313 = vunpack.c.l.b16 %v2248
      %v2314 = vunpack.c.l.b16 %v2249
      %v2315 = vunpack.c.l.b16 %v2250
      %v2316 = vunpack.c.l.b16 %v2251
      %v2317 = vunpack.c.l.b16 %v2252
      %v2318 = vunpack.c.l.b16 %v2253
      %v2319 = vunpack.c.l.b16 %v2254
      %v2320 = vunpack.c.l.b16 %v2255
      %v2321 = vunpack.c.l.b16 %v2256
      %v2322 = vunpack.c.l.b16 %v2257
      %v2323 = vunpack.c.l.b16 %v2258
      %v2324 = vpack.c.b16 %v2309, %v2308
      %v2325 = vpack.c.b16 %v2311, %v2310
      %v2326 = vpack.c.b16 %v2313, %v2312
      %v2327 = vpack.c.b16 %v2315, %v2314
      %v2328 = vpack.c.b16 %v2317, %v2316
      %v2329 = vpack.c.b16 %v2319, %v2318
      %v2330 = vpack.c.b16 %v2321, %v2320
      %v2331 = vpack.c.b16 %v2323, %v2322
      %v2356 = vunpack.c.l.b16 %v2276
      %v2357 = vunpack.c.l.b16 %v2277
      %v2358 = vunpack.c.l.b16 %v2278
      %v2359 = vunpack.c.l.b16 %v2279
      %v2360 = vunpack.c.l.b16 %v2280
      %v2361 = vunpack.c.l.b16 %v2281
      %v2362 = vunpack.c.l.b16 %v2282
      %v2363 = vunpack.c.l.b16 %v2283
      %v2364 = vunpack.c.l.b16 %v2284
      %v2365 = vunpack.c.l.b16 %v2285
      %v2366 = vunpack.c.l.b16 %v2286
      %v2367 = vunpack.c.l.b16 %v2287
      %v2368 = vunpack.c.l.b16 %v2288
      %v2369 = vunpack.c.l.b16 %v2289
      %v2370 = vunpack.c.l.b16 %v2290
      %v2371 = vunpack.c.l.b16 %v2291
      %v2372 = vpack.c.b16 %v2357, %v2356
      %v2373 = vpack.c.b16 %v2359, %v2358
      %v2374 = vpack.c.b16 %v2361, %v2360
      %v2375 = vpack.c.b16 %v2363, %v2362
      %v2376 = vpack.c.b16 %v2365, %v2364
      %v2377 = vpack.c.b16 %v2367, %v2366
      %v2378 = vpack.c.b16 %v2369, %v2368
      %v2379 = vpack.c.b16 %v2371, %v2370
      %2388 = vmatpush.bf16.msra.mxu0 %v2379
      %2389 = vmatpush.bf16.msra.mxu0 %v2378
      %2390 = vmatpush.bf16.msra.mxu0 %v2377
      %2391 = vmatpush.bf16.msra.mxu0 %v2376
      %2392 = vmatpush.bf16.msra.mxu0 %v2375
      %2393 = vmatpush.bf16.msra.mxu0 %v2374
      %2394 = vmatpush.bf16.msra.mxu0 %v2373
      %2395 = vmatpush.bf16.msra.mxu0 %v2372
      %2396 = vmatmul.bf16.gmra.mxu0 %v2324
      %v2397 = vpop.f32.mrf.mxu0
      %v2398 = vadd.f32 0.0, %v2397
      %v2399 = vpop.f32.mrf.mxu0
      %v2400 = vadd.f32 0.0, %v2399
      %2401 = vmatmul.bf16.gmra.mxu0 %v2325
      %v2402 = vpop.f32.mrf.mxu0
      %v2403 = vadd.f32 0.0, %v2402
      %v2404 = vpop.f32.mrf.mxu0
      %v2405 = vadd.f32 0.0, %v2404
      %2406 = vmatmul.bf16.gmra.mxu0 %v2326
      %v2407 = vpop.f32.mrf.mxu0
      %v2408 = vadd.f32 0.0, %v2407
      %v2409 = vpop.f32.mrf.mxu0
      %v2410 = vadd.f32 0.0, %v2409
      %2411 = vmatmul.bf16.gmra.mxu0 %v2327
      %v2412 = vpop.f32.mrf.mxu0
      %v2413 = vadd.f32 0.0, %v2412
      %v2414 = vpop.f32.mrf.mxu0
      %v2415 = vadd.f32 0.0, %v2414
      %2416 = vmatmul.bf16.gmra.mxu0 %v2328
      %v2417 = vpop.f32.mrf.mxu0
      %v2418 = vadd.f32 0.0, %v2417
      %v2419 = vpop.f32.mrf.mxu0
      %v2420 = vadd.f32 0.0, %v2419
      %2421 = vmatmul.bf16.gmra.mxu0 %v2329
      %v2422 = vpop.f32.mrf.mxu0
      %v2423 = vadd.f32 0.0, %v2422
      %v2424 = vpop.f32.mrf.mxu0
      %v2425 = vadd.f32 0.0, %v2424
      %2426 = vmatmul.bf16.gmra.mxu0 %v2330
      %v2427 = vpop.f32.mrf.mxu0
      %v2428 = vadd.f32 0.0, %v2427
      %v2429 = vpop.f32.mrf.mxu0
      %v2430 = vadd.f32 0.0, %v2429
      %2431 = vmatmul.bf16.gmra.mxu0 %v2331
      %v2432 = vpop.f32.mrf.mxu0
      %v2433 = vadd.f32 0.0, %v2432
      %v2434 = vpop.f32.mrf.mxu0
      %v2435 = vadd.f32 0.0, %v2434
      %2436 = vdwg.mxu0
      %v2437 = vadd.f32 %v2259, %v2398
      %v2438 = vadd.f32 %v2260, %v2400
      %v2439 = vadd.f32 %v2261, %v2403
      %v2440 = vadd.f32 %v2262, %v2405
      %v2441 = vadd.f32 %v2263, %v2408
      %v2442 = vadd.f32 %v2264, %v2410
      %v2443 = vadd.f32 %v2265, %v2413
      %v2444 = vadd.f32 %v2266, %v2415
      %v2445 = vadd.f32 %v2267, %v2418
      %v2446 = vadd.f32 %v2268, %v2420
      %v2447 = vadd.f32 %v2269, %v2423
      %v2448 = vadd.f32 %v2270, %v2425
      %v2449 = vadd.f32 %v2271, %v2428
      %v2450 = vadd.f32 %v2272, %v2430
      %v2451 = vadd.f32 %v2273, %v2433
      %v2452 = vadd.f32 %v2274, %v2435
      %2453 = vst [vmem:[#allocation3] sm:$0xff] %v2437
      %2454 = vst [vmem:[#allocation3 + $0x8] sm:$0xff] %v2438
      %2455 = vst [vmem:[#allocation3 + $0x10] sm:$0xff] %v2439
      %2456 = vst [vmem:[#allocation3 + $0x18] sm:$0xff] %v2440
      %2457 = vst [vmem:[#allocation3 + $0x20] sm:$0xff] %v2441
      %2458 = vst [vmem:[#allocation3 + $0x28] sm:$0xff] %v2442
      %2459 = vst [vmem:[#allocation3 + $0x30] sm:$0xff] %v2443
      %2460 = vst [vmem:[#allocation3 + $0x38] sm:$0xff] %v2444
      %2461 = vst [vmem:[#allocation3 + $0x40] sm:$0xff] %v2445
      %2462 = vst [vmem:[#allocation3 + $0x48] sm:$0xff] %v2446
      %2463 = vst [vmem:[#allocation3 + $0x50] sm:$0xff] %v2447
      %2464 = vst [vmem:[#allocation3 + $0x58] sm:$0xff] %v2448
      %2465 = vst [vmem:[#allocation3 + $0x60] sm:$0xff] %v2449
      %2466 = vst [vmem:[#allocation3 + $0x68] sm:$0xff] %v2450
      %2467 = vst [vmem:[#allocation3 + $0x70] sm:$0xff] %v2451
      %2468 = vst [vmem:[#allocation3 + $0x78] sm:$0xff] %v2452
      %v2469 = vld [vmem:[%s1944 + $0x4] sm:$0xe]
      %v2470 = vld [vmem:[%s1944 + $0x8] sm:$0xf]
      %v2471 = vld [vmem:[%s1944 + $0xc] sm:$0x1]
      %v2472 = vld [vmem:[%s1944 + $0x14] sm:$0xe]
      %v2473 = vld [vmem:[%s1944 + $0x18] sm:$0xf]
      %v2474 = vld [vmem:[%s1944 + $0x1c] sm:$0x1]
      %v2475 = vld [vmem:[%s1944 + $0x24] sm:$0xe]
      %v2476 = vld [vmem:[%s1944 + $0x28] sm:$0xf]
      %v2477 = vld [vmem:[%s1944 + $0x2c] sm:$0x1]
      %v2478 = vld [vmem:[%s1944 + $0x34] sm:$0xe]
      %v2479 = vld [vmem:[%s1944 + $0x38] sm:$0xf]
      %v2480 = vld [vmem:[%s1944 + $0x3c] sm:$0x1]
      %v2481 = vld [vmem:[%s1944 + $0x44] sm:$0xe]
      %v2482 = vld [vmem:[%s1944 + $0x48] sm:$0xf]
      %v2483 = vld [vmem:[%s1944 + $0x4c] sm:$0x1]
      %v2484 = vld [vmem:[%s1944 + $0x54] sm:$0xe]
      %v2485 = vld [vmem:[%s1944 + $0x58] sm:$0xf]
      %v2486 = vld [vmem:[%s1944 + $0x5c] sm:$0x1]
      %v2487 = vld [vmem:[%s1944 + $0x64] sm:$0xe]
      %v2488 = vld [vmem:[%s1944 + $0x68] sm:$0xf]
      %v2489 = vld [vmem:[%s1944 + $0x6c] sm:$0x1]
      %v2490 = vld [vmem:[%s1944 + $0x74] sm:$0xe]
      %v2491 = vld [vmem:[%s1944 + $0x78] sm:$0xf]
      %v2492 = vld [vmem:[%s1944 + $0x7c] sm:$0x1]
      %v2517 = vrot.slane %v2469, 5
      %v2518 = vrot.slane %v2517, 4
      %v2519 = vrot.slane %v2470, 5
      %v2520 = vsel %vm870, %v2518, %v2519
      %v2521 = vrot.slane %v2519, 4
      %v2522 = vrot.slane %v2471, 5
      %v2523 = vsel %vm870, %v2521, %v2522
      %v2524 = vrot.slane %v2472, 5
      %v2525 = vrot.slane %v2524, 4
      %v2526 = vrot.slane %v2473, 5
      %v2527 = vsel %vm870, %v2525, %v2526
      %v2528 = vrot.slane %v2526, 4
      %v2529 = vrot.slane %v2474, 5
      %v2530 = vsel %vm870, %v2528, %v2529
      %v2531 = vrot.slane %v2475, 5
      %v2532 = vrot.slane %v2531, 4
      %v2533 = vrot.slane %v2476, 5
      %v2534 = vsel %vm870, %v2532, %v2533
      %v2535 = vrot.slane %v2533, 4
      %v2536 = vrot.slane %v2477, 5
      %v2537 = vsel %vm870, %v2535, %v2536
      %v2538 = vrot.slane %v2478, 5
      %v2539 = vrot.slane %v2538, 4
      %v2540 = vrot.slane %v2479, 5
      %v2541 = vsel %vm870, %v2539, %v2540
      %v2542 = vrot.slane %v2540, 4
      %v2543 = vrot.slane %v2480, 5
      %v2544 = vsel %vm870, %v2542, %v2543
      %v2545 = vrot.slane %v2481, 5
      %v2546 = vrot.slane %v2545, 4
      %v2547 = vrot.slane %v2482, 5
      %v2548 = vsel %vm870, %v2546, %v2547
      %v2549 = vrot.slane %v2547, 4
      %v2550 = vrot.slane %v2483, 5
      %v2551 = vsel %vm870, %v2549, %v2550
      %v2552 = vrot.slane %v2484, 5
      %v2553 = vrot.slane %v2552, 4
      %v2554 = vrot.slane %v2485, 5
      %v2555 = vsel %vm870, %v2553, %v2554
      %v2556 = vrot.slane %v2554, 4
      %v2557 = vrot.slane %v2486, 5
      %v2558 = vsel %vm870, %v2556, %v2557
      %v2559 = vrot.slane %v2487, 5
      %v2560 = vrot.slane %v2559, 4
      %v2561 = vrot.slane %v2488, 5
      %v2562 = vsel %vm870, %v2560, %v2561
      %v2563 = vrot.slane %v2561, 4
      %v2564 = vrot.slane %v2489, 5
      %v2565 = vsel %vm870, %v2563, %v2564
      %v2566 = vrot.slane %v2490, 5
      %v2567 = vrot.slane %v2566, 4
      %v2568 = vrot.slane %v2491, 5
      %v2569 = vsel %vm870, %v2567, %v2568
      %v2570 = vrot.slane %v2568, 4
      %v2571 = vrot.slane %v2492, 5
      %v2572 = vsel %vm870, %v2570, %v2571
      %v2573 = vld [vmem:[#allocation3] sm:$0xff]
      %v2574 = vld [vmem:[#allocation3 + $0x8] sm:$0xff]
      %v2575 = vld [vmem:[#allocation3 + $0x10] sm:$0xff]
      %v2576 = vld [vmem:[#allocation3 + $0x18] sm:$0xff]
      %v2577 = vld [vmem:[#allocation3 + $0x20] sm:$0xff]
      %v2578 = vld [vmem:[#allocation3 + $0x28] sm:$0xff]
      %v2579 = vld [vmem:[#allocation3 + $0x30] sm:$0xff]
      %v2580 = vld [vmem:[#allocation3 + $0x38] sm:$0xff]
      %v2581 = vld [vmem:[#allocation3 + $0x40] sm:$0xff]
      %v2582 = vld [vmem:[#allocation3 + $0x48] sm:$0xff]
      %v2583 = vld [vmem:[#allocation3 + $0x50] sm:$0xff]
      %v2584 = vld [vmem:[#allocation3 + $0x58] sm:$0xff]
      %v2585 = vld [vmem:[#allocation3 + $0x60] sm:$0xff]
      %v2586 = vld [vmem:[#allocation3 + $0x68] sm:$0xff]
      %v2587 = vld [vmem:[#allocation3 + $0x70] sm:$0xff]
      %v2588 = vld [vmem:[#allocation3 + $0x78] sm:$0xff]
      %s2589 = scalar_lea.vmem %s1, 512
      %v2590 = vld [vmem:[%s2589] sm:$0xf]
      %v2591 = vld [vmem:[%s2589 + $0x4] sm:$0xf]
      %v2592 = vld [vmem:[%s2589 + $0x8] sm:$0xf]
      %v2593 = vld [vmem:[%s2589 + $0xc] sm:$0xf]
      %v2594 = vld [vmem:[%s2589 + $0x10] sm:$0xf]
      %v2595 = vld [vmem:[%s2589 + $0x14] sm:$0xf]
      %v2596 = vld [vmem:[%s2589 + $0x18] sm:$0xf]
      %v2597 = vld [vmem:[%s2589 + $0x1c] sm:$0xf]
      %v2598 = vld [vmem:[%s2589 + $0x20] sm:$0xf]
      %v2599 = vld [vmem:[%s2589 + $0x24] sm:$0xf]
      %v2600 = vld [vmem:[%s2589 + $0x28] sm:$0xf]
      %v2601 = vld [vmem:[%s2589 + $0x2c] sm:$0xf]
      %v2602 = vld [vmem:[%s2589 + $0x30] sm:$0xf]
      %v2603 = vld [vmem:[%s2589 + $0x34] sm:$0xf]
      %v2604 = vld [vmem:[%s2589 + $0x38] sm:$0xf]
      %v2605 = vld [vmem:[%s2589 + $0x3c] sm:$0xf]
      %v2606 = vunpack.c.l.b16 %v2520
      %v2607 = vunpack.c.l.b16 %v2523
      %v2608 = vunpack.c.l.b16 %v2527
      %v2609 = vunpack.c.l.b16 %v2530
      %v2610 = vunpack.c.l.b16 %v2534
      %v2611 = vunpack.c.l.b16 %v2537
      %v2612 = vunpack.c.l.b16 %v2541
      %v2613 = vunpack.c.l.b16 %v2544
      %v2614 = vunpack.c.l.b16 %v2548
      %v2615 = vunpack.c.l.b16 %v2551
      %v2616 = vunpack.c.l.b16 %v2555
      %v2617 = vunpack.c.l.b16 %v2558
      %v2618 = vunpack.c.l.b16 %v2562
      %v2619 = vunpack.c.l.b16 %v2565
      %v2620 = vunpack.c.l.b16 %v2569
      %v2621 = vunpack.c.l.b16 %v2572
      %v2622 = vpack.c.b16 %v2607, %v2606
      %v2623 = vpack.c.b16 %v2609, %v2608
      %v2624 = vpack.c.b16 %v2611, %v2610
      %v2625 = vpack.c.b16 %v2613, %v2612
      %v2626 = vpack.c.b16 %v2615, %v2614
      %v2627 = vpack.c.b16 %v2617, %v2616
      %v2628 = vpack.c.b16 %v2619, %v2618
      %v2629 = vpack.c.b16 %v2621, %v2620
      %v2654 = vunpack.c.l.b16 %v2590
      %v2655 = vunpack.c.l.b16 %v2591
      %v2656 = vunpack.c.l.b16 %v2592
      %v2657 = vunpack.c.l.b16 %v2593
      %v2658 = vunpack.c.l.b16 %v2594
      %v2659 = vunpack.c.l.b16 %v2595
      %v2660 = vunpack.c.l.b16 %v2596
      %v2661 = vunpack.c.l.b16 %v2597
      %v2662 = vunpack.c.l.b16 %v2598
      %v2663 = vunpack.c.l.b16 %v2599
      %v2664 = vunpack.c.l.b16 %v2600
      %v2665 = vunpack.c.l.b16 %v2601
      %v2666 = vunpack.c.l.b16 %v2602
      %v2667 = vunpack.c.l.b16 %v2603
      %v2668 = vunpack.c.l.b16 %v2604
      %v2669 = vunpack.c.l.b16 %v2605
      %v2670 = vpack.c.b16 %v2655, %v2654
      %v2671 = vpack.c.b16 %v2657, %v2656
      %v2672 = vpack.c.b16 %v2659, %v2658
      %v2673 = vpack.c.b16 %v2661, %v2660
      %v2674 = vpack.c.b16 %v2663, %v2662
      %v2675 = vpack.c.b16 %v2665, %v2664
      %v2676 = vpack.c.b16 %v2667, %v2666
      %v2677 = vpack.c.b16 %v2669, %v2668
      %2686 = vmatpush.bf16.msra.mxu0 %v2677
      %2687 = vmatpush.bf16.msra.mxu0 %v2676
      %2688 = vmatpush.bf16.msra.mxu0 %v2675
      %2689 = vmatpush.bf16.msra.mxu0 %v2674
      %2690 = vmatpush.bf16.msra.mxu0 %v2673
      %2691 = vmatpush.bf16.msra.mxu0 %v2672
      %2692 = vmatpush.bf16.msra.mxu0 %v2671
      %2693 = vmatpush.bf16.msra.mxu0 %v2670
      %2694 = vmatmul.bf16.gmra.mxu0 %v2622
      %v2695 = vpop.f32.mrf.mxu0
      %v2696 = vadd.f32 0.0, %v2695
      %v2697 = vpop.f32.mrf.mxu0
      %v2698 = vadd.f32 0.0, %v2697
      %2699 = vmatmul.bf16.gmra.mxu0 %v2623
      %v2700 = vpop.f32.mrf.mxu0
      %v2701 = vadd.f32 0.0, %v2700
      %v2702 = vpop.f32.mrf.mxu0
      %v2703 = vadd.f32 0.0, %v2702
      %2704 = vmatmul.bf16.gmra.mxu0 %v2624
      %v2705 = vpop.f32.mrf.mxu0
      %v2706 = vadd.f32 0.0, %v2705
      %v2707 = vpop.f32.mrf.mxu0
      %v2708 = vadd.f32 0.0, %v2707
      %2709 = vmatmul.bf16.gmra.mxu0 %v2625
      %v2710 = vpop.f32.mrf.mxu0
      %v2711 = vadd.f32 0.0, %v2710
      %v2712 = vpop.f32.mrf.mxu0
      %v2713 = vadd.f32 0.0, %v2712
      %2714 = vmatmul.bf16.gmra.mxu0 %v2626
      %v2715 = vpop.f32.mrf.mxu0
      %v2716 = vadd.f32 0.0, %v2715
      %v2717 = vpop.f32.mrf.mxu0
      %v2718 = vadd.f32 0.0, %v2717
      %2719 = vmatmul.bf16.gmra.mxu0 %v2627
      %v2720 = vpop.f32.mrf.mxu0
      %v2721 = vadd.f32 0.0, %v2720
      %v2722 = vpop.f32.mrf.mxu0
      %v2723 = vadd.f32 0.0, %v2722
      %2724 = vmatmul.bf16.gmra.mxu0 %v2628
      %v2725 = vpop.f32.mrf.mxu0
      %v2726 = vadd.f32 0.0, %v2725
      %v2727 = vpop.f32.mrf.mxu0
      %v2728 = vadd.f32 0.0, %v2727
      %2729 = vmatmul.bf16.gmra.mxu0 %v2629
      %v2730 = vpop.f32.mrf.mxu0
      %v2731 = vadd.f32 0.0, %v2730
      %v2732 = vpop.f32.mrf.mxu0
      %v2733 = vadd.f32 0.0, %v2732
      %2734 = vdwg.mxu0
      %v2735 = vadd.f32 %v2573, %v2696
      %v2736 = vadd.f32 %v2574, %v2698
      %v2737 = vadd.f32 %v2575, %v2701
      %v2738 = vadd.f32 %v2576, %v2703
      %v2739 = vadd.f32 %v2577, %v2706
      %v2740 = vadd.f32 %v2578, %v2708
      %v2741 = vadd.f32 %v2579, %v2711
      %v2742 = vadd.f32 %v2580, %v2713
      %v2743 = vadd.f32 %v2581, %v2716
      %v2744 = vadd.f32 %v2582, %v2718
      %v2745 = vadd.f32 %v2583, %v2721
      %v2746 = vadd.f32 %v2584, %v2723
      %v2747 = vadd.f32 %v2585, %v2726
      %v2748 = vadd.f32 %v2586, %v2728
      %v2749 = vadd.f32 %v2587, %v2731
      %v2750 = vadd.f32 %v2588, %v2733
      %2751 = vst [vmem:[#allocation3] sm:$0xff] %v2735
      %2752 = vst [vmem:[#allocation3 + $0x8] sm:$0xff] %v2736
      %2753 = vst [vmem:[#allocation3 + $0x10] sm:$0xff] %v2737
      %2754 = vst [vmem:[#allocation3 + $0x18] sm:$0xff] %v2738
      %2755 = vst [vmem:[#allocation3 + $0x20] sm:$0xff] %v2739
      %2756 = vst [vmem:[#allocation3 + $0x28] sm:$0xff] %v2740
      %2757 = vst [vmem:[#allocation3 + $0x30] sm:$0xff] %v2741
      %2758 = vst [vmem:[#allocation3 + $0x38] sm:$0xff] %v2742
      %2759 = vst [vmem:[#allocation3 + $0x40] sm:$0xff] %v2743
      %2760 = vst [vmem:[#allocation3 + $0x48] sm:$0xff] %v2744
      %2761 = vst [vmem:[#allocation3 + $0x50] sm:$0xff] %v2745
      %2762 = vst [vmem:[#allocation3 + $0x58] sm:$0xff] %v2746
      %2763 = vst [vmem:[#allocation3 + $0x60] sm:$0xff] %v2747
      %2764 = vst [vmem:[#allocation3 + $0x68] sm:$0xff] %v2748
      %2765 = vst [vmem:[#allocation3 + $0x70] sm:$0xff] %v2749
      %2766 = vst [vmem:[#allocation3 + $0x78] sm:$0xff] %v2750
      %s2767 = scalar_lea.vmem [#allocation2], 64
      %v2768 = vld [vmem:[%s2767] sm:$0xc]
      %v2769 = vld [vmem:[%s2767 + $0x4] sm:$0xf]
      %v2770 = vld [vmem:[%s2767 + $0x8] sm:$0x3]
      %v2771 = vld [vmem:[%s2767 + $0x10] sm:$0xc]
      %v2772 = vld [vmem:[%s2767 + $0x14] sm:$0xf]
      %v2773 = vld [vmem:[%s2767 + $0x18] sm:$0x3]
      %v2774 = vld [vmem:[%s2767 + $0x20] sm:$0xc]
      %v2775 = vld [vmem:[%s2767 + $0x24] sm:$0xf]
      %v2776 = vld [vmem:[%s2767 + $0x28] sm:$0x3]
      %v2777 = vld [vmem:[%s2767 + $0x30] sm:$0xc]
      %v2778 = vld [vmem:[%s2767 + $0x34] sm:$0xf]
      %v2779 = vld [vmem:[%s2767 + $0x38] sm:$0x3]
      %v2780 = vld [vmem:[%s2767 + $0x40] sm:$0xc]
      %v2781 = vld [vmem:[%s2767 + $0x44] sm:$0xf]
      %v2782 = vld [vmem:[%s2767 + $0x48] sm:$0x3]
      %v2783 = vld [vmem:[%s2767 + $0x50] sm:$0xc]
      %v2784 = vld [vmem:[%s2767 + $0x54] sm:$0xf]
      %v2785 = vld [vmem:[%s2767 + $0x58] sm:$0x3]
      %v2786 = vld [vmem:[%s2767 + $0x60] sm:$0xc]
      %v2787 = vld [vmem:[%s2767 + $0x64] sm:$0xf]
      %v2788 = vld [vmem:[%s2767 + $0x68] sm:$0x3]
      %v2789 = vld [vmem:[%s2767 + $0x70] sm:$0xc]
      %v2790 = vld [vmem:[%s2767 + $0x74] sm:$0xf]
      %v2791 = vld [vmem:[%s2767 + $0x78] sm:$0x3]
      %vm2816 = vcmask 1041408
      %vm2817 = vcmask 1045508
      %vm2818 = vmor %vm2816, %vm2817
      %v2819 = vrot.slane %v2768, 6
      %v2820 = vrot.slane %v2819, 4
      %v2821 = vrot.slane %v2769, 6
      %v2822 = vsel %vm2818, %v2820, %v2821
      %v2823 = vrot.slane %v2821, 4
      %v2824 = vrot.slane %v2770, 6
      %v2825 = vsel %vm2818, %v2823, %v2824
      %v2826 = vrot.slane %v2771, 6
      %v2827 = vrot.slane %v2826, 4
      %v2828 = vrot.slane %v2772, 6
      %v2829 = vsel %vm2818, %v2827, %v2828
      %v2830 = vrot.slane %v2828, 4
      %v2831 = vrot.slane %v2773, 6
      %v2832 = vsel %vm2818, %v2830, %v2831
      %v2833 = vrot.slane %v2774, 6
      %v2834 = vrot.slane %v2833, 4
      %v2835 = vrot.slane %v2775, 6
      %v2836 = vsel %vm2818, %v2834, %v2835
      %v2837 = vrot.slane %v2835, 4
      %v2838 = vrot.slane %v2776, 6
      %v2839 = vsel %vm2818, %v2837, %v2838
      %v2840 = vrot.slane %v2777, 6
      %v2841 = vrot.slane %v2840, 4
      %v2842 = vrot.slane %v2778, 6
      %v2843 = vsel %vm2818, %v2841, %v2842
      %v2844 = vrot.slane %v2842, 4
      %v2845 = vrot.slane %v2779, 6
      %v2846 = vsel %vm2818, %v2844, %v2845
      %v2847 = vrot.slane %v2780, 6
      %v2848 = vrot.slane %v2847, 4
      %v2849 = vrot.slane %v2781, 6
      %v2850 = vsel %vm2818, %v2848, %v2849
      %v2851 = vrot.slane %v2849, 4
      %v2852 = vrot.slane %v2782, 6
      %v2853 = vsel %vm2818, %v2851, %v2852
      %v2854 = vrot.slane %v2783, 6
      %v2855 = vrot.slane %v2854, 4
      %v2856 = vrot.slane %v2784, 6
      %v2857 = vsel %vm2818, %v2855, %v2856
      %v2858 = vrot.slane %v2856, 4
      %v2859 = vrot.slane %v2785, 6
      %v2860 = vsel %vm2818, %v2858, %v2859
      %v2861 = vrot.slane %v2786, 6
      %v2862 = vrot.slane %v2861, 4
      %v2863 = vrot.slane %v2787, 6
      %v2864 = vsel %vm2818, %v2862, %v2863
      %v2865 = vrot.slane %v2863, 4
      %v2866 = vrot.slane %v2788, 6
      %v2867 = vsel %vm2818, %v2865, %v2866
      %v2868 = vrot.slane %v2789, 6
      %v2869 = vrot.slane %v2868, 4
      %v2870 = vrot.slane %v2790, 6
      %v2871 = vsel %vm2818, %v2869, %v2870
      %v2872 = vrot.slane %v2870, 4
      %v2873 = vrot.slane %v2791, 6
      %v2874 = vsel %vm2818, %v2872, %v2873
      %v2875 = vld [vmem:[#allocation3] sm:$0xff]
      %v2876 = vld [vmem:[#allocation3 + $0x8] sm:$0xff]
      %v2877 = vld [vmem:[#allocation3 + $0x10] sm:$0xff]
      %v2878 = vld [vmem:[#allocation3 + $0x18] sm:$0xff]
      %v2879 = vld [vmem:[#allocation3 + $0x20] sm:$0xff]
      %v2880 = vld [vmem:[#allocation3 + $0x28] sm:$0xff]
      %v2881 = vld [vmem:[#allocation3 + $0x30] sm:$0xff]
      %v2882 = vld [vmem:[#allocation3 + $0x38] sm:$0xff]
      %v2883 = vld [vmem:[#allocation3 + $0x40] sm:$0xff]
      %v2884 = vld [vmem:[#allocation3 + $0x48] sm:$0xff]
      %v2885 = vld [vmem:[#allocation3 + $0x50] sm:$0xff]
      %v2886 = vld [vmem:[#allocation3 + $0x58] sm:$0xff]
      %v2887 = vld [vmem:[#allocation3 + $0x60] sm:$0xff]
      %v2888 = vld [vmem:[#allocation3 + $0x68] sm:$0xff]
      %v2889 = vld [vmem:[#allocation3 + $0x70] sm:$0xff]
      %v2890 = vld [vmem:[#allocation3 + $0x78] sm:$0xff]
      %s2891 = scalar_lea.vmem %s1, 576
      %v2892 = vld [vmem:[%s2891] sm:$0xf]
      %v2893 = vld [vmem:[%s2891 + $0x4] sm:$0xf]
      %v2894 = vld [vmem:[%s2891 + $0x8] sm:$0xf]
      %v2895 = vld [vmem:[%s2891 + $0xc] sm:$0xf]
      %v2896 = vld [vmem:[%s2891 + $0x10] sm:$0xf]
      %v2897 = vld [vmem:[%s2891 + $0x14] sm:$0xf]
      %v2898 = vld [vmem:[%s2891 + $0x18] sm:$0xf]
      %v2899 = vld [vmem:[%s2891 + $0x1c] sm:$0xf]
      %v2900 = vld [vmem:[%s2891 + $0x20] sm:$0xf]
      %v2901 = vld [vmem:[%s2891 + $0x24] sm:$0xf]
      %v2902 = vld [vmem:[%s2891 + $0x28] sm:$0xf]
      %v2903 = vld [vmem:[%s2891 + $0x2c] sm:$0xf]
      %v2904 = vld [vmem:[%s2891 + $0x30] sm:$0xf]
      %v2905 = vld [vmem:[%s2891 + $0x34] sm:$0xf]
      %v2906 = vld [vmem:[%s2891 + $0x38] sm:$0xf]
      %v2907 = vld [vmem:[%s2891 + $0x3c] sm:$0xf]
      %v2908 = vunpack.c.l.b16 %v2822
      %v2909 = vunpack.c.l.b16 %v2825
      %v2910 = vunpack.c.l.b16 %v2829
      %v2911 = vunpack.c.l.b16 %v2832
      %v2912 = vunpack.c.l.b16 %v2836
      %v2913 = vunpack.c.l.b16 %v2839
      %v2914 = vunpack.c.l.b16 %v2843
      %v2915 = vunpack.c.l.b16 %v2846
      %v2916 = vunpack.c.l.b16 %v2850
      %v2917 = vunpack.c.l.b16 %v2853
      %v2918 = vunpack.c.l.b16 %v2857
      %v2919 = vunpack.c.l.b16 %v2860
      %v2920 = vunpack.c.l.b16 %v2864
      %v2921 = vunpack.c.l.b16 %v2867
      %v2922 = vunpack.c.l.b16 %v2871
      %v2923 = vunpack.c.l.b16 %v2874
      %v2924 = vpack.c.b16 %v2909, %v2908
      %v2925 = vpack.c.b16 %v2911, %v2910
      %v2926 = vpack.c.b16 %v2913, %v2912
      %v2927 = vpack.c.b16 %v2915, %v2914
      %v2928 = vpack.c.b16 %v2917, %v2916
      %v2929 = vpack.c.b16 %v2919, %v2918
      %v2930 = vpack.c.b16 %v2921, %v2920
      %v2931 = vpack.c.b16 %v2923, %v2922
      %v2956 = vunpack.c.l.b16 %v2892
      %v2957 = vunpack.c.l.b16 %v2893
      %v2958 = vunpack.c.l.b16 %v2894
      %v2959 = vunpack.c.l.b16 %v2895
      %v2960 = vunpack.c.l.b16 %v2896
      %v2961 = vunpack.c.l.b16 %v2897
      %v2962 = vunpack.c.l.b16 %v2898
      %v2963 = vunpack.c.l.b16 %v2899
      %v2964 = vunpack.c.l.b16 %v2900
      %v2965 = vunpack.c.l.b16 %v2901
      %v2966 = vunpack.c.l.b16 %v2902
      %v2967 = vunpack.c.l.b16 %v2903
      %v2968 = vunpack.c.l.b16 %v2904
      %v2969 = vunpack.c.l.b16 %v2905
      %v2970 = vunpack.c.l.b16 %v2906
      %v2971 = vunpack.c.l.b16 %v2907
      %v2972 = vpack.c.b16 %v2957, %v2956
      %v2973 = vpack.c.b16 %v2959, %v2958
      %v2974 = vpack.c.b16 %v2961, %v2960
      %v2975 = vpack.c.b16 %v2963, %v2962
      %v2976 = vpack.c.b16 %v2965, %v2964
      %v2977 = vpack.c.b16 %v2967, %v2966
      %v2978 = vpack.c.b16 %v2969, %v2968
      %v2979 = vpack.c.b16 %v2971, %v2970
      %2988 = vmatpush.bf16.msra.mxu0 %v2979
      %2989 = vmatpush.bf16.msra.mxu0 %v2978
      %2990 = vmatpush.bf16.msra.mxu0 %v2977
      %2991 = vmatpush.bf16.msra.mxu0 %v2976
      %2992 = vmatpush.bf16.msra.mxu0 %v2975
      %2993 = vmatpush.bf16.msra.mxu0 %v2974
      %2994 = vmatpush.bf16.msra.mxu0 %v2973
      %2995 = vmatpush.bf16.msra.mxu0 %v2972
      %2996 = vmatmul.bf16.gmra.mxu0 %v2924
      %v2997 = vpop.f32.mrf.mxu0
      %v2998 = vadd.f32 0.0, %v2997
      %v2999 = vpop.f32.mrf.mxu0
      %v3000 = vadd.f32 0.0, %v2999
      %3001 = vmatmul.bf16.gmra.mxu0 %v2925
      %v3002 = vpop.f32.mrf.mxu0
      %v3003 = vadd.f32 0.0, %v3002
      %v3004 = vpop.f32.mrf.mxu0
      %v3005 = vadd.f32 0.0, %v3004
      %3006 = vmatmul.bf16.gmra.mxu0 %v2926
      %v3007 = vpop.f32.mrf.mxu0
      %v3008 = vadd.f32 0.0, %v3007
      %v3009 = vpop.f32.mrf.mxu0
      %v3010 = vadd.f32 0.0, %v3009
      %3011 = vmatmul.bf16.gmra.mxu0 %v2927
      %v3012 = vpop.f32.mrf.mxu0
      %v3013 = vadd.f32 0.0, %v3012
      %v3014 = vpop.f32.mrf.mxu0
      %v3015 = vadd.f32 0.0, %v3014
      %3016 = vmatmul.bf16.gmra.mxu0 %v2928
      %v3017 = vpop.f32.mrf.mxu0
      %v3018 = vadd.f32 0.0, %v3017
      %v3019 = vpop.f32.mrf.mxu0
      %v3020 = vadd.f32 0.0, %v3019
      %3021 = vmatmul.bf16.gmra.mxu0 %v2929
      %v3022 = vpop.f32.mrf.mxu0
      %v3023 = vadd.f32 0.0, %v3022
      %v3024 = vpop.f32.mrf.mxu0
      %v3025 = vadd.f32 0.0, %v3024
      %3026 = vmatmul.bf16.gmra.mxu0 %v2930
      %v3027 = vpop.f32.mrf.mxu0
      %v3028 = vadd.f32 0.0, %v3027
      %v3029 = vpop.f32.mrf.mxu0
      %v3030 = vadd.f32 0.0, %v3029
      %3031 = vmatmul.bf16.gmra.mxu0 %v2931
      %v3032 = vpop.f32.mrf.mxu0
      %v3033 = vadd.f32 0.0, %v3032
      %v3034 = vpop.f32.mrf.mxu0
      %v3035 = vadd.f32 0.0, %v3034
      %3036 = vdwg.mxu0
      %v3037 = vadd.f32 %v2875, %v2998
      %v3038 = vadd.f32 %v2876, %v3000
      %v3039 = vadd.f32 %v2877, %v3003
      %v3040 = vadd.f32 %v2878, %v3005
      %v3041 = vadd.f32 %v2879, %v3008
      %v3042 = vadd.f32 %v2880, %v3010
      %v3043 = vadd.f32 %v2881, %v3013
      %v3044 = vadd.f32 %v2882, %v3015
      %v3045 = vadd.f32 %v2883, %v3018
      %v3046 = vadd.f32 %v2884, %v3020
      %v3047 = vadd.f32 %v2885, %v3023
      %v3048 = vadd.f32 %v2886, %v3025
      %v3049 = vadd.f32 %v2887, %v3028
      %v3050 = vadd.f32 %v2888, %v3030
      %v3051 = vadd.f32 %v2889, %v3033
      %v3052 = vadd.f32 %v2890, %v3035
      %3053 = vst [vmem:[#allocation3] sm:$0xff] %v3037
      %3054 = vst [vmem:[#allocation3 + $0x8] sm:$0xff] %v3038
      %3055 = vst [vmem:[#allocation3 + $0x10] sm:$0xff] %v3039
      %3056 = vst [vmem:[#allocation3 + $0x18] sm:$0xff] %v3040
      %3057 = vst [vmem:[#allocation3 + $0x20] sm:$0xff] %v3041
      %3058 = vst [vmem:[#allocation3 + $0x28] sm:$0xff] %v3042
      %3059 = vst [vmem:[#allocation3 + $0x30] sm:$0xff] %v3043
      %3060 = vst [vmem:[#allocation3 + $0x38] sm:$0xff] %v3044
      %3061 = vst [vmem:[#allocation3 + $0x40] sm:$0xff] %v3045
      %3062 = vst [vmem:[#allocation3 + $0x48] sm:$0xff] %v3046
      %3063 = vst [vmem:[#allocation3 + $0x50] sm:$0xff] %v3047
      %3064 = vst [vmem:[#allocation3 + $0x58] sm:$0xff] %v3048
      %3065 = vst [vmem:[#allocation3 + $0x60] sm:$0xff] %v3049
      %3066 = vst [vmem:[#allocation3 + $0x68] sm:$0xff] %v3050
      %3067 = vst [vmem:[#allocation3 + $0x70] sm:$0xff] %v3051
      %3068 = vst [vmem:[#allocation3 + $0x78] sm:$0xff] %v3052
      %v3069 = vld [vmem:[%s2767 + $0x4] sm:$0xf]
      %v3070 = vld [vmem:[%s2767 + $0x8] sm:$0xf]
      %v3071 = vld [vmem:[%s2767 + $0x14] sm:$0xf]
      %v3072 = vld [vmem:[%s2767 + $0x18] sm:$0xf]
      %v3073 = vld [vmem:[%s2767 + $0x24] sm:$0xf]
      %v3074 = vld [vmem:[%s2767 + $0x28] sm:$0xf]
      %v3075 = vld [vmem:[%s2767 + $0x34] sm:$0xf]
      %v3076 = vld [vmem:[%s2767 + $0x38] sm:$0xf]
      %v3077 = vld [vmem:[%s2767 + $0x44] sm:$0xf]
      %v3078 = vld [vmem:[%s2767 + $0x48] sm:$0xf]
      %v3079 = vld [vmem:[%s2767 + $0x54] sm:$0xf]
      %v3080 = vld [vmem:[%s2767 + $0x58] sm:$0xf]
      %v3081 = vld [vmem:[%s2767 + $0x64] sm:$0xf]
      %v3082 = vld [vmem:[%s2767 + $0x68] sm:$0xf]
      %v3083 = vld [vmem:[%s2767 + $0x74] sm:$0xf]
      %v3084 = vld [vmem:[%s2767 + $0x78] sm:$0xf]
      %v3085 = vld [vmem:[#allocation3] sm:$0xff]
      %v3086 = vld [vmem:[#allocation3 + $0x8] sm:$0xff]
      %v3087 = vld [vmem:[#allocation3 + $0x10] sm:$0xff]
      %v3088 = vld [vmem:[#allocation3 + $0x18] sm:$0xff]
      %v3089 = vld [vmem:[#allocation3 + $0x20] sm:$0xff]
      %v3090 = vld [vmem:[#allocation3 + $0x28] sm:$0xff]
      %v3091 = vld [vmem:[#allocation3 + $0x30] sm:$0xff]
      %v3092 = vld [vmem:[#allocation3 + $0x38] sm:$0xff]
      %v3093 = vld [vmem:[#allocation3 + $0x40] sm:$0xff]
      %v3094 = vld [vmem:[#allocation3 + $0x48] sm:$0xff]
      %v3095 = vld [vmem:[#allocation3 + $0x50] sm:$0xff]
      %v3096 = vld [vmem:[#allocation3 + $0x58] sm:$0xff]
      %v3097 = vld [vmem:[#allocation3 + $0x60] sm:$0xff]
      %v3098 = vld [vmem:[#allocation3 + $0x68] sm:$0xff]
      %v3099 = vld [vmem:[#allocation3 + $0x70] sm:$0xff]
      %v3100 = vld [vmem:[#allocation3 + $0x78] sm:$0xff]
      %s3101 = scalar_lea.vmem %s1, 640
      %v3102 = vld [vmem:[%s3101] sm:$0xf]
      %v3103 = vld [vmem:[%s3101 + $0x4] sm:$0xf]
      %v3104 = vld [vmem:[%s3101 + $0x8] sm:$0xf]
      %v3105 = vld [vmem:[%s3101 + $0xc] sm:$0xf]
      %v3106 = vld [vmem:[%s3101 + $0x10] sm:$0xf]
      %v3107 = vld [vmem:[%s3101 + $0x14] sm:$0xf]
      %v3108 = vld [vmem:[%s3101 + $0x18] sm:$0xf]
      %v3109 = vld [vmem:[%s3101 + $0x1c] sm:$0xf]
      %v3110 = vld [vmem:[%s3101 + $0x20] sm:$0xf]
      %v3111 = vld [vmem:[%s3101 + $0x24] sm:$0xf]
      %v3112 = vld [vmem:[%s3101 + $0x28] sm:$0xf]
      %v3113 = vld [vmem:[%s3101 + $0x2c] sm:$0xf]
      %v3114 = vld [vmem:[%s3101 + $0x30] sm:$0xf]
      %v3115 = vld [vmem:[%s3101 + $0x34] sm:$0xf]
      %v3116 = vld [vmem:[%s3101 + $0x38] sm:$0xf]
      %v3117 = vld [vmem:[%s3101 + $0x3c] sm:$0xf]
      %v3134 = vunpack.c.l.b16 %v3069
      %v3135 = vunpack.c.l.b16 %v3070
      %v3136 = vunpack.c.l.b16 %v3071
      %v3137 = vunpack.c.l.b16 %v3072
      %v3138 = vunpack.c.l.b16 %v3073
      %v3139 = vunpack.c.l.b16 %v3074
      %v3140 = vunpack.c.l.b16 %v3075
      %v3141 = vunpack.c.l.b16 %v3076
      %v3142 = vunpack.c.l.b16 %v3077
      %v3143 = vunpack.c.l.b16 %v3078
      %v3144 = vunpack.c.l.b16 %v3079
      %v3145 = vunpack.c.l.b16 %v3080
      %v3146 = vunpack.c.l.b16 %v3081
      %v3147 = vunpack.c.l.b16 %v3082
      %v3148 = vunpack.c.l.b16 %v3083
      %v3149 = vunpack.c.l.b16 %v3084
      %v3150 = vpack.c.b16 %v3135, %v3134
      %v3151 = vpack.c.b16 %v3137, %v3136
      %v3152 = vpack.c.b16 %v3139, %v3138
      %v3153 = vpack.c.b16 %v3141, %v3140
      %v3154 = vpack.c.b16 %v3143, %v3142
      %v3155 = vpack.c.b16 %v3145, %v3144
      %v3156 = vpack.c.b16 %v3147, %v3146
      %v3157 = vpack.c.b16 %v3149, %v3148
      %v3182 = vunpack.c.l.b16 %v3102
      %v3183 = vunpack.c.l.b16 %v3103
      %v3184 = vunpack.c.l.b16 %v3104
      %v3185 = vunpack.c.l.b16 %v3105
      %v3186 = vunpack.c.l.b16 %v3106
      %v3187 = vunpack.c.l.b16 %v3107
      %v3188 = vunpack.c.l.b16 %v3108
      %v3189 = vunpack.c.l.b16 %v3109
      %v3190 = vunpack.c.l.b16 %v3110
      %v3191 = vunpack.c.l.b16 %v3111
      %v3192 = vunpack.c.l.b16 %v3112
      %v3193 = vunpack.c.l.b16 %v3113
      %v3194 = vunpack.c.l.b16 %v3114
      %v3195 = vunpack.c.l.b16 %v3115
      %v3196 = vunpack.c.l.b16 %v3116
      %v3197 = vunpack.c.l.b16 %v3117
      %v3198 = vpack.c.b16 %v3183, %v3182
      %v3199 = vpack.c.b16 %v3185, %v3184
      %v3200 = vpack.c.b16 %v3187, %v3186
      %v3201 = vpack.c.b16 %v3189, %v3188
      %v3202 = vpack.c.b16 %v3191, %v3190
      %v3203 = vpack.c.b16 %v3193, %v3192
      %v3204 = vpack.c.b16 %v3195, %v3194
      %v3205 = vpack.c.b16 %v3197, %v3196
      %3214 = vmatpush.bf16.msra.mxu0 %v3205
      %3215 = vmatpush.bf16.msra.mxu0 %v3204
      %3216 = vmatpush.bf16.msra.mxu0 %v3203
      %3217 = vmatpush.bf16.msra.mxu0 %v3202
      %3218 = vmatpush.bf16.msra.mxu0 %v3201
      %3219 = vmatpush.bf16.msra.mxu0 %v3200
      %3220 = vmatpush.bf16.msra.mxu0 %v3199
      %3221 = vmatpush.bf16.msra.mxu0 %v3198
      %3222 = vmatmul.bf16.gmra.mxu0 %v3150
      %v3223 = vpop.f32.mrf.mxu0
      %v3224 = vadd.f32 0.0, %v3223
      %v3225 = vpop.f32.mrf.mxu0
      %v3226 = vadd.f32 0.0, %v3225
      %3227 = vmatmul.bf16.gmra.mxu0 %v3151
      %v3228 = vpop.f32.mrf.mxu0
      %v3229 = vadd.f32 0.0, %v3228
      %v3230 = vpop.f32.mrf.mxu0
      %v3231 = vadd.f32 0.0, %v3230
      %3232 = vmatmul.bf16.gmra.mxu0 %v3152
      %v3233 = vpop.f32.mrf.mxu0
      %v3234 = vadd.f32 0.0, %v3233
      %v3235 = vpop.f32.mrf.mxu0
      %v3236 = vadd.f32 0.0, %v3235
      %3237 = vmatmul.bf16.gmra.mxu0 %v3153
      %v3238 = vpop.f32.mrf.mxu0
      %v3239 = vadd.f32 0.0, %v3238
      %v3240 = vpop.f32.mrf.mxu0
      %v3241 = vadd.f32 0.0, %v3240
      %3242 = vmatmul.bf16.gmra.mxu0 %v3154
      %v3243 = vpop.f32.mrf.mxu0
      %v3244 = vadd.f32 0.0, %v3243
      %v3245 = vpop.f32.mrf.mxu0
      %v3246 = vadd.f32 0.0, %v3245
      %3247 = vmatmul.bf16.gmra.mxu0 %v3155
      %v3248 = vpop.f32.mrf.mxu0
      %v3249 = vadd.f32 0.0, %v3248
      %v3250 = vpop.f32.mrf.mxu0
      %v3251 = vadd.f32 0.0, %v3250
      %3252 = vmatmul.bf16.gmra.mxu0 %v3156
      %v3253 = vpop.f32.mrf.mxu0
      %v3254 = vadd.f32 0.0, %v3253
      %v3255 = vpop.f32.mrf.mxu0
      %v3256 = vadd.f32 0.0, %v3255
      %3257 = vmatmul.bf16.gmra.mxu0 %v3157
      %v3258 = vpop.f32.mrf.mxu0
      %v3259 = vadd.f32 0.0, %v3258
      %v3260 = vpop.f32.mrf.mxu0
      %v3261 = vadd.f32 0.0, %v3260
      %3262 = vdwg.mxu0
      %v3263 = vadd.f32 %v3085, %v3224
      %v3264 = vadd.f32 %v3086, %v3226
      %v3265 = vadd.f32 %v3087, %v3229
      %v3266 = vadd.f32 %v3088, %v3231
      %v3267 = vadd.f32 %v3089, %v3234
      %v3268 = vadd.f32 %v3090, %v3236
      %v3269 = vadd.f32 %v3091, %v3239
      %v3270 = vadd.f32 %v3092, %v3241
      %v3271 = vadd.f32 %v3093, %v3244
      %v3272 = vadd.f32 %v3094, %v3246
      %v3273 = vadd.f32 %v3095, %v3249
      %v3274 = vadd.f32 %v3096, %v3251
      %v3275 = vadd.f32 %v3097, %v3254
      %v3276 = vadd.f32 %v3098, %v3256
      %v3277 = vadd.f32 %v3099, %v3259
      %v3278 = vadd.f32 %v3100, %v3261
      %3279 = vst [vmem:[#allocation3] sm:$0xff] %v3263
      %3280 = vst [vmem:[#allocation3 + $0x8] sm:$0xff] %v3264
      %3281 = vst [vmem:[#allocation3 + $0x10] sm:$0xff] %v3265
      %3282 = vst [vmem:[#allocation3 + $0x18] sm:$0xff] %v3266
      %3283 = vst [vmem:[#allocation3 + $0x20] sm:$0xff] %v3267
      %3284 = vst [vmem:[#allocation3 + $0x28] sm:$0xff] %v3268
      %3285 = vst [vmem:[#allocation3 + $0x30] sm:$0xff] %v3269
      %3286 = vst [vmem:[#allocation3 + $0x38] sm:$0xff] %v3270
      %3287 = vst [vmem:[#allocation3 + $0x40] sm:$0xff] %v3271
      %3288 = vst [vmem:[#allocation3 + $0x48] sm:$0xff] %v3272
      %3289 = vst [vmem:[#allocation3 + $0x50] sm:$0xff] %v3273
      %3290 = vst [vmem:[#allocation3 + $0x58] sm:$0xff] %v3274
      %3291 = vst [vmem:[#allocation3 + $0x60] sm:$0xff] %v3275
      %3292 = vst [vmem:[#allocation3 + $0x68] sm:$0xff] %v3276
      %3293 = vst [vmem:[#allocation3 + $0x70] sm:$0xff] %v3277
      %3294 = vst [vmem:[#allocation3 + $0x78] sm:$0xff] %v3278
      %v3295 = vld [vmem:[%s2767 + $0x4] sm:$0xc]
      %v3296 = vld [vmem:[%s2767 + $0x8] sm:$0xf]
      %v3297 = vld [vmem:[%s2767 + $0xc] sm:$0x3]
      %v3298 = vld [vmem:[%s2767 + $0x14] sm:$0xc]
      %v3299 = vld [vmem:[%s2767 + $0x18] sm:$0xf]
      %v3300 = vld [vmem:[%s2767 + $0x1c] sm:$0x3]
      %v3301 = vld [vmem:[%s2767 + $0x24] sm:$0xc]
      %v3302 = vld [vmem:[%s2767 + $0x28] sm:$0xf]
      %v3303 = vld [vmem:[%s2767 + $0x2c] sm:$0x3]
      %v3304 = vld [vmem:[%s2767 + $0x34] sm:$0xc]
      %v3305 = vld [vmem:[%s2767 + $0x38] sm:$0xf]
      %v3306 = vld [vmem:[%s2767 + $0x3c] sm:$0x3]
      %v3307 = vld [vmem:[%s2767 + $0x44] sm:$0xc]
      %v3308 = vld [vmem:[%s2767 + $0x48] sm:$0xf]
      %v3309 = vld [vmem:[%s2767 + $0x4c] sm:$0x3]
      %v3310 = vld [vmem:[%s2767 + $0x54] sm:$0xc]
      %v3311 = vld [vmem:[%s2767 + $0x58] sm:$0xf]
      %v3312 = vld [vmem:[%s2767 + $0x5c] sm:$0x3]
      %v3313 = vld [vmem:[%s2767 + $0x64] sm:$0xc]
      %v3314 = vld [vmem:[%s2767 + $0x68] sm:$0xf]
      %v3315 = vld [vmem:[%s2767 + $0x6c] sm:$0x3]
      %v3316 = vld [vmem:[%s2767 + $0x74] sm:$0xc]
      %v3317 = vld [vmem:[%s2767 + $0x78] sm:$0xf]
      %v3318 = vld [vmem:[%s2767 + $0x7c] sm:$0x3]
      %v3343 = vrot.slane %v3295, 6
      %v3344 = vrot.slane %v3343, 4
      %v3345 = vrot.slane %v3296, 6
      %v3346 = vsel %vm2818, %v3344, %v3345
      %v3347 = vrot.slane %v3345, 4
      %v3348 = vrot.slane %v3297, 6
      %v3349 = vsel %vm2818, %v3347, %v3348
      %v3350 = vrot.slane %v3298, 6
      %v3351 = vrot.slane %v3350, 4
      %v3352 = vrot.slane %v3299, 6
      %v3353 = vsel %vm2818, %v3351, %v3352
      %v3354 = vrot.slane %v3352, 4
      %v3355 = vrot.slane %v3300, 6
      %v3356 = vsel %vm2818, %v3354, %v3355
      %v3357 = vrot.slane %v3301, 6
      %v3358 = vrot.slane %v3357, 4
      %v3359 = vrot.slane %v3302, 6
      %v3360 = vsel %vm2818, %v3358, %v3359
      %v3361 = vrot.slane %v3359, 4
      %v3362 = vrot.slane %v3303, 6
      %v3363 = vsel %vm2818, %v3361, %v3362
      %v3364 = vrot.slane %v3304, 6
      %v3365 = vrot.slane %v3364, 4
      %v3366 = vrot.slane %v3305, 6
      %v3367 = vsel %vm2818, %v3365, %v3366
      %v3368 = vrot.slane %v3366, 4
      %v3369 = vrot.slane %v3306, 6
      %v3370 = vsel %vm2818, %v3368, %v3369
      %v3371 = vrot.slane %v3307, 6
      %v3372 = vrot.slane %v3371, 4
      %v3373 = vrot.slane %v3308, 6
      %v3374 = vsel %vm2818, %v3372, %v3373
      %v3375 = vrot.slane %v3373, 4
      %v3376 = vrot.slane %v3309, 6
      %v3377 = vsel %vm2818, %v3375, %v3376
      %v3378 = vrot.slane %v3310, 6
      %v3379 = vrot.slane %v3378, 4
      %v3380 = vrot.slane %v3311, 6
      %v3381 = vsel %vm2818, %v3379, %v3380
      %v3382 = vrot.slane %v3380, 4
      %v3383 = vrot.slane %v3312, 6
      %v3384 = vsel %vm2818, %v3382, %v3383
      %v3385 = vrot.slane %v3313, 6
      %v3386 = vrot.slane %v3385, 4
      %v3387 = vrot.slane %v3314, 6
      %v3388 = vsel %vm2818, %v3386, %v3387
      %v3389 = vrot.slane %v3387, 4
      %v3390 = vrot.slane %v3315, 6
      %v3391 = vsel %vm2818, %v3389, %v3390
      %v3392 = vrot.slane %v3316, 6
      %v3393 = vrot.slane %v3392, 4
      %v3394 = vrot.slane %v3317, 6
      %v3395 = vsel %vm2818, %v3393, %v3394
      %v3396 = vrot.slane %v3394, 4
      %v3397 = vrot.slane %v3318, 6
      %v3398 = vsel %vm2818, %v3396, %v3397
      %v3399 = vld [vmem:[#allocation3] sm:$0xff]
      %v3400 = vld [vmem:[#allocation3 + $0x8] sm:$0xff]
      %v3401 = vld [vmem:[#allocation3 + $0x10] sm:$0xff]
      %v3402 = vld [vmem:[#allocation3 + $0x18] sm:$0xff]
      %v3403 = vld [vmem:[#allocation3 + $0x20] sm:$0xff]
      %v3404 = vld [vmem:[#allocation3 + $0x28] sm:$0xff]
      %v3405 = vld [vmem:[#allocation3 + $0x30] sm:$0xff]
      %v3406 = vld [vmem:[#allocation3 + $0x38] sm:$0xff]
      %v3407 = vld [vmem:[#allocation3 + $0x40] sm:$0xff]
      %v3408 = vld [vmem:[#allocation3 + $0x48] sm:$0xff]
      %v3409 = vld [vmem:[#allocation3 + $0x50] sm:$0xff]
      %v3410 = vld [vmem:[#allocation3 + $0x58] sm:$0xff]
      %v3411 = vld [vmem:[#allocation3 + $0x60] sm:$0xff]
      %v3412 = vld [vmem:[#allocation3 + $0x68] sm:$0xff]
      %v3413 = vld [vmem:[#allocation3 + $0x70] sm:$0xff]
      %v3414 = vld [vmem:[#allocation3 + $0x78] sm:$0xff]
      %s3415 = scalar_lea.vmem %s1, 704
      %v3416 = vld [vmem:[%s3415] sm:$0xf]
      %v3417 = vld [vmem:[%s3415 + $0x4] sm:$0xf]
      %v3418 = vld [vmem:[%s3415 + $0x8] sm:$0xf]
      %v3419 = vld [vmem:[%s3415 + $0xc] sm:$0xf]
      %v3420 = vld [vmem:[%s3415 + $0x10] sm:$0xf]
      %v3421 = vld [vmem:[%s3415 + $0x14] sm:$0xf]
      %v3422 = vld [vmem:[%s3415 + $0x18] sm:$0xf]
      %v3423 = vld [vmem:[%s3415 + $0x1c] sm:$0xf]
      %v3424 = vld [vmem:[%s3415 + $0x20] sm:$0xf]
      %v3425 = vld [vmem:[%s3415 + $0x24] sm:$0xf]
      %v3426 = vld [vmem:[%s3415 + $0x28] sm:$0xf]
      %v3427 = vld [vmem:[%s3415 + $0x2c] sm:$0xf]
      %v3428 = vld [vmem:[%s3415 + $0x30] sm:$0xf]
      %v3429 = vld [vmem:[%s3415 + $0x34] sm:$0xf]
      %v3430 = vld [vmem:[%s3415 + $0x38] sm:$0xf]
      %v3431 = vld [vmem:[%s3415 + $0x3c] sm:$0xf]
      %v3432 = vunpack.c.l.b16 %v3346
      %v3433 = vunpack.c.l.b16 %v3349
      %v3434 = vunpack.c.l.b16 %v3353
      %v3435 = vunpack.c.l.b16 %v3356
      %v3436 = vunpack.c.l.b16 %v3360
      %v3437 = vunpack.c.l.b16 %v3363
      %v3438 = vunpack.c.l.b16 %v3367
      %v3439 = vunpack.c.l.b16 %v3370
      %v3440 = vunpack.c.l.b16 %v3374
      %v3441 = vunpack.c.l.b16 %v3377
      %v3442 = vunpack.c.l.b16 %v3381
      %v3443 = vunpack.c.l.b16 %v3384
      %v3444 = vunpack.c.l.b16 %v3388
      %v3445 = vunpack.c.l.b16 %v3391
      %v3446 = vunpack.c.l.b16 %v3395
      %v3447 = vunpack.c.l.b16 %v3398
      %v3448 = vpack.c.b16 %v3433, %v3432
      %v3449 = vpack.c.b16 %v3435, %v3434
      %v3450 = vpack.c.b16 %v3437, %v3436
      %v3451 = vpack.c.b16 %v3439, %v3438
      %v3452 = vpack.c.b16 %v3441, %v3440
      %v3453 = vpack.c.b16 %v3443, %v3442
      %v3454 = vpack.c.b16 %v3445, %v3444
      %v3455 = vpack.c.b16 %v3447, %v3446
      %v3480 = vunpack.c.l.b16 %v3416
      %v3481 = vunpack.c.l.b16 %v3417
      %v3482 = vunpack.c.l.b16 %v3418
      %v3483 = vunpack.c.l.b16 %v3419
      %v3484 = vunpack.c.l.b16 %v3420
      %v3485 = vunpack.c.l.b16 %v3421
      %v3486 = vunpack.c.l.b16 %v3422
      %v3487 = vunpack.c.l.b16 %v3423
      %v3488 = vunpack.c.l.b16 %v3424
      %v3489 = vunpack.c.l.b16 %v3425
      %v3490 = vunpack.c.l.b16 %v3426
      %v3491 = vunpack.c.l.b16 %v3427
      %v3492 = vunpack.c.l.b16 %v3428
      %v3493 = vunpack.c.l.b16 %v3429
      %v3494 = vunpack.c.l.b16 %v3430
      %v3495 = vunpack.c.l.b16 %v3431
      %v3496 = vpack.c.b16 %v3481, %v3480
      %v3497 = vpack.c.b16 %v3483, %v3482
      %v3498 = vpack.c.b16 %v3485, %v3484
      %v3499 = vpack.c.b16 %v3487, %v3486
      %v3500 = vpack.c.b16 %v3489, %v3488
      %v3501 = vpack.c.b16 %v3491, %v3490
      %v3502 = vpack.c.b16 %v3493, %v3492
      %v3503 = vpack.c.b16 %v3495, %v3494
      %3512 = vmatpush.bf16.msra.mxu0 %v3503
      %3513 = vmatpush.bf16.msra.mxu0 %v3502
      %3514 = vmatpush.bf16.msra.mxu0 %v3501
      %3515 = vmatpush.bf16.msra.mxu0 %v3500
      %3516 = vmatpush.bf16.msra.mxu0 %v3499
      %3517 = vmatpush.bf16.msra.mxu0 %v3498
      %3518 = vmatpush.bf16.msra.mxu0 %v3497
      %3519 = vmatpush.bf16.msra.mxu0 %v3496
      %3520 = vmatmul.bf16.gmra.mxu0 %v3448
      %v3521 = vpop.f32.mrf.mxu0
      %v3522 = vadd.f32 0.0, %v3521
      %v3523 = vpop.f32.mrf.mxu0
      %v3524 = vadd.f32 0.0, %v3523
      %3525 = vmatmul.bf16.gmra.mxu0 %v3449
      %v3526 = vpop.f32.mrf.mxu0
      %v3527 = vadd.f32 0.0, %v3526
      %v3528 = vpop.f32.mrf.mxu0
      %v3529 = vadd.f32 0.0, %v3528
      %3530 = vmatmul.bf16.gmra.mxu0 %v3450
      %v3531 = vpop.f32.mrf.mxu0
      %v3532 = vadd.f32 0.0, %v3531
      %v3533 = vpop.f32.mrf.mxu0
      %v3534 = vadd.f32 0.0, %v3533
      %3535 = vmatmul.bf16.gmra.mxu0 %v3451
      %v3536 = vpop.f32.mrf.mxu0
      %v3537 = vadd.f32 0.0, %v3536
      %v3538 = vpop.f32.mrf.mxu0
      %v3539 = vadd.f32 0.0, %v3538
      %3540 = vmatmul.bf16.gmra.mxu0 %v3452
      %v3541 = vpop.f32.mrf.mxu0
      %v3542 = vadd.f32 0.0, %v3541
      %v3543 = vpop.f32.mrf.mxu0
      %v3544 = vadd.f32 0.0, %v3543
      %3545 = vmatmul.bf16.gmra.mxu0 %v3453
      %v3546 = vpop.f32.mrf.mxu0
      %v3547 = vadd.f32 0.0, %v3546
      %v3548 = vpop.f32.mrf.mxu0
      %v3549 = vadd.f32 0.0, %v3548
      %3550 = vmatmul.bf16.gmra.mxu0 %v3454
      %v3551 = vpop.f32.mrf.mxu0
      %v3552 = vadd.f32 0.0, %v3551
      %v3553 = vpop.f32.mrf.mxu0
      %v3554 = vadd.f32 0.0, %v3553
      %3555 = vmatmul.bf16.gmra.mxu0 %v3455
      %v3556 = vpop.f32.mrf.mxu0
      %v3557 = vadd.f32 0.0, %v3556
      %v3558 = vpop.f32.mrf.mxu0
      %v3559 = vadd.f32 0.0, %v3558
      %3560 = vdwg.mxu0
      %v3561 = vadd.f32 %v3399, %v3522
      %v3562 = vadd.f32 %v3400, %v3524
      %v3563 = vadd.f32 %v3401, %v3527
      %v3564 = vadd.f32 %v3402, %v3529
      %v3565 = vadd.f32 %v3403, %v3532
      %v3566 = vadd.f32 %v3404, %v3534
      %v3567 = vadd.f32 %v3405, %v3537
      %v3568 = vadd.f32 %v3406, %v3539
      %v3569 = vadd.f32 %v3407, %v3542
      %v3570 = vadd.f32 %v3408, %v3544
      %v3571 = vadd.f32 %v3409, %v3547
      %v3572 = vadd.f32 %v3410, %v3549
      %v3573 = vadd.f32 %v3411, %v3552
      %v3574 = vadd.f32 %v3412, %v3554
      %v3575 = vadd.f32 %v3413, %v3557
      %v3576 = vadd.f32 %v3414, %v3559
      %3577 = vst [vmem:[#allocation3] sm:$0xff] %v3561
      %3578 = vst [vmem:[#allocation3 + $0x8] sm:$0xff] %v3562
      %3579 = vst [vmem:[#allocation3 + $0x10] sm:$0xff] %v3563
      %3580 = vst [vmem:[#allocation3 + $0x18] sm:$0xff] %v3564
      %3581 = vst [vmem:[#allocation3 + $0x20] sm:$0xff] %v3565
      %3582 = vst [vmem:[#allocation3 + $0x28] sm:$0xff] %v3566
      %3583 = vst [vmem:[#allocation3 + $0x30] sm:$0xff] %v3567
      %3584 = vst [vmem:[#allocation3 + $0x38] sm:$0xff] %v3568
      %3585 = vst [vmem:[#allocation3 + $0x40] sm:$0xff] %v3569
      %3586 = vst [vmem:[#allocation3 + $0x48] sm:$0xff] %v3570
      %3587 = vst [vmem:[#allocation3 + $0x50] sm:$0xff] %v3571
      %3588 = vst [vmem:[#allocation3 + $0x58] sm:$0xff] %v3572
      %3589 = vst [vmem:[#allocation3 + $0x60] sm:$0xff] %v3573
      %3590 = vst [vmem:[#allocation3 + $0x68] sm:$0xff] %v3574
      %3591 = vst [vmem:[#allocation3 + $0x70] sm:$0xff] %v3575
      %3592 = vst [vmem:[#allocation3 + $0x78] sm:$0xff] %v3576
      %v3593 = vld [vmem:[%s1121] sm:$0xc]
      %v3594 = vld [vmem:[%s1121 + $0x4] sm:$0xf]
      %v3595 = vld [vmem:[%s1121 + $0x8] sm:$0x3]
      %v3596 = vld [vmem:[%s1121 + $0x10] sm:$0xc]
      %v3597 = vld [vmem:[%s1121 + $0x14] sm:$0xf]
      %v3598 = vld [vmem:[%s1121 + $0x18] sm:$0x3]
      %v3599 = vld [vmem:[%s1121 + $0x20] sm:$0xc]
      %v3600 = vld [vmem:[%s1121 + $0x24] sm:$0xf]
      %v3601 = vld [vmem:[%s1121 + $0x28] sm:$0x3]
      %v3602 = vld [vmem:[%s1121 + $0x30] sm:$0xc]
      %v3603 = vld [vmem:[%s1121 + $0x34] sm:$0xf]
      %v3604 = vld [vmem:[%s1121 + $0x38] sm:$0x3]
      %v3605 = vld [vmem:[%s1121 + $0x40] sm:$0xc]
      %v3606 = vld [vmem:[%s1121 + $0x44] sm:$0xf]
      %v3607 = vld [vmem:[%s1121 + $0x48] sm:$0x3]
      %v3608 = vld [vmem:[%s1121 + $0x50] sm:$0xc]
      %v3609 = vld [vmem:[%s1121 + $0x54] sm:$0xf]
      %v3610 = vld [vmem:[%s1121 + $0x58] sm:$0x3]
      %v3611 = vld [vmem:[%s1121 + $0x60] sm:$0xc]
      %v3612 = vld [vmem:[%s1121 + $0x64] sm:$0xf]
      %v3613 = vld [vmem:[%s1121 + $0x68] sm:$0x3]
      %v3614 = vld [vmem:[%s1121 + $0x70] sm:$0xc]
      %v3615 = vld [vmem:[%s1121 + $0x74] sm:$0xf]
      %v3616 = vld [vmem:[%s1121 + $0x78] sm:$0x3]
      %v3641 = vrot.slane %v3593, 6
      %v3642 = vrot.slane %v3641, 4
      %v3643 = vrot.slane %v3594, 6
      %v3644 = vsel %vm2818, %v3642, %v3643
      %v3645 = vrot.slane %v3643, 4
      %v3646 = vrot.slane %v3595, 6
      %v3647 = vsel %vm2818, %v3645, %v3646
      %v3648 = vrot.slane %v3596, 6
      %v3649 = vrot.slane %v3648, 4
      %v3650 = vrot.slane %v3597, 6
      %v3651 = vsel %vm2818, %v3649, %v3650
      %v3652 = vrot.slane %v3650, 4
      %v3653 = vrot.slane %v3598, 6
      %v3654 = vsel %vm2818, %v3652, %v3653
      %v3655 = vrot.slane %v3599, 6
      %v3656 = vrot.slane %v3655, 4
      %v3657 = vrot.slane %v3600, 6
      %v3658 = vsel %vm2818, %v3656, %v3657
      %v3659 = vrot.slane %v3657, 4
      %v3660 = vrot.slane %v3601, 6
      %v3661 = vsel %vm2818, %v3659, %v3660
      %v3662 = vrot.slane %v3602, 6
      %v3663 = vrot.slane %v3662, 4
      %v3664 = vrot.slane %v3603, 6
      %v3665 = vsel %vm2818, %v3663, %v3664
      %v3666 = vrot.slane %v3664, 4
      %v3667 = vrot.slane %v3604, 6
      %v3668 = vsel %vm2818, %v3666, %v3667
      %v3669 = vrot.slane %v3605, 6
      %v3670 = vrot.slane %v3669, 4
      %v3671 = vrot.slane %v3606, 6
      %v3672 = vsel %vm2818, %v3670, %v3671
      %v3673 = vrot.slane %v3671, 4
      %v3674 = vrot.slane %v3607, 6
      %v3675 = vsel %vm2818, %v3673, %v3674
      %v3676 = vrot.slane %v3608, 6
      %v3677 = vrot.slane %v3676, 4
      %v3678 = vrot.slane %v3609, 6
      %v3679 = vsel %vm2818, %v3677, %v3678
      %v3680 = vrot.slane %v3678, 4
      %v3681 = vrot.slane %v3610, 6
      %v3682 = vsel %vm2818, %v3680, %v3681
      %v3683 = vrot.slane %v3611, 6
      %v3684 = vrot.slane %v3683, 4
      %v3685 = vrot.slane %v3612, 6
      %v3686 = vsel %vm2818, %v3684, %v3685
      %v3687 = vrot.slane %v3685, 4
      %v3688 = vrot.slane %v3613, 6
      %v3689 = vsel %vm2818, %v3687, %v3688
      %v3690 = vrot.slane %v3614, 6
      %v3691 = vrot.slane %v3690, 4
      %v3692 = vrot.slane %v3615, 6
      %v3693 = vsel %vm2818, %v3691, %v3692
      %v3694 = vrot.slane %v3692, 4
      %v3695 = vrot.slane %v3616, 6
      %v3696 = vsel %vm2818, %v3694, %v3695
      %v3697 = vld [vmem:[#allocation3] sm:$0xff]
      %v3698 = vld [vmem:[#allocation3 + $0x8] sm:$0xff]
      %v3699 = vld [vmem:[#allocation3 + $0x10] sm:$0xff]
      %v3700 = vld [vmem:[#allocation3 + $0x18] sm:$0xff]
      %v3701 = vld [vmem:[#allocation3 + $0x20] sm:$0xff]
      %v3702 = vld [vmem:[#allocation3 + $0x28] sm:$0xff]
      %v3703 = vld [vmem:[#allocation3 + $0x30] sm:$0xff]
      %v3704 = vld [vmem:[#allocation3 + $0x38] sm:$0xff]
      %v3705 = vld [vmem:[#allocation3 + $0x40] sm:$0xff]
      %v3706 = vld [vmem:[#allocation3 + $0x48] sm:$0xff]
      %v3707 = vld [vmem:[#allocation3 + $0x50] sm:$0xff]
      %v3708 = vld [vmem:[#allocation3 + $0x58] sm:$0xff]
      %v3709 = vld [vmem:[#allocation3 + $0x60] sm:$0xff]
      %v3710 = vld [vmem:[#allocation3 + $0x68] sm:$0xff]
      %v3711 = vld [vmem:[#allocation3 + $0x70] sm:$0xff]
      %v3712 = vld [vmem:[#allocation3 + $0x78] sm:$0xff]
      %s3713 = scalar_lea.vmem %s1, 768
      %v3714 = vld [vmem:[%s3713] sm:$0xf]
      %v3715 = vld [vmem:[%s3713 + $0x4] sm:$0xf]
      %v3716 = vld [vmem:[%s3713 + $0x8] sm:$0xf]
      %v3717 = vld [vmem:[%s3713 + $0xc] sm:$0xf]
      %v3718 = vld [vmem:[%s3713 + $0x10] sm:$0xf]
      %v3719 = vld [vmem:[%s3713 + $0x14] sm:$0xf]
      %v3720 = vld [vmem:[%s3713 + $0x18] sm:$0xf]
      %v3721 = vld [vmem:[%s3713 + $0x1c] sm:$0xf]
      %v3722 = vld [vmem:[%s3713 + $0x20] sm:$0xf]
      %v3723 = vld [vmem:[%s3713 + $0x24] sm:$0xf]
      %v3724 = vld [vmem:[%s3713 + $0x28] sm:$0xf]
      %v3725 = vld [vmem:[%s3713 + $0x2c] sm:$0xf]
      %v3726 = vld [vmem:[%s3713 + $0x30] sm:$0xf]
      %v3727 = vld [vmem:[%s3713 + $0x34] sm:$0xf]
      %v3728 = vld [vmem:[%s3713 + $0x38] sm:$0xf]
      %v3729 = vld [vmem:[%s3713 + $0x3c] sm:$0xf]
      %v3730 = vunpack.c.l.b16 %v3644
      %v3731 = vunpack.c.l.b16 %v3647
      %v3732 = vunpack.c.l.b16 %v3651
      %v3733 = vunpack.c.l.b16 %v3654
      %v3734 = vunpack.c.l.b16 %v3658
      %v3735 = vunpack.c.l.b16 %v3661
      %v3736 = vunpack.c.l.b16 %v3665
      %v3737 = vunpack.c.l.b16 %v3668
      %v3738 = vunpack.c.l.b16 %v3672
      %v3739 = vunpack.c.l.b16 %v3675
      %v3740 = vunpack.c.l.b16 %v3679
      %v3741 = vunpack.c.l.b16 %v3682
      %v3742 = vunpack.c.l.b16 %v3686
      %v3743 = vunpack.c.l.b16 %v3689
      %v3744 = vunpack.c.l.b16 %v3693
      %v3745 = vunpack.c.l.b16 %v3696
      %v3746 = vpack.c.b16 %v3731, %v3730
      %v3747 = vpack.c.b16 %v3733, %v3732
      %v3748 = vpack.c.b16 %v3735, %v3734
      %v3749 = vpack.c.b16 %v3737, %v3736
      %v3750 = vpack.c.b16 %v3739, %v3738
      %v3751 = vpack.c.b16 %v3741, %v3740
      %v3752 = vpack.c.b16 %v3743, %v3742
      %v3753 = vpack.c.b16 %v3745, %v3744
      %v3778 = vunpack.c.l.b16 %v3714
      %v3779 = vunpack.c.l.b16 %v3715
      %v3780 = vunpack.c.l.b16 %v3716
      %v3781 = vunpack.c.l.b16 %v3717
      %v3782 = vunpack.c.l.b16 %v3718
      %v3783 = vunpack.c.l.b16 %v3719
      %v3784 = vunpack.c.l.b16 %v3720
      %v3785 = vunpack.c.l.b16 %v3721
      %v3786 = vunpack.c.l.b16 %v3722
      %v3787 = vunpack.c.l.b16 %v3723
      %v3788 = vunpack.c.l.b16 %v3724
      %v3789 = vunpack.c.l.b16 %v3725
      %v3790 = vunpack.c.l.b16 %v3726
      %v3791 = vunpack.c.l.b16 %v3727
      %v3792 = vunpack.c.l.b16 %v3728
      %v3793 = vunpack.c.l.b16 %v3729
      %v3794 = vpack.c.b16 %v3779, %v3778
      %v3795 = vpack.c.b16 %v3781, %v3780
      %v3796 = vpack.c.b16 %v3783, %v3782
      %v3797 = vpack.c.b16 %v3785, %v3784
      %v3798 = vpack.c.b16 %v3787, %v3786
      %v3799 = vpack.c.b16 %v3789, %v3788
      %v3800 = vpack.c.b16 %v3791, %v3790
      %v3801 = vpack.c.b16 %v3793, %v3792
      %3810 = vmatpush.bf16.msra.mxu0 %v3801
      %3811 = vmatpush.bf16.msra.mxu0 %v3800
      %3812 = vmatpush.bf16.msra.mxu0 %v3799
      %3813 = vmatpush.bf16.msra.mxu0 %v3798
      %3814 = vmatpush.bf16.msra.mxu0 %v3797
      %3815 = vmatpush.bf16.msra.mxu0 %v3796
      %3816 = vmatpush.bf16.msra.mxu0 %v3795
      %3817 = vmatpush.bf16.msra.mxu0 %v3794
      %3818 = vmatmul.bf16.gmra.mxu0 %v3746
      %v3819 = vpop.f32.mrf.mxu0
      %v3820 = vadd.f32 0.0, %v3819
      %v3821 = vpop.f32.mrf.mxu0
      %v3822 = vadd.f32 0.0, %v3821
      %3823 = vmatmul.bf16.gmra.mxu0 %v3747
      %v3824 = vpop.f32.mrf.mxu0
      %v3825 = vadd.f32 0.0, %v3824
      %v3826 = vpop.f32.mrf.mxu0
      %v3827 = vadd.f32 0.0, %v3826
      %3828 = vmatmul.bf16.gmra.mxu0 %v3748
      %v3829 = vpop.f32.mrf.mxu0
      %v3830 = vadd.f32 0.0, %v3829
      %v3831 = vpop.f32.mrf.mxu0
      %v3832 = vadd.f32 0.0, %v3831
      %3833 = vmatmul.bf16.gmra.mxu0 %v3749
      %v3834 = vpop.f32.mrf.mxu0
      %v3835 = vadd.f32 0.0, %v3834
      %v3836 = vpop.f32.mrf.mxu0
      %v3837 = vadd.f32 0.0, %v3836
      %3838 = vmatmul.bf16.gmra.mxu0 %v3750
      %v3839 = vpop.f32.mrf.mxu0
      %v3840 = vadd.f32 0.0, %v3839
      %v3841 = vpop.f32.mrf.mxu0
      %v3842 = vadd.f32 0.0, %v3841
      %3843 = vmatmul.bf16.gmra.mxu0 %v3751
      %v3844 = vpop.f32.mrf.mxu0
      %v3845 = vadd.f32 0.0, %v3844
      %v3846 = vpop.f32.mrf.mxu0
      %v3847 = vadd.f32 0.0, %v3846
      %3848 = vmatmul.bf16.gmra.mxu0 %v3752
      %v3849 = vpop.f32.mrf.mxu0
      %v3850 = vadd.f32 0.0, %v3849
      %v3851 = vpop.f32.mrf.mxu0
      %v3852 = vadd.f32 0.0, %v3851
      %3853 = vmatmul.bf16.gmra.mxu0 %v3753
      %v3854 = vpop.f32.mrf.mxu0
      %v3855 = vadd.f32 0.0, %v3854
      %v3856 = vpop.f32.mrf.mxu0
      %v3857 = vadd.f32 0.0, %v3856
      %3858 = vdwg.mxu0
      %v3859 = vadd.f32 %v3697, %v3820
      %v3860 = vadd.f32 %v3698, %v3822
      %v3861 = vadd.f32 %v3699, %v3825
      %v3862 = vadd.f32 %v3700, %v3827
      %v3863 = vadd.f32 %v3701, %v3830
      %v3864 = vadd.f32 %v3702, %v3832
      %v3865 = vadd.f32 %v3703, %v3835
      %v3866 = vadd.f32 %v3704, %v3837
      %v3867 = vadd.f32 %v3705, %v3840
      %v3868 = vadd.f32 %v3706, %v3842
      %v3869 = vadd.f32 %v3707, %v3845
      %v3870 = vadd.f32 %v3708, %v3847
      %v3871 = vadd.f32 %v3709, %v3850
      %v3872 = vadd.f32 %v3710, %v3852
      %v3873 = vadd.f32 %v3711, %v3855
      %v3874 = vadd.f32 %v3712, %v3857
      %3875 = vst [vmem:[#allocation3] sm:$0xff] %v3859
      %3876 = vst [vmem:[#allocation3 + $0x8] sm:$0xff] %v3860
      %3877 = vst [vmem:[#allocation3 + $0x10] sm:$0xff] %v3861
      %3878 = vst [vmem:[#allocation3 + $0x18] sm:$0xff] %v3862
      %3879 = vst [vmem:[#allocation3 + $0x20] sm:$0xff] %v3863
      %3880 = vst [vmem:[#allocation3 + $0x28] sm:$0xff] %v3864
      %3881 = vst [vmem:[#allocation3 + $0x30] sm:$0xff] %v3865
      %3882 = vst [vmem:[#allocation3 + $0x38] sm:$0xff] %v3866
      %3883 = vst [vmem:[#allocation3 + $0x40] sm:$0xff] %v3867
      %3884 = vst [vmem:[#allocation3 + $0x48] sm:$0xff] %v3868
      %3885 = vst [vmem:[#allocation3 + $0x50] sm:$0xff] %v3869
      %3886 = vst [vmem:[#allocation3 + $0x58] sm:$0xff] %v3870
      %3887 = vst [vmem:[#allocation3 + $0x60] sm:$0xff] %v3871
      %3888 = vst [vmem:[#allocation3 + $0x68] sm:$0xff] %v3872
      %3889 = vst [vmem:[#allocation3 + $0x70] sm:$0xff] %v3873
      %3890 = vst [vmem:[#allocation3 + $0x78] sm:$0xff] %v3874
      %v3891 = vld [vmem:[%s1121 + $0x4] sm:$0xf]
      %v3892 = vld [vmem:[%s1121 + $0x8] sm:$0xf]
      %v3893 = vld [vmem:[%s1121 + $0x14] sm:$0xf]
      %v3894 = vld [vmem:[%s1121 + $0x18] sm:$0xf]
      %v3895 = vld [vmem:[%s1121 + $0x24] sm:$0xf]
      %v3896 = vld [vmem:[%s1121 + $0x28] sm:$0xf]
      %v3897 = vld [vmem:[%s1121 + $0x34] sm:$0xf]
      %v3898 = vld [vmem:[%s1121 + $0x38] sm:$0xf]
      %v3899 = vld [vmem:[%s1121 + $0x44] sm:$0xf]
      %v3900 = vld [vmem:[%s1121 + $0x48] sm:$0xf]
      %v3901 = vld [vmem:[%s1121 + $0x54] sm:$0xf]
      %v3902 = vld [vmem:[%s1121 + $0x58] sm:$0xf]
      %v3903 = vld [vmem:[%s1121 + $0x64] sm:$0xf]
      %v3904 = vld [vmem:[%s1121 + $0x68] sm:$0xf]
      %v3905 = vld [vmem:[%s1121 + $0x74] sm:$0xf]
      %v3906 = vld [vmem:[%s1121 + $0x78] sm:$0xf]
      %v3907 = vld [vmem:[#allocation3] sm:$0xff]
      %v3908 = vld [vmem:[#allocation3 + $0x8] sm:$0xff]
      %v3909 = vld [vmem:[#allocation3 + $0x10] sm:$0xff]
      %v3910 = vld [vmem:[#allocation3 + $0x18] sm:$0xff]
      %v3911 = vld [vmem:[#allocation3 + $0x20] sm:$0xff]
      %v3912 = vld [vmem:[#allocation3 + $0x28] sm:$0xff]
      %v3913 = vld [vmem:[#allocation3 + $0x30] sm:$0xff]
      %v3914 = vld [vmem:[#allocation3 + $0x38] sm:$0xff]
      %v3915 = vld [vmem:[#allocation3 + $0x40] sm:$0xff]
      %v3916 = vld [vmem:[#allocation3 + $0x48] sm:$0xff]
      %v3917 = vld [vmem:[#allocation3 + $0x50] sm:$0xff]
      %v3918 = vld [vmem:[#allocation3 + $0x58] sm:$0xff]
      %v3919 = vld [vmem:[#allocation3 + $0x60] sm:$0xff]
      %v3920 = vld [vmem:[#allocation3 + $0x68] sm:$0xff]
      %v3921 = vld [vmem:[#allocation3 + $0x70] sm:$0xff]
      %v3922 = vld [vmem:[#allocation3 + $0x78] sm:$0xff]
      %s3923 = scalar_lea.vmem %s1, 832
      %v3924 = vld [vmem:[%s3923] sm:$0xf]
      %v3925 = vld [vmem:[%s3923 + $0x4] sm:$0xf]
      %v3926 = vld [vmem:[%s3923 + $0x8] sm:$0xf]
      %v3927 = vld [vmem:[%s3923 + $0xc] sm:$0xf]
      %v3928 = vld [vmem:[%s3923 + $0x10] sm:$0xf]
      %v3929 = vld [vmem:[%s3923 + $0x14] sm:$0xf]
      %v3930 = vld [vmem:[%s3923 + $0x18] sm:$0xf]
      %v3931 = vld [vmem:[%s3923 + $0x1c] sm:$0xf]
      %v3932 = vld [vmem:[%s3923 + $0x20] sm:$0xf]
      %v3933 = vld [vmem:[%s3923 + $0x24] sm:$0xf]
      %v3934 = vld [vmem:[%s3923 + $0x28] sm:$0xf]
      %v3935 = vld [vmem:[%s3923 + $0x2c] sm:$0xf]
      %v3936 = vld [vmem:[%s3923 + $0x30] sm:$0xf]
      %v3937 = vld [vmem:[%s3923 + $0x34] sm:$0xf]
      %v3938 = vld [vmem:[%s3923 + $0x38] sm:$0xf]
      %v3939 = vld [vmem:[%s3923 + $0x3c] sm:$0xf]
      %v3956 = vunpack.c.l.b16 %v3891
      %v3957 = vunpack.c.l.b16 %v3892
      %v3958 = vunpack.c.l.b16 %v3893
      %v3959 = vunpack.c.l.b16 %v3894
      %v3960 = vunpack.c.l.b16 %v3895
      %v3961 = vunpack.c.l.b16 %v3896
      %v3962 = vunpack.c.l.b16 %v3897
      %v3963 = vunpack.c.l.b16 %v3898
      %v3964 = vunpack.c.l.b16 %v3899
      %v3965 = vunpack.c.l.b16 %v3900
      %v3966 = vunpack.c.l.b16 %v3901
      %v3967 = vunpack.c.l.b16 %v3902
      %v3968 = vunpack.c.l.b16 %v3903
      %v3969 = vunpack.c.l.b16 %v3904
      %v3970 = vunpack.c.l.b16 %v3905
      %v3971 = vunpack.c.l.b16 %v3906
      %v3972 = vpack.c.b16 %v3957, %v3956
      %v3973 = vpack.c.b16 %v3959, %v3958
      %v3974 = vpack.c.b16 %v3961, %v3960
      %v3975 = vpack.c.b16 %v3963, %v3962
      %v3976 = vpack.c.b16 %v3965, %v3964
      %v3977 = vpack.c.b16 %v3967, %v3966
      %v3978 = vpack.c.b16 %v3969, %v3968
      %v3979 = vpack.c.b16 %v3971, %v3970
      %v4004 = vunpack.c.l.b16 %v3924
      %v4005 = vunpack.c.l.b16 %v3925
      %v4006 = vunpack.c.l.b16 %v3926
      %v4007 = vunpack.c.l.b16 %v3927
      %v4008 = vunpack.c.l.b16 %v3928
      %v4009 = vunpack.c.l.b16 %v3929
      %v4010 = vunpack.c.l.b16 %v3930
      %v4011 = vunpack.c.l.b16 %v3931
      %v4012 = vunpack.c.l.b16 %v3932
      %v4013 = vunpack.c.l.b16 %v3933
      %v4014 = vunpack.c.l.b16 %v3934
      %v4015 = vunpack.c.l.b16 %v3935
      %v4016 = vunpack.c.l.b16 %v3936
      %v4017 = vunpack.c.l.b16 %v3937
      %v4018 = vunpack.c.l.b16 %v3938
      %v4019 = vunpack.c.l.b16 %v3939
      %v4020 = vpack.c.b16 %v4005, %v4004
      %v4021 = vpack.c.b16 %v4007, %v4006
      %v4022 = vpack.c.b16 %v4009, %v4008
      %v4023 = vpack.c.b16 %v4011, %v4010
      %v4024 = vpack.c.b16 %v4013, %v4012
      %v4025 = vpack.c.b16 %v4015, %v4014
      %v4026 = vpack.c.b16 %v4017, %v4016
      %v4027 = vpack.c.b16 %v4019, %v4018
      %4036 = vmatpush.bf16.msra.mxu0 %v4027
      %4037 = vmatpush.bf16.msra.mxu0 %v4026
      %4038 = vmatpush.bf16.msra.mxu0 %v4025
      %4039 = vmatpush.bf16.msra.mxu0 %v4024
      %4040 = vmatpush.bf16.msra.mxu0 %v4023
      %4041 = vmatpush.bf16.msra.mxu0 %v4022
      %4042 = vmatpush.bf16.msra.mxu0 %v4021
      %4043 = vmatpush.bf16.msra.mxu0 %v4020
      %4044 = vmatmul.bf16.gmra.mxu0 %v3972
      %v4045 = vpop.f32.mrf.mxu0
      %v4046 = vadd.f32 0.0, %v4045
      %v4047 = vpop.f32.mrf.mxu0
      %v4048 = vadd.f32 0.0, %v4047
      %4049 = vmatmul.bf16.gmra.mxu0 %v3973
      %v4050 = vpop.f32.mrf.mxu0
      %v4051 = vadd.f32 0.0, %v4050
      %v4052 = vpop.f32.mrf.mxu0
      %v4053 = vadd.f32 0.0, %v4052
      %4054 = vmatmul.bf16.gmra.mxu0 %v3974
      %v4055 = vpop.f32.mrf.mxu0
      %v4056 = vadd.f32 0.0, %v4055
      %v4057 = vpop.f32.mrf.mxu0
      %v4058 = vadd.f32 0.0, %v4057
      %4059 = vmatmul.bf16.gmra.mxu0 %v3975
      %v4060 = vpop.f32.mrf.mxu0
      %v4061 = vadd.f32 0.0, %v4060
      %v4062 = vpop.f32.mrf.mxu0
      %v4063 = vadd.f32 0.0, %v4062
      %4064 = vmatmul.bf16.gmra.mxu0 %v3976
      %v4065 = vpop.f32.mrf.mxu0
      %v4066 = vadd.f32 0.0, %v4065
      %v4067 = vpop.f32.mrf.mxu0
      %v4068 = vadd.f32 0.0, %v4067
      %4069 = vmatmul.bf16.gmra.mxu0 %v3977
      %v4070 = vpop.f32.mrf.mxu0
      %v4071 = vadd.f32 0.0, %v4070
      %v4072 = vpop.f32.mrf.mxu0
      %v4073 = vadd.f32 0.0, %v4072
      %4074 = vmatmul.bf16.gmra.mxu0 %v3978
      %v4075 = vpop.f32.mrf.mxu0
      %v4076 = vadd.f32 0.0, %v4075
      %v4077 = vpop.f32.mrf.mxu0
      %v4078 = vadd.f32 0.0, %v4077
      %4079 = vmatmul.bf16.gmra.mxu0 %v3979
      %v4080 = vpop.f32.mrf.mxu0
      %v4081 = vadd.f32 0.0, %v4080
      %v4082 = vpop.f32.mrf.mxu0
      %v4083 = vadd.f32 0.0, %v4082
      %4084 = vdwg.mxu0
      %v4085 = vadd.f32 %v3907, %v4046
      %v4086 = vadd.f32 %v3908, %v4048
      %v4087 = vadd.f32 %v3909, %v4051
      %v4088 = vadd.f32 %v3910, %v4053
      %v4089 = vadd.f32 %v3911, %v4056
      %v4090 = vadd.f32 %v3912, %v4058
      %v4091 = vadd.f32 %v3913, %v4061
      %v4092 = vadd.f32 %v3914, %v4063
      %v4093 = vadd.f32 %v3915, %v4066
      %v4094 = vadd.f32 %v3916, %v4068
      %v4095 = vadd.f32 %v3917, %v4071
      %v4096 = vadd.f32 %v3918, %v4073
      %v4097 = vadd.f32 %v3919, %v4076
      %v4098 = vadd.f32 %v3920, %v4078
      %v4099 = vadd.f32 %v3921, %v4081
      %v4100 = vadd.f32 %v3922, %v4083
      %4101 = vst [vmem:[#allocation3] sm:$0xff] %v4085
      %4102 = vst [vmem:[#allocation3 + $0x8] sm:$0xff] %v4086
      %4103 = vst [vmem:[#allocation3 + $0x10] sm:$0xff] %v4087
      %4104 = vst [vmem:[#allocation3 + $0x18] sm:$0xff] %v4088
      %4105 = vst [vmem:[#allocation3 + $0x20] sm:$0xff] %v4089
      %4106 = vst [vmem:[#allocation3 + $0x28] sm:$0xff] %v4090
      %4107 = vst [vmem:[#allocation3 + $0x30] sm:$0xff] %v4091
      %4108 = vst [vmem:[#allocation3 + $0x38] sm:$0xff] %v4092
      %4109 = vst [vmem:[#allocation3 + $0x40] sm:$0xff] %v4093
      %4110 = vst [vmem:[#allocation3 + $0x48] sm:$0xff] %v4094
      %4111 = vst [vmem:[#allocation3 + $0x50] sm:$0xff] %v4095
      %4112 = vst [vmem:[#allocation3 + $0x58] sm:$0xff] %v4096
      %4113 = vst [vmem:[#allocation3 + $0x60] sm:$0xff] %v4097
      %4114 = vst [vmem:[#allocation3 + $0x68] sm:$0xff] %v4098
      %4115 = vst [vmem:[#allocation3 + $0x70] sm:$0xff] %v4099
      %4116 = vst [vmem:[#allocation3 + $0x78] sm:$0xff] %v4100
      %v4117 = vld [vmem:[%s1121 + $0x4] sm:$0xc]
      %v4118 = vld [vmem:[%s1121 + $0x8] sm:$0xf]
      %v4119 = vld [vmem:[%s1121 + $0xc] sm:$0x3]
      %v4120 = vld [vmem:[%s1121 + $0x14] sm:$0xc]
      %v4121 = vld [vmem:[%s1121 + $0x18] sm:$0xf]
      %v4122 = vld [vmem:[%s1121 + $0x1c] sm:$0x3]
      %v4123 = vld [vmem:[%s1121 + $0x24] sm:$0xc]
      %v4124 = vld [vmem:[%s1121 + $0x28] sm:$0xf]
      %v4125 = vld [vmem:[%s1121 + $0x2c] sm:$0x3]
      %v4126 = vld [vmem:[%s1121 + $0x34] sm:$0xc]
      %v4127 = vld [vmem:[%s1121 + $0x38] sm:$0xf]
      %v4128 = vld [vmem:[%s1121 + $0x3c] sm:$0x3]
      %v4129 = vld [vmem:[%s1121 + $0x44] sm:$0xc]
      %v4130 = vld [vmem:[%s1121 + $0x48] sm:$0xf]
      %v4131 = vld [vmem:[%s1121 + $0x4c] sm:$0x3]
      %v4132 = vld [vmem:[%s1121 + $0x54] sm:$0xc]
      %v4133 = vld [vmem:[%s1121 + $0x58] sm:$0xf]
      %v4134 = vld [vmem:[%s1121 + $0x5c] sm:$0x3]
      %v4135 = vld [vmem:[%s1121 + $0x64] sm:$0xc]
      %v4136 = vld [vmem:[%s1121 + $0x68] sm:$0xf]
      %v4137 = vld [vmem:[%s1121 + $0x6c] sm:$0x3]
      %v4138 = vld [vmem:[%s1121 + $0x74] sm:$0xc]
      %v4139 = vld [vmem:[%s1121 + $0x78] sm:$0xf]
      %v4140 = vld [vmem:[%s1121 + $0x7c] sm:$0x3]
      %v4165 = vrot.slane %v4117, 6
      %v4166 = vrot.slane %v4165, 4
      %v4167 = vrot.slane %v4118, 6
      %v4168 = vsel %vm2818, %v4166, %v4167
      %v4169 = vrot.slane %v4167, 4
      %v4170 = vrot.slane %v4119, 6
      %v4171 = vsel %vm2818, %v4169, %v4170
      %v4172 = vrot.slane %v4120, 6
      %v4173 = vrot.slane %v4172, 4
      %v4174 = vrot.slane %v4121, 6
      %v4175 = vsel %vm2818, %v4173, %v4174
      %v4176 = vrot.slane %v4174, 4
      %v4177 = vrot.slane %v4122, 6
      %v4178 = vsel %vm2818, %v4176, %v4177
      %v4179 = vrot.slane %v4123, 6
      %v4180 = vrot.slane %v4179, 4
      %v4181 = vrot.slane %v4124, 6
      %v4182 = vsel %vm2818, %v4180, %v4181
      %v4183 = vrot.slane %v4181, 4
      %v4184 = vrot.slane %v4125, 6
      %v4185 = vsel %vm2818, %v4183, %v4184
      %v4186 = vrot.slane %v4126, 6
      %v4187 = vrot.slane %v4186, 4
      %v4188 = vrot.slane %v4127, 6
      %v4189 = vsel %vm2818, %v4187, %v4188
      %v4190 = vrot.slane %v4188, 4
      %v4191 = vrot.slane %v4128, 6
      %v4192 = vsel %vm2818, %v4190, %v4191
      %v4193 = vrot.slane %v4129, 6
      %v4194 = vrot.slane %v4193, 4
      %v4195 = vrot.slane %v4130, 6
      %v4196 = vsel %vm2818, %v4194, %v4195
      %v4197 = vrot.slane %v4195, 4
      %v4198 = vrot.slane %v4131, 6
      %v4199 = vsel %vm2818, %v4197, %v4198
      %v4200 = vrot.slane %v4132, 6
      %v4201 = vrot.slane %v4200, 4
      %v4202 = vrot.slane %v4133, 6
      %v4203 = vsel %vm2818, %v4201, %v4202
      %v4204 = vrot.slane %v4202, 4
      %v4205 = vrot.slane %v4134, 6
      %v4206 = vsel %vm2818, %v4204, %v4205
      %v4207 = vrot.slane %v4135, 6
      %v4208 = vrot.slane %v4207, 4
      %v4209 = vrot.slane %v4136, 6
      %v4210 = vsel %vm2818, %v4208, %v4209
      %v4211 = vrot.slane %v4209, 4
      %v4212 = vrot.slane %v4137, 6
      %v4213 = vsel %vm2818, %v4211, %v4212
      %v4214 = vrot.slane %v4138, 6
      %v4215 = vrot.slane %v4214, 4
      %v4216 = vrot.slane %v4139, 6
      %v4217 = vsel %vm2818, %v4215, %v4216
      %v4218 = vrot.slane %v4216, 4
      %v4219 = vrot.slane %v4140, 6
      %v4220 = vsel %vm2818, %v4218, %v4219
      %v4221 = vld [vmem:[#allocation3] sm:$0xff]
      %v4222 = vld [vmem:[#allocation3 + $0x8] sm:$0xff]
      %v4223 = vld [vmem:[#allocation3 + $0x10] sm:$0xff]
      %v4224 = vld [vmem:[#allocation3 + $0x18] sm:$0xff]
      %v4225 = vld [vmem:[#allocation3 + $0x20] sm:$0xff]
      %v4226 = vld [vmem:[#allocation3 + $0x28] sm:$0xff]
      %v4227 = vld [vmem:[#allocation3 + $0x30] sm:$0xff]
      %v4228 = vld [vmem:[#allocation3 + $0x38] sm:$0xff]
      %v4229 = vld [vmem:[#allocation3 + $0x40] sm:$0xff]
      %v4230 = vld [vmem:[#allocation3 + $0x48] sm:$0xff]
      %v4231 = vld [vmem:[#allocation3 + $0x50] sm:$0xff]
      %v4232 = vld [vmem:[#allocation3 + $0x58] sm:$0xff]
      %v4233 = vld [vmem:[#allocation3 + $0x60] sm:$0xff]
      %v4234 = vld [vmem:[#allocation3 + $0x68] sm:$0xff]
      %v4235 = vld [vmem:[#allocation3 + $0x70] sm:$0xff]
      %v4236 = vld [vmem:[#allocation3 + $0x78] sm:$0xff]
      %s4237 = scalar_lea.vmem %s1, 896
      %v4238 = vld [vmem:[%s4237] sm:$0xf]
      %v4239 = vld [vmem:[%s4237 + $0x4] sm:$0xf]
      %v4240 = vld [vmem:[%s4237 + $0x8] sm:$0xf]
      %v4241 = vld [vmem:[%s4237 + $0xc] sm:$0xf]
      %v4242 = vld [vmem:[%s4237 + $0x10] sm:$0xf]
      %v4243 = vld [vmem:[%s4237 + $0x14] sm:$0xf]
      %v4244 = vld [vmem:[%s4237 + $0x18] sm:$0xf]
      %v4245 = vld [vmem:[%s4237 + $0x1c] sm:$0xf]
      %v4246 = vld [vmem:[%s4237 + $0x20] sm:$0xf]
      %v4247 = vld [vmem:[%s4237 + $0x24] sm:$0xf]
      %v4248 = vld [vmem:[%s4237 + $0x28] sm:$0xf]
      %v4249 = vld [vmem:[%s4237 + $0x2c] sm:$0xf]
      %v4250 = vld [vmem:[%s4237 + $0x30] sm:$0xf]
      %v4251 = vld [vmem:[%s4237 + $0x34] sm:$0xf]
      %v4252 = vld [vmem:[%s4237 + $0x38] sm:$0xf]
      %v4253 = vld [vmem:[%s4237 + $0x3c] sm:$0xf]
      %v4254 = vunpack.c.l.b16 %v4168
      %v4255 = vunpack.c.l.b16 %v4171
      %v4256 = vunpack.c.l.b16 %v4175
      %v4257 = vunpack.c.l.b16 %v4178
      %v4258 = vunpack.c.l.b16 %v4182
      %v4259 = vunpack.c.l.b16 %v4185
      %v4260 = vunpack.c.l.b16 %v4189
      %v4261 = vunpack.c.l.b16 %v4192
      %v4262 = vunpack.c.l.b16 %v4196
      %v4263 = vunpack.c.l.b16 %v4199
      %v4264 = vunpack.c.l.b16 %v4203
      %v4265 = vunpack.c.l.b16 %v4206
      %v4266 = vunpack.c.l.b16 %v4210
      %v4267 = vunpack.c.l.b16 %v4213
      %v4268 = vunpack.c.l.b16 %v4217
      %v4269 = vunpack.c.l.b16 %v4220
      %v4270 = vpack.c.b16 %v4255, %v4254
      %v4271 = vpack.c.b16 %v4257, %v4256
      %v4272 = vpack.c.b16 %v4259, %v4258
      %v4273 = vpack.c.b16 %v4261, %v4260
      %v4274 = vpack.c.b16 %v4263, %v4262
      %v4275 = vpack.c.b16 %v4265, %v4264
      %v4276 = vpack.c.b16 %v4267, %v4266
      %v4277 = vpack.c.b16 %v4269, %v4268
      %v4302 = vunpack.c.l.b16 %v4238
      %v4303 = vunpack.c.l.b16 %v4239
      %v4304 = vunpack.c.l.b16 %v4240
      %v4305 = vunpack.c.l.b16 %v4241
      %v4306 = vunpack.c.l.b16 %v4242
      %v4307 = vunpack.c.l.b16 %v4243
      %v4308 = vunpack.c.l.b16 %v4244
      %v4309 = vunpack.c.l.b16 %v4245
      %v4310 = vunpack.c.l.b16 %v4246
      %v4311 = vunpack.c.l.b16 %v4247
      %v4312 = vunpack.c.l.b16 %v4248
      %v4313 = vunpack.c.l.b16 %v4249
      %v4314 = vunpack.c.l.b16 %v4250
      %v4315 = vunpack.c.l.b16 %v4251
      %v4316 = vunpack.c.l.b16 %v4252
      %v4317 = vunpack.c.l.b16 %v4253
      %v4318 = vpack.c.b16 %v4303, %v4302
      %v4319 = vpack.c.b16 %v4305, %v4304
      %v4320 = vpack.c.b16 %v4307, %v4306
      %v4321 = vpack.c.b16 %v4309, %v4308
      %v4322 = vpack.c.b16 %v4311, %v4310
      %v4323 = vpack.c.b16 %v4313, %v4312
      %v4324 = vpack.c.b16 %v4315, %v4314
      %v4325 = vpack.c.b16 %v4317, %v4316
      %4334 = vmatpush.bf16.msra.mxu0 %v4325
      %4335 = vmatpush.bf16.msra.mxu0 %v4324
      %4336 = vmatpush.bf16.msra.mxu0 %v4323
      %4337 = vmatpush.bf16.msra.mxu0 %v4322
      %4338 = vmatpush.bf16.msra.mxu0 %v4321
      %4339 = vmatpush.bf16.msra.mxu0 %v4320
      %4340 = vmatpush.bf16.msra.mxu0 %v4319
      %4341 = vmatpush.bf16.msra.mxu0 %v4318
      %4342 = vmatmul.bf16.gmra.mxu0 %v4270
      %v4343 = vpop.f32.mrf.mxu0
      %v4344 = vadd.f32 0.0, %v4343
      %v4345 = vpop.f32.mrf.mxu0
      %v4346 = vadd.f32 0.0, %v4345
      %4347 = vmatmul.bf16.gmra.mxu0 %v4271
      %v4348 = vpop.f32.mrf.mxu0
      %v4349 = vadd.f32 0.0, %v4348
      %v4350 = vpop.f32.mrf.mxu0
      %v4351 = vadd.f32 0.0, %v4350
      %4352 = vmatmul.bf16.gmra.mxu0 %v4272
      %v4353 = vpop.f32.mrf.mxu0
      %v4354 = vadd.f32 0.0, %v4353
      %v4355 = vpop.f32.mrf.mxu0
      %v4356 = vadd.f32 0.0, %v4355
      %4357 = vmatmul.bf16.gmra.mxu0 %v4273
      %v4358 = vpop.f32.mrf.mxu0
      %v4359 = vadd.f32 0.0, %v4358
      %v4360 = vpop.f32.mrf.mxu0
      %v4361 = vadd.f32 0.0, %v4360
      %4362 = vmatmul.bf16.gmra.mxu0 %v4274
      %v4363 = vpop.f32.mrf.mxu0
      %v4364 = vadd.f32 0.0, %v4363
      %v4365 = vpop.f32.mrf.mxu0
      %v4366 = vadd.f32 0.0, %v4365
      %4367 = vmatmul.bf16.gmra.mxu0 %v4275
      %v4368 = vpop.f32.mrf.mxu0
      %v4369 = vadd.f32 0.0, %v4368
      %v4370 = vpop.f32.mrf.mxu0
      %v4371 = vadd.f32 0.0, %v4370
      %4372 = vmatmul.bf16.gmra.mxu0 %v4276
      %v4373 = vpop.f32.mrf.mxu0
      %v4374 = vadd.f32 0.0, %v4373
      %v4375 = vpop.f32.mrf.mxu0
      %v4376 = vadd.f32 0.0, %v4375
      %4377 = vmatmul.bf16.gmra.mxu0 %v4277
      %v4378 = vpop.f32.mrf.mxu0
      %v4379 = vadd.f32 0.0, %v4378
      %v4380 = vpop.f32.mrf.mxu0
      %v4381 = vadd.f32 0.0, %v4380
      %4382 = vdwg.mxu0
      %v4383 = vadd.f32 %v4221, %v4344
      %v4384 = vadd.f32 %v4222, %v4346
      %v4385 = vadd.f32 %v4223, %v4349
      %v4386 = vadd.f32 %v4224, %v4351
      %v4387 = vadd.f32 %v4225, %v4354
      %v4388 = vadd.f32 %v4226, %v4356
      %v4389 = vadd.f32 %v4227, %v4359
      %v4390 = vadd.f32 %v4228, %v4361
      %v4391 = vadd.f32 %v4229, %v4364
      %v4392 = vadd.f32 %v4230, %v4366
      %v4393 = vadd.f32 %v4231, %v4369
      %v4394 = vadd.f32 %v4232, %v4371
      %v4395 = vadd.f32 %v4233, %v4374
      %v4396 = vadd.f32 %v4234, %v4376
      %v4397 = vadd.f32 %v4235, %v4379
      %v4398 = vadd.f32 %v4236, %v4381
      %4399 = vst [vmem:[#allocation3] sm:$0xff] %v4383
      %4400 = vst [vmem:[#allocation3 + $0x8] sm:$0xff] %v4384
      %4401 = vst [vmem:[#allocation3 + $0x10] sm:$0xff] %v4385
      %4402 = vst [vmem:[#allocation3 + $0x18] sm:$0xff] %v4386
      %4403 = vst [vmem:[#allocation3 + $0x20] sm:$0xff] %v4387
      %4404 = vst [vmem:[#allocation3 + $0x28] sm:$0xff] %v4388
      %4405 = vst [vmem:[#allocation3 + $0x30] sm:$0xff] %v4389
      %4406 = vst [vmem:[#allocation3 + $0x38] sm:$0xff] %v4390
      %4407 = vst [vmem:[#allocation3 + $0x40] sm:$0xff] %v4391
      %4408 = vst [vmem:[#allocation3 + $0x48] sm:$0xff] %v4392
      %4409 = vst [vmem:[#allocation3 + $0x50] sm:$0xff] %v4393
      %4410 = vst [vmem:[#allocation3 + $0x58] sm:$0xff] %v4394
      %4411 = vst [vmem:[#allocation3 + $0x60] sm:$0xff] %v4395
      %4412 = vst [vmem:[#allocation3 + $0x68] sm:$0xff] %v4396
      %4413 = vst [vmem:[#allocation3 + $0x70] sm:$0xff] %v4397
      %4414 = vst [vmem:[#allocation3 + $0x78] sm:$0xff] %v4398
      %s4415 = scalar_lea.vmem [#allocation2], 192
      %v4416 = vld [vmem:[%s4415] sm:$0xc]
      %v4417 = vld [vmem:[%s4415 + $0x4] sm:$0xf]
      %v4418 = vld [vmem:[%s4415 + $0x8] sm:$0x3]
      %v4419 = vld [vmem:[%s4415 + $0x10] sm:$0xc]
      %v4420 = vld [vmem:[%s4415 + $0x14] sm:$0xf]
      %v4421 = vld [vmem:[%s4415 + $0x18] sm:$0x3]
      %v4422 = vld [vmem:[%s4415 + $0x20] sm:$0xc]
      %v4423 = vld [vmem:[%s4415 + $0x24] sm:$0xf]
      %v4424 = vld [vmem:[%s4415 + $0x28] sm:$0x3]
      %v4425 = vld [vmem:[%s4415 + $0x30] sm:$0xc]
      %v4426 = vld [vmem:[%s4415 + $0x34] sm:$0xf]
      %v4427 = vld [vmem:[%s4415 + $0x38] sm:$0x3]
      %v4428 = vld [vmem:[%s4415 + $0x40] sm:$0xc]
      %v4429 = vld [vmem:[%s4415 + $0x44] sm:$0xf]
      %v4430 = vld [vmem:[%s4415 + $0x48] sm:$0x3]
      %v4431 = vld [vmem:[%s4415 + $0x50] sm:$0xc]
      %v4432 = vld [vmem:[%s4415 + $0x54] sm:$0xf]
      %v4433 = vld [vmem:[%s4415 + $0x58] sm:$0x3]
      %v4434 = vld [vmem:[%s4415 + $0x60] sm:$0xc]
      %v4435 = vld [vmem:[%s4415 + $0x64] sm:$0xf]
      %v4436 = vld [vmem:[%s4415 + $0x68] sm:$0x3]
      %v4437 = vld [vmem:[%s4415 + $0x70] sm:$0xc]
      %v4438 = vld [vmem:[%s4415 + $0x74] sm:$0xf]
      %v4439 = vld [vmem:[%s4415 + $0x78] sm:$0x3]
      %v4464 = vrot.slane %v4416, 6
      %v4465 = vrot.slane %v4464, 4
      %v4466 = vrot.slane %v4417, 6
      %v4467 = vsel %vm2818, %v4465, %v4466
      %v4468 = vrot.slane %v4466, 4
      %v4469 = vrot.slane %v4418, 6
      %v4470 = vsel %vm2818, %v4468, %v4469
      %v4471 = vrot.slane %v4419, 6
      %v4472 = vrot.slane %v4471, 4
      %v4473 = vrot.slane %v4420, 6
      %v4474 = vsel %vm2818, %v4472, %v4473
      %v4475 = vrot.slane %v4473, 4
      %v4476 = vrot.slane %v4421, 6
      %v4477 = vsel %vm2818, %v4475, %v4476
      %v4478 = vrot.slane %v4422, 6
      %v4479 = vrot.slane %v4478, 4
      %v4480 = vrot.slane %v4423, 6
      %v4481 = vsel %vm2818, %v4479, %v4480
      %v4482 = vrot.slane %v4480, 4
      %v4483 = vrot.slane %v4424, 6
      %v4484 = vsel %vm2818, %v4482, %v4483
      %v4485 = vrot.slane %v4425, 6
      %v4486 = vrot.slane %v4485, 4
      %v4487 = vrot.slane %v4426, 6
      %v4488 = vsel %vm2818, %v4486, %v4487
      %v4489 = vrot.slane %v4487, 4
      %v4490 = vrot.slane %v4427, 6
      %v4491 = vsel %vm2818, %v4489, %v4490
      %v4492 = vrot.slane %v4428, 6
      %v4493 = vrot.slane %v4492, 4
      %v4494 = vrot.slane %v4429, 6
      %v4495 = vsel %vm2818, %v4493, %v4494
      %v4496 = vrot.slane %v4494, 4
      %v4497 = vrot.slane %v4430, 6
      %v4498 = vsel %vm2818, %v4496, %v4497
      %v4499 = vrot.slane %v4431, 6
      %v4500 = vrot.slane %v4499, 4
      %v4501 = vrot.slane %v4432, 6
      %v4502 = vsel %vm2818, %v4500, %v4501
      %v4503 = vrot.slane %v4501, 4
      %v4504 = vrot.slane %v4433, 6
      %v4505 = vsel %vm2818, %v4503, %v4504
      %v4506 = vrot.slane %v4434, 6
      %v4507 = vrot.slane %v4506, 4
      %v4508 = vrot.slane %v4435, 6
      %v4509 = vsel %vm2818, %v4507, %v4508
      %v4510 = vrot.slane %v4508, 4
      %v4511 = vrot.slane %v4436, 6
      %v4512 = vsel %vm2818, %v4510, %v4511
      %v4513 = vrot.slane %v4437, 6
      %v4514 = vrot.slane %v4513, 4
      %v4515 = vrot.slane %v4438, 6
      %v4516 = vsel %vm2818, %v4514, %v4515
      %v4517 = vrot.slane %v4515, 4
      %v4518 = vrot.slane %v4439, 6
      %v4519 = vsel %vm2818, %v4517, %v4518
      %v4520 = vld [vmem:[#allocation3] sm:$0xff]
      %v4521 = vld [vmem:[#allocation3 + $0x8] sm:$0xff]
      %v4522 = vld [vmem:[#allocation3 + $0x10] sm:$0xff]
      %v4523 = vld [vmem:[#allocation3 + $0x18] sm:$0xff]
      %v4524 = vld [vmem:[#allocation3 + $0x20] sm:$0xff]
      %v4525 = vld [vmem:[#allocation3 + $0x28] sm:$0xff]
      %v4526 = vld [vmem:[#allocation3 + $0x30] sm:$0xff]
      %v4527 = vld [vmem:[#allocation3 + $0x38] sm:$0xff]
      %v4528 = vld [vmem:[#allocation3 + $0x40] sm:$0xff]
      %v4529 = vld [vmem:[#allocation3 + $0x48] sm:$0xff]
      %v4530 = vld [vmem:[#allocation3 + $0x50] sm:$0xff]
      %v4531 = vld [vmem:[#allocation3 + $0x58] sm:$0xff]
      %v4532 = vld [vmem:[#allocation3 + $0x60] sm:$0xff]
      %v4533 = vld [vmem:[#allocation3 + $0x68] sm:$0xff]
      %v4534 = vld [vmem:[#allocation3 + $0x70] sm:$0xff]
      %v4535 = vld [vmem:[#allocation3 + $0x78] sm:$0xff]
      %s4536 = scalar_lea.vmem %s1, 960
      %v4537 = vld [vmem:[%s4536] sm:$0xf]
      %v4538 = vld [vmem:[%s4536 + $0x4] sm:$0xf]
      %v4539 = vld [vmem:[%s4536 + $0x8] sm:$0xf]
      %v4540 = vld [vmem:[%s4536 + $0xc] sm:$0xf]
      %v4541 = vld [vmem:[%s4536 + $0x10] sm:$0xf]
      %v4542 = vld [vmem:[%s4536 + $0x14] sm:$0xf]
      %v4543 = vld [vmem:[%s4536 + $0x18] sm:$0xf]
      %v4544 = vld [vmem:[%s4536 + $0x1c] sm:$0xf]
      %v4545 = vld [vmem:[%s4536 + $0x20] sm:$0xf]
      %v4546 = vld [vmem:[%s4536 + $0x24] sm:$0xf]
      %v4547 = vld [vmem:[%s4536 + $0x28] sm:$0xf]
      %v4548 = vld [vmem:[%s4536 + $0x2c] sm:$0xf]
      %v4549 = vld [vmem:[%s4536 + $0x30] sm:$0xf]
      %v4550 = vld [vmem:[%s4536 + $0x34] sm:$0xf]
      %v4551 = vld [vmem:[%s4536 + $0x38] sm:$0xf]
      %v4552 = vld [vmem:[%s4536 + $0x3c] sm:$0xf]
      %v4553 = vunpack.c.l.b16 %v4467
      %v4554 = vunpack.c.l.b16 %v4470
      %v4555 = vunpack.c.l.b16 %v4474
      %v4556 = vunpack.c.l.b16 %v4477
      %v4557 = vunpack.c.l.b16 %v4481
      %v4558 = vunpack.c.l.b16 %v4484
      %v4559 = vunpack.c.l.b16 %v4488
      %v4560 = vunpack.c.l.b16 %v4491
      %v4561 = vunpack.c.l.b16 %v4495
      %v4562 = vunpack.c.l.b16 %v4498
      %v4563 = vunpack.c.l.b16 %v4502
      %v4564 = vunpack.c.l.b16 %v4505
      %v4565 = vunpack.c.l.b16 %v4509
      %v4566 = vunpack.c.l.b16 %v4512
      %v4567 = vunpack.c.l.b16 %v4516
      %v4568 = vunpack.c.l.b16 %v4519
      %v4569 = vpack.c.b16 %v4554, %v4553
      %v4570 = vpack.c.b16 %v4556, %v4555
      %v4571 = vpack.c.b16 %v4558, %v4557
      %v4572 = vpack.c.b16 %v4560, %v4559
      %v4573 = vpack.c.b16 %v4562, %v4561
      %v4574 = vpack.c.b16 %v4564, %v4563
      %v4575 = vpack.c.b16 %v4566, %v4565
      %v4576 = vpack.c.b16 %v4568, %v4567
      %v4601 = vunpack.c.l.b16 %v4537
      %v4602 = vunpack.c.l.b16 %v4538
      %v4603 = vunpack.c.l.b16 %v4539
      %v4604 = vunpack.c.l.b16 %v4540
      %v4605 = vunpack.c.l.b16 %v4541
      %v4606 = vunpack.c.l.b16 %v4542
      %v4607 = vunpack.c.l.b16 %v4543
      %v4608 = vunpack.c.l.b16 %v4544
      %v4609 = vunpack.c.l.b16 %v4545
      %v4610 = vunpack.c.l.b16 %v4546
      %v4611 = vunpack.c.l.b16 %v4547
      %v4612 = vunpack.c.l.b16 %v4548
      %v4613 = vunpack.c.l.b16 %v4549
      %v4614 = vunpack.c.l.b16 %v4550
      %v4615 = vunpack.c.l.b16 %v4551
      %v4616 = vunpack.c.l.b16 %v4552
      %v4617 = vpack.c.b16 %v4602, %v4601
      %v4618 = vpack.c.b16 %v4604, %v4603
      %v4619 = vpack.c.b16 %v4606, %v4605
      %v4620 = vpack.c.b16 %v4608, %v4607
      %v4621 = vpack.c.b16 %v4610, %v4609
      %v4622 = vpack.c.b16 %v4612, %v4611
      %v4623 = vpack.c.b16 %v4614, %v4613
      %v4624 = vpack.c.b16 %v4616, %v4615
      %4633 = vmatpush.bf16.msra.mxu0 %v4624
      %4634 = vmatpush.bf16.msra.mxu0 %v4623
      %4635 = vmatpush.bf16.msra.mxu0 %v4622
      %4636 = vmatpush.bf16.msra.mxu0 %v4621
      %4637 = vmatpush.bf16.msra.mxu0 %v4620
      %4638 = vmatpush.bf16.msra.mxu0 %v4619
      %4639 = vmatpush.bf16.msra.mxu0 %v4618
      %4640 = vmatpush.bf16.msra.mxu0 %v4617
      %4641 = vmatmul.bf16.gmra.mxu0 %v4569
      %v4642 = vpop.f32.mrf.mxu0
      %v4643 = vadd.f32 0.0, %v4642
      %v4644 = vpop.f32.mrf.mxu0
      %v4645 = vadd.f32 0.0, %v4644
      %4646 = vmatmul.bf16.gmra.mxu0 %v4570
      %v4647 = vpop.f32.mrf.mxu0
      %v4648 = vadd.f32 0.0, %v4647
      %v4649 = vpop.f32.mrf.mxu0
      %v4650 = vadd.f32 0.0, %v4649
      %4651 = vmatmul.bf16.gmra.mxu0 %v4571
      %v4652 = vpop.f32.mrf.mxu0
      %v4653 = vadd.f32 0.0, %v4652
      %v4654 = vpop.f32.mrf.mxu0
      %v4655 = vadd.f32 0.0, %v4654
      %4656 = vmatmul.bf16.gmra.mxu0 %v4572
      %v4657 = vpop.f32.mrf.mxu0
      %v4658 = vadd.f32 0.0, %v4657
      %v4659 = vpop.f32.mrf.mxu0
      %v4660 = vadd.f32 0.0, %v4659
      %4661 = vmatmul.bf16.gmra.mxu0 %v4573
      %v4662 = vpop.f32.mrf.mxu0
      %v4663 = vadd.f32 0.0, %v4662
      %v4664 = vpop.f32.mrf.mxu0
      %v4665 = vadd.f32 0.0, %v4664
      %4666 = vmatmul.bf16.gmra.mxu0 %v4574
      %v4667 = vpop.f32.mrf.mxu0
      %v4668 = vadd.f32 0.0, %v4667
      %v4669 = vpop.f32.mrf.mxu0
      %v4670 = vadd.f32 0.0, %v4669
      %4671 = vmatmul.bf16.gmra.mxu0 %v4575
      %v4672 = vpop.f32.mrf.mxu0
      %v4673 = vadd.f32 0.0, %v4672
      %v4674 = vpop.f32.mrf.mxu0
      %v4675 = vadd.f32 0.0, %v4674
      %4676 = vmatmul.bf16.gmra.mxu0 %v4576
      %v4677 = vpop.f32.mrf.mxu0
      %v4678 = vadd.f32 0.0, %v4677
      %v4679 = vpop.f32.mrf.mxu0
      %v4680 = vadd.f32 0.0, %v4679
      %4681 = vdwg.mxu0
      %v4682 = vadd.f32 %v4520, %v4643
      %v4683 = vadd.f32 %v4521, %v4645
      %v4684 = vadd.f32 %v4522, %v4648
      %v4685 = vadd.f32 %v4523, %v4650
      %v4686 = vadd.f32 %v4524, %v4653
      %v4687 = vadd.f32 %v4525, %v4655
      %v4688 = vadd.f32 %v4526, %v4658
      %v4689 = vadd.f32 %v4527, %v4660
      %v4690 = vadd.f32 %v4528, %v4663
      %v4691 = vadd.f32 %v4529, %v4665
      %v4692 = vadd.f32 %v4530, %v4668
      %v4693 = vadd.f32 %v4531, %v4670
      %v4694 = vadd.f32 %v4532, %v4673
      %v4695 = vadd.f32 %v4533, %v4675
      %v4696 = vadd.f32 %v4534, %v4678
      %v4697 = vadd.f32 %v4535, %v4680
      %4698 = vst [vmem:[#allocation3] sm:$0xff] %v4682
      %4699 = vst [vmem:[#allocation3 + $0x8] sm:$0xff] %v4683
      %4700 = vst [vmem:[#allocation3 + $0x10] sm:$0xff] %v4684
      %4701 = vst [vmem:[#allocation3 + $0x18] sm:$0xff] %v4685
      %4702 = vst [vmem:[#allocation3 + $0x20] sm:$0xff] %v4686
      %4703 = vst [vmem:[#allocation3 + $0x28] sm:$0xff] %v4687
      %4704 = vst [vmem:[#allocation3 + $0x30] sm:$0xff] %v4688
      %4705 = vst [vmem:[#allocation3 + $0x38] sm:$0xff] %v4689
      %4706 = vst [vmem:[#allocation3 + $0x40] sm:$0xff] %v4690
      %4707 = vst [vmem:[#allocation3 + $0x48] sm:$0xff] %v4691
      %4708 = vst [vmem:[#allocation3 + $0x50] sm:$0xff] %v4692
      %4709 = vst [vmem:[#allocation3 + $0x58] sm:$0xff] %v4693
      %4710 = vst [vmem:[#allocation3 + $0x60] sm:$0xff] %v4694
      %4711 = vst [vmem:[#allocation3 + $0x68] sm:$0xff] %v4695
      %4712 = vst [vmem:[#allocation3 + $0x70] sm:$0xff] %v4696
      %4713 = vst [vmem:[#allocation3 + $0x78] sm:$0xff] %v4697
      %v4714 = vld [vmem:[%s4415 + $0x4] sm:$0xf]
      %v4715 = vld [vmem:[%s4415 + $0x8] sm:$0xf]
      %v4716 = vld [vmem:[%s4415 + $0x14] sm:$0xf]
      %v4717 = vld [vmem:[%s4415 + $0x18] sm:$0xf]
      %v4718 = vld [vmem:[%s4415 + $0x24] sm:$0xf]
      %v4719 = vld [vmem:[%s4415 + $0x28] sm:$0xf]
      %v4720 = vld [vmem:[%s4415 + $0x34] sm:$0xf]
      %v4721 = vld [vmem:[%s4415 + $0x38] sm:$0xf]
      %v4722 = vld [vmem:[%s4415 + $0x44] sm:$0xf]
      %v4723 = vld [vmem:[%s4415 + $0x48] sm:$0xf]
      %v4724 = vld [vmem:[%s4415 + $0x54] sm:$0xf]
      %v4725 = vld [vmem:[%s4415 + $0x58] sm:$0xf]
      %v4726 = vld [vmem:[%s4415 + $0x64] sm:$0xf]
      %v4727 = vld [vmem:[%s4415 + $0x68] sm:$0xf]
      %v4728 = vld [vmem:[%s4415 + $0x74] sm:$0xf]
      %v4729 = vld [vmem:[%s4415 + $0x78] sm:$0xf]
      %v4730 = vld [vmem:[#allocation3] sm:$0xff]
      %v4731 = vld [vmem:[#allocation3 + $0x8] sm:$0xff]
      %v4732 = vld [vmem:[#allocation3 + $0x10] sm:$0xff]
      %v4733 = vld [vmem:[#allocation3 + $0x18] sm:$0xff]
      %v4734 = vld [vmem:[#allocation3 + $0x20] sm:$0xff]
      %v4735 = vld [vmem:[#allocation3 + $0x28] sm:$0xff]
      %v4736 = vld [vmem:[#allocation3 + $0x30] sm:$0xff]
      %v4737 = vld [vmem:[#allocation3 + $0x38] sm:$0xff]
      %v4738 = vld [vmem:[#allocation3 + $0x40] sm:$0xff]
      %v4739 = vld [vmem:[#allocation3 + $0x48] sm:$0xff]
      %v4740 = vld [vmem:[#allocation3 + $0x50] sm:$0xff]
      %v4741 = vld [vmem:[#allocation3 + $0x58] sm:$0xff]
      %v4742 = vld [vmem:[#allocation3 + $0x60] sm:$0xff]
      %v4743 = vld [vmem:[#allocation3 + $0x68] sm:$0xff]
      %v4744 = vld [vmem:[#allocation3 + $0x70] sm:$0xff]
      %v4745 = vld [vmem:[#allocation3 + $0x78] sm:$0xff]
      %s4746 = scalar_lea.vmem %s1, 1024
      %v4747 = vld [vmem:[%s4746] sm:$0xf]
      %v4748 = vld [vmem:[%s4746 + $0x4] sm:$0xf]
      %v4749 = vld [vmem:[%s4746 + $0x8] sm:$0xf]
      %v4750 = vld [vmem:[%s4746 + $0xc] sm:$0xf]
      %v4751 = vld [vmem:[%s4746 + $0x10] sm:$0xf]
      %v4752 = vld [vmem:[%s4746 + $0x14] sm:$0xf]
      %v4753 = vld [vmem:[%s4746 + $0x18] sm:$0xf]
      %v4754 = vld [vmem:[%s4746 + $0x1c] sm:$0xf]
      %v4755 = vld [vmem:[%s4746 + $0x20] sm:$0xf]
      %v4756 = vld [vmem:[%s4746 + $0x24] sm:$0xf]
      %v4757 = vld [vmem:[%s4746 + $0x28] sm:$0xf]
      %v4758 = vld [vmem:[%s4746 + $0x2c] sm:$0xf]
      %v4759 = vld [vmem:[%s4746 + $0x30] sm:$0xf]
      %v4760 = vld [vmem:[%s4746 + $0x34] sm:$0xf]
      %v4761 = vld [vmem:[%s4746 + $0x38] sm:$0xf]
      %v4762 = vld [vmem:[%s4746 + $0x3c] sm:$0xf]
      %v4779 = vunpack.c.l.b16 %v4714
      %v4780 = vunpack.c.l.b16 %v4715
      %v4781 = vunpack.c.l.b16 %v4716
      %v4782 = vunpack.c.l.b16 %v4717
      %v4783 = vunpack.c.l.b16 %v4718
      %v4784 = vunpack.c.l.b16 %v4719
      %v4785 = vunpack.c.l.b16 %v4720
      %v4786 = vunpack.c.l.b16 %v4721
      %v4787 = vunpack.c.l.b16 %v4722
      %v4788 = vunpack.c.l.b16 %v4723
      %v4789 = vunpack.c.l.b16 %v4724
      %v4790 = vunpack.c.l.b16 %v4725
      %v4791 = vunpack.c.l.b16 %v4726
      %v4792 = vunpack.c.l.b16 %v4727
      %v4793 = vunpack.c.l.b16 %v4728
      %v4794 = vunpack.c.l.b16 %v4729
      %v4795 = vpack.c.b16 %v4780, %v4779
      %v4796 = vpack.c.b16 %v4782, %v4781
      %v4797 = vpack.c.b16 %v4784, %v4783
      %v4798 = vpack.c.b16 %v4786, %v4785
      %v4799 = vpack.c.b16 %v4788, %v4787
      %v4800 = vpack.c.b16 %v4790, %v4789
      %v4801 = vpack.c.b16 %v4792, %v4791
      %v4802 = vpack.c.b16 %v4794, %v4793
      %v4827 = vunpack.c.l.b16 %v4747
      %v4828 = vunpack.c.l.b16 %v4748
      %v4829 = vunpack.c.l.b16 %v4749
      %v4830 = vunpack.c.l.b16 %v4750
      %v4831 = vunpack.c.l.b16 %v4751
      %v4832 = vunpack.c.l.b16 %v4752
      %v4833 = vunpack.c.l.b16 %v4753
      %v4834 = vunpack.c.l.b16 %v4754
      %v4835 = vunpack.c.l.b16 %v4755
      %v4836 = vunpack.c.l.b16 %v4756
      %v4837 = vunpack.c.l.b16 %v4757
      %v4838 = vunpack.c.l.b16 %v4758
      %v4839 = vunpack.c.l.b16 %v4759
      %v4840 = vunpack.c.l.b16 %v4760
      %v4841 = vunpack.c.l.b16 %v4761
      %v4842 = vunpack.c.l.b16 %v4762
      %v4843 = vpack.c.b16 %v4828, %v4827
      %v4844 = vpack.c.b16 %v4830, %v4829
      %v4845 = vpack.c.b16 %v4832, %v4831
      %v4846 = vpack.c.b16 %v4834, %v4833
      %v4847 = vpack.c.b16 %v4836, %v4835
      %v4848 = vpack.c.b16 %v4838, %v4837
      %v4849 = vpack.c.b16 %v4840, %v4839
      %v4850 = vpack.c.b16 %v4842, %v4841
      %4859 = vmatpush.bf16.msra.mxu0 %v4850
      %4860 = vmatpush.bf16.msra.mxu0 %v4849
      %4861 = vmatpush.bf16.msra.mxu0 %v4848
      %4862 = vmatpush.bf16.msra.mxu0 %v4847
      %4863 = vmatpush.bf16.msra.mxu0 %v4846
      %4864 = vmatpush.bf16.msra.mxu0 %v4845
      %4865 = vmatpush.bf16.msra.mxu0 %v4844
      %4866 = vmatpush.bf16.msra.mxu0 %v4843
      %4867 = vmatmul.bf16.gmra.mxu0 %v4795
      %v4868 = vpop.f32.mrf.mxu0
      %v4869 = vadd.f32 0.0, %v4868
      %v4870 = vpop.f32.mrf.mxu0
      %v4871 = vadd.f32 0.0, %v4870
      %4872 = vmatmul.bf16.gmra.mxu0 %v4796
      %v4873 = vpop.f32.mrf.mxu0
      %v4874 = vadd.f32 0.0, %v4873
      %v4875 = vpop.f32.mrf.mxu0
      %v4876 = vadd.f32 0.0, %v4875
      %4877 = vmatmul.bf16.gmra.mxu0 %v4797
      %v4878 = vpop.f32.mrf.mxu0
      %v4879 = vadd.f32 0.0, %v4878
      %v4880 = vpop.f32.mrf.mxu0
      %v4881 = vadd.f32 0.0, %v4880
      %4882 = vmatmul.bf16.gmra.mxu0 %v4798
      %v4883 = vpop.f32.mrf.mxu0
      %v4884 = vadd.f32 0.0, %v4883
      %v4885 = vpop.f32.mrf.mxu0
      %v4886 = vadd.f32 0.0, %v4885
      %4887 = vmatmul.bf16.gmra.mxu0 %v4799
      %v4888 = vpop.f32.mrf.mxu0
      %v4889 = vadd.f32 0.0, %v4888
      %v4890 = vpop.f32.mrf.mxu0
      %v4891 = vadd.f32 0.0, %v4890
      %4892 = vmatmul.bf16.gmra.mxu0 %v4800
      %v4893 = vpop.f32.mrf.mxu0
      %v4894 = vadd.f32 0.0, %v4893
      %v4895 = vpop.f32.mrf.mxu0
      %v4896 = vadd.f32 0.0, %v4895
      %4897 = vmatmul.bf16.gmra.mxu0 %v4801
      %v4898 = vpop.f32.mrf.mxu0
      %v4899 = vadd.f32 0.0, %v4898
      %v4900 = vpop.f32.mrf.mxu0
      %v4901 = vadd.f32 0.0, %v4900
      %4902 = vmatmul.bf16.gmra.mxu0 %v4802
      %v4903 = vpop.f32.mrf.mxu0
      %v4904 = vadd.f32 0.0, %v4903
      %v4905 = vpop.f32.mrf.mxu0
      %v4906 = vadd.f32 0.0, %v4905
      %4907 = vdwg.mxu0
      %v4908 = vadd.f32 %v4730, %v4869
      %v4909 = vadd.f32 %v4731, %v4871
      %v4910 = vadd.f32 %v4732, %v4874
      %v4911 = vadd.f32 %v4733, %v4876
      %v4912 = vadd.f32 %v4734, %v4879
      %v4913 = vadd.f32 %v4735, %v4881
      %v4914 = vadd.f32 %v4736, %v4884
      %v4915 = vadd.f32 %v4737, %v4886
      %v4916 = vadd.f32 %v4738, %v4889
      %v4917 = vadd.f32 %v4739, %v4891
      %v4918 = vadd.f32 %v4740, %v4894
      %v4919 = vadd.f32 %v4741, %v4896
      %v4920 = vadd.f32 %v4742, %v4899
      %v4921 = vadd.f32 %v4743, %v4901
      %v4922 = vadd.f32 %v4744, %v4904
      %v4923 = vadd.f32 %v4745, %v4906
      %4924 = vst [vmem:[#allocation3] sm:$0xff] %v4908
      %4925 = vst [vmem:[#allocation3 + $0x8] sm:$0xff] %v4909
      %4926 = vst [vmem:[#allocation3 + $0x10] sm:$0xff] %v4910
      %4927 = vst [vmem:[#allocation3 + $0x18] sm:$0xff] %v4911
      %4928 = vst [vmem:[#allocation3 + $0x20] sm:$0xff] %v4912
      %4929 = vst [vmem:[#allocation3 + $0x28] sm:$0xff] %v4913
      %4930 = vst [vmem:[#allocation3 + $0x30] sm:$0xff] %v4914
      %4931 = vst [vmem:[#allocation3 + $0x38] sm:$0xff] %v4915
      %4932 = vst [vmem:[#allocation3 + $0x40] sm:$0xff] %v4916
      %4933 = vst [vmem:[#allocation3 + $0x48] sm:$0xff] %v4917
      %4934 = vst [vmem:[#allocation3 + $0x50] sm:$0xff] %v4918
      %4935 = vst [vmem:[#allocation3 + $0x58] sm:$0xff] %v4919
      %4936 = vst [vmem:[#allocation3 + $0x60] sm:$0xff] %v4920
      %4937 = vst [vmem:[#allocation3 + $0x68] sm:$0xff] %v4921
      %4938 = vst [vmem:[#allocation3 + $0x70] sm:$0xff] %v4922
      %4939 = vst [vmem:[#allocation3 + $0x78] sm:$0xff] %v4923
      %v4940 = vld [vmem:[%s4415 + $0x4] sm:$0xc]
      %v4941 = vld [vmem:[%s4415 + $0x8] sm:$0xf]
      %v4942 = vld [vmem:[%s4415 + $0xc] sm:$0x3]
      %v4943 = vld [vmem:[%s4415 + $0x14] sm:$0xc]
      %v4944 = vld [vmem:[%s4415 + $0x18] sm:$0xf]
      %v4945 = vld [vmem:[%s4415 + $0x1c] sm:$0x3]
      %v4946 = vld [vmem:[%s4415 + $0x24] sm:$0xc]
      %v4947 = vld [vmem:[%s4415 + $0x28] sm:$0xf]
      %v4948 = vld [vmem:[%s4415 + $0x2c] sm:$0x3]
      %v4949 = vld [vmem:[%s4415 + $0x34] sm:$0xc]
      %v4950 = vld [vmem:[%s4415 + $0x38] sm:$0xf]
      %v4951 = vld [vmem:[%s4415 + $0x3c] sm:$0x3]
      %v4952 = vld [vmem:[%s4415 + $0x44] sm:$0xc]
      %v4953 = vld [vmem:[%s4415 + $0x48] sm:$0xf]
      %v4954 = vld [vmem:[%s4415 + $0x4c] sm:$0x3]
      %v4955 = vld [vmem:[%s4415 + $0x54] sm:$0xc]
      %v4956 = vld [vmem:[%s4415 + $0x58] sm:$0xf]
      %v4957 = vld [vmem:[%s4415 + $0x5c] sm:$0x3]
      %v4958 = vld [vmem:[%s4415 + $0x64] sm:$0xc]
      %v4959 = vld [vmem:[%s4415 + $0x68] sm:$0xf]
      %v4960 = vld [vmem:[%s4415 + $0x6c] sm:$0x3]
      %v4961 = vld [vmem:[%s4415 + $0x74] sm:$0xc]
      %v4962 = vld [vmem:[%s4415 + $0x78] sm:$0xf]
      %v4963 = vld [vmem:[%s4415 + $0x7c] sm:$0x3]
      %v4988 = vrot.slane %v4940, 6
      %v4989 = vrot.slane %v4988, 4
      %v4990 = vrot.slane %v4941, 6
      %v4991 = vsel %vm2818, %v4989, %v4990
      %v4992 = vrot.slane %v4990, 4
      %v4993 = vrot.slane %v4942, 6
      %v4994 = vsel %vm2818, %v4992, %v4993
      %v4995 = vrot.slane %v4943, 6
      %v4996 = vrot.slane %v4995, 4
      %v4997 = vrot.slane %v4944, 6
      %v4998 = vsel %vm2818, %v4996, %v4997
      %v4999 = vrot.slane %v4997, 4
      %v5000 = vrot.slane %v4945, 6
      %v5001 = vsel %vm2818, %v4999, %v5000
      %v5002 = vrot.slane %v4946, 6
      %v5003 = vrot.slane %v5002, 4
      %v5004 = vrot.slane %v4947, 6
      %v5005 = vsel %vm2818, %v5003, %v5004
      %v5006 = vrot.slane %v5004, 4
      %v5007 = vrot.slane %v4948, 6
      %v5008 = vsel %vm2818, %v5006, %v5007
      %v5009 = vrot.slane %v4949, 6
      %v5010 = vrot.slane %v5009, 4
      %v5011 = vrot.slane %v4950, 6
      %v5012 = vsel %vm2818, %v5010, %v5011
      %v5013 = vrot.slane %v5011, 4
      %v5014 = vrot.slane %v4951, 6
      %v5015 = vsel %vm2818, %v5013, %v5014
      %v5016 = vrot.slane %v4952, 6
      %v5017 = vrot.slane %v5016, 4
      %v5018 = vrot.slane %v4953, 6
      %v5019 = vsel %vm2818, %v5017, %v5018
      %v5020 = vrot.slane %v5018, 4
      %v5021 = vrot.slane %v4954, 6
      %v5022 = vsel %vm2818, %v5020, %v5021
      %v5023 = vrot.slane %v4955, 6
      %v5024 = vrot.slane %v5023, 4
      %v5025 = vrot.slane %v4956, 6
      %v5026 = vsel %vm2818, %v5024, %v5025
      %v5027 = vrot.slane %v5025, 4
      %v5028 = vrot.slane %v4957, 6
      %v5029 = vsel %vm2818, %v5027, %v5028
      %v5030 = vrot.slane %v4958, 6
      %v5031 = vrot.slane %v5030, 4
      %v5032 = vrot.slane %v4959, 6
      %v5033 = vsel %vm2818, %v5031, %v5032
      %v5034 = vrot.slane %v5032, 4
      %v5035 = vrot.slane %v4960, 6
      %v5036 = vsel %vm2818, %v5034, %v5035
      %v5037 = vrot.slane %v4961, 6
      %v5038 = vrot.slane %v5037, 4
      %v5039 = vrot.slane %v4962, 6
      %v5040 = vsel %vm2818, %v5038, %v5039
      %v5041 = vrot.slane %v5039, 4
      %v5042 = vrot.slane %v4963, 6
      %v5043 = vsel %vm2818, %v5041, %v5042
      %v5044 = vld [vmem:[#allocation3] sm:$0xff]
      %v5045 = vld [vmem:[#allocation3 + $0x8] sm:$0xff]
      %v5046 = vld [vmem:[#allocation3 + $0x10] sm:$0xff]
      %v5047 = vld [vmem:[#allocation3 + $0x18] sm:$0xff]
      %v5048 = vld [vmem:[#allocation3 + $0x20] sm:$0xff]
      %v5049 = vld [vmem:[#allocation3 + $0x28] sm:$0xff]
      %v5050 = vld [vmem:[#allocation3 + $0x30] sm:$0xff]
      %v5051 = vld [vmem:[#allocation3 + $0x38] sm:$0xff]
      %v5052 = vld [vmem:[#allocation3 + $0x40] sm:$0xff]
      %v5053 = vld [vmem:[#allocation3 + $0x48] sm:$0xff]
      %v5054 = vld [vmem:[#allocation3 + $0x50] sm:$0xff]
      %v5055 = vld [vmem:[#allocation3 + $0x58] sm:$0xff]
      %v5056 = vld [vmem:[#allocation3 + $0x60] sm:$0xff]
      %v5057 = vld [vmem:[#allocation3 + $0x68] sm:$0xff]
      %v5058 = vld [vmem:[#allocation3 + $0x70] sm:$0xff]
      %v5059 = vld [vmem:[#allocation3 + $0x78] sm:$0xff]
      %s5060 = scalar_lea.vmem %s1, 1088
      %v5061 = vld [vmem:[%s5060] sm:$0xf]
      %v5062 = vld [vmem:[%s5060 + $0x4] sm:$0xf]
      %v5063 = vld [vmem:[%s5060 + $0x8] sm:$0xf]
      %v5064 = vld [vmem:[%s5060 + $0xc] sm:$0xf]
      %v5065 = vld [vmem:[%s5060 + $0x10] sm:$0xf]
      %v5066 = vld [vmem:[%s5060 + $0x14] sm:$0xf]
      %v5067 = vld [vmem:[%s5060 + $0x18] sm:$0xf]
      %v5068 = vld [vmem:[%s5060 + $0x1c] sm:$0xf]
      %v5069 = vld [vmem:[%s5060 + $0x20] sm:$0xf]
      %v5070 = vld [vmem:[%s5060 + $0x24] sm:$0xf]
      %v5071 = vld [vmem:[%s5060 + $0x28] sm:$0xf]
      %v5072 = vld [vmem:[%s5060 + $0x2c] sm:$0xf]
      %v5073 = vld [vmem:[%s5060 + $0x30] sm:$0xf]
      %v5074 = vld [vmem:[%s5060 + $0x34] sm:$0xf]
      %v5075 = vld [vmem:[%s5060 + $0x38] sm:$0xf]
      %v5076 = vld [vmem:[%s5060 + $0x3c] sm:$0xf]
      %v5077 = vunpack.c.l.b16 %v4991
      %v5078 = vunpack.c.l.b16 %v4994
      %v5079 = vunpack.c.l.b16 %v4998
      %v5080 = vunpack.c.l.b16 %v5001
      %v5081 = vunpack.c.l.b16 %v5005
      %v5082 = vunpack.c.l.b16 %v5008
      %v5083 = vunpack.c.l.b16 %v5012
      %v5084 = vunpack.c.l.b16 %v5015
      %v5085 = vunpack.c.l.b16 %v5019
      %v5086 = vunpack.c.l.b16 %v5022
      %v5087 = vunpack.c.l.b16 %v5026
      %v5088 = vunpack.c.l.b16 %v5029
      %v5089 = vunpack.c.l.b16 %v5033
      %v5090 = vunpack.c.l.b16 %v5036
      %v5091 = vunpack.c.l.b16 %v5040
      %v5092 = vunpack.c.l.b16 %v5043
      %v5093 = vpack.c.b16 %v5078, %v5077
      %v5094 = vpack.c.b16 %v5080, %v5079
      %v5095 = vpack.c.b16 %v5082, %v5081
      %v5096 = vpack.c.b16 %v5084, %v5083
      %v5097 = vpack.c.b16 %v5086, %v5085
      %v5098 = vpack.c.b16 %v5088, %v5087
      %v5099 = vpack.c.b16 %v5090, %v5089
      %v5100 = vpack.c.b16 %v5092, %v5091
      %v5125 = vunpack.c.l.b16 %v5061
      %v5126 = vunpack.c.l.b16 %v5062
      %v5127 = vunpack.c.l.b16 %v5063
      %v5128 = vunpack.c.l.b16 %v5064
      %v5129 = vunpack.c.l.b16 %v5065
      %v5130 = vunpack.c.l.b16 %v5066
      %v5131 = vunpack.c.l.b16 %v5067
      %v5132 = vunpack.c.l.b16 %v5068
      %v5133 = vunpack.c.l.b16 %v5069
      %v5134 = vunpack.c.l.b16 %v5070
      %v5135 = vunpack.c.l.b16 %v5071
      %v5136 = vunpack.c.l.b16 %v5072
      %v5137 = vunpack.c.l.b16 %v5073
      %v5138 = vunpack.c.l.b16 %v5074
      %v5139 = vunpack.c.l.b16 %v5075
      %v5140 = vunpack.c.l.b16 %v5076
      %v5141 = vpack.c.b16 %v5126, %v5125
      %v5142 = vpack.c.b16 %v5128, %v5127
      %v5143 = vpack.c.b16 %v5130, %v5129
      %v5144 = vpack.c.b16 %v5132, %v5131
      %v5145 = vpack.c.b16 %v5134, %v5133
      %v5146 = vpack.c.b16 %v5136, %v5135
      %v5147 = vpack.c.b16 %v5138, %v5137
      %v5148 = vpack.c.b16 %v5140, %v5139
      %5157 = vmatpush.bf16.msra.mxu0 %v5148
      %5158 = vmatpush.bf16.msra.mxu0 %v5147
      %5159 = vmatpush.bf16.msra.mxu0 %v5146
      %5160 = vmatpush.bf16.msra.mxu0 %v5145
      %5161 = vmatpush.bf16.msra.mxu0 %v5144
      %5162 = vmatpush.bf16.msra.mxu0 %v5143
      %5163 = vmatpush.bf16.msra.mxu0 %v5142
      %5164 = vmatpush.bf16.msra.mxu0 %v5141
      %5165 = vmatmul.bf16.gmra.mxu0 %v5093
      %v5166 = vpop.f32.mrf.mxu0
      %v5167 = vadd.f32 0.0, %v5166
      %v5168 = vpop.f32.mrf.mxu0
      %v5169 = vadd.f32 0.0, %v5168
      %5170 = vmatmul.bf16.gmra.mxu0 %v5094
      %v5171 = vpop.f32.mrf.mxu0
      %v5172 = vadd.f32 0.0, %v5171
      %v5173 = vpop.f32.mrf.mxu0
      %v5174 = vadd.f32 0.0, %v5173
      %5175 = vmatmul.bf16.gmra.mxu0 %v5095
      %v5176 = vpop.f32.mrf.mxu0
      %v5177 = vadd.f32 0.0, %v5176
      %v5178 = vpop.f32.mrf.mxu0
      %v5179 = vadd.f32 0.0, %v5178
      %5180 = vmatmul.bf16.gmra.mxu0 %v5096
      %v5181 = vpop.f32.mrf.mxu0
      %v5182 = vadd.f32 0.0, %v5181
      %v5183 = vpop.f32.mrf.mxu0
      %v5184 = vadd.f32 0.0, %v5183
      %5185 = vmatmul.bf16.gmra.mxu0 %v5097
      %v5186 = vpop.f32.mrf.mxu0
      %v5187 = vadd.f32 0.0, %v5186
      %v5188 = vpop.f32.mrf.mxu0
      %v5189 = vadd.f32 0.0, %v5188
      %5190 = vmatmul.bf16.gmra.mxu0 %v5098
      %v5191 = vpop.f32.mrf.mxu0
      %v5192 = vadd.f32 0.0, %v5191
      %v5193 = vpop.f32.mrf.mxu0
      %v5194 = vadd.f32 0.0, %v5193
      %5195 = vmatmul.bf16.gmra.mxu0 %v5099
      %v5196 = vpop.f32.mrf.mxu0
      %v5197 = vadd.f32 0.0, %v5196
      %v5198 = vpop.f32.mrf.mxu0
      %v5199 = vadd.f32 0.0, %v5198
      %5200 = vmatmul.bf16.gmra.mxu0 %v5100
      %v5201 = vpop.f32.mrf.mxu0
      %v5202 = vadd.f32 0.0, %v5201
      %v5203 = vpop.f32.mrf.mxu0
      %v5204 = vadd.f32 0.0, %v5203
      %5205 = vdwg.mxu0
      %v5206 = vadd.f32 %v5044, %v5167
      %v5207 = vadd.f32 %v5045, %v5169
      %v5208 = vadd.f32 %v5046, %v5172
      %v5209 = vadd.f32 %v5047, %v5174
      %v5210 = vadd.f32 %v5048, %v5177
      %v5211 = vadd.f32 %v5049, %v5179
      %v5212 = vadd.f32 %v5050, %v5182
      %v5213 = vadd.f32 %v5051, %v5184
      %v5214 = vadd.f32 %v5052, %v5187
      %v5215 = vadd.f32 %v5053, %v5189
      %v5216 = vadd.f32 %v5054, %v5192
      %v5217 = vadd.f32 %v5055, %v5194
      %v5218 = vadd.f32 %v5056, %v5197
      %v5219 = vadd.f32 %v5057, %v5199
      %v5220 = vadd.f32 %v5058, %v5202
      %v5221 = vadd.f32 %v5059, %v5204
      %5222 = vst [vmem:[#allocation3] sm:$0xff] %v5206
      %5223 = vst [vmem:[#allocation3 + $0x8] sm:$0xff] %v5207
      %5224 = vst [vmem:[#allocation3 + $0x10] sm:$0xff] %v5208
      %5225 = vst [vmem:[#allocation3 + $0x18] sm:$0xff] %v5209
      %5226 = vst [vmem:[#allocation3 + $0x20] sm:$0xff] %v5210
      %5227 = vst [vmem:[#allocation3 + $0x28] sm:$0xff] %v5211
      %5228 = vst [vmem:[#allocation3 + $0x30] sm:$0xff] %v5212
      %5229 = vst [vmem:[#allocation3 + $0x38] sm:$0xff] %v5213
      %5230 = vst [vmem:[#allocation3 + $0x40] sm:$0xff] %v5214
      %5231 = vst [vmem:[#allocation3 + $0x48] sm:$0xff] %v5215
      %5232 = vst [vmem:[#allocation3 + $0x50] sm:$0xff] %v5216
      %5233 = vst [vmem:[#allocation3 + $0x58] sm:$0xff] %v5217
      %5234 = vst [vmem:[#allocation3 + $0x60] sm:$0xff] %v5218
      %5235 = vst [vmem:[#allocation3 + $0x68] sm:$0xff] %v5219
      %5236 = vst [vmem:[#allocation3 + $0x70] sm:$0xff] %v5220
      %5237 = vst [vmem:[#allocation3 + $0x78] sm:$0xff] %v5221
      %s5238 = scalar_lea.vmem [#allocation2], 32
      %v5239 = vld [vmem:[%s5238] sm:$0xe]
      %v5240 = vld [vmem:[%s5238 + $0x4] sm:$0xf]
      %v5241 = vld [vmem:[%s5238 + $0x8] sm:$0x1]
      %v5242 = vld [vmem:[%s5238 + $0x10] sm:$0xe]
      %v5243 = vld [vmem:[%s5238 + $0x14] sm:$0xf]
      %v5244 = vld [vmem:[%s5238 + $0x18] sm:$0x1]
      %v5245 = vld [vmem:[%s5238 + $0x20] sm:$0xe]
      %v5246 = vld [vmem:[%s5238 + $0x24] sm:$0xf]
      %v5247 = vld [vmem:[%s5238 + $0x28] sm:$0x1]
      %v5248 = vld [vmem:[%s5238 + $0x30] sm:$0xe]
      %v5249 = vld [vmem:[%s5238 + $0x34] sm:$0xf]
      %v5250 = vld [vmem:[%s5238 + $0x38] sm:$0x1]
      %v5251 = vld [vmem:[%s5238 + $0x40] sm:$0xe]
      %v5252 = vld [vmem:[%s5238 + $0x44] sm:$0xf]
      %v5253 = vld [vmem:[%s5238 + $0x48] sm:$0x1]
      %v5254 = vld [vmem:[%s5238 + $0x50] sm:$0xe]
      %v5255 = vld [vmem:[%s5238 + $0x54] sm:$0xf]
      %v5256 = vld [vmem:[%s5238 + $0x58] sm:$0x1]
      %v5257 = vld [vmem:[%s5238 + $0x60] sm:$0xe]
      %v5258 = vld [vmem:[%s5238 + $0x64] sm:$0xf]
      %v5259 = vld [vmem:[%s5238 + $0x68] sm:$0x1]
      %v5260 = vld [vmem:[%s5238 + $0x70] sm:$0xe]
      %v5261 = vld [vmem:[%s5238 + $0x74] sm:$0xf]
      %v5262 = vld [vmem:[%s5238 + $0x78] sm:$0x1]
      %v5287 = vrot.slane %v5239, 5
      %v5288 = vrot.slane %v5287, 4
      %v5289 = vrot.slane %v5240, 5
      %v5290 = vsel %vm870, %v5288, %v5289
      %v5291 = vrot.slane %v5289, 4
      %v5292 = vrot.slane %v5241, 5
      %v5293 = vsel %vm870, %v5291, %v5292
      %v5294 = vrot.slane %v5242, 5
      %v5295 = vrot.slane %v5294, 4
      %v5296 = vrot.slane %v5243, 5
      %v5297 = vsel %vm870, %v5295, %v5296
      %v5298 = vrot.slane %v5296, 4
      %v5299 = vrot.slane %v5244, 5
      %v5300 = vsel %vm870, %v5298, %v5299
      %v5301 = vrot.slane %v5245, 5
      %v5302 = vrot.slane %v5301, 4
      %v5303 = vrot.slane %v5246, 5
      %v5304 = vsel %vm870, %v5302, %v5303
      %v5305 = vrot.slane %v5303, 4
      %v5306 = vrot.slane %v5247, 5
      %v5307 = vsel %vm870, %v5305, %v5306
      %v5308 = vrot.slane %v5248, 5
      %v5309 = vrot.slane %v5308, 4
      %v5310 = vrot.slane %v5249, 5
      %v5311 = vsel %vm870, %v5309, %v5310
      %v5312 = vrot.slane %v5310, 4
      %v5313 = vrot.slane %v5250, 5
      %v5314 = vsel %vm870, %v5312, %v5313
      %v5315 = vrot.slane %v5251, 5
      %v5316 = vrot.slane %v5315, 4
      %v5317 = vrot.slane %v5252, 5
      %v5318 = vsel %vm870, %v5316, %v5317
      %v5319 = vrot.slane %v5317, 4
      %v5320 = vrot.slane %v5253, 5
      %v5321 = vsel %vm870, %v5319, %v5320
      %v5322 = vrot.slane %v5254, 5
      %v5323 = vrot.slane %v5322, 4
      %v5324 = vrot.slane %v5255, 5
      %v5325 = vsel %vm870, %v5323, %v5324
      %v5326 = vrot.slane %v5324, 4
      %v5327 = vrot.slane %v5256, 5
      %v5328 = vsel %vm870, %v5326, %v5327
      %v5329 = vrot.slane %v5257, 5
      %v5330 = vrot.slane %v5329, 4
      %v5331 = vrot.slane %v5258, 5
      %v5332 = vsel %vm870, %v5330, %v5331
      %v5333 = vrot.slane %v5331, 4
      %v5334 = vrot.slane %v5259, 5
      %v5335 = vsel %vm870, %v5333, %v5334
      %v5336 = vrot.slane %v5260, 5
      %v5337 = vrot.slane %v5336, 4
      %v5338 = vrot.slane %v5261, 5
      %v5339 = vsel %vm870, %v5337, %v5338
      %v5340 = vrot.slane %v5338, 4
      %v5341 = vrot.slane %v5262, 5
      %v5342 = vsel %vm870, %v5340, %v5341
      %v5343 = vld [vmem:[#allocation3] sm:$0xff]
      %v5344 = vld [vmem:[#allocation3 + $0x8] sm:$0xff]
      %v5345 = vld [vmem:[#allocation3 + $0x10] sm:$0xff]
      %v5346 = vld [vmem:[#allocation3 + $0x18] sm:$0xff]
      %v5347 = vld [vmem:[#allocation3 + $0x20] sm:$0xff]
      %v5348 = vld [vmem:[#allocation3 + $0x28] sm:$0xff]
      %v5349 = vld [vmem:[#allocation3 + $0x30] sm:$0xff]
      %v5350 = vld [vmem:[#allocation3 + $0x38] sm:$0xff]
      %v5351 = vld [vmem:[#allocation3 + $0x40] sm:$0xff]
      %v5352 = vld [vmem:[#allocation3 + $0x48] sm:$0xff]
      %v5353 = vld [vmem:[#allocation3 + $0x50] sm:$0xff]
      %v5354 = vld [vmem:[#allocation3 + $0x58] sm:$0xff]
      %v5355 = vld [vmem:[#allocation3 + $0x60] sm:$0xff]
      %v5356 = vld [vmem:[#allocation3 + $0x68] sm:$0xff]
      %v5357 = vld [vmem:[#allocation3 + $0x70] sm:$0xff]
      %v5358 = vld [vmem:[#allocation3 + $0x78] sm:$0xff]
      %s5359 = scalar_lea.vmem %s1, 1152
      %v5360 = vld [vmem:[%s5359] sm:$0xf]
      %v5361 = vld [vmem:[%s5359 + $0x4] sm:$0xf]
      %v5362 = vld [vmem:[%s5359 + $0x8] sm:$0xf]
      %v5363 = vld [vmem:[%s5359 + $0xc] sm:$0xf]
      %v5364 = vld [vmem:[%s5359 + $0x10] sm:$0xf]
      %v5365 = vld [vmem:[%s5359 + $0x14] sm:$0xf]
      %v5366 = vld [vmem:[%s5359 + $0x18] sm:$0xf]
      %v5367 = vld [vmem:[%s5359 + $0x1c] sm:$0xf]
      %v5368 = vld [vmem:[%s5359 + $0x20] sm:$0xf]
      %v5369 = vld [vmem:[%s5359 + $0x24] sm:$0xf]
      %v5370 = vld [vmem:[%s5359 + $0x28] sm:$0xf]
      %v5371 = vld [vmem:[%s5359 + $0x2c] sm:$0xf]
      %v5372 = vld [vmem:[%s5359 + $0x30] sm:$0xf]
      %v5373 = vld [vmem:[%s5359 + $0x34] sm:$0xf]
      %v5374 = vld [vmem:[%s5359 + $0x38] sm:$0xf]
      %v5375 = vld [vmem:[%s5359 + $0x3c] sm:$0xf]
      %v5376 = vunpack.c.l.b16 %v5290
      %v5377 = vunpack.c.l.b16 %v5293
      %v5378 = vunpack.c.l.b16 %v5297
      %v5379 = vunpack.c.l.b16 %v5300
      %v5380 = vunpack.c.l.b16 %v5304
      %v5381 = vunpack.c.l.b16 %v5307
      %v5382 = vunpack.c.l.b16 %v5311
      %v5383 = vunpack.c.l.b16 %v5314
      %v5384 = vunpack.c.l.b16 %v5318
      %v5385 = vunpack.c.l.b16 %v5321
      %v5386 = vunpack.c.l.b16 %v5325
      %v5387 = vunpack.c.l.b16 %v5328
      %v5388 = vunpack.c.l.b16 %v5332
      %v5389 = vunpack.c.l.b16 %v5335
      %v5390 = vunpack.c.l.b16 %v5339
      %v5391 = vunpack.c.l.b16 %v5342
      %v5392 = vpack.c.b16 %v5377, %v5376
      %v5393 = vpack.c.b16 %v5379, %v5378
      %v5394 = vpack.c.b16 %v5381, %v5380
      %v5395 = vpack.c.b16 %v5383, %v5382
      %v5396 = vpack.c.b16 %v5385, %v5384
      %v5397 = vpack.c.b16 %v5387, %v5386
      %v5398 = vpack.c.b16 %v5389, %v5388
      %v5399 = vpack.c.b16 %v5391, %v5390
      %v5424 = vunpack.c.l.b16 %v5360
      %v5425 = vunpack.c.l.b16 %v5361
      %v5426 = vunpack.c.l.b16 %v5362
      %v5427 = vunpack.c.l.b16 %v5363
      %v5428 = vunpack.c.l.b16 %v5364
      %v5429 = vunpack.c.l.b16 %v5365
      %v5430 = vunpack.c.l.b16 %v5366
      %v5431 = vunpack.c.l.b16 %v5367
      %v5432 = vunpack.c.l.b16 %v5368
      %v5433 = vunpack.c.l.b16 %v5369
      %v5434 = vunpack.c.l.b16 %v5370
      %v5435 = vunpack.c.l.b16 %v5371
      %v5436 = vunpack.c.l.b16 %v5372
      %v5437 = vunpack.c.l.b16 %v5373
      %v5438 = vunpack.c.l.b16 %v5374
      %v5439 = vunpack.c.l.b16 %v5375
      %v5440 = vpack.c.b16 %v5425, %v5424
      %v5441 = vpack.c.b16 %v5427, %v5426
      %v5442 = vpack.c.b16 %v5429, %v5428
      %v5443 = vpack.c.b16 %v5431, %v5430
      %v5444 = vpack.c.b16 %v5433, %v5432
      %v5445 = vpack.c.b16 %v5435, %v5434
      %v5446 = vpack.c.b16 %v5437, %v5436
      %v5447 = vpack.c.b16 %v5439, %v5438
      %5456 = vmatpush.bf16.msra.mxu0 %v5447
      %5457 = vmatpush.bf16.msra.mxu0 %v5446
      %5458 = vmatpush.bf16.msra.mxu0 %v5445
      %5459 = vmatpush.bf16.msra.mxu0 %v5444
      %5460 = vmatpush.bf16.msra.mxu0 %v5443
      %5461 = vmatpush.bf16.msra.mxu0 %v5442
      %5462 = vmatpush.bf16.msra.mxu0 %v5441
      %5463 = vmatpush.bf16.msra.mxu0 %v5440
      %5464 = vmatmul.bf16.gmra.mxu0 %v5392
      %v5465 = vpop.f32.mrf.mxu0
      %v5466 = vadd.f32 0.0, %v5465
      %v5467 = vpop.f32.mrf.mxu0
      %v5468 = vadd.f32 0.0, %v5467
      %5469 = vmatmul.bf16.gmra.mxu0 %v5393
      %v5470 = vpop.f32.mrf.mxu0
      %v5471 = vadd.f32 0.0, %v5470
      %v5472 = vpop.f32.mrf.mxu0
      %v5473 = vadd.f32 0.0, %v5472
      %5474 = vmatmul.bf16.gmra.mxu0 %v5394
      %v5475 = vpop.f32.mrf.mxu0
      %v5476 = vadd.f32 0.0, %v5475
      %v5477 = vpop.f32.mrf.mxu0
      %v5478 = vadd.f32 0.0, %v5477
      %5479 = vmatmul.bf16.gmra.mxu0 %v5395
      %v5480 = vpop.f32.mrf.mxu0
      %v5481 = vadd.f32 0.0, %v5480
      %v5482 = vpop.f32.mrf.mxu0
      %v5483 = vadd.f32 0.0, %v5482
      %5484 = vmatmul.bf16.gmra.mxu0 %v5396
      %v5485 = vpop.f32.mrf.mxu0
      %v5486 = vadd.f32 0.0, %v5485
      %v5487 = vpop.f32.mrf.mxu0
      %v5488 = vadd.f32 0.0, %v5487
      %5489 = vmatmul.bf16.gmra.mxu0 %v5397
      %v5490 = vpop.f32.mrf.mxu0
      %v5491 = vadd.f32 0.0, %v5490
      %v5492 = vpop.f32.mrf.mxu0
      %v5493 = vadd.f32 0.0, %v5492
      %5494 = vmatmul.bf16.gmra.mxu0 %v5398
      %v5495 = vpop.f32.mrf.mxu0
      %v5496 = vadd.f32 0.0, %v5495
      %v5497 = vpop.f32.mrf.mxu0
      %v5498 = vadd.f32 0.0, %v5497
      %5499 = vmatmul.bf16.gmra.mxu0 %v5399
      %v5500 = vpop.f32.mrf.mxu0
      %v5501 = vadd.f32 0.0, %v5500
      %v5502 = vpop.f32.mrf.mxu0
      %v5503 = vadd.f32 0.0, %v5502
      %5504 = vdwg.mxu0
      %v5505 = vadd.f32 %v5343, %v5466
      %v5506 = vadd.f32 %v5344, %v5468
      %v5507 = vadd.f32 %v5345, %v5471
      %v5508 = vadd.f32 %v5346, %v5473
      %v5509 = vadd.f32 %v5347, %v5476
      %v5510 = vadd.f32 %v5348, %v5478
      %v5511 = vadd.f32 %v5349, %v5481
      %v5512 = vadd.f32 %v5350, %v5483
      %v5513 = vadd.f32 %v5351, %v5486
      %v5514 = vadd.f32 %v5352, %v5488
      %v5515 = vadd.f32 %v5353, %v5491
      %v5516 = vadd.f32 %v5354, %v5493
      %v5517 = vadd.f32 %v5355, %v5496
      %v5518 = vadd.f32 %v5356, %v5498
      %v5519 = vadd.f32 %v5357, %v5501
      %v5520 = vadd.f32 %v5358, %v5503
      %5521 = vst [vmem:[#allocation3] sm:$0xff] %v5505
      %5522 = vst [vmem:[#allocation3 + $0x8] sm:$0xff] %v5506
      %5523 = vst [vmem:[#allocation3 + $0x10] sm:$0xff] %v5507
      %5524 = vst [vmem:[#allocation3 + $0x18] sm:$0xff] %v5508
      %5525 = vst [vmem:[#allocation3 + $0x20] sm:$0xff] %v5509
      %5526 = vst [vmem:[#allocation3 + $0x28] sm:$0xff] %v5510
      %5527 = vst [vmem:[#allocation3 + $0x30] sm:$0xff] %v5511
      %5528 = vst [vmem:[#allocation3 + $0x38] sm:$0xff] %v5512
      %5529 = vst [vmem:[#allocation3 + $0x40] sm:$0xff] %v5513
      %5530 = vst [vmem:[#allocation3 + $0x48] sm:$0xff] %v5514
      %5531 = vst [vmem:[#allocation3 + $0x50] sm:$0xff] %v5515
      %5532 = vst [vmem:[#allocation3 + $0x58] sm:$0xff] %v5516
      %5533 = vst [vmem:[#allocation3 + $0x60] sm:$0xff] %v5517
      %5534 = vst [vmem:[#allocation3 + $0x68] sm:$0xff] %v5518
      %5535 = vst [vmem:[#allocation3 + $0x70] sm:$0xff] %v5519
      %5536 = vst [vmem:[#allocation3 + $0x78] sm:$0xff] %v5520
      %v5537 = vld [vmem:[%s5238 + $0x4] sm:$0xf]
      %v5538 = vld [vmem:[%s5238 + $0x8] sm:$0xf]
      %v5539 = vld [vmem:[%s5238 + $0x14] sm:$0xf]
      %v5540 = vld [vmem:[%s5238 + $0x18] sm:$0xf]
      %v5541 = vld [vmem:[%s5238 + $0x24] sm:$0xf]
      %v5542 = vld [vmem:[%s5238 + $0x28] sm:$0xf]
      %v5543 = vld [vmem:[%s5238 + $0x34] sm:$0xf]
      %v5544 = vld [vmem:[%s5238 + $0x38] sm:$0xf]
      %v5545 = vld [vmem:[%s5238 + $0x44] sm:$0xf]
      %v5546 = vld [vmem:[%s5238 + $0x48] sm:$0xf]
      %v5547 = vld [vmem:[%s5238 + $0x54] sm:$0xf]
      %v5548 = vld [vmem:[%s5238 + $0x58] sm:$0xf]
      %v5549 = vld [vmem:[%s5238 + $0x64] sm:$0xf]
      %v5550 = vld [vmem:[%s5238 + $0x68] sm:$0xf]
      %v5551 = vld [vmem:[%s5238 + $0x74] sm:$0xf]
      %v5552 = vld [vmem:[%s5238 + $0x78] sm:$0xf]
      %v5553 = vld [vmem:[#allocation3] sm:$0xff]
      %v5554 = vld [vmem:[#allocation3 + $0x8] sm:$0xff]
      %v5555 = vld [vmem:[#allocation3 + $0x10] sm:$0xff]
      %v5556 = vld [vmem:[#allocation3 + $0x18] sm:$0xff]
      %v5557 = vld [vmem:[#allocation3 + $0x20] sm:$0xff]
      %v5558 = vld [vmem:[#allocation3 + $0x28] sm:$0xff]
      %v5559 = vld [vmem:[#allocation3 + $0x30] sm:$0xff]
      %v5560 = vld [vmem:[#allocation3 + $0x38] sm:$0xff]
      %v5561 = vld [vmem:[#allocation3 + $0x40] sm:$0xff]
      %v5562 = vld [vmem:[#allocation3 + $0x48] sm:$0xff]
      %v5563 = vld [vmem:[#allocation3 + $0x50] sm:$0xff]
      %v5564 = vld [vmem:[#allocation3 + $0x58] sm:$0xff]
      %v5565 = vld [vmem:[#allocation3 + $0x60] sm:$0xff]
      %v5566 = vld [vmem:[#allocation3 + $0x68] sm:$0xff]
      %v5567 = vld [vmem:[#allocation3 + $0x70] sm:$0xff]
      %v5568 = vld [vmem:[#allocation3 + $0x78] sm:$0xff]
      %s5569 = scalar_lea.vmem %s1, 1216
      %v5570 = vld [vmem:[%s5569] sm:$0xf]
      %v5571 = vld [vmem:[%s5569 + $0x4] sm:$0xf]
      %v5572 = vld [vmem:[%s5569 + $0x8] sm:$0xf]
      %v5573 = vld [vmem:[%s5569 + $0xc] sm:$0xf]
      %v5574 = vld [vmem:[%s5569 + $0x10] sm:$0xf]
      %v5575 = vld [vmem:[%s5569 + $0x14] sm:$0xf]
      %v5576 = vld [vmem:[%s5569 + $0x18] sm:$0xf]
      %v5577 = vld [vmem:[%s5569 + $0x1c] sm:$0xf]
      %v5578 = vld [vmem:[%s5569 + $0x20] sm:$0xf]
      %v5579 = vld [vmem:[%s5569 + $0x24] sm:$0xf]
      %v5580 = vld [vmem:[%s5569 + $0x28] sm:$0xf]
      %v5581 = vld [vmem:[%s5569 + $0x2c] sm:$0xf]
      %v5582 = vld [vmem:[%s5569 + $0x30] sm:$0xf]
      %v5583 = vld [vmem:[%s5569 + $0x34] sm:$0xf]
      %v5584 = vld [vmem:[%s5569 + $0x38] sm:$0xf]
      %v5585 = vld [vmem:[%s5569 + $0x3c] sm:$0xf]
      %v5602 = vunpack.c.l.b16 %v5537
      %v5603 = vunpack.c.l.b16 %v5538
      %v5604 = vunpack.c.l.b16 %v5539
      %v5605 = vunpack.c.l.b16 %v5540
      %v5606 = vunpack.c.l.b16 %v5541
      %v5607 = vunpack.c.l.b16 %v5542
      %v5608 = vunpack.c.l.b16 %v5543
      %v5609 = vunpack.c.l.b16 %v5544
      %v5610 = vunpack.c.l.b16 %v5545
      %v5611 = vunpack.c.l.b16 %v5546
      %v5612 = vunpack.c.l.b16 %v5547
      %v5613 = vunpack.c.l.b16 %v5548
      %v5614 = vunpack.c.l.b16 %v5549
      %v5615 = vunpack.c.l.b16 %v5550
      %v5616 = vunpack.c.l.b16 %v5551
      %v5617 = vunpack.c.l.b16 %v5552
      %v5618 = vpack.c.b16 %v5603, %v5602
      %v5619 = vpack.c.b16 %v5605, %v5604
      %v5620 = vpack.c.b16 %v5607, %v5606
      %v5621 = vpack.c.b16 %v5609, %v5608
      %v5622 = vpack.c.b16 %v5611, %v5610
      %v5623 = vpack.c.b16 %v5613, %v5612
      %v5624 = vpack.c.b16 %v5615, %v5614
      %v5625 = vpack.c.b16 %v5617, %v5616
      %v5650 = vunpack.c.l.b16 %v5570
      %v5651 = vunpack.c.l.b16 %v5571
      %v5652 = vunpack.c.l.b16 %v5572
      %v5653 = vunpack.c.l.b16 %v5573
      %v5654 = vunpack.c.l.b16 %v5574
      %v5655 = vunpack.c.l.b16 %v5575
      %v5656 = vunpack.c.l.b16 %v5576
      %v5657 = vunpack.c.l.b16 %v5577
      %v5658 = vunpack.c.l.b16 %v5578
      %v5659 = vunpack.c.l.b16 %v5579
      %v5660 = vunpack.c.l.b16 %v5580
      %v5661 = vunpack.c.l.b16 %v5581
      %v5662 = vunpack.c.l.b16 %v5582
      %v5663 = vunpack.c.l.b16 %v5583
      %v5664 = vunpack.c.l.b16 %v5584
      %v5665 = vunpack.c.l.b16 %v5585
      %v5666 = vpack.c.b16 %v5651, %v5650
      %v5667 = vpack.c.b16 %v5653, %v5652
      %v5668 = vpack.c.b16 %v5655, %v5654
      %v5669 = vpack.c.b16 %v5657, %v5656
      %v5670 = vpack.c.b16 %v5659, %v5658
      %v5671 = vpack.c.b16 %v5661, %v5660
      %v5672 = vpack.c.b16 %v5663, %v5662
      %v5673 = vpack.c.b16 %v5665, %v5664
      %5682 = vmatpush.bf16.msra.mxu0 %v5673
      %5683 = vmatpush.bf16.msra.mxu0 %v5672
      %5684 = vmatpush.bf16.msra.mxu0 %v5671
      %5685 = vmatpush.bf16.msra.mxu0 %v5670
      %5686 = vmatpush.bf16.msra.mxu0 %v5669
      %5687 = vmatpush.bf16.msra.mxu0 %v5668
      %5688 = vmatpush.bf16.msra.mxu0 %v5667
      %5689 = vmatpush.bf16.msra.mxu0 %v5666
      %5690 = vmatmul.bf16.gmra.mxu0 %v5618
      %v5691 = vpop.f32.mrf.mxu0
      %v5692 = vadd.f32 0.0, %v5691
      %v5693 = vpop.f32.mrf.mxu0
      %v5694 = vadd.f32 0.0, %v5693
      %5695 = vmatmul.bf16.gmra.mxu0 %v5619
      %v5696 = vpop.f32.mrf.mxu0
      %v5697 = vadd.f32 0.0, %v5696
      %v5698 = vpop.f32.mrf.mxu0
      %v5699 = vadd.f32 0.0, %v5698
      %5700 = vmatmul.bf16.gmra.mxu0 %v5620
      %v5701 = vpop.f32.mrf.mxu0
      %v5702 = vadd.f32 0.0, %v5701
      %v5703 = vpop.f32.mrf.mxu0
      %v5704 = vadd.f32 0.0, %v5703
      %5705 = vmatmul.bf16.gmra.mxu0 %v5621
      %v5706 = vpop.f32.mrf.mxu0
      %v5707 = vadd.f32 0.0, %v5706
      %v5708 = vpop.f32.mrf.mxu0
      %v5709 = vadd.f32 0.0, %v5708
      %5710 = vmatmul.bf16.gmra.mxu0 %v5622
      %v5711 = vpop.f32.mrf.mxu0
      %v5712 = vadd.f32 0.0, %v5711
      %v5713 = vpop.f32.mrf.mxu0
      %v5714 = vadd.f32 0.0, %v5713
      %5715 = vmatmul.bf16.gmra.mxu0 %v5623
      %v5716 = vpop.f32.mrf.mxu0
      %v5717 = vadd.f32 0.0, %v5716
      %v5718 = vpop.f32.mrf.mxu0
      %v5719 = vadd.f32 0.0, %v5718
      %5720 = vmatmul.bf16.gmra.mxu0 %v5624
      %v5721 = vpop.f32.mrf.mxu0
      %v5722 = vadd.f32 0.0, %v5721
      %v5723 = vpop.f32.mrf.mxu0
      %v5724 = vadd.f32 0.0, %v5723
      %5725 = vmatmul.bf16.gmra.mxu0 %v5625
      %v5726 = vpop.f32.mrf.mxu0
      %v5727 = vadd.f32 0.0, %v5726
      %v5728 = vpop.f32.mrf.mxu0
      %v5729 = vadd.f32 0.0, %v5728
      %5730 = vdwg.mxu0
      %v5731 = vadd.f32 %v5553, %v5692
      %v5732 = vadd.f32 %v5554, %v5694
      %v5733 = vadd.f32 %v5555, %v5697
      %v5734 = vadd.f32 %v5556, %v5699
      %v5735 = vadd.f32 %v5557, %v5702
      %v5736 = vadd.f32 %v5558, %v5704
      %v5737 = vadd.f32 %v5559, %v5707
      %v5738 = vadd.f32 %v5560, %v5709
      %v5739 = vadd.f32 %v5561, %v5712
      %v5740 = vadd.f32 %v5562, %v5714
      %v5741 = vadd.f32 %v5563, %v5717
      %v5742 = vadd.f32 %v5564, %v5719
      %v5743 = vadd.f32 %v5565, %v5722
      %v5744 = vadd.f32 %v5566, %v5724
      %v5745 = vadd.f32 %v5567, %v5727
      %v5746 = vadd.f32 %v5568, %v5729
      %5747 = vst [vmem:[#allocation3] sm:$0xff] %v5731
      %5748 = vst [vmem:[#allocation3 + $0x8] sm:$0xff] %v5732
      %5749 = vst [vmem:[#allocation3 + $0x10] sm:$0xff] %v5733
      %5750 = vst [vmem:[#allocation3 + $0x18] sm:$0xff] %v5734
      %5751 = vst [vmem:[#allocation3 + $0x20] sm:$0xff] %v5735
      %5752 = vst [vmem:[#allocation3 + $0x28] sm:$0xff] %v5736
      %5753 = vst [vmem:[#allocation3 + $0x30] sm:$0xff] %v5737
      %5754 = vst [vmem:[#allocation3 + $0x38] sm:$0xff] %v5738
      %5755 = vst [vmem:[#allocation3 + $0x40] sm:$0xff] %v5739
      %5756 = vst [vmem:[#allocation3 + $0x48] sm:$0xff] %v5740
      %5757 = vst [vmem:[#allocation3 + $0x50] sm:$0xff] %v5741
      %5758 = vst [vmem:[#allocation3 + $0x58] sm:$0xff] %v5742
      %5759 = vst [vmem:[#allocation3 + $0x60] sm:$0xff] %v5743
      %5760 = vst [vmem:[#allocation3 + $0x68] sm:$0xff] %v5744
      %5761 = vst [vmem:[#allocation3 + $0x70] sm:$0xff] %v5745
      %5762 = vst [vmem:[#allocation3 + $0x78] sm:$0xff] %v5746
      %v5763 = vld [vmem:[%s5238 + $0x4] sm:$0x8]
      %v5764 = vld [vmem:[%s5238 + $0x8] sm:$0xf]
      %v5765 = vld [vmem:[%s5238 + $0xc] sm:$0x7]
      %v5766 = vld [vmem:[%s5238 + $0x14] sm:$0x8]
      %v5767 = vld [vmem:[%s5238 + $0x18] sm:$0xf]
      %v5768 = vld [vmem:[%s5238 + $0x1c] sm:$0x7]
      %v5769 = vld [vmem:[%s5238 + $0x24] sm:$0x8]
      %v5770 = vld [vmem:[%s5238 + $0x28] sm:$0xf]
      %v5771 = vld [vmem:[%s5238 + $0x2c] sm:$0x7]
      %v5772 = vld [vmem:[%s5238 + $0x34] sm:$0x8]
      %v5773 = vld [vmem:[%s5238 + $0x38] sm:$0xf]
      %v5774 = vld [vmem:[%s5238 + $0x3c] sm:$0x7]
      %v5775 = vld [vmem:[%s5238 + $0x44] sm:$0x8]
      %v5776 = vld [vmem:[%s5238 + $0x48] sm:$0xf]
      %v5777 = vld [vmem:[%s5238 + $0x4c] sm:$0x7]
      %v5778 = vld [vmem:[%s5238 + $0x54] sm:$0x8]
      %v5779 = vld [vmem:[%s5238 + $0x58] sm:$0xf]
      %v5780 = vld [vmem:[%s5238 + $0x5c] sm:$0x7]
      %v5781 = vld [vmem:[%s5238 + $0x64] sm:$0x8]
      %v5782 = vld [vmem:[%s5238 + $0x68] sm:$0xf]
      %v5783 = vld [vmem:[%s5238 + $0x6c] sm:$0x7]
      %v5784 = vld [vmem:[%s5238 + $0x74] sm:$0x8]
      %v5785 = vld [vmem:[%s5238 + $0x78] sm:$0xf]
      %v5786 = vld [vmem:[%s5238 + $0x7c] sm:$0x7]
      %v5811 = vrot.slane %v5763, 7
      %v5812 = vrot.slane %v5811, 4
      %v5813 = vrot.slane %v5764, 7
      %v5814 = vsel %vm344, %v5812, %v5813
      %v5815 = vrot.slane %v5813, 4
      %v5816 = vrot.slane %v5765, 7
      %v5817 = vsel %vm344, %v5815, %v5816
      %v5818 = vrot.slane %v5766, 7
      %v5819 = vrot.slane %v5818, 4
      %v5820 = vrot.slane %v5767, 7
      %v5821 = vsel %vm344, %v5819, %v5820
      %v5822 = vrot.slane %v5820, 4
      %v5823 = vrot.slane %v5768, 7
      %v5824 = vsel %vm344, %v5822, %v5823
      %v5825 = vrot.slane %v5769, 7
      %v5826 = vrot.slane %v5825, 4
      %v5827 = vrot.slane %v5770, 7
      %v5828 = vsel %vm344, %v5826, %v5827
      %v5829 = vrot.slane %v5827, 4
      %v5830 = vrot.slane %v5771, 7
      %v5831 = vsel %vm344, %v5829, %v5830
      %v5832 = vrot.slane %v5772, 7
      %v5833 = vrot.slane %v5832, 4
      %v5834 = vrot.slane %v5773, 7
      %v5835 = vsel %vm344, %v5833, %v5834
      %v5836 = vrot.slane %v5834, 4
      %v5837 = vrot.slane %v5774, 7
      %v5838 = vsel %vm344, %v5836, %v5837
      %v5839 = vrot.slane %v5775, 7
      %v5840 = vrot.slane %v5839, 4
      %v5841 = vrot.slane %v5776, 7
      %v5842 = vsel %vm344, %v5840, %v5841
      %v5843 = vrot.slane %v5841, 4
      %v5844 = vrot.slane %v5777, 7
      %v5845 = vsel %vm344, %v5843, %v5844
      %v5846 = vrot.slane %v5778, 7
      %v5847 = vrot.slane %v5846, 4
      %v5848 = vrot.slane %v5779, 7
      %v5849 = vsel %vm344, %v5847, %v5848
      %v5850 = vrot.slane %v5848, 4
      %v5851 = vrot.slane %v5780, 7
      %v5852 = vsel %vm344, %v5850, %v5851
      %v5853 = vrot.slane %v5781, 7
      %v5854 = vrot.slane %v5853, 4
      %v5855 = vrot.slane %v5782, 7
      %v5856 = vsel %vm344, %v5854, %v5855
      %v5857 = vrot.slane %v5855, 4
      %v5858 = vrot.slane %v5783, 7
      %v5859 = vsel %vm344, %v5857, %v5858
      %v5860 = vrot.slane %v5784, 7
      %v5861 = vrot.slane %v5860, 4
      %v5862 = vrot.slane %v5785, 7
      %v5863 = vsel %vm344, %v5861, %v5862
      %v5864 = vrot.slane %v5862, 4
      %v5865 = vrot.slane %v5786, 7
      %v5866 = vsel %vm344, %v5864, %v5865
      %v5867 = vld [vmem:[#allocation3] sm:$0xff]
      %v5868 = vld [vmem:[#allocation3 + $0x8] sm:$0xff]
      %v5869 = vld [vmem:[#allocation3 + $0x10] sm:$0xff]
      %v5870 = vld [vmem:[#allocation3 + $0x18] sm:$0xff]
      %v5871 = vld [vmem:[#allocation3 + $0x20] sm:$0xff]
      %v5872 = vld [vmem:[#allocation3 + $0x28] sm:$0xff]
      %v5873 = vld [vmem:[#allocation3 + $0x30] sm:$0xff]
      %v5874 = vld [vmem:[#allocation3 + $0x38] sm:$0xff]
      %v5875 = vld [vmem:[#allocation3 + $0x40] sm:$0xff]
      %v5876 = vld [vmem:[#allocation3 + $0x48] sm:$0xff]
      %v5877 = vld [vmem:[#allocation3 + $0x50] sm:$0xff]
      %v5878 = vld [vmem:[#allocation3 + $0x58] sm:$0xff]
      %v5879 = vld [vmem:[#allocation3 + $0x60] sm:$0xff]
      %v5880 = vld [vmem:[#allocation3 + $0x68] sm:$0xff]
      %v5881 = vld [vmem:[#allocation3 + $0x70] sm:$0xff]
      %v5882 = vld [vmem:[#allocation3 + $0x78] sm:$0xff]
      %s5883 = scalar_lea.vmem %s1, 1280
      %v5884 = vld [vmem:[%s5883] sm:$0xf]
      %v5885 = vld [vmem:[%s5883 + $0x4] sm:$0xf]
      %v5886 = vld [vmem:[%s5883 + $0x8] sm:$0xf]
      %v5887 = vld [vmem:[%s5883 + $0xc] sm:$0xf]
      %v5888 = vld [vmem:[%s5883 + $0x10] sm:$0xf]
      %v5889 = vld [vmem:[%s5883 + $0x14] sm:$0xf]
      %v5890 = vld [vmem:[%s5883 + $0x18] sm:$0xf]
      %v5891 = vld [vmem:[%s5883 + $0x1c] sm:$0xf]
      %v5892 = vld [vmem:[%s5883 + $0x20] sm:$0xf]
      %v5893 = vld [vmem:[%s5883 + $0x24] sm:$0xf]
      %v5894 = vld [vmem:[%s5883 + $0x28] sm:$0xf]
      %v5895 = vld [vmem:[%s5883 + $0x2c] sm:$0xf]
      %v5896 = vld [vmem:[%s5883 + $0x30] sm:$0xf]
      %v5897 = vld [vmem:[%s5883 + $0x34] sm:$0xf]
      %v5898 = vld [vmem:[%s5883 + $0x38] sm:$0xf]
      %v5899 = vld [vmem:[%s5883 + $0x3c] sm:$0xf]
      %v5900 = vunpack.c.l.b16 %v5814
      %v5901 = vunpack.c.l.b16 %v5817
      %v5902 = vunpack.c.l.b16 %v5821
      %v5903 = vunpack.c.l.b16 %v5824
      %v5904 = vunpack.c.l.b16 %v5828
      %v5905 = vunpack.c.l.b16 %v5831
      %v5906 = vunpack.c.l.b16 %v5835
      %v5907 = vunpack.c.l.b16 %v5838
      %v5908 = vunpack.c.l.b16 %v5842
      %v5909 = vunpack.c.l.b16 %v5845
      %v5910 = vunpack.c.l.b16 %v5849
      %v5911 = vunpack.c.l.b16 %v5852
      %v5912 = vunpack.c.l.b16 %v5856
      %v5913 = vunpack.c.l.b16 %v5859
      %v5914 = vunpack.c.l.b16 %v5863
      %v5915 = vunpack.c.l.b16 %v5866
      %v5916 = vpack.c.b16 %v5901, %v5900
      %v5917 = vpack.c.b16 %v5903, %v5902
      %v5918 = vpack.c.b16 %v5905, %v5904
      %v5919 = vpack.c.b16 %v5907, %v5906
      %v5920 = vpack.c.b16 %v5909, %v5908
      %v5921 = vpack.c.b16 %v5911, %v5910
      %v5922 = vpack.c.b16 %v5913, %v5912
      %v5923 = vpack.c.b16 %v5915, %v5914
      %v5948 = vunpack.c.l.b16 %v5884
      %v5949 = vunpack.c.l.b16 %v5885
      %v5950 = vunpack.c.l.b16 %v5886
      %v5951 = vunpack.c.l.b16 %v5887
      %v5952 = vunpack.c.l.b16 %v5888
      %v5953 = vunpack.c.l.b16 %v5889
      %v5954 = vunpack.c.l.b16 %v5890
      %v5955 = vunpack.c.l.b16 %v5891
      %v5956 = vunpack.c.l.b16 %v5892
      %v5957 = vunpack.c.l.b16 %v5893
      %v5958 = vunpack.c.l.b16 %v5894
      %v5959 = vunpack.c.l.b16 %v5895
      %v5960 = vunpack.c.l.b16 %v5896
      %v5961 = vunpack.c.l.b16 %v5897
      %v5962 = vunpack.c.l.b16 %v5898
      %v5963 = vunpack.c.l.b16 %v5899
      %v5964 = vpack.c.b16 %v5949, %v5948
      %v5965 = vpack.c.b16 %v5951, %v5950
      %v5966 = vpack.c.b16 %v5953, %v5952
      %v5967 = vpack.c.b16 %v5955, %v5954
      %v5968 = vpack.c.b16 %v5957, %v5956
      %v5969 = vpack.c.b16 %v5959, %v5958
      %v5970 = vpack.c.b16 %v5961, %v5960
      %v5971 = vpack.c.b16 %v5963, %v5962
      %5980 = vmatpush.bf16.msra.mxu0 %v5971
      %5981 = vmatpush.bf16.msra.mxu0 %v5970
      %5982 = vmatpush.bf16.msra.mxu0 %v5969
      %5983 = vmatpush.bf16.msra.mxu0 %v5968
      %5984 = vmatpush.bf16.msra.mxu0 %v5967
      %5985 = vmatpush.bf16.msra.mxu0 %v5966
      %5986 = vmatpush.bf16.msra.mxu0 %v5965
      %5987 = vmatpush.bf16.msra.mxu0 %v5964
      %5988 = vmatmul.bf16.gmra.mxu0 %v5916
      %v5989 = vpop.f32.mrf.mxu0
      %v5990 = vadd.f32 0.0, %v5989
      %v5991 = vpop.f32.mrf.mxu0
      %v5992 = vadd.f32 0.0, %v5991
      %5993 = vmatmul.bf16.gmra.mxu0 %v5917
      %v5994 = vpop.f32.mrf.mxu0
      %v5995 = vadd.f32 0.0, %v5994
      %v5996 = vpop.f32.mrf.mxu0
      %v5997 = vadd.f32 0.0, %v5996
      %5998 = vmatmul.bf16.gmra.mxu0 %v5918
      %v5999 = vpop.f32.mrf.mxu0
      %v6000 = vadd.f32 0.0, %v5999
      %v6001 = vpop.f32.mrf.mxu0
      %v6002 = vadd.f32 0.0, %v6001
      %6003 = vmatmul.bf16.gmra.mxu0 %v5919
      %v6004 = vpop.f32.mrf.mxu0
      %v6005 = vadd.f32 0.0, %v6004
      %v6006 = vpop.f32.mrf.mxu0
      %v6007 = vadd.f32 0.0, %v6006
      %6008 = vmatmul.bf16.gmra.mxu0 %v5920
      %v6009 = vpop.f32.mrf.mxu0
      %v6010 = vadd.f32 0.0, %v6009
      %v6011 = vpop.f32.mrf.mxu0
      %v6012 = vadd.f32 0.0, %v6011
      %6013 = vmatmul.bf16.gmra.mxu0 %v5921
      %v6014 = vpop.f32.mrf.mxu0
      %v6015 = vadd.f32 0.0, %v6014
      %v6016 = vpop.f32.mrf.mxu0
      %v6017 = vadd.f32 0.0, %v6016
      %6018 = vmatmul.bf16.gmra.mxu0 %v5922
      %v6019 = vpop.f32.mrf.mxu0
      %v6020 = vadd.f32 0.0, %v6019
      %v6021 = vpop.f32.mrf.mxu0
      %v6022 = vadd.f32 0.0, %v6021
      %6023 = vmatmul.bf16.gmra.mxu0 %v5923
      %v6024 = vpop.f32.mrf.mxu0
      %v6025 = vadd.f32 0.0, %v6024
      %v6026 = vpop.f32.mrf.mxu0
      %v6027 = vadd.f32 0.0, %v6026
      %6028 = vdwg.mxu0
      %v6029 = vadd.f32 %v5867, %v5990
      %v6030 = vadd.f32 %v5868, %v5992
      %v6031 = vadd.f32 %v5869, %v5995
      %v6032 = vadd.f32 %v5870, %v5997
      %v6033 = vadd.f32 %v5871, %v6000
      %v6034 = vadd.f32 %v5872, %v6002
      %v6035 = vadd.f32 %v5873, %v6005
      %v6036 = vadd.f32 %v5874, %v6007
      %v6037 = vadd.f32 %v5875, %v6010
      %v6038 = vadd.f32 %v5876, %v6012
      %v6039 = vadd.f32 %v5877, %v6015
      %v6040 = vadd.f32 %v5878, %v6017
      %v6041 = vadd.f32 %v5879, %v6020
      %v6042 = vadd.f32 %v5880, %v6022
      %v6043 = vadd.f32 %v5881, %v6025
      %v6044 = vadd.f32 %v5882, %v6027
      %6045 = vst [vmem:[#allocation3] sm:$0xff] %v6029
      %6046 = vst [vmem:[#allocation3 + $0x8] sm:$0xff] %v6030
      %6047 = vst [vmem:[#allocation3 + $0x10] sm:$0xff] %v6031
      %6048 = vst [vmem:[#allocation3 + $0x18] sm:$0xff] %v6032
      %6049 = vst [vmem:[#allocation3 + $0x20] sm:$0xff] %v6033
      %6050 = vst [vmem:[#allocation3 + $0x28] sm:$0xff] %v6034
      %6051 = vst [vmem:[#allocation3 + $0x30] sm:$0xff] %v6035
      %6052 = vst [vmem:[#allocation3 + $0x38] sm:$0xff] %v6036
      %6053 = vst [vmem:[#allocation3 + $0x40] sm:$0xff] %v6037
      %6054 = vst [vmem:[#allocation3 + $0x48] sm:$0xff] %v6038
      %6055 = vst [vmem:[#allocation3 + $0x50] sm:$0xff] %v6039
      %6056 = vst [vmem:[#allocation3 + $0x58] sm:$0xff] %v6040
      %6057 = vst [vmem:[#allocation3 + $0x60] sm:$0xff] %v6041
      %6058 = vst [vmem:[#allocation3 + $0x68] sm:$0xff] %v6042
      %6059 = vst [vmem:[#allocation3 + $0x70] sm:$0xff] %v6043
      %6060 = vst [vmem:[#allocation3 + $0x78] sm:$0xff] %v6044
      %v6061 = vld [vmem:[%s1121] sm:$0xe]
      %v6062 = vld [vmem:[%s1121 + $0x4] sm:$0xf]
      %v6063 = vld [vmem:[%s1121 + $0x8] sm:$0x1]
      %v6064 = vld [vmem:[%s1121 + $0x10] sm:$0xe]
      %v6065 = vld [vmem:[%s1121 + $0x14] sm:$0xf]
      %v6066 = vld [vmem:[%s1121 + $0x18] sm:$0x1]
      %v6067 = vld [vmem:[%s1121 + $0x20] sm:$0xe]
      %v6068 = vld [vmem:[%s1121 + $0x24] sm:$0xf]
      %v6069 = vld [vmem:[%s1121 + $0x28] sm:$0x1]
      %v6070 = vld [vmem:[%s1121 + $0x30] sm:$0xe]
      %v6071 = vld [vmem:[%s1121 + $0x34] sm:$0xf]
      %v6072 = vld [vmem:[%s1121 + $0x38] sm:$0x1]
      %v6073 = vld [vmem:[%s1121 + $0x40] sm:$0xe]
      %v6074 = vld [vmem:[%s1121 + $0x44] sm:$0xf]
      %v6075 = vld [vmem:[%s1121 + $0x48] sm:$0x1]
      %v6076 = vld [vmem:[%s1121 + $0x50] sm:$0xe]
      %v6077 = vld [vmem:[%s1121 + $0x54] sm:$0xf]
      %v6078 = vld [vmem:[%s1121 + $0x58] sm:$0x1]
      %v6079 = vld [vmem:[%s1121 + $0x60] sm:$0xe]
      %v6080 = vld [vmem:[%s1121 + $0x64] sm:$0xf]
      %v6081 = vld [vmem:[%s1121 + $0x68] sm:$0x1]
      %v6082 = vld [vmem:[%s1121 + $0x70] sm:$0xe]
      %v6083 = vld [vmem:[%s1121 + $0x74] sm:$0xf]
      %v6084 = vld [vmem:[%s1121 + $0x78] sm:$0x1]
      %v6109 = vrot.slane %v6061, 5
      %v6110 = vrot.slane %v6109, 4
      %v6111 = vrot.slane %v6062, 5
      %v6112 = vsel %vm870, %v6110, %v6111
      %v6113 = vrot.slane %v6111, 4
      %v6114 = vrot.slane %v6063, 5
      %v6115 = vsel %vm870, %v6113, %v6114
      %v6116 = vrot.slane %v6064, 5
      %v6117 = vrot.slane %v6116, 4
      %v6118 = vrot.slane %v6065, 5
      %v6119 = vsel %vm870, %v6117, %v6118
      %v6120 = vrot.slane %v6118, 4
      %v6121 = vrot.slane %v6066, 5
      %v6122 = vsel %vm870, %v6120, %v6121
      %v6123 = vrot.slane %v6067, 5
      %v6124 = vrot.slane %v6123, 4
      %v6125 = vrot.slane %v6068, 5
      %v6126 = vsel %vm870, %v6124, %v6125
      %v6127 = vrot.slane %v6125, 4
      %v6128 = vrot.slane %v6069, 5
      %v6129 = vsel %vm870, %v6127, %v6128
      %v6130 = vrot.slane %v6070, 5
      %v6131 = vrot.slane %v6130, 4
      %v6132 = vrot.slane %v6071, 5
      %v6133 = vsel %vm870, %v6131, %v6132
      %v6134 = vrot.slane %v6132, 4
      %v6135 = vrot.slane %v6072, 5
      %v6136 = vsel %vm870, %v6134, %v6135
      %v6137 = vrot.slane %v6073, 5
      %v6138 = vrot.slane %v6137, 4
      %v6139 = vrot.slane %v6074, 5
      %v6140 = vsel %vm870, %v6138, %v6139
      %v6141 = vrot.slane %v6139, 4
      %v6142 = vrot.slane %v6075, 5
      %v6143 = vsel %vm870, %v6141, %v6142
      %v6144 = vrot.slane %v6076, 5
      %v6145 = vrot.slane %v6144, 4
      %v6146 = vrot.slane %v6077, 5
      %v6147 = vsel %vm870, %v6145, %v6146
      %v6148 = vrot.slane %v6146, 4
      %v6149 = vrot.slane %v6078, 5
      %v6150 = vsel %vm870, %v6148, %v6149
      %v6151 = vrot.slane %v6079, 5
      %v6152 = vrot.slane %v6151, 4
      %v6153 = vrot.slane %v6080, 5
      %v6154 = vsel %vm870, %v6152, %v6153
      %v6155 = vrot.slane %v6153, 4
      %v6156 = vrot.slane %v6081, 5
      %v6157 = vsel %vm870, %v6155, %v6156
      %v6158 = vrot.slane %v6082, 5
      %v6159 = vrot.slane %v6158, 4
      %v6160 = vrot.slane %v6083, 5
      %v6161 = vsel %vm870, %v6159, %v6160
      %v6162 = vrot.slane %v6160, 4
      %v6163 = vrot.slane %v6084, 5
      %v6164 = vsel %vm870, %v6162, %v6163
      %v6165 = vld [vmem:[#allocation3] sm:$0xff]
      %v6166 = vld [vmem:[#allocation3 + $0x8] sm:$0xff]
      %v6167 = vld [vmem:[#allocation3 + $0x10] sm:$0xff]
      %v6168 = vld [vmem:[#allocation3 + $0x18] sm:$0xff]
      %v6169 = vld [vmem:[#allocation3 + $0x20] sm:$0xff]
      %v6170 = vld [vmem:[#allocation3 + $0x28] sm:$0xff]
      %v6171 = vld [vmem:[#allocation3 + $0x30] sm:$0xff]
      %v6172 = vld [vmem:[#allocation3 + $0x38] sm:$0xff]
      %v6173 = vld [vmem:[#allocation3 + $0x40] sm:$0xff]
      %v6174 = vld [vmem:[#allocation3 + $0x48] sm:$0xff]
      %v6175 = vld [vmem:[#allocation3 + $0x50] sm:$0xff]
      %v6176 = vld [vmem:[#allocation3 + $0x58] sm:$0xff]
      %v6177 = vld [vmem:[#allocation3 + $0x60] sm:$0xff]
      %v6178 = vld [vmem:[#allocation3 + $0x68] sm:$0xff]
      %v6179 = vld [vmem:[#allocation3 + $0x70] sm:$0xff]
      %v6180 = vld [vmem:[#allocation3 + $0x78] sm:$0xff]
      %s6181 = scalar_lea.vmem %s1, 1344
      %v6182 = vld [vmem:[%s6181] sm:$0xf]
      %v6183 = vld [vmem:[%s6181 + $0x4] sm:$0xf]
      %v6184 = vld [vmem:[%s6181 + $0x8] sm:$0xf]
      %v6185 = vld [vmem:[%s6181 + $0xc] sm:$0xf]
      %v6186 = vld [vmem:[%s6181 + $0x10] sm:$0xf]
      %v6187 = vld [vmem:[%s6181 + $0x14] sm:$0xf]
      %v6188 = vld [vmem:[%s6181 + $0x18] sm:$0xf]
      %v6189 = vld [vmem:[%s6181 + $0x1c] sm:$0xf]
      %v6190 = vld [vmem:[%s6181 + $0x20] sm:$0xf]
      %v6191 = vld [vmem:[%s6181 + $0x24] sm:$0xf]
      %v6192 = vld [vmem:[%s6181 + $0x28] sm:$0xf]
      %v6193 = vld [vmem:[%s6181 + $0x2c] sm:$0xf]
      %v6194 = vld [vmem:[%s6181 + $0x30] sm:$0xf]
      %v6195 = vld [vmem:[%s6181 + $0x34] sm:$0xf]
      %v6196 = vld [vmem:[%s6181 + $0x38] sm:$0xf]
      %v6197 = vld [vmem:[%s6181 + $0x3c] sm:$0xf]
      %v6198 = vunpack.c.l.b16 %v6112
      %v6199 = vunpack.c.l.b16 %v6115
      %v6200 = vunpack.c.l.b16 %v6119
      %v6201 = vunpack.c.l.b16 %v6122
      %v6202 = vunpack.c.l.b16 %v6126
      %v6203 = vunpack.c.l.b16 %v6129
      %v6204 = vunpack.c.l.b16 %v6133
      %v6205 = vunpack.c.l.b16 %v6136
      %v6206 = vunpack.c.l.b16 %v6140
      %v6207 = vunpack.c.l.b16 %v6143
      %v6208 = vunpack.c.l.b16 %v6147
      %v6209 = vunpack.c.l.b16 %v6150
      %v6210 = vunpack.c.l.b16 %v6154
      %v6211 = vunpack.c.l.b16 %v6157
      %v6212 = vunpack.c.l.b16 %v6161
      %v6213 = vunpack.c.l.b16 %v6164
      %v6214 = vpack.c.b16 %v6199, %v6198
      %v6215 = vpack.c.b16 %v6201, %v6200
      %v6216 = vpack.c.b16 %v6203, %v6202
      %v6217 = vpack.c.b16 %v6205, %v6204
      %v6218 = vpack.c.b16 %v6207, %v6206
      %v6219 = vpack.c.b16 %v6209, %v6208
      %v6220 = vpack.c.b16 %v6211, %v6210
      %v6221 = vpack.c.b16 %v6213, %v6212
      %v6246 = vunpack.c.l.b16 %v6182
      %v6247 = vunpack.c.l.b16 %v6183
      %v6248 = vunpack.c.l.b16 %v6184
      %v6249 = vunpack.c.l.b16 %v6185
      %v6250 = vunpack.c.l.b16 %v6186
      %v6251 = vunpack.c.l.b16 %v6187
      %v6252 = vunpack.c.l.b16 %v6188
      %v6253 = vunpack.c.l.b16 %v6189
      %v6254 = vunpack.c.l.b16 %v6190
      %v6255 = vunpack.c.l.b16 %v6191
      %v6256 = vunpack.c.l.b16 %v6192
      %v6257 = vunpack.c.l.b16 %v6193
      %v6258 = vunpack.c.l.b16 %v6194
      %v6259 = vunpack.c.l.b16 %v6195
      %v6260 = vunpack.c.l.b16 %v6196
      %v6261 = vunpack.c.l.b16 %v6197
      %v6262 = vpack.c.b16 %v6247, %v6246
      %v6263 = vpack.c.b16 %v6249, %v6248
      %v6264 = vpack.c.b16 %v6251, %v6250
      %v6265 = vpack.c.b16 %v6253, %v6252
      %v6266 = vpack.c.b16 %v6255, %v6254
      %v6267 = vpack.c.b16 %v6257, %v6256
      %v6268 = vpack.c.b16 %v6259, %v6258
      %v6269 = vpack.c.b16 %v6261, %v6260
      %6278 = vmatpush.bf16.msra.mxu0 %v6269
      %6279 = vmatpush.bf16.msra.mxu0 %v6268
      %6280 = vmatpush.bf16.msra.mxu0 %v6267
      %6281 = vmatpush.bf16.msra.mxu0 %v6266
      %6282 = vmatpush.bf16.msra.mxu0 %v6265
      %6283 = vmatpush.bf16.msra.mxu0 %v6264
      %6284 = vmatpush.bf16.msra.mxu0 %v6263
      %6285 = vmatpush.bf16.msra.mxu0 %v6262
      %6286 = vmatmul.bf16.gmra.mxu0 %v6214
      %v6287 = vpop.f32.mrf.mxu0
      %v6288 = vadd.f32 0.0, %v6287
      %v6289 = vpop.f32.mrf.mxu0
      %v6290 = vadd.f32 0.0, %v6289
      %6291 = vmatmul.bf16.gmra.mxu0 %v6215
      %v6292 = vpop.f32.mrf.mxu0
      %v6293 = vadd.f32 0.0, %v6292
      %v6294 = vpop.f32.mrf.mxu0
      %v6295 = vadd.f32 0.0, %v6294
      %6296 = vmatmul.bf16.gmra.mxu0 %v6216
      %v6297 = vpop.f32.mrf.mxu0
      %v6298 = vadd.f32 0.0, %v6297
      %v6299 = vpop.f32.mrf.mxu0
      %v6300 = vadd.f32 0.0, %v6299
      %6301 = vmatmul.bf16.gmra.mxu0 %v6217
      %v6302 = vpop.f32.mrf.mxu0
      %v6303 = vadd.f32 0.0, %v6302
      %v6304 = vpop.f32.mrf.mxu0
      %v6305 = vadd.f32 0.0, %v6304
      %6306 = vmatmul.bf16.gmra.mxu0 %v6218
      %v6307 = vpop.f32.mrf.mxu0
      %v6308 = vadd.f32 0.0, %v6307
      %v6309 = vpop.f32.mrf.mxu0
      %v6310 = vadd.f32 0.0, %v6309
      %6311 = vmatmul.bf16.gmra.mxu0 %v6219
      %v6312 = vpop.f32.mrf.mxu0
      %v6313 = vadd.f32 0.0, %v6312
      %v6314 = vpop.f32.mrf.mxu0
      %v6315 = vadd.f32 0.0, %v6314
      %6316 = vmatmul.bf16.gmra.mxu0 %v6220
      %v6317 = vpop.f32.mrf.mxu0
      %v6318 = vadd.f32 0.0, %v6317
      %v6319 = vpop.f32.mrf.mxu0
      %v6320 = vadd.f32 0.0, %v6319
      %6321 = vmatmul.bf16.gmra.mxu0 %v6221
      %v6322 = vpop.f32.mrf.mxu0
      %v6323 = vadd.f32 0.0, %v6322
      %v6324 = vpop.f32.mrf.mxu0
      %v6325 = vadd.f32 0.0, %v6324
      %6326 = vdwg.mxu0
      %v6327 = vadd.f32 %v6165, %v6288
      %v6328 = vadd.f32 %v6166, %v6290
      %v6329 = vadd.f32 %v6167, %v6293
      %v6330 = vadd.f32 %v6168, %v6295
      %v6331 = vadd.f32 %v6169, %v6298
      %v6332 = vadd.f32 %v6170, %v6300
      %v6333 = vadd.f32 %v6171, %v6303
      %v6334 = vadd.f32 %v6172, %v6305
      %v6335 = vadd.f32 %v6173, %v6308
      %v6336 = vadd.f32 %v6174, %v6310
      %v6337 = vadd.f32 %v6175, %v6313
      %v6338 = vadd.f32 %v6176, %v6315
      %v6339 = vadd.f32 %v6177, %v6318
      %v6340 = vadd.f32 %v6178, %v6320
      %v6341 = vadd.f32 %v6179, %v6323
      %v6342 = vadd.f32 %v6180, %v6325
      %6343 = vst [vmem:[#allocation3] sm:$0xff] %v6327
      %6344 = vst [vmem:[#allocation3 + $0x8] sm:$0xff] %v6328
      %6345 = vst [vmem:[#allocation3 + $0x10] sm:$0xff] %v6329
      %6346 = vst [vmem:[#allocation3 + $0x18] sm:$0xff] %v6330
      %6347 = vst [vmem:[#allocation3 + $0x20] sm:$0xff] %v6331
      %6348 = vst [vmem:[#allocation3 + $0x28] sm:$0xff] %v6332
      %6349 = vst [vmem:[#allocation3 + $0x30] sm:$0xff] %v6333
      %6350 = vst [vmem:[#allocation3 + $0x38] sm:$0xff] %v6334
      %6351 = vst [vmem:[#allocation3 + $0x40] sm:$0xff] %v6335
      %6352 = vst [vmem:[#allocation3 + $0x48] sm:$0xff] %v6336
      %6353 = vst [vmem:[#allocation3 + $0x50] sm:$0xff] %v6337
      %6354 = vst [vmem:[#allocation3 + $0x58] sm:$0xff] %v6338
      %6355 = vst [vmem:[#allocation3 + $0x60] sm:$0xff] %v6339
      %6356 = vst [vmem:[#allocation3 + $0x68] sm:$0xff] %v6340
      %6357 = vst [vmem:[#allocation3 + $0x70] sm:$0xff] %v6341
      %6358 = vst [vmem:[#allocation3 + $0x78] sm:$0xff] %v6342
      %v6359 = vld [vmem:[%s1121 + $0x4] sm:$0xf]
      %v6360 = vld [vmem:[%s1121 + $0x8] sm:$0xf]
      %v6361 = vld [vmem:[%s1121 + $0x14] sm:$0xf]
      %v6362 = vld [vmem:[%s1121 + $0x18] sm:$0xf]
      %v6363 = vld [vmem:[%s1121 + $0x24] sm:$0xf]
      %v6364 = vld [vmem:[%s1121 + $0x28] sm:$0xf]
      %v6365 = vld [vmem:[%s1121 + $0x34] sm:$0xf]
      %v6366 = vld [vmem:[%s1121 + $0x38] sm:$0xf]
      %v6367 = vld [vmem:[%s1121 + $0x44] sm:$0xf]
      %v6368 = vld [vmem:[%s1121 + $0x48] sm:$0xf]
      %v6369 = vld [vmem:[%s1121 + $0x54] sm:$0xf]
      %v6370 = vld [vmem:[%s1121 + $0x58] sm:$0xf]
      %v6371 = vld [vmem:[%s1121 + $0x64] sm:$0xf]
      %v6372 = vld [vmem:[%s1121 + $0x68] sm:$0xf]
      %v6373 = vld [vmem:[%s1121 + $0x74] sm:$0xf]
      %v6374 = vld [vmem:[%s1121 + $0x78] sm:$0xf]
      %v6375 = vld [vmem:[#allocation3] sm:$0xff]
      %v6376 = vld [vmem:[#allocation3 + $0x8] sm:$0xff]
      %v6377 = vld [vmem:[#allocation3 + $0x10] sm:$0xff]
      %v6378 = vld [vmem:[#allocation3 + $0x18] sm:$0xff]
      %v6379 = vld [vmem:[#allocation3 + $0x20] sm:$0xff]
      %v6380 = vld [vmem:[#allocation3 + $0x28] sm:$0xff]
      %v6381 = vld [vmem:[#allocation3 + $0x30] sm:$0xff]
      %v6382 = vld [vmem:[#allocation3 + $0x38] sm:$0xff]
      %v6383 = vld [vmem:[#allocation3 + $0x40] sm:$0xff]
      %v6384 = vld [vmem:[#allocation3 + $0x48] sm:$0xff]
      %v6385 = vld [vmem:[#allocation3 + $0x50] sm:$0xff]
      %v6386 = vld [vmem:[#allocation3 + $0x58] sm:$0xff]
      %v6387 = vld [vmem:[#allocation3 + $0x60] sm:$0xff]
      %v6388 = vld [vmem:[#allocation3 + $0x68] sm:$0xff]
      %v6389 = vld [vmem:[#allocation3 + $0x70] sm:$0xff]
      %v6390 = vld [vmem:[#allocation3 + $0x78] sm:$0xff]
      %s6391 = scalar_lea.vmem %s1, 1408
      %v6392 = vld [vmem:[%s6391] sm:$0xf]
      %v6393 = vld [vmem:[%s6391 + $0x4] sm:$0xf]
      %v6394 = vld [vmem:[%s6391 + $0x8] sm:$0xf]
      %v6395 = vld [vmem:[%s6391 + $0xc] sm:$0xf]
      %v6396 = vld [vmem:[%s6391 + $0x10] sm:$0xf]
      %v6397 = vld [vmem:[%s6391 + $0x14] sm:$0xf]
      %v6398 = vld [vmem:[%s6391 + $0x18] sm:$0xf]
      %v6399 = vld [vmem:[%s6391 + $0x1c] sm:$0xf]
      %v6400 = vld [vmem:[%s6391 + $0x20] sm:$0xf]
      %v6401 = vld [vmem:[%s6391 + $0x24] sm:$0xf]
      %v6402 = vld [vmem:[%s6391 + $0x28] sm:$0xf]
      %v6403 = vld [vmem:[%s6391 + $0x2c] sm:$0xf]
      %v6404 = vld [vmem:[%s6391 + $0x30] sm:$0xf]
      %v6405 = vld [vmem:[%s6391 + $0x34] sm:$0xf]
      %v6406 = vld [vmem:[%s6391 + $0x38] sm:$0xf]
      %v6407 = vld [vmem:[%s6391 + $0x3c] sm:$0xf]
      %v6424 = vunpack.c.l.b16 %v6359
      %v6425 = vunpack.c.l.b16 %v6360
      %v6426 = vunpack.c.l.b16 %v6361
      %v6427 = vunpack.c.l.b16 %v6362
      %v6428 = vunpack.c.l.b16 %v6363
      %v6429 = vunpack.c.l.b16 %v6364
      %v6430 = vunpack.c.l.b16 %v6365
      %v6431 = vunpack.c.l.b16 %v6366
      %v6432 = vunpack.c.l.b16 %v6367
      %v6433 = vunpack.c.l.b16 %v6368
      %v6434 = vunpack.c.l.b16 %v6369
      %v6435 = vunpack.c.l.b16 %v6370
      %v6436 = vunpack.c.l.b16 %v6371
      %v6437 = vunpack.c.l.b16 %v6372
      %v6438 = vunpack.c.l.b16 %v6373
      %v6439 = vunpack.c.l.b16 %v6374
      %v6440 = vpack.c.b16 %v6425, %v6424
      %v6441 = vpack.c.b16 %v6427, %v6426
      %v6442 = vpack.c.b16 %v6429, %v6428
      %v6443 = vpack.c.b16 %v6431, %v6430
      %v6444 = vpack.c.b16 %v6433, %v6432
      %v6445 = vpack.c.b16 %v6435, %v6434
      %v6446 = vpack.c.b16 %v6437, %v6436
      %v6447 = vpack.c.b16 %v6439, %v6438
      %v6472 = vunpack.c.l.b16 %v6392
      %v6473 = vunpack.c.l.b16 %v6393
      %v6474 = vunpack.c.l.b16 %v6394
      %v6475 = vunpack.c.l.b16 %v6395
      %v6476 = vunpack.c.l.b16 %v6396
      %v6477 = vunpack.c.l.b16 %v6397
      %v6478 = vunpack.c.l.b16 %v6398
      %v6479 = vunpack.c.l.b16 %v6399
      %v6480 = vunpack.c.l.b16 %v6400
      %v6481 = vunpack.c.l.b16 %v6401
      %v6482 = vunpack.c.l.b16 %v6402
      %v6483 = vunpack.c.l.b16 %v6403
      %v6484 = vunpack.c.l.b16 %v6404
      %v6485 = vunpack.c.l.b16 %v6405
      %v6486 = vunpack.c.l.b16 %v6406
      %v6487 = vunpack.c.l.b16 %v6407
      %v6488 = vpack.c.b16 %v6473, %v6472
      %v6489 = vpack.c.b16 %v6475, %v6474
      %v6490 = vpack.c.b16 %v6477, %v6476
      %v6491 = vpack.c.b16 %v6479, %v6478
      %v6492 = vpack.c.b16 %v6481, %v6480
      %v6493 = vpack.c.b16 %v6483, %v6482
      %v6494 = vpack.c.b16 %v6485, %v6484
      %v6495 = vpack.c.b16 %v6487, %v6486
      %6504 = vmatpush.bf16.msra.mxu0 %v6495
      %6505 = vmatpush.bf16.msra.mxu0 %v6494
      %6506 = vmatpush.bf16.msra.mxu0 %v6493
      %6507 = vmatpush.bf16.msra.mxu0 %v6492
      %6508 = vmatpush.bf16.msra.mxu0 %v6491
      %6509 = vmatpush.bf16.msra.mxu0 %v6490
      %6510 = vmatpush.bf16.msra.mxu0 %v6489
      %6511 = vmatpush.bf16.msra.mxu0 %v6488
      %6512 = vmatmul.bf16.gmra.mxu0 %v6440
      %v6513 = vpop.f32.mrf.mxu0
      %v6514 = vadd.f32 0.0, %v6513
      %v6515 = vpop.f32.mrf.mxu0
      %v6516 = vadd.f32 0.0, %v6515
      %6517 = vmatmul.bf16.gmra.mxu0 %v6441
      %v6518 = vpop.f32.mrf.mxu0
      %v6519 = vadd.f32 0.0, %v6518
      %v6520 = vpop.f32.mrf.mxu0
      %v6521 = vadd.f32 0.0, %v6520
      %6522 = vmatmul.bf16.gmra.mxu0 %v6442
      %v6523 = vpop.f32.mrf.mxu0
      %v6524 = vadd.f32 0.0, %v6523
      %v6525 = vpop.f32.mrf.mxu0
      %v6526 = vadd.f32 0.0, %v6525
      %6527 = vmatmul.bf16.gmra.mxu0 %v6443
      %v6528 = vpop.f32.mrf.mxu0
      %v6529 = vadd.f32 0.0, %v6528
      %v6530 = vpop.f32.mrf.mxu0
      %v6531 = vadd.f32 0.0, %v6530
      %6532 = vmatmul.bf16.gmra.mxu0 %v6444
      %v6533 = vpop.f32.mrf.mxu0
      %v6534 = vadd.f32 0.0, %v6533
      %v6535 = vpop.f32.mrf.mxu0
      %v6536 = vadd.f32 0.0, %v6535
      %6537 = vmatmul.bf16.gmra.mxu0 %v6445
      %v6538 = vpop.f32.mrf.mxu0
      %v6539 = vadd.f32 0.0, %v6538
      %v6540 = vpop.f32.mrf.mxu0
      %v6541 = vadd.f32 0.0, %v6540
      %6542 = vmatmul.bf16.gmra.mxu0 %v6446
      %v6543 = vpop.f32.mrf.mxu0
      %v6544 = vadd.f32 0.0, %v6543
      %v6545 = vpop.f32.mrf.mxu0
      %v6546 = vadd.f32 0.0, %v6545
      %6547 = vmatmul.bf16.gmra.mxu0 %v6447
      %v6548 = vpop.f32.mrf.mxu0
      %v6549 = vadd.f32 0.0, %v6548
      %v6550 = vpop.f32.mrf.mxu0
      %v6551 = vadd.f32 0.0, %v6550
      %6552 = vdwg.mxu0
      %v6553 = vadd.f32 %v6375, %v6514
      %v6554 = vadd.f32 %v6376, %v6516
      %v6555 = vadd.f32 %v6377, %v6519
      %v6556 = vadd.f32 %v6378, %v6521
      %v6557 = vadd.f32 %v6379, %v6524
      %v6558 = vadd.f32 %v6380, %v6526
      %v6559 = vadd.f32 %v6381, %v6529
      %v6560 = vadd.f32 %v6382, %v6531
      %v6561 = vadd.f32 %v6383, %v6534
      %v6562 = vadd.f32 %v6384, %v6536
      %v6563 = vadd.f32 %v6385, %v6539
      %v6564 = vadd.f32 %v6386, %v6541
      %v6565 = vadd.f32 %v6387, %v6544
      %v6566 = vadd.f32 %v6388, %v6546
      %v6567 = vadd.f32 %v6389, %v6549
      %v6568 = vadd.f32 %v6390, %v6551
      %6569 = vst [vmem:[#allocation3] sm:$0xff] %v6553
      %6570 = vst [vmem:[#allocation3 + $0x8] sm:$0xff] %v6554
      %6571 = vst [vmem:[#allocation3 + $0x10] sm:$0xff] %v6555
      %6572 = vst [vmem:[#allocation3 + $0x18] sm:$0xff] %v6556
      %6573 = vst [vmem:[#allocation3 + $0x20] sm:$0xff] %v6557
      %6574 = vst [vmem:[#allocation3 + $0x28] sm:$0xff] %v6558
      %6575 = vst [vmem:[#allocation3 + $0x30] sm:$0xff] %v6559
      %6576 = vst [vmem:[#allocation3 + $0x38] sm:$0xff] %v6560
      %6577 = vst [vmem:[#allocation3 + $0x40] sm:$0xff] %v6561
      %6578 = vst [vmem:[#allocation3 + $0x48] sm:$0xff] %v6562
      %6579 = vst [vmem:[#allocation3 + $0x50] sm:$0xff] %v6563
      %6580 = vst [vmem:[#allocation3 + $0x58] sm:$0xff] %v6564
      %6581 = vst [vmem:[#allocation3 + $0x60] sm:$0xff] %v6565
      %6582 = vst [vmem:[#allocation3 + $0x68] sm:$0xff] %v6566
      %6583 = vst [vmem:[#allocation3 + $0x70] sm:$0xff] %v6567
      %6584 = vst [vmem:[#allocation3 + $0x78] sm:$0xff] %v6568
      %v6585 = vld [vmem:[%s1121 + $0x4] sm:$0x8]
      %v6586 = vld [vmem:[%s1121 + $0x8] sm:$0xf]
      %v6587 = vld [vmem:[%s1121 + $0xc] sm:$0x7]
      %v6588 = vld [vmem:[%s1121 + $0x14] sm:$0x8]
      %v6589 = vld [vmem:[%s1121 + $0x18] sm:$0xf]
      %v6590 = vld [vmem:[%s1121 + $0x1c] sm:$0x7]
      %v6591 = vld [vmem:[%s1121 + $0x24] sm:$0x8]
      %v6592 = vld [vmem:[%s1121 + $0x28] sm:$0xf]
      %v6593 = vld [vmem:[%s1121 + $0x2c] sm:$0x7]
      %v6594 = vld [vmem:[%s1121 + $0x34] sm:$0x8]
      %v6595 = vld [vmem:[%s1121 + $0x38] sm:$0xf]
      %v6596 = vld [vmem:[%s1121 + $0x3c] sm:$0x7]
      %v6597 = vld [vmem:[%s1121 + $0x44] sm:$0x8]
      %v6598 = vld [vmem:[%s1121 + $0x48] sm:$0xf]
      %v6599 = vld [vmem:[%s1121 + $0x4c] sm:$0x7]
      %v6600 = vld [vmem:[%s1121 + $0x54] sm:$0x8]
      %v6601 = vld [vmem:[%s1121 + $0x58] sm:$0xf]
      %v6602 = vld [vmem:[%s1121 + $0x5c] sm:$0x7]
      %v6603 = vld [vmem:[%s1121 + $0x64] sm:$0x8]
      %v6604 = vld [vmem:[%s1121 + $0x68] sm:$0xf]
      %v6605 = vld [vmem:[%s1121 + $0x6c] sm:$0x7]
      %v6606 = vld [vmem:[%s1121 + $0x74] sm:$0x8]
      %v6607 = vld [vmem:[%s1121 + $0x78] sm:$0xf]
      %v6608 = vld [vmem:[%s1121 + $0x7c] sm:$0x7]
      %v6633 = vrot.slane %v6585, 7
      %v6634 = vrot.slane %v6633, 4
      %v6635 = vrot.slane %v6586, 7
      %v6636 = vsel %vm344, %v6634, %v6635
      %v6637 = vrot.slane %v6635, 4
      %v6638 = vrot.slane %v6587, 7
      %v6639 = vsel %vm344, %v6637, %v6638
      %v6640 = vrot.slane %v6588, 7
      %v6641 = vrot.slane %v6640, 4
      %v6642 = vrot.slane %v6589, 7
      %v6643 = vsel %vm344, %v6641, %v6642
      %v6644 = vrot.slane %v6642, 4
      %v6645 = vrot.slane %v6590, 7
      %v6646 = vsel %vm344, %v6644, %v6645
      %v6647 = vrot.slane %v6591, 7
      %v6648 = vrot.slane %v6647, 4
      %v6649 = vrot.slane %v6592, 7
      %v6650 = vsel %vm344, %v6648, %v6649
      %v6651 = vrot.slane %v6649, 4
      %v6652 = vrot.slane %v6593, 7
      %v6653 = vsel %vm344, %v6651, %v6652
      %v6654 = vrot.slane %v6594, 7
      %v6655 = vrot.slane %v6654, 4
      %v6656 = vrot.slane %v6595, 7
      %v6657 = vsel %vm344, %v6655, %v6656
      %v6658 = vrot.slane %v6656, 4
      %v6659 = vrot.slane %v6596, 7
      %v6660 = vsel %vm344, %v6658, %v6659
      %v6661 = vrot.slane %v6597, 7
      %v6662 = vrot.slane %v6661, 4
      %v6663 = vrot.slane %v6598, 7
      %v6664 = vsel %vm344, %v6662, %v6663
      %v6665 = vrot.slane %v6663, 4
      %v6666 = vrot.slane %v6599, 7
      %v6667 = vsel %vm344, %v6665, %v6666
      %v6668 = vrot.slane %v6600, 7
      %v6669 = vrot.slane %v6668, 4
      %v6670 = vrot.slane %v6601, 7
      %v6671 = vsel %vm344, %v6669, %v6670
      %v6672 = vrot.slane %v6670, 4
      %v6673 = vrot.slane %v6602, 7
      %v6674 = vsel %vm344, %v6672, %v6673
      %v6675 = vrot.slane %v6603, 7
      %v6676 = vrot.slane %v6675, 4
      %v6677 = vrot.slane %v6604, 7
      %v6678 = vsel %vm344, %v6676, %v6677
      %v6679 = vrot.slane %v6677, 4
      %v6680 = vrot.slane %v6605, 7
      %v6681 = vsel %vm344, %v6679, %v6680
      %v6682 = vrot.slane %v6606, 7
      %v6683 = vrot.slane %v6682, 4
      %v6684 = vrot.slane %v6607, 7
      %v6685 = vsel %vm344, %v6683, %v6684
      %v6686 = vrot.slane %v6684, 4
      %v6687 = vrot.slane %v6608, 7
      %v6688 = vsel %vm344, %v6686, %v6687
      %v6689 = vld [vmem:[#allocation3] sm:$0xff]
      %v6690 = vld [vmem:[#allocation3 + $0x8] sm:$0xff]
      %v6691 = vld [vmem:[#allocation3 + $0x10] sm:$0xff]
      %v6692 = vld [vmem:[#allocation3 + $0x18] sm:$0xff]
      %v6693 = vld [vmem:[#allocation3 + $0x20] sm:$0xff]
      %v6694 = vld [vmem:[#allocation3 + $0x28] sm:$0xff]
      %v6695 = vld [vmem:[#allocation3 + $0x30] sm:$0xff]
      %v6696 = vld [vmem:[#allocation3 + $0x38] sm:$0xff]
      %v6697 = vld [vmem:[#allocation3 + $0x40] sm:$0xff]
      %v6698 = vld [vmem:[#allocation3 + $0x48] sm:$0xff]
      %v6699 = vld [vmem:[#allocation3 + $0x50] sm:$0xff]
      %v6700 = vld [vmem:[#allocation3 + $0x58] sm:$0xff]
      %v6701 = vld [vmem:[#allocation3 + $0x60] sm:$0xff]
      %v6702 = vld [vmem:[#allocation3 + $0x68] sm:$0xff]
      %v6703 = vld [vmem:[#allocation3 + $0x70] sm:$0xff]
      %v6704 = vld [vmem:[#allocation3 + $0x78] sm:$0xff]
      %s6705 = scalar_lea.vmem %s1, 1472
      %v6706 = vld [vmem:[%s6705] sm:$0xf]
      %v6707 = vld [vmem:[%s6705 + $0x4] sm:$0xf]
      %v6708 = vld [vmem:[%s6705 + $0x8] sm:$0xf]
      %v6709 = vld [vmem:[%s6705 + $0xc] sm:$0xf]
      %v6710 = vld [vmem:[%s6705 + $0x10] sm:$0xf]
      %v6711 = vld [vmem:[%s6705 + $0x14] sm:$0xf]
      %v6712 = vld [vmem:[%s6705 + $0x18] sm:$0xf]
      %v6713 = vld [vmem:[%s6705 + $0x1c] sm:$0xf]
      %v6714 = vld [vmem:[%s6705 + $0x20] sm:$0xf]
      %v6715 = vld [vmem:[%s6705 + $0x24] sm:$0xf]
      %v6716 = vld [vmem:[%s6705 + $0x28] sm:$0xf]
      %v6717 = vld [vmem:[%s6705 + $0x2c] sm:$0xf]
      %v6718 = vld [vmem:[%s6705 + $0x30] sm:$0xf]
      %v6719 = vld [vmem:[%s6705 + $0x34] sm:$0xf]
      %v6720 = vld [vmem:[%s6705 + $0x38] sm:$0xf]
      %v6721 = vld [vmem:[%s6705 + $0x3c] sm:$0xf]
      %v6722 = vunpack.c.l.b16 %v6636
      %v6723 = vunpack.c.l.b16 %v6639
      %v6724 = vunpack.c.l.b16 %v6643
      %v6725 = vunpack.c.l.b16 %v6646
      %v6726 = vunpack.c.l.b16 %v6650
      %v6727 = vunpack.c.l.b16 %v6653
      %v6728 = vunpack.c.l.b16 %v6657
      %v6729 = vunpack.c.l.b16 %v6660
      %v6730 = vunpack.c.l.b16 %v6664
      %v6731 = vunpack.c.l.b16 %v6667
      %v6732 = vunpack.c.l.b16 %v6671
      %v6733 = vunpack.c.l.b16 %v6674
      %v6734 = vunpack.c.l.b16 %v6678
      %v6735 = vunpack.c.l.b16 %v6681
      %v6736 = vunpack.c.l.b16 %v6685
      %v6737 = vunpack.c.l.b16 %v6688
      %v6738 = vpack.c.b16 %v6723, %v6722
      %v6739 = vpack.c.b16 %v6725, %v6724
      %v6740 = vpack.c.b16 %v6727, %v6726
      %v6741 = vpack.c.b16 %v6729, %v6728
      %v6742 = vpack.c.b16 %v6731, %v6730
      %v6743 = vpack.c.b16 %v6733, %v6732
      %v6744 = vpack.c.b16 %v6735, %v6734
      %v6745 = vpack.c.b16 %v6737, %v6736
      %v6770 = vunpack.c.l.b16 %v6706
      %v6771 = vunpack.c.l.b16 %v6707
      %v6772 = vunpack.c.l.b16 %v6708
      %v6773 = vunpack.c.l.b16 %v6709
      %v6774 = vunpack.c.l.b16 %v6710
      %v6775 = vunpack.c.l.b16 %v6711
      %v6776 = vunpack.c.l.b16 %v6712
      %v6777 = vunpack.c.l.b16 %v6713
      %v6778 = vunpack.c.l.b16 %v6714
      %v6779 = vunpack.c.l.b16 %v6715
      %v6780 = vunpack.c.l.b16 %v6716
      %v6781 = vunpack.c.l.b16 %v6717
      %v6782 = vunpack.c.l.b16 %v6718
      %v6783 = vunpack.c.l.b16 %v6719
      %v6784 = vunpack.c.l.b16 %v6720
      %v6785 = vunpack.c.l.b16 %v6721
      %v6786 = vpack.c.b16 %v6771, %v6770
      %v6787 = vpack.c.b16 %v6773, %v6772
      %v6788 = vpack.c.b16 %v6775, %v6774
      %v6789 = vpack.c.b16 %v6777, %v6776
      %v6790 = vpack.c.b16 %v6779, %v6778
      %v6791 = vpack.c.b16 %v6781, %v6780
      %v6792 = vpack.c.b16 %v6783, %v6782
      %v6793 = vpack.c.b16 %v6785, %v6784
      %6802 = vmatpush.bf16.msra.mxu0 %v6793
      %6803 = vmatpush.bf16.msra.mxu0 %v6792
      %6804 = vmatpush.bf16.msra.mxu0 %v6791
      %6805 = vmatpush.bf16.msra.mxu0 %v6790
      %6806 = vmatpush.bf16.msra.mxu0 %v6789
      %6807 = vmatpush.bf16.msra.mxu0 %v6788
      %6808 = vmatpush.bf16.msra.mxu0 %v6787
      %6809 = vmatpush.bf16.msra.mxu0 %v6786
      %6810 = vmatmul.bf16.gmra.mxu0 %v6738
      %v6811 = vpop.f32.mrf.mxu0
      %v6812 = vadd.f32 0.0, %v6811
      %v6813 = vpop.f32.mrf.mxu0
      %v6814 = vadd.f32 0.0, %v6813
      %6815 = vmatmul.bf16.gmra.mxu0 %v6739
      %v6816 = vpop.f32.mrf.mxu0
      %v6817 = vadd.f32 0.0, %v6816
      %v6818 = vpop.f32.mrf.mxu0
      %v6819 = vadd.f32 0.0, %v6818
      %6820 = vmatmul.bf16.gmra.mxu0 %v6740
      %v6821 = vpop.f32.mrf.mxu0
      %v6822 = vadd.f32 0.0, %v6821
      %v6823 = vpop.f32.mrf.mxu0
      %v6824 = vadd.f32 0.0, %v6823
      %6825 = vmatmul.bf16.gmra.mxu0 %v6741
      %v6826 = vpop.f32.mrf.mxu0
      %v6827 = vadd.f32 0.0, %v6826
      %v6828 = vpop.f32.mrf.mxu0
      %v6829 = vadd.f32 0.0, %v6828
      %6830 = vmatmul.bf16.gmra.mxu0 %v6742
      %v6831 = vpop.f32.mrf.mxu0
      %v6832 = vadd.f32 0.0, %v6831
      %v6833 = vpop.f32.mrf.mxu0
      %v6834 = vadd.f32 0.0, %v6833
      %6835 = vmatmul.bf16.gmra.mxu0 %v6743
      %v6836 = vpop.f32.mrf.mxu0
      %v6837 = vadd.f32 0.0, %v6836
      %v6838 = vpop.f32.mrf.mxu0
      %v6839 = vadd.f32 0.0, %v6838
      %6840 = vmatmul.bf16.gmra.mxu0 %v6744
      %v6841 = vpop.f32.mrf.mxu0
      %v6842 = vadd.f32 0.0, %v6841
      %v6843 = vpop.f32.mrf.mxu0
      %v6844 = vadd.f32 0.0, %v6843
      %6845 = vmatmul.bf16.gmra.mxu0 %v6745
      %v6846 = vpop.f32.mrf.mxu0
      %v6847 = vadd.f32 0.0, %v6846
      %v6848 = vpop.f32.mrf.mxu0
      %v6849 = vadd.f32 0.0, %v6848
      %6850 = vdwg.mxu0
      %v6851 = vadd.f32 %v6689, %v6812
      %v6852 = vadd.f32 %v6690, %v6814
      %v6853 = vadd.f32 %v6691, %v6817
      %v6854 = vadd.f32 %v6692, %v6819
      %v6855 = vadd.f32 %v6693, %v6822
      %v6856 = vadd.f32 %v6694, %v6824
      %v6857 = vadd.f32 %v6695, %v6827
      %v6858 = vadd.f32 %v6696, %v6829
      %v6859 = vadd.f32 %v6697, %v6832
      %v6860 = vadd.f32 %v6698, %v6834
      %v6861 = vadd.f32 %v6699, %v6837
      %v6862 = vadd.f32 %v6700, %v6839
      %v6863 = vadd.f32 %v6701, %v6842
      %v6864 = vadd.f32 %v6702, %v6844
      %v6865 = vadd.f32 %v6703, %v6847
      %v6866 = vadd.f32 %v6704, %v6849
      %6867 = vst [vmem:[#allocation3] sm:$0xff] %v6851
      %6868 = vst [vmem:[#allocation3 + $0x8] sm:$0xff] %v6852
      %6869 = vst [vmem:[#allocation3 + $0x10] sm:$0xff] %v6853
      %6870 = vst [vmem:[#allocation3 + $0x18] sm:$0xff] %v6854
      %6871 = vst [vmem:[#allocation3 + $0x20] sm:$0xff] %v6855
      %6872 = vst [vmem:[#allocation3 + $0x28] sm:$0xff] %v6856
      %6873 = vst [vmem:[#allocation3 + $0x30] sm:$0xff] %v6857
      %6874 = vst [vmem:[#allocation3 + $0x38] sm:$0xff] %v6858
      %6875 = vst [vmem:[#allocation3 + $0x40] sm:$0xff] %v6859
      %6876 = vst [vmem:[#allocation3 + $0x48] sm:$0xff] %v6860
      %6877 = vst [vmem:[#allocation3 + $0x50] sm:$0xff] %v6861
      %6878 = vst [vmem:[#allocation3 + $0x58] sm:$0xff] %v6862
      %6879 = vst [vmem:[#allocation3 + $0x60] sm:$0xff] %v6863
      %6880 = vst [vmem:[#allocation3 + $0x68] sm:$0xff] %v6864
      %6881 = vst [vmem:[#allocation3 + $0x70] sm:$0xff] %v6865
      %6882 = vst [vmem:[#allocation3 + $0x78] sm:$0xff] %v6866
      %s6883 = scalar_lea.vmem [#allocation2], 224
      %v6884 = vld [vmem:[%s6883] sm:$0xe]
      %v6885 = vld [vmem:[%s6883 + $0x4] sm:$0xf]
      %v6886 = vld [vmem:[%s6883 + $0x8] sm:$0x1]
      %v6887 = vld [vmem:[%s6883 + $0x10] sm:$0xe]
      %v6888 = vld [vmem:[%s6883 + $0x14] sm:$0xf]
      %v6889 = vld [vmem:[%s6883 + $0x18] sm:$0x1]
      %v6890 = vld [vmem:[%s6883 + $0x20] sm:$0xe]
      %v6891 = vld [vmem:[%s6883 + $0x24] sm:$0xf]
      %v6892 = vld [vmem:[%s6883 + $0x28] sm:$0x1]
      %v6893 = vld [vmem:[%s6883 + $0x30] sm:$0xe]
      %v6894 = vld [vmem:[%s6883 + $0x34] sm:$0xf]
      %v6895 = vld [vmem:[%s6883 + $0x38] sm:$0x1]
      %v6896 = vld [vmem:[%s6883 + $0x40] sm:$0xe]
      %v6897 = vld [vmem:[%s6883 + $0x44] sm:$0xf]
      %v6898 = vld [vmem:[%s6883 + $0x48] sm:$0x1]
      %v6899 = vld [vmem:[%s6883 + $0x50] sm:$0xe]
      %v6900 = vld [vmem:[%s6883 + $0x54] sm:$0xf]
      %v6901 = vld [vmem:[%s6883 + $0x58] sm:$0x1]
      %v6902 = vld [vmem:[%s6883 + $0x60] sm:$0xe]
      %v6903 = vld [vmem:[%s6883 + $0x64] sm:$0xf]
      %v6904 = vld [vmem:[%s6883 + $0x68] sm:$0x1]
      %v6905 = vld [vmem:[%s6883 + $0x70] sm:$0xe]
      %v6906 = vld [vmem:[%s6883 + $0x74] sm:$0xf]
      %v6907 = vld [vmem:[%s6883 + $0x78] sm:$0x1]
      %v6932 = vrot.slane %v6884, 5
      %v6933 = vrot.slane %v6932, 4
      %v6934 = vrot.slane %v6885, 5
      %v6935 = vsel %vm870, %v6933, %v6934
      %v6936 = vrot.slane %v6934, 4
      %v6937 = vrot.slane %v6886, 5
      %v6938 = vsel %vm870, %v6936, %v6937
      %v6939 = vrot.slane %v6887, 5
      %v6940 = vrot.slane %v6939, 4
      %v6941 = vrot.slane %v6888, 5
      %v6942 = vsel %vm870, %v6940, %v6941
      %v6943 = vrot.slane %v6941, 4
      %v6944 = vrot.slane %v6889, 5
      %v6945 = vsel %vm870, %v6943, %v6944
      %v6946 = vrot.slane %v6890, 5
      %v6947 = vrot.slane %v6946, 4
      %v6948 = vrot.slane %v6891, 5
      %v6949 = vsel %vm870, %v6947, %v6948
      %v6950 = vrot.slane %v6948, 4
      %v6951 = vrot.slane %v6892, 5
      %v6952 = vsel %vm870, %v6950, %v6951
      %v6953 = vrot.slane %v6893, 5
      %v6954 = vrot.slane %v6953, 4
      %v6955 = vrot.slane %v6894, 5
      %v6956 = vsel %vm870, %v6954, %v6955
      %v6957 = vrot.slane %v6955, 4
      %v6958 = vrot.slane %v6895, 5
      %v6959 = vsel %vm870, %v6957, %v6958
      %v6960 = vrot.slane %v6896, 5
      %v6961 = vrot.slane %v6960, 4
      %v6962 = vrot.slane %v6897, 5
      %v6963 = vsel %vm870, %v6961, %v6962
      %v6964 = vrot.slane %v6962, 4
      %v6965 = vrot.slane %v6898, 5
      %v6966 = vsel %vm870, %v6964, %v6965
      %v6967 = vrot.slane %v6899, 5
      %v6968 = vrot.slane %v6967, 4
      %v6969 = vrot.slane %v6900, 5
      %v6970 = vsel %vm870, %v6968, %v6969
      %v6971 = vrot.slane %v6969, 4
      %v6972 = vrot.slane %v6901, 5
      %v6973 = vsel %vm870, %v6971, %v6972
      %v6974 = vrot.slane %v6902, 5
      %v6975 = vrot.slane %v6974, 4
      %v6976 = vrot.slane %v6903, 5
      %v6977 = vsel %vm870, %v6975, %v6976
      %v6978 = vrot.slane %v6976, 4
      %v6979 = vrot.slane %v6904, 5
      %v6980 = vsel %vm870, %v6978, %v6979
      %v6981 = vrot.slane %v6905, 5
      %v6982 = vrot.slane %v6981, 4
      %v6983 = vrot.slane %v6906, 5
      %v6984 = vsel %vm870, %v6982, %v6983
      %v6985 = vrot.slane %v6983, 4
      %v6986 = vrot.slane %v6907, 5
      %v6987 = vsel %vm870, %v6985, %v6986
      %v6988 = vld [vmem:[#allocation3] sm:$0xff]
      %v6989 = vld [vmem:[#allocation3 + $0x8] sm:$0xff]
      %v6990 = vld [vmem:[#allocation3 + $0x10] sm:$0xff]
      %v6991 = vld [vmem:[#allocation3 + $0x18] sm:$0xff]
      %v6992 = vld [vmem:[#allocation3 + $0x20] sm:$0xff]
      %v6993 = vld [vmem:[#allocation3 + $0x28] sm:$0xff]
      %v6994 = vld [vmem:[#allocation3 + $0x30] sm:$0xff]
      %v6995 = vld [vmem:[#allocation3 + $0x38] sm:$0xff]
      %v6996 = vld [vmem:[#allocation3 + $0x40] sm:$0xff]
      %v6997 = vld [vmem:[#allocation3 + $0x48] sm:$0xff]
      %v6998 = vld [vmem:[#allocation3 + $0x50] sm:$0xff]
      %v6999 = vld [vmem:[#allocation3 + $0x58] sm:$0xff]
      %v7000 = vld [vmem:[#allocation3 + $0x60] sm:$0xff]
      %v7001 = vld [vmem:[#allocation3 + $0x68] sm:$0xff]
      %v7002 = vld [vmem:[#allocation3 + $0x70] sm:$0xff]
      %v7003 = vld [vmem:[#allocation3 + $0x78] sm:$0xff]
      %s7004 = scalar_lea.vmem %s1, 1536
      %v7005 = vld [vmem:[%s7004] sm:$0xf]
      %v7006 = vld [vmem:[%s7004 + $0x4] sm:$0xf]
      %v7007 = vld [vmem:[%s7004 + $0x8] sm:$0xf]
      %v7008 = vld [vmem:[%s7004 + $0xc] sm:$0xf]
      %v7009 = vld [vmem:[%s7004 + $0x10] sm:$0xf]
      %v7010 = vld [vmem:[%s7004 + $0x14] sm:$0xf]
      %v7011 = vld [vmem:[%s7004 + $0x18] sm:$0xf]
      %v7012 = vld [vmem:[%s7004 + $0x1c] sm:$0xf]
      %v7013 = vld [vmem:[%s7004 + $0x20] sm:$0xf]
      %v7014 = vld [vmem:[%s7004 + $0x24] sm:$0xf]
      %v7015 = vld [vmem:[%s7004 + $0x28] sm:$0xf]
      %v7016 = vld [vmem:[%s7004 + $0x2c] sm:$0xf]
      %v7017 = vld [vmem:[%s7004 + $0x30] sm:$0xf]
      %v7018 = vld [vmem:[%s7004 + $0x34] sm:$0xf]
      %v7019 = vld [vmem:[%s7004 + $0x38] sm:$0xf]
      %v7020 = vld [vmem:[%s7004 + $0x3c] sm:$0xf]
      %v7021 = vunpack.c.l.b16 %v6935
      %v7022 = vunpack.c.l.b16 %v6938
      %v7023 = vunpack.c.l.b16 %v6942
      %v7024 = vunpack.c.l.b16 %v6945
      %v7025 = vunpack.c.l.b16 %v6949
      %v7026 = vunpack.c.l.b16 %v6952
      %v7027 = vunpack.c.l.b16 %v6956
      %v7028 = vunpack.c.l.b16 %v6959
      %v7029 = vunpack.c.l.b16 %v6963
      %v7030 = vunpack.c.l.b16 %v6966
      %v7031 = vunpack.c.l.b16 %v6970
      %v7032 = vunpack.c.l.b16 %v6973
      %v7033 = vunpack.c.l.b16 %v6977
      %v7034 = vunpack.c.l.b16 %v6980
      %v7035 = vunpack.c.l.b16 %v6984
      %v7036 = vunpack.c.l.b16 %v6987
      %v7037 = vpack.c.b16 %v7022, %v7021
      %v7038 = vpack.c.b16 %v7024, %v7023
      %v7039 = vpack.c.b16 %v7026, %v7025
      %v7040 = vpack.c.b16 %v7028, %v7027
      %v7041 = vpack.c.b16 %v7030, %v7029
      %v7042 = vpack.c.b16 %v7032, %v7031
      %v7043 = vpack.c.b16 %v7034, %v7033
      %v7044 = vpack.c.b16 %v7036, %v7035
      %v7069 = vunpack.c.l.b16 %v7005
      %v7070 = vunpack.c.l.b16 %v7006
      %v7071 = vunpack.c.l.b16 %v7007
      %v7072 = vunpack.c.l.b16 %v7008
      %v7073 = vunpack.c.l.b16 %v7009
      %v7074 = vunpack.c.l.b16 %v7010
      %v7075 = vunpack.c.l.b16 %v7011
      %v7076 = vunpack.c.l.b16 %v7012
      %v7077 = vunpack.c.l.b16 %v7013
      %v7078 = vunpack.c.l.b16 %v7014
      %v7079 = vunpack.c.l.b16 %v7015
      %v7080 = vunpack.c.l.b16 %v7016
      %v7081 = vunpack.c.l.b16 %v7017
      %v7082 = vunpack.c.l.b16 %v7018
      %v7083 = vunpack.c.l.b16 %v7019
      %v7084 = vunpack.c.l.b16 %v7020
      %v7085 = vpack.c.b16 %v7070, %v7069
      %v7086 = vpack.c.b16 %v7072, %v7071
      %v7087 = vpack.c.b16 %v7074, %v7073
      %v7088 = vpack.c.b16 %v7076, %v7075
      %v7089 = vpack.c.b16 %v7078, %v7077
      %v7090 = vpack.c.b16 %v7080, %v7079
      %v7091 = vpack.c.b16 %v7082, %v7081
      %v7092 = vpack.c.b16 %v7084, %v7083
      %7101 = vmatpush.bf16.msra.mxu0 %v7092
      %7102 = vmatpush.bf16.msra.mxu0 %v7091
      %7103 = vmatpush.bf16.msra.mxu0 %v7090
      %7104 = vmatpush.bf16.msra.mxu0 %v7089
      %7105 = vmatpush.bf16.msra.mxu0 %v7088
      %7106 = vmatpush.bf16.msra.mxu0 %v7087
      %7107 = vmatpush.bf16.msra.mxu0 %v7086
      %7108 = vmatpush.bf16.msra.mxu0 %v7085
      %7109 = vmatmul.bf16.gmra.mxu0 %v7037
      %v7110 = vpop.f32.mrf.mxu0
      %v7111 = vadd.f32 0.0, %v7110
      %v7112 = vpop.f32.mrf.mxu0
      %v7113 = vadd.f32 0.0, %v7112
      %7114 = vmatmul.bf16.gmra.mxu0 %v7038
      %v7115 = vpop.f32.mrf.mxu0
      %v7116 = vadd.f32 0.0, %v7115
      %v7117 = vpop.f32.mrf.mxu0
      %v7118 = vadd.f32 0.0, %v7117
      %7119 = vmatmul.bf16.gmra.mxu0 %v7039
      %v7120 = vpop.f32.mrf.mxu0
      %v7121 = vadd.f32 0.0, %v7120
      %v7122 = vpop.f32.mrf.mxu0
      %v7123 = vadd.f32 0.0, %v7122
      %7124 = vmatmul.bf16.gmra.mxu0 %v7040
      %v7125 = vpop.f32.mrf.mxu0
      %v7126 = vadd.f32 0.0, %v7125
      %v7127 = vpop.f32.mrf.mxu0
      %v7128 = vadd.f32 0.0, %v7127
      %7129 = vmatmul.bf16.gmra.mxu0 %v7041
      %v7130 = vpop.f32.mrf.mxu0
      %v7131 = vadd.f32 0.0, %v7130
      %v7132 = vpop.f32.mrf.mxu0
      %v7133 = vadd.f32 0.0, %v7132
      %7134 = vmatmul.bf16.gmra.mxu0 %v7042
      %v7135 = vpop.f32.mrf.mxu0
      %v7136 = vadd.f32 0.0, %v7135
      %v7137 = vpop.f32.mrf.mxu0
      %v7138 = vadd.f32 0.0, %v7137
      %7139 = vmatmul.bf16.gmra.mxu0 %v7043
      %v7140 = vpop.f32.mrf.mxu0
      %v7141 = vadd.f32 0.0, %v7140
      %v7142 = vpop.f32.mrf.mxu0
      %v7143 = vadd.f32 0.0, %v7142
      %7144 = vmatmul.bf16.gmra.mxu0 %v7044
      %v7145 = vpop.f32.mrf.mxu0
      %v7146 = vadd.f32 0.0, %v7145
      %v7147 = vpop.f32.mrf.mxu0
      %v7148 = vadd.f32 0.0, %v7147
      %7149 = vdwg.mxu0
      %v7150 = vadd.f32 %v6988, %v7111
      %v7151 = vadd.f32 %v6989, %v7113
      %v7152 = vadd.f32 %v6990, %v7116
      %v7153 = vadd.f32 %v6991, %v7118
      %v7154 = vadd.f32 %v6992, %v7121
      %v7155 = vadd.f32 %v6993, %v7123
      %v7156 = vadd.f32 %v6994, %v7126
      %v7157 = vadd.f32 %v6995, %v7128
      %v7158 = vadd.f32 %v6996, %v7131
      %v7159 = vadd.f32 %v6997, %v7133
      %v7160 = vadd.f32 %v6998, %v7136
      %v7161 = vadd.f32 %v6999, %v7138
      %v7162 = vadd.f32 %v7000, %v7141
      %v7163 = vadd.f32 %v7001, %v7143
      %v7164 = vadd.f32 %v7002, %v7146
      %v7165 = vadd.f32 %v7003, %v7148
      %7166 = vst [vmem:[#allocation3] sm:$0xff] %v7150
      %7167 = vst [vmem:[#allocation3 + $0x8] sm:$0xff] %v7151
      %7168 = vst [vmem:[#allocation3 + $0x10] sm:$0xff] %v7152
      %7169 = vst [vmem:[#allocation3 + $0x18] sm:$0xff] %v7153
      %7170 = vst [vmem:[#allocation3 + $0x20] sm:$0xff] %v7154
      %7171 = vst [vmem:[#allocation3 + $0x28] sm:$0xff] %v7155
      %7172 = vst [vmem:[#allocation3 + $0x30] sm:$0xff] %v7156
      %7173 = vst [vmem:[#allocation3 + $0x38] sm:$0xff] %v7157
      %7174 = vst [vmem:[#allocation3 + $0x40] sm:$0xff] %v7158
      %7175 = vst [vmem:[#allocation3 + $0x48] sm:$0xff] %v7159
      %7176 = vst [vmem:[#allocation3 + $0x50] sm:$0xff] %v7160
      %7177 = vst [vmem:[#allocation3 + $0x58] sm:$0xff] %v7161
      %7178 = vst [vmem:[#allocation3 + $0x60] sm:$0xff] %v7162
      %7179 = vst [vmem:[#allocation3 + $0x68] sm:$0xff] %v7163
      %7180 = vst [vmem:[#allocation3 + $0x70] sm:$0xff] %v7164
      %7181 = vst [vmem:[#allocation3 + $0x78] sm:$0xff] %v7165
      %v7182 = vld [vmem:[%s6883 + $0x4] sm:$0xf]
      %v7183 = vld [vmem:[%s6883 + $0x8] sm:$0xf]
      %v7184 = vld [vmem:[%s6883 + $0x14] sm:$0xf]
      %v7185 = vld [vmem:[%s6883 + $0x18] sm:$0xf]
      %v7186 = vld [vmem:[%s6883 + $0x24] sm:$0xf]
      %v7187 = vld [vmem:[%s6883 + $0x28] sm:$0xf]
      %v7188 = vld [vmem:[%s6883 + $0x34] sm:$0xf]
      %v7189 = vld [vmem:[%s6883 + $0x38] sm:$0xf]
      %v7190 = vld [vmem:[%s6883 + $0x44] sm:$0xf]
      %v7191 = vld [vmem:[%s6883 + $0x48] sm:$0xf]
      %v7192 = vld [vmem:[%s6883 + $0x54] sm:$0xf]
      %v7193 = vld [vmem:[%s6883 + $0x58] sm:$0xf]
      %v7194 = vld [vmem:[%s6883 + $0x64] sm:$0xf]
      %v7195 = vld [vmem:[%s6883 + $0x68] sm:$0xf]
      %v7196 = vld [vmem:[%s6883 + $0x74] sm:$0xf]
      %v7197 = vld [vmem:[%s6883 + $0x78] sm:$0xf]
      %v7198 = vld [vmem:[#allocation3] sm:$0xff]
      %v7199 = vld [vmem:[#allocation3 + $0x8] sm:$0xff]
      %v7200 = vld [vmem:[#allocation3 + $0x10] sm:$0xff]
      %v7201 = vld [vmem:[#allocation3 + $0x18] sm:$0xff]
      %v7202 = vld [vmem:[#allocation3 + $0x20] sm:$0xff]
      %v7203 = vld [vmem:[#allocation3 + $0x28] sm:$0xff]
      %v7204 = vld [vmem:[#allocation3 + $0x30] sm:$0xff]
      %v7205 = vld [vmem:[#allocation3 + $0x38] sm:$0xff]
      %v7206 = vld [vmem:[#allocation3 + $0x40] sm:$0xff]
      %v7207 = vld [vmem:[#allocation3 + $0x48] sm:$0xff]
      %v7208 = vld [vmem:[#allocation3 + $0x50] sm:$0xff]
      %v7209 = vld [vmem:[#allocation3 + $0x58] sm:$0xff]
      %v7210 = vld [vmem:[#allocation3 + $0x60] sm:$0xff]
      %v7211 = vld [vmem:[#allocation3 + $0x68] sm:$0xff]
      %v7212 = vld [vmem:[#allocation3 + $0x70] sm:$0xff]
      %v7213 = vld [vmem:[#allocation3 + $0x78] sm:$0xff]
      %s7214 = scalar_lea.vmem %s1, 1600
      %v7215 = vld [vmem:[%s7214] sm:$0xf]
      %v7216 = vld [vmem:[%s7214 + $0x4] sm:$0xf]
      %v7217 = vld [vmem:[%s7214 + $0x8] sm:$0xf]
      %v7218 = vld [vmem:[%s7214 + $0xc] sm:$0xf]
      %v7219 = vld [vmem:[%s7214 + $0x10] sm:$0xf]
      %v7220 = vld [vmem:[%s7214 + $0x14] sm:$0xf]
      %v7221 = vld [vmem:[%s7214 + $0x18] sm:$0xf]
      %v7222 = vld [vmem:[%s7214 + $0x1c] sm:$0xf]
      %v7223 = vld [vmem:[%s7214 + $0x20] sm:$0xf]
      %v7224 = vld [vmem:[%s7214 + $0x24] sm:$0xf]
      %v7225 = vld [vmem:[%s7214 + $0x28] sm:$0xf]
      %v7226 = vld [vmem:[%s7214 + $0x2c] sm:$0xf]
      %v7227 = vld [vmem:[%s7214 + $0x30] sm:$0xf]
      %v7228 = vld [vmem:[%s7214 + $0x34] sm:$0xf]
      %v7229 = vld [vmem:[%s7214 + $0x38] sm:$0xf]
      %v7230 = vld [vmem:[%s7214 + $0x3c] sm:$0xf]
      %v7247 = vunpack.c.l.b16 %v7182
      %v7248 = vunpack.c.l.b16 %v7183
      %v7249 = vunpack.c.l.b16 %v7184
      %v7250 = vunpack.c.l.b16 %v7185
      %v7251 = vunpack.c.l.b16 %v7186
      %v7252 = vunpack.c.l.b16 %v7187
      %v7253 = vunpack.c.l.b16 %v7188
      %v7254 = vunpack.c.l.b16 %v7189
      %v7255 = vunpack.c.l.b16 %v7190
      %v7256 = vunpack.c.l.b16 %v7191
      %v7257 = vunpack.c.l.b16 %v7192
      %v7258 = vunpack.c.l.b16 %v7193
      %v7259 = vunpack.c.l.b16 %v7194
      %v7260 = vunpack.c.l.b16 %v7195
      %v7261 = vunpack.c.l.b16 %v7196
      %v7262 = vunpack.c.l.b16 %v7197
      %v7263 = vpack.c.b16 %v7248, %v7247
      %v7264 = vpack.c.b16 %v7250, %v7249
      %v7265 = vpack.c.b16 %v7252, %v7251
      %v7266 = vpack.c.b16 %v7254, %v7253
      %v7267 = vpack.c.b16 %v7256, %v7255
      %v7268 = vpack.c.b16 %v7258, %v7257
      %v7269 = vpack.c.b16 %v7260, %v7259
      %v7270 = vpack.c.b16 %v7262, %v7261
      %v7295 = vunpack.c.l.b16 %v7215
      %v7296 = vunpack.c.l.b16 %v7216
      %v7297 = vunpack.c.l.b16 %v7217
      %v7298 = vunpack.c.l.b16 %v7218
      %v7299 = vunpack.c.l.b16 %v7219
      %v7300 = vunpack.c.l.b16 %v7220
      %v7301 = vunpack.c.l.b16 %v7221
      %v7302 = vunpack.c.l.b16 %v7222
      %v7303 = vunpack.c.l.b16 %v7223
      %v7304 = vunpack.c.l.b16 %v7224
      %v7305 = vunpack.c.l.b16 %v7225
      %v7306 = vunpack.c.l.b16 %v7226
      %v7307 = vunpack.c.l.b16 %v7227
      %v7308 = vunpack.c.l.b16 %v7228
      %v7309 = vunpack.c.l.b16 %v7229
      %v7310 = vunpack.c.l.b16 %v7230
      %v7311 = vpack.c.b16 %v7296, %v7295
      %v7312 = vpack.c.b16 %v7298, %v7297
      %v7313 = vpack.c.b16 %v7300, %v7299
      %v7314 = vpack.c.b16 %v7302, %v7301
      %v7315 = vpack.c.b16 %v7304, %v7303
      %v7316 = vpack.c.b16 %v7306, %v7305
      %v7317 = vpack.c.b16 %v7308, %v7307
      %v7318 = vpack.c.b16 %v7310, %v7309
      %7327 = vmatpush.bf16.msra.mxu0 %v7318
      %7328 = vmatpush.bf16.msra.mxu0 %v7317
      %7329 = vmatpush.bf16.msra.mxu0 %v7316
      %7330 = vmatpush.bf16.msra.mxu0 %v7315
      %7331 = vmatpush.bf16.msra.mxu0 %v7314
      %7332 = vmatpush.bf16.msra.mxu0 %v7313
      %7333 = vmatpush.bf16.msra.mxu0 %v7312
      %7334 = vmatpush.bf16.msra.mxu0 %v7311
      %7335 = vmatmul.bf16.gmra.mxu0 %v7263
      %v7336 = vpop.f32.mrf.mxu0
      %v7337 = vadd.f32 0.0, %v7336
      %v7338 = vpop.f32.mrf.mxu0
      %v7339 = vadd.f32 0.0, %v7338
      %7340 = vmatmul.bf16.gmra.mxu0 %v7264
      %v7341 = vpop.f32.mrf.mxu0
      %v7342 = vadd.f32 0.0, %v7341
      %v7343 = vpop.f32.mrf.mxu0
      %v7344 = vadd.f32 0.0, %v7343
      %7345 = vmatmul.bf16.gmra.mxu0 %v7265
      %v7346 = vpop.f32.mrf.mxu0
      %v7347 = vadd.f32 0.0, %v7346
      %v7348 = vpop.f32.mrf.mxu0
      %v7349 = vadd.f32 0.0, %v7348
      %7350 = vmatmul.bf16.gmra.mxu0 %v7266
      %v7351 = vpop.f32.mrf.mxu0
      %v7352 = vadd.f32 0.0, %v7351
      %v7353 = vpop.f32.mrf.mxu0
      %v7354 = vadd.f32 0.0, %v7353
      %7355 = vmatmul.bf16.gmra.mxu0 %v7267
      %v7356 = vpop.f32.mrf.mxu0
      %v7357 = vadd.f32 0.0, %v7356
      %v7358 = vpop.f32.mrf.mxu0
      %v7359 = vadd.f32 0.0, %v7358
      %7360 = vmatmul.bf16.gmra.mxu0 %v7268
      %v7361 = vpop.f32.mrf.mxu0
      %v7362 = vadd.f32 0.0, %v7361
      %v7363 = vpop.f32.mrf.mxu0
      %v7364 = vadd.f32 0.0, %v7363
      %7365 = vmatmul.bf16.gmra.mxu0 %v7269
      %v7366 = vpop.f32.mrf.mxu0
      %v7367 = vadd.f32 0.0, %v7366
      %v7368 = vpop.f32.mrf.mxu0
      %v7369 = vadd.f32 0.0, %v7368
      %7370 = vmatmul.bf16.gmra.mxu0 %v7270
      %v7371 = vpop.f32.mrf.mxu0
      %v7372 = vadd.f32 0.0, %v7371
      %v7373 = vpop.f32.mrf.mxu0
      %v7374 = vadd.f32 0.0, %v7373
      %7375 = vdwg.mxu0
      %v7376 = vadd.f32 %v7198, %v7337
      %v7377 = vadd.f32 %v7199, %v7339
      %v7378 = vadd.f32 %v7200, %v7342
      %v7379 = vadd.f32 %v7201, %v7344
      %v7380 = vadd.f32 %v7202, %v7347
      %v7381 = vadd.f32 %v7203, %v7349
      %v7382 = vadd.f32 %v7204, %v7352
      %v7383 = vadd.f32 %v7205, %v7354
      %v7384 = vadd.f32 %v7206, %v7357
      %v7385 = vadd.f32 %v7207, %v7359
      %v7386 = vadd.f32 %v7208, %v7362
      %v7387 = vadd.f32 %v7209, %v7364
      %v7388 = vadd.f32 %v7210, %v7367
      %v7389 = vadd.f32 %v7211, %v7369
      %v7390 = vadd.f32 %v7212, %v7372
      %v7391 = vadd.f32 %v7213, %v7374
      %7392 = vst [vmem:[#allocation3] sm:$0xff] %v7376
      %7393 = vst [vmem:[#allocation3 + $0x8] sm:$0xff] %v7377
      %7394 = vst [vmem:[#allocation3 + $0x10] sm:$0xff] %v7378
      %7395 = vst [vmem:[#allocation3 + $0x18] sm:$0xff] %v7379
      %7396 = vst [vmem:[#allocation3 + $0x20] sm:$0xff] %v7380
      %7397 = vst [vmem:[#allocation3 + $0x28] sm:$0xff] %v7381
      %7398 = vst [vmem:[#allocation3 + $0x30] sm:$0xff] %v7382
      %7399 = vst [vmem:[#allocation3 + $0x38] sm:$0xff] %v7383
      %7400 = vst [vmem:[#allocation3 + $0x40] sm:$0xff] %v7384
      %7401 = vst [vmem:[#allocation3 + $0x48] sm:$0xff] %v7385
      %7402 = vst [vmem:[#allocation3 + $0x50] sm:$0xff] %v7386
      %7403 = vst [vmem:[#allocation3 + $0x58] sm:$0xff] %v7387
      %7404 = vst [vmem:[#allocation3 + $0x60] sm:$0xff] %v7388
      %7405 = vst [vmem:[#allocation3 + $0x68] sm:$0xff] %v7389
      %7406 = vst [vmem:[#allocation3 + $0x70] sm:$0xff] %v7390
      %7407 = vst [vmem:[#allocation3 + $0x78] sm:$0xff] %v7391
      %v7408 = vld [vmem:[%s6883 + $0x4] sm:$0x8]
      %v7409 = vld [vmem:[%s6883 + $0x8] sm:$0xf]
      %v7410 = vld [vmem:[%s6883 + $0xc] sm:$0x7]
      %v7411 = vld [vmem:[%s6883 + $0x14] sm:$0x8]
      %v7412 = vld [vmem:[%s6883 + $0x18] sm:$0xf]
      %v7413 = vld [vmem:[%s6883 + $0x1c] sm:$0x7]
      %v7414 = vld [vmem:[%s6883 + $0x24] sm:$0x8]
      %v7415 = vld [vmem:[%s6883 + $0x28] sm:$0xf]
      %v7416 = vld [vmem:[%s6883 + $0x2c] sm:$0x7]
      %v7417 = vld [vmem:[%s6883 + $0x34] sm:$0x8]
      %v7418 = vld [vmem:[%s6883 + $0x38] sm:$0xf]
      %v7419 = vld [vmem:[%s6883 + $0x3c] sm:$0x7]
      %v7420 = vld [vmem:[%s6883 + $0x44] sm:$0x8]
      %v7421 = vld [vmem:[%s6883 + $0x48] sm:$0xf]
      %v7422 = vld [vmem:[%s6883 + $0x4c] sm:$0x7]
      %v7423 = vld [vmem:[%s6883 + $0x54] sm:$0x8]
      %v7424 = vld [vmem:[%s6883 + $0x58] sm:$0xf]
      %v7425 = vld [vmem:[%s6883 + $0x5c] sm:$0x7]
      %v7426 = vld [vmem:[%s6883 + $0x64] sm:$0x8]
      %v7427 = vld [vmem:[%s6883 + $0x68] sm:$0xf]
      %v7428 = vld [vmem:[%s6883 + $0x6c] sm:$0x7]
      %v7429 = vld [vmem:[%s6883 + $0x74] sm:$0x8]
      %v7430 = vld [vmem:[%s6883 + $0x78] sm:$0xf]
      %v7431 = vld [vmem:[%s6883 + $0x7c] sm:$0x7]
      %v7456 = vrot.slane %v7408, 7
      %v7457 = vrot.slane %v7456, 4
      %v7458 = vrot.slane %v7409, 7
      %v7459 = vsel %vm344, %v7457, %v7458
      %v7460 = vrot.slane %v7458, 4
      %v7461 = vrot.slane %v7410, 7
      %v7462 = vsel %vm344, %v7460, %v7461
      %v7463 = vrot.slane %v7411, 7
      %v7464 = vrot.slane %v7463, 4
      %v7465 = vrot.slane %v7412, 7
      %v7466 = vsel %vm344, %v7464, %v7465
      %v7467 = vrot.slane %v7465, 4
      %v7468 = vrot.slane %v7413, 7
      %v7469 = vsel %vm344, %v7467, %v7468
      %v7470 = vrot.slane %v7414, 7
      %v7471 = vrot.slane %v7470, 4
      %v7472 = vrot.slane %v7415, 7
      %v7473 = vsel %vm344, %v7471, %v7472
      %v7474 = vrot.slane %v7472, 4
      %v7475 = vrot.slane %v7416, 7
      %v7476 = vsel %vm344, %v7474, %v7475
      %v7477 = vrot.slane %v7417, 7
      %v7478 = vrot.slane %v7477, 4
      %v7479 = vrot.slane %v7418, 7
      %v7480 = vsel %vm344, %v7478, %v7479
      %v7481 = vrot.slane %v7479, 4
      %v7482 = vrot.slane %v7419, 7
      %v7483 = vsel %vm344, %v7481, %v7482
      %v7484 = vrot.slane %v7420, 7
      %v7485 = vrot.slane %v7484, 4
      %v7486 = vrot.slane %v7421, 7
      %v7487 = vsel %vm344, %v7485, %v7486
      %v7488 = vrot.slane %v7486, 4
      %v7489 = vrot.slane %v7422, 7
      %v7490 = vsel %vm344, %v7488, %v7489
      %v7491 = vrot.slane %v7423, 7
      %v7492 = vrot.slane %v7491, 4
      %v7493 = vrot.slane %v7424, 7
      %v7494 = vsel %vm344, %v7492, %v7493
      %v7495 = vrot.slane %v7493, 4
      %v7496 = vrot.slane %v7425, 7
      %v7497 = vsel %vm344, %v7495, %v7496
      %v7498 = vrot.slane %v7426, 7
      %v7499 = vrot.slane %v7498, 4
      %v7500 = vrot.slane %v7427, 7
      %v7501 = vsel %vm344, %v7499, %v7500
      %v7502 = vrot.slane %v7500, 4
      %v7503 = vrot.slane %v7428, 7
      %v7504 = vsel %vm344, %v7502, %v7503
      %v7505 = vrot.slane %v7429, 7
      %v7506 = vrot.slane %v7505, 4
      %v7507 = vrot.slane %v7430, 7
      %v7508 = vsel %vm344, %v7506, %v7507
      %v7509 = vrot.slane %v7507, 4
      %v7510 = vrot.slane %v7431, 7
      %v7511 = vsel %vm344, %v7509, %v7510
      %v7512 = vld [vmem:[#allocation3] sm:$0xff]
      %v7513 = vld [vmem:[#allocation3 + $0x8] sm:$0xff]
      %v7514 = vld [vmem:[#allocation3 + $0x10] sm:$0xff]
      %v7515 = vld [vmem:[#allocation3 + $0x18] sm:$0xff]
      %v7516 = vld [vmem:[#allocation3 + $0x20] sm:$0xff]
      %v7517 = vld [vmem:[#allocation3 + $0x28] sm:$0xff]
      %v7518 = vld [vmem:[#allocation3 + $0x30] sm:$0xff]
      %v7519 = vld [vmem:[#allocation3 + $0x38] sm:$0xff]
      %v7520 = vld [vmem:[#allocation3 + $0x40] sm:$0xff]
      %v7521 = vld [vmem:[#allocation3 + $0x48] sm:$0xff]
      %v7522 = vld [vmem:[#allocation3 + $0x50] sm:$0xff]
      %v7523 = vld [vmem:[#allocation3 + $0x58] sm:$0xff]
      %v7524 = vld [vmem:[#allocation3 + $0x60] sm:$0xff]
      %v7525 = vld [vmem:[#allocation3 + $0x68] sm:$0xff]
      %v7526 = vld [vmem:[#allocation3 + $0x70] sm:$0xff]
      %v7527 = vld [vmem:[#allocation3 + $0x78] sm:$0xff]
      %s7528 = scalar_lea.vmem %s1, 1664
      %v7529 = vld [vmem:[%s7528] sm:$0xf]
      %v7530 = vld [vmem:[%s7528 + $0x4] sm:$0xf]
      %v7531 = vld [vmem:[%s7528 + $0x8] sm:$0xf]
      %v7532 = vld [vmem:[%s7528 + $0xc] sm:$0xf]
      %v7533 = vld [vmem:[%s7528 + $0x10] sm:$0xf]
      %v7534 = vld [vmem:[%s7528 + $0x14] sm:$0xf]
      %v7535 = vld [vmem:[%s7528 + $0x18] sm:$0xf]
      %v7536 = vld [vmem:[%s7528 + $0x1c] sm:$0xf]
      %v7537 = vld [vmem:[%s7528 + $0x20] sm:$0xf]
      %v7538 = vld [vmem:[%s7528 + $0x24] sm:$0xf]
      %v7539 = vld [vmem:[%s7528 + $0x28] sm:$0xf]
      %v7540 = vld [vmem:[%s7528 + $0x2c] sm:$0xf]
      %v7541 = vld [vmem:[%s7528 + $0x30] sm:$0xf]
      %v7542 = vld [vmem:[%s7528 + $0x34] sm:$0xf]
      %v7543 = vld [vmem:[%s7528 + $0x38] sm:$0xf]
      %v7544 = vld [vmem:[%s7528 + $0x3c] sm:$0xf]
      %v7545 = vunpack.c.l.b16 %v7459
      %v7546 = vunpack.c.l.b16 %v7462
      %v7547 = vunpack.c.l.b16 %v7466
      %v7548 = vunpack.c.l.b16 %v7469
      %v7549 = vunpack.c.l.b16 %v7473
      %v7550 = vunpack.c.l.b16 %v7476
      %v7551 = vunpack.c.l.b16 %v7480
      %v7552 = vunpack.c.l.b16 %v7483
      %v7553 = vunpack.c.l.b16 %v7487
      %v7554 = vunpack.c.l.b16 %v7490
      %v7555 = vunpack.c.l.b16 %v7494
      %v7556 = vunpack.c.l.b16 %v7497
      %v7557 = vunpack.c.l.b16 %v7501
      %v7558 = vunpack.c.l.b16 %v7504
      %v7559 = vunpack.c.l.b16 %v7508
      %v7560 = vunpack.c.l.b16 %v7511
      %v7561 = vpack.c.b16 %v7546, %v7545
      %v7562 = vpack.c.b16 %v7548, %v7547
      %v7563 = vpack.c.b16 %v7550, %v7549
      %v7564 = vpack.c.b16 %v7552, %v7551
      %v7565 = vpack.c.b16 %v7554, %v7553
      %v7566 = vpack.c.b16 %v7556, %v7555
      %v7567 = vpack.c.b16 %v7558, %v7557
      %v7568 = vpack.c.b16 %v7560, %v7559
      %v7593 = vunpack.c.l.b16 %v7529
      %v7594 = vunpack.c.l.b16 %v7530
      %v7595 = vunpack.c.l.b16 %v7531
      %v7596 = vunpack.c.l.b16 %v7532
      %v7597 = vunpack.c.l.b16 %v7533
      %v7598 = vunpack.c.l.b16 %v7534
      %v7599 = vunpack.c.l.b16 %v7535
      %v7600 = vunpack.c.l.b16 %v7536
      %v7601 = vunpack.c.l.b16 %v7537
      %v7602 = vunpack.c.l.b16 %v7538
      %v7603 = vunpack.c.l.b16 %v7539
      %v7604 = vunpack.c.l.b16 %v7540
      %v7605 = vunpack.c.l.b16 %v7541
      %v7606 = vunpack.c.l.b16 %v7542
      %v7607 = vunpack.c.l.b16 %v7543
      %v7608 = vunpack.c.l.b16 %v7544
      %v7609 = vpack.c.b16 %v7594, %v7593
      %v7610 = vpack.c.b16 %v7596, %v7595
      %v7611 = vpack.c.b16 %v7598, %v7597
      %v7612 = vpack.c.b16 %v7600, %v7599
      %v7613 = vpack.c.b16 %v7602, %v7601
      %v7614 = vpack.c.b16 %v7604, %v7603
      %v7615 = vpack.c.b16 %v7606, %v7605
      %v7616 = vpack.c.b16 %v7608, %v7607
      %7625 = vmatpush.bf16.msra.mxu0 %v7616
      %7626 = vmatpush.bf16.msra.mxu0 %v7615
      %7627 = vmatpush.bf16.msra.mxu0 %v7614
      %7628 = vmatpush.bf16.msra.mxu0 %v7613
      %7629 = vmatpush.bf16.msra.mxu0 %v7612
      %7630 = vmatpush.bf16.msra.mxu0 %v7611
      %7631 = vmatpush.bf16.msra.mxu0 %v7610
      %7632 = vmatpush.bf16.msra.mxu0 %v7609
      %7633 = vmatmul.bf16.gmra.mxu0 %v7561
      %v7634 = vpop.f32.mrf.mxu0
      %v7635 = vadd.f32 0.0, %v7634
      %v7636 = vpop.f32.mrf.mxu0
      %v7637 = vadd.f32 0.0, %v7636
      %7638 = vmatmul.bf16.gmra.mxu0 %v7562
      %v7639 = vpop.f32.mrf.mxu0
      %v7640 = vadd.f32 0.0, %v7639
      %v7641 = vpop.f32.mrf.mxu0
      %v7642 = vadd.f32 0.0, %v7641
      %7643 = vmatmul.bf16.gmra.mxu0 %v7563
      %v7644 = vpop.f32.mrf.mxu0
      %v7645 = vadd.f32 0.0, %v7644
      %v7646 = vpop.f32.mrf.mxu0
      %v7647 = vadd.f32 0.0, %v7646
      %7648 = vmatmul.bf16.gmra.mxu0 %v7564
      %v7649 = vpop.f32.mrf.mxu0
      %v7650 = vadd.f32 0.0, %v7649
      %v7651 = vpop.f32.mrf.mxu0
      %v7652 = vadd.f32 0.0, %v7651
      %7653 = vmatmul.bf16.gmra.mxu0 %v7565
      %v7654 = vpop.f32.mrf.mxu0
      %v7655 = vadd.f32 0.0, %v7654
      %v7656 = vpop.f32.mrf.mxu0
      %v7657 = vadd.f32 0.0, %v7656
      %7658 = vmatmul.bf16.gmra.mxu0 %v7566
      %v7659 = vpop.f32.mrf.mxu0
      %v7660 = vadd.f32 0.0, %v7659
      %v7661 = vpop.f32.mrf.mxu0
      %v7662 = vadd.f32 0.0, %v7661
      %7663 = vmatmul.bf16.gmra.mxu0 %v7567
      %v7664 = vpop.f32.mrf.mxu0
      %v7665 = vadd.f32 0.0, %v7664
      %v7666 = vpop.f32.mrf.mxu0
      %v7667 = vadd.f32 0.0, %v7666
      %7668 = vmatmul.bf16.gmra.mxu0 %v7568
      %v7669 = vpop.f32.mrf.mxu0
      %v7670 = vadd.f32 0.0, %v7669
      %v7671 = vpop.f32.mrf.mxu0
      %v7672 = vadd.f32 0.0, %v7671
      %7673 = vdwg.mxu0
      %v7674 = vadd.f32 %v7512, %v7635
      %v7675 = vadd.f32 %v7513, %v7637
      %v7676 = vadd.f32 %v7514, %v7640
      %v7677 = vadd.f32 %v7515, %v7642
      %v7678 = vadd.f32 %v7516, %v7645
      %v7679 = vadd.f32 %v7517, %v7647
      %v7680 = vadd.f32 %v7518, %v7650
      %v7681 = vadd.f32 %v7519, %v7652
      %v7682 = vadd.f32 %v7520, %v7655
      %v7683 = vadd.f32 %v7521, %v7657
      %v7684 = vadd.f32 %v7522, %v7660
      %v7685 = vadd.f32 %v7523, %v7662
      %v7686 = vadd.f32 %v7524, %v7665
      %v7687 = vadd.f32 %v7525, %v7667
      %v7688 = vadd.f32 %v7526, %v7670
      %v7689 = vadd.f32 %v7527, %v7672
      %7690 = vst [vmem:[#allocation3] sm:$0xff] %v7674
      %7691 = vst [vmem:[#allocation3 + $0x8] sm:$0xff] %v7675
      %7692 = vst [vmem:[#allocation3 + $0x10] sm:$0xff] %v7676
      %7693 = vst [vmem:[#allocation3 + $0x18] sm:$0xff] %v7677
      %7694 = vst [vmem:[#allocation3 + $0x20] sm:$0xff] %v7678
      %7695 = vst [vmem:[#allocation3 + $0x28] sm:$0xff] %v7679
      %7696 = vst [vmem:[#allocation3 + $0x30] sm:$0xff] %v7680
      %7697 = vst [vmem:[#allocation3 + $0x38] sm:$0xff] %v7681
      %7698 = vst [vmem:[#allocation3 + $0x40] sm:$0xff] %v7682
      %7699 = vst [vmem:[#allocation3 + $0x48] sm:$0xff] %v7683
      %7700 = vst [vmem:[#allocation3 + $0x50] sm:$0xff] %v7684
      %7701 = vst [vmem:[#allocation3 + $0x58] sm:$0xff] %v7685
      %7702 = vst [vmem:[#allocation3 + $0x60] sm:$0xff] %v7686
      %7703 = vst [vmem:[#allocation3 + $0x68] sm:$0xff] %v7687
      %7704 = vst [vmem:[#allocation3 + $0x70] sm:$0xff] %v7688
      %7705 = vst [vmem:[#allocation3 + $0x78] sm:$0xff] %v7689
      %v7706 = vld [vmem:[#allocation2] sm:$0xf]
      %v7707 = vld [vmem:[#allocation2 + $0x4] sm:$0xf]
      %v7708 = vld [vmem:[#allocation2 + $0x10] sm:$0xf]
      %v7709 = vld [vmem:[#allocation2 + $0x14] sm:$0xf]
      %v7710 = vld [vmem:[#allocation2 + $0x20] sm:$0xf]
      %v7711 = vld [vmem:[#allocation2 + $0x24] sm:$0xf]
      %v7712 = vld [vmem:[#allocation2 + $0x30] sm:$0xf]
      %v7713 = vld [vmem:[#allocation2 + $0x34] sm:$0xf]
      %v7714 = vld [vmem:[#allocation2 + $0x40] sm:$0xf]
      %v7715 = vld [vmem:[#allocation2 + $0x44] sm:$0xf]
      %v7716 = vld [vmem:[#allocation2 + $0x50] sm:$0xf]
      %v7717 = vld [vmem:[#allocation2 + $0x54] sm:$0xf]
      %v7718 = vld [vmem:[#allocation2 + $0x60] sm:$0xf]
      %v7719 = vld [vmem:[#allocation2 + $0x64] sm:$0xf]
      %v7720 = vld [vmem:[#allocation2 + $0x70] sm:$0xf]
      %v7721 = vld [vmem:[#allocation2 + $0x74] sm:$0xf]
      %v7722 = vld [vmem:[#allocation3] sm:$0xff]
      %v7723 = vld [vmem:[#allocation3 + $0x8] sm:$0xff]
      %v7724 = vld [vmem:[#allocation3 + $0x10] sm:$0xff]
      %v7725 = vld [vmem:[#allocation3 + $0x18] sm:$0xff]
      %v7726 = vld [vmem:[#allocation3 + $0x20] sm:$0xff]
      %v7727 = vld [vmem:[#allocation3 + $0x28] sm:$0xff]
      %v7728 = vld [vmem:[#allocation3 + $0x30] sm:$0xff]
      %v7729 = vld [vmem:[#allocation3 + $0x38] sm:$0xff]
      %v7730 = vld [vmem:[#allocation3 + $0x40] sm:$0xff]
      %v7731 = vld [vmem:[#allocation3 + $0x48] sm:$0xff]
      %v7732 = vld [vmem:[#allocation3 + $0x50] sm:$0xff]
      %v7733 = vld [vmem:[#allocation3 + $0x58] sm:$0xff]
      %v7734 = vld [vmem:[#allocation3 + $0x60] sm:$0xff]
      %v7735 = vld [vmem:[#allocation3 + $0x68] sm:$0xff]
      %v7736 = vld [vmem:[#allocation3 + $0x70] sm:$0xff]
      %v7737 = vld [vmem:[#allocation3 + $0x78] sm:$0xff]
      %s7738 = scalar_lea.vmem %s1, 1728
      %v7739 = vld [vmem:[%s7738] sm:$0xf]
      %v7740 = vld [vmem:[%s7738 + $0x4] sm:$0xf]
      %v7741 = vld [vmem:[%s7738 + $0x8] sm:$0xf]
      %v7742 = vld [vmem:[%s7738 + $0xc] sm:$0xf]
      %v7743 = vld [vmem:[%s7738 + $0x10] sm:$0xf]
      %v7744 = vld [vmem:[%s7738 + $0x14] sm:$0xf]
      %v7745 = vld [vmem:[%s7738 + $0x18] sm:$0xf]
      %v7746 = vld [vmem:[%s7738 + $0x1c] sm:$0xf]
      %v7747 = vld [vmem:[%s7738 + $0x20] sm:$0xf]
      %v7748 = vld [vmem:[%s7738 + $0x24] sm:$0xf]
      %v7749 = vld [vmem:[%s7738 + $0x28] sm:$0xf]
      %v7750 = vld [vmem:[%s7738 + $0x2c] sm:$0xf]
      %v7751 = vld [vmem:[%s7738 + $0x30] sm:$0xf]
      %v7752 = vld [vmem:[%s7738 + $0x34] sm:$0xf]
      %v7753 = vld [vmem:[%s7738 + $0x38] sm:$0xf]
      %v7754 = vld [vmem:[%s7738 + $0x3c] sm:$0xf]
      %v7771 = vunpack.c.l.b16 %v7706
      %v7772 = vunpack.c.l.b16 %v7707
      %v7773 = vunpack.c.l.b16 %v7708
      %v7774 = vunpack.c.l.b16 %v7709
      %v7775 = vunpack.c.l.b16 %v7710
      %v7776 = vunpack.c.l.b16 %v7711
      %v7777 = vunpack.c.l.b16 %v7712
      %v7778 = vunpack.c.l.b16 %v7713
      %v7779 = vunpack.c.l.b16 %v7714
      %v7780 = vunpack.c.l.b16 %v7715
      %v7781 = vunpack.c.l.b16 %v7716
      %v7782 = vunpack.c.l.b16 %v7717
      %v7783 = vunpack.c.l.b16 %v7718
      %v7784 = vunpack.c.l.b16 %v7719
      %v7785 = vunpack.c.l.b16 %v7720
      %v7786 = vunpack.c.l.b16 %v7721
      %v7787 = vpack.c.b16 %v7772, %v7771
      %v7788 = vpack.c.b16 %v7774, %v7773
      %v7789 = vpack.c.b16 %v7776, %v7775
      %v7790 = vpack.c.b16 %v7778, %v7777
      %v7791 = vpack.c.b16 %v7780, %v7779
      %v7792 = vpack.c.b16 %v7782, %v7781
      %v7793 = vpack.c.b16 %v7784, %v7783
      %v7794 = vpack.c.b16 %v7786, %v7785
      %v7819 = vunpack.c.l.b16 %v7739
      %v7820 = vunpack.c.l.b16 %v7740
      %v7821 = vunpack.c.l.b16 %v7741
      %v7822 = vunpack.c.l.b16 %v7742
      %v7823 = vunpack.c.l.b16 %v7743
      %v7824 = vunpack.c.l.b16 %v7744
      %v7825 = vunpack.c.l.b16 %v7745
      %v7826 = vunpack.c.l.b16 %v7746
      %v7827 = vunpack.c.l.b16 %v7747
      %v7828 = vunpack.c.l.b16 %v7748
      %v7829 = vunpack.c.l.b16 %v7749
      %v7830 = vunpack.c.l.b16 %v7750
      %v7831 = vunpack.c.l.b16 %v7751
      %v7832 = vunpack.c.l.b16 %v7752
      %v7833 = vunpack.c.l.b16 %v7753
      %v7834 = vunpack.c.l.b16 %v7754
      %v7835 = vpack.c.b16 %v7820, %v7819
      %v7836 = vpack.c.b16 %v7822, %v7821
      %v7837 = vpack.c.b16 %v7824, %v7823
      %v7838 = vpack.c.b16 %v7826, %v7825
      %v7839 = vpack.c.b16 %v7828, %v7827
      %v7840 = vpack.c.b16 %v7830, %v7829
      %v7841 = vpack.c.b16 %v7832, %v7831
      %v7842 = vpack.c.b16 %v7834, %v7833
      %7851 = vmatpush.bf16.msra.mxu0 %v7842
      %7852 = vmatpush.bf16.msra.mxu0 %v7841
      %7853 = vmatpush.bf16.msra.mxu0 %v7840
      %7854 = vmatpush.bf16.msra.mxu0 %v7839
      %7855 = vmatpush.bf16.msra.mxu0 %v7838
      %7856 = vmatpush.bf16.msra.mxu0 %v7837
      %7857 = vmatpush.bf16.msra.mxu0 %v7836
      %7858 = vmatpush.bf16.msra.mxu0 %v7835
      %7859 = vmatmul.bf16.gmra.mxu0 %v7787
      %v7860 = vpop.f32.mrf.mxu0
      %v7861 = vadd.f32 0.0, %v7860
      %v7862 = vpop.f32.mrf.mxu0
      %v7863 = vadd.f32 0.0, %v7862
      %7864 = vmatmul.bf16.gmra.mxu0 %v7788
      %v7865 = vpop.f32.mrf.mxu0
      %v7866 = vadd.f32 0.0, %v7865
      %v7867 = vpop.f32.mrf.mxu0
      %v7868 = vadd.f32 0.0, %v7867
      %7869 = vmatmul.bf16.gmra.mxu0 %v7789
      %v7870 = vpop.f32.mrf.mxu0
      %v7871 = vadd.f32 0.0, %v7870
      %v7872 = vpop.f32.mrf.mxu0
      %v7873 = vadd.f32 0.0, %v7872
      %7874 = vmatmul.bf16.gmra.mxu0 %v7790
      %v7875 = vpop.f32.mrf.mxu0
      %v7876 = vadd.f32 0.0, %v7875
      %v7877 = vpop.f32.mrf.mxu0
      %v7878 = vadd.f32 0.0, %v7877
      %7879 = vmatmul.bf16.gmra.mxu0 %v7791
      %v7880 = vpop.f32.mrf.mxu0
      %v7881 = vadd.f32 0.0, %v7880
      %v7882 = vpop.f32.mrf.mxu0
      %v7883 = vadd.f32 0.0, %v7882
      %7884 = vmatmul.bf16.gmra.mxu0 %v7792
      %v7885 = vpop.f32.mrf.mxu0
      %v7886 = vadd.f32 0.0, %v7885
      %v7887 = vpop.f32.mrf.mxu0
      %v7888 = vadd.f32 0.0, %v7887
      %7889 = vmatmul.bf16.gmra.mxu0 %v7793
      %v7890 = vpop.f32.mrf.mxu0
      %v7891 = vadd.f32 0.0, %v7890
      %v7892 = vpop.f32.mrf.mxu0
      %v7893 = vadd.f32 0.0, %v7892
      %7894 = vmatmul.bf16.gmra.mxu0 %v7794
      %v7895 = vpop.f32.mrf.mxu0
      %v7896 = vadd.f32 0.0, %v7895
      %v7897 = vpop.f32.mrf.mxu0
      %v7898 = vadd.f32 0.0, %v7897
      %7899 = vdwg.mxu0
      %v7900 = vadd.f32 %v7722, %v7861
      %v7901 = vadd.f32 %v7723, %v7863
      %v7902 = vadd.f32 %v7724, %v7866
      %v7903 = vadd.f32 %v7725, %v7868
      %v7904 = vadd.f32 %v7726, %v7871
      %v7905 = vadd.f32 %v7727, %v7873
      %v7906 = vadd.f32 %v7728, %v7876
      %v7907 = vadd.f32 %v7729, %v7878
      %v7908 = vadd.f32 %v7730, %v7881
      %v7909 = vadd.f32 %v7731, %v7883
      %v7910 = vadd.f32 %v7732, %v7886
      %v7911 = vadd.f32 %v7733, %v7888
      %v7912 = vadd.f32 %v7734, %v7891
      %v7913 = vadd.f32 %v7735, %v7893
      %v7914 = vadd.f32 %v7736, %v7896
      %v7915 = vadd.f32 %v7737, %v7898
      %7916 = vst [vmem:[#allocation3] sm:$0xff] %v7900
      %7917 = vst [vmem:[#allocation3 + $0x8] sm:$0xff] %v7901
      %7918 = vst [vmem:[#allocation3 + $0x10] sm:$0xff] %v7902
      %7919 = vst [vmem:[#allocation3 + $0x18] sm:$0xff] %v7903
      %7920 = vst [vmem:[#allocation3 + $0x20] sm:$0xff] %v7904
      %7921 = vst [vmem:[#allocation3 + $0x28] sm:$0xff] %v7905
      %7922 = vst [vmem:[#allocation3 + $0x30] sm:$0xff] %v7906
      %7923 = vst [vmem:[#allocation3 + $0x38] sm:$0xff] %v7907
      %7924 = vst [vmem:[#allocation3 + $0x40] sm:$0xff] %v7908
      %7925 = vst [vmem:[#allocation3 + $0x48] sm:$0xff] %v7909
      %7926 = vst [vmem:[#allocation3 + $0x50] sm:$0xff] %v7910
      %7927 = vst [vmem:[#allocation3 + $0x58] sm:$0xff] %v7911
      %7928 = vst [vmem:[#allocation3 + $0x60] sm:$0xff] %v7912
      %7929 = vst [vmem:[#allocation3 + $0x68] sm:$0xff] %v7913
      %7930 = vst [vmem:[#allocation3 + $0x70] sm:$0xff] %v7914
      %7931 = vst [vmem:[#allocation3 + $0x78] sm:$0xff] %v7915
      %v7932 = vld [vmem:[#allocation2 + $0x4] sm:$0xf]
      %v7933 = vld [vmem:[#allocation2 + $0x8] sm:$0xf]
      %v7934 = vld [vmem:[#allocation2 + $0x14] sm:$0xf]
      %v7935 = vld [vmem:[#allocation2 + $0x18] sm:$0xf]
      %v7936 = vld [vmem:[#allocation2 + $0x24] sm:$0xf]
      %v7937 = vld [vmem:[#allocation2 + $0x28] sm:$0xf]
      %v7938 = vld [vmem:[#allocation2 + $0x34] sm:$0xf]
      %v7939 = vld [vmem:[#allocation2 + $0x38] sm:$0xf]
      %v7940 = vld [vmem:[#allocation2 + $0x44] sm:$0xf]
      %v7941 = vld [vmem:[#allocation2 + $0x48] sm:$0xf]
      %v7942 = vld [vmem:[#allocation2 + $0x54] sm:$0xf]
      %v7943 = vld [vmem:[#allocation2 + $0x58] sm:$0xf]
      %v7944 = vld [vmem:[#allocation2 + $0x64] sm:$0xf]
      %v7945 = vld [vmem:[#allocation2 + $0x68] sm:$0xf]
      %v7946 = vld [vmem:[#allocation2 + $0x74] sm:$0xf]
      %v7947 = vld [vmem:[#allocation2 + $0x78] sm:$0xf]
      %v7948 = vld [vmem:[#allocation3] sm:$0xff]
      %v7949 = vld [vmem:[#allocation3 + $0x8] sm:$0xff]
      %v7950 = vld [vmem:[#allocation3 + $0x10] sm:$0xff]
      %v7951 = vld [vmem:[#allocation3 + $0x18] sm:$0xff]
      %v7952 = vld [vmem:[#allocation3 + $0x20] sm:$0xff]
      %v7953 = vld [vmem:[#allocation3 + $0x28] sm:$0xff]
      %v7954 = vld [vmem:[#allocation3 + $0x30] sm:$0xff]
      %v7955 = vld [vmem:[#allocation3 + $0x38] sm:$0xff]
      %v7956 = vld [vmem:[#allocation3 + $0x40] sm:$0xff]
      %v7957 = vld [vmem:[#allocation3 + $0x48] sm:$0xff]
      %v7958 = vld [vmem:[#allocation3 + $0x50] sm:$0xff]
      %v7959 = vld [vmem:[#allocation3 + $0x58] sm:$0xff]
      %v7960 = vld [vmem:[#allocation3 + $0x60] sm:$0xff]
      %v7961 = vld [vmem:[#allocation3 + $0x68] sm:$0xff]
      %v7962 = vld [vmem:[#allocation3 + $0x70] sm:$0xff]
      %v7963 = vld [vmem:[#allocation3 + $0x78] sm:$0xff]
      %s7964 = scalar_lea.vmem %s1, 1792
      %v7965 = vld [vmem:[%s7964] sm:$0xf]
      %v7966 = vld [vmem:[%s7964 + $0x4] sm:$0xf]
      %v7967 = vld [vmem:[%s7964 + $0x8] sm:$0xf]
      %v7968 = vld [vmem:[%s7964 + $0xc] sm:$0xf]
      %v7969 = vld [vmem:[%s7964 + $0x10] sm:$0xf]
      %v7970 = vld [vmem:[%s7964 + $0x14] sm:$0xf]
      %v7971 = vld [vmem:[%s7964 + $0x18] sm:$0xf]
      %v7972 = vld [vmem:[%s7964 + $0x1c] sm:$0xf]
      %v7973 = vld [vmem:[%s7964 + $0x20] sm:$0xf]
      %v7974 = vld [vmem:[%s7964 + $0x24] sm:$0xf]
      %v7975 = vld [vmem:[%s7964 + $0x28] sm:$0xf]
      %v7976 = vld [vmem:[%s7964 + $0x2c] sm:$0xf]
      %v7977 = vld [vmem:[%s7964 + $0x30] sm:$0xf]
      %v7978 = vld [vmem:[%s7964 + $0x34] sm:$0xf]
      %v7979 = vld [vmem:[%s7964 + $0x38] sm:$0xf]
      %v7980 = vld [vmem:[%s7964 + $0x3c] sm:$0xf]
      %v7997 = vunpack.c.l.b16 %v7932
      %v7998 = vunpack.c.l.b16 %v7933
      %v7999 = vunpack.c.l.b16 %v7934
      %v8000 = vunpack.c.l.b16 %v7935
      %v8001 = vunpack.c.l.b16 %v7936
      %v8002 = vunpack.c.l.b16 %v7937
      %v8003 = vunpack.c.l.b16 %v7938
      %v8004 = vunpack.c.l.b16 %v7939
      %v8005 = vunpack.c.l.b16 %v7940
      %v8006 = vunpack.c.l.b16 %v7941
      %v8007 = vunpack.c.l.b16 %v7942
      %v8008 = vunpack.c.l.b16 %v7943
      %v8009 = vunpack.c.l.b16 %v7944
      %v8010 = vunpack.c.l.b16 %v7945
      %v8011 = vunpack.c.l.b16 %v7946
      %v8012 = vunpack.c.l.b16 %v7947
      %v8013 = vpack.c.b16 %v7998, %v7997
      %v8014 = vpack.c.b16 %v8000, %v7999
      %v8015 = vpack.c.b16 %v8002, %v8001
      %v8016 = vpack.c.b16 %v8004, %v8003
      %v8017 = vpack.c.b16 %v8006, %v8005
      %v8018 = vpack.c.b16 %v8008, %v8007
      %v8019 = vpack.c.b16 %v8010, %v8009
      %v8020 = vpack.c.b16 %v8012, %v8011
      %v8045 = vunpack.c.l.b16 %v7965
      %v8046 = vunpack.c.l.b16 %v7966
      %v8047 = vunpack.c.l.b16 %v7967
      %v8048 = vunpack.c.l.b16 %v7968
      %v8049 = vunpack.c.l.b16 %v7969
      %v8050 = vunpack.c.l.b16 %v7970
      %v8051 = vunpack.c.l.b16 %v7971
      %v8052 = vunpack.c.l.b16 %v7972
      %v8053 = vunpack.c.l.b16 %v7973
      %v8054 = vunpack.c.l.b16 %v7974
      %v8055 = vunpack.c.l.b16 %v7975
      %v8056 = vunpack.c.l.b16 %v7976
      %v8057 = vunpack.c.l.b16 %v7977
      %v8058 = vunpack.c.l.b16 %v7978
      %v8059 = vunpack.c.l.b16 %v7979
      %v8060 = vunpack.c.l.b16 %v7980
      %v8061 = vpack.c.b16 %v8046, %v8045
      %v8062 = vpack.c.b16 %v8048, %v8047
      %v8063 = vpack.c.b16 %v8050, %v8049
      %v8064 = vpack.c.b16 %v8052, %v8051
      %v8065 = vpack.c.b16 %v8054, %v8053
      %v8066 = vpack.c.b16 %v8056, %v8055
      %v8067 = vpack.c.b16 %v8058, %v8057
      %v8068 = vpack.c.b16 %v8060, %v8059
      %8077 = vmatpush.bf16.msra.mxu0 %v8068
      %8078 = vmatpush.bf16.msra.mxu0 %v8067
      %8079 = vmatpush.bf16.msra.mxu0 %v8066
      %8080 = vmatpush.bf16.msra.mxu0 %v8065
      %8081 = vmatpush.bf16.msra.mxu0 %v8064
      %8082 = vmatpush.bf16.msra.mxu0 %v8063
      %8083 = vmatpush.bf16.msra.mxu0 %v8062
      %8084 = vmatpush.bf16.msra.mxu0 %v8061
      %8085 = vmatmul.bf16.gmra.mxu0 %v8013
      %v8086 = vpop.f32.mrf.mxu0
      %v8087 = vadd.f32 0.0, %v8086
      %v8088 = vpop.f32.mrf.mxu0
      %v8089 = vadd.f32 0.0, %v8088
      %8090 = vmatmul.bf16.gmra.mxu0 %v8014
      %v8091 = vpop.f32.mrf.mxu0
      %v8092 = vadd.f32 0.0, %v8091
      %v8093 = vpop.f32.mrf.mxu0
      %v8094 = vadd.f32 0.0, %v8093
      %8095 = vmatmul.bf16.gmra.mxu0 %v8015
      %v8096 = vpop.f32.mrf.mxu0
      %v8097 = vadd.f32 0.0, %v8096
      %v8098 = vpop.f32.mrf.mxu0
      %v8099 = vadd.f32 0.0, %v8098
      %8100 = vmatmul.bf16.gmra.mxu0 %v8016
      %v8101 = vpop.f32.mrf.mxu0
      %v8102 = vadd.f32 0.0, %v8101
      %v8103 = vpop.f32.mrf.mxu0
      %v8104 = vadd.f32 0.0, %v8103
      %8105 = vmatmul.bf16.gmra.mxu0 %v8017
      %v8106 = vpop.f32.mrf.mxu0
      %v8107 = vadd.f32 0.0, %v8106
      %v8108 = vpop.f32.mrf.mxu0
      %v8109 = vadd.f32 0.0, %v8108
      %8110 = vmatmul.bf16.gmra.mxu0 %v8018
      %v8111 = vpop.f32.mrf.mxu0
      %v8112 = vadd.f32 0.0, %v8111
      %v8113 = vpop.f32.mrf.mxu0
      %v8114 = vadd.f32 0.0, %v8113
      %8115 = vmatmul.bf16.gmra.mxu0 %v8019
      %v8116 = vpop.f32.mrf.mxu0
      %v8117 = vadd.f32 0.0, %v8116
      %v8118 = vpop.f32.mrf.mxu0
      %v8119 = vadd.f32 0.0, %v8118
      %8120 = vmatmul.bf16.gmra.mxu0 %v8020
      %v8121 = vpop.f32.mrf.mxu0
      %v8122 = vadd.f32 0.0, %v8121
      %v8123 = vpop.f32.mrf.mxu0
      %v8124 = vadd.f32 0.0, %v8123
      %8125 = vdwg.mxu0
      %v8126 = vadd.f32 %v7948, %v8087
      %v8127 = vadd.f32 %v7949, %v8089
      %v8128 = vadd.f32 %v7950, %v8092
      %v8129 = vadd.f32 %v7951, %v8094
      %v8130 = vadd.f32 %v7952, %v8097
      %v8131 = vadd.f32 %v7953, %v8099
      %v8132 = vadd.f32 %v7954, %v8102
      %v8133 = vadd.f32 %v7955, %v8104
      %v8134 = vadd.f32 %v7956, %v8107
      %v8135 = vadd.f32 %v7957, %v8109
      %v8136 = vadd.f32 %v7958, %v8112
      %v8137 = vadd.f32 %v7959, %v8114
      %v8138 = vadd.f32 %v7960, %v8117
      %v8139 = vadd.f32 %v7961, %v8119
      %v8140 = vadd.f32 %v7962, %v8122
      %v8141 = vadd.f32 %v7963, %v8124
      %8142 = vst [vmem:[#allocation3] sm:$0xff] %v8126
      %8143 = vst [vmem:[#allocation3 + $0x8] sm:$0xff] %v8127
      %8144 = vst [vmem:[#allocation3 + $0x10] sm:$0xff] %v8128
      %8145 = vst [vmem:[#allocation3 + $0x18] sm:$0xff] %v8129
      %8146 = vst [vmem:[#allocation3 + $0x20] sm:$0xff] %v8130
      %8147 = vst [vmem:[#allocation3 + $0x28] sm:$0xff] %v8131
      %8148 = vst [vmem:[#allocation3 + $0x30] sm:$0xff] %v8132
      %8149 = vst [vmem:[#allocation3 + $0x38] sm:$0xff] %v8133
      %8150 = vst [vmem:[#allocation3 + $0x40] sm:$0xff] %v8134
      %8151 = vst [vmem:[#allocation3 + $0x48] sm:$0xff] %v8135
      %8152 = vst [vmem:[#allocation3 + $0x50] sm:$0xff] %v8136
      %8153 = vst [vmem:[#allocation3 + $0x58] sm:$0xff] %v8137
      %8154 = vst [vmem:[#allocation3 + $0x60] sm:$0xff] %v8138
      %8155 = vst [vmem:[#allocation3 + $0x68] sm:$0xff] %v8139
      %8156 = vst [vmem:[#allocation3 + $0x70] sm:$0xff] %v8140
      %8157 = vst [vmem:[#allocation3 + $0x78] sm:$0xff] %v8141
      %v8158 = vld [vmem:[#allocation2 + $0x8] sm:$0xf]
      %v8159 = vld [vmem:[#allocation2 + $0xc] sm:$0xf]
      %v8160 = vld [vmem:[#allocation2 + $0x18] sm:$0xf]
      %v8161 = vld [vmem:[#allocation2 + $0x1c] sm:$0xf]
      %v8162 = vld [vmem:[#allocation2 + $0x28] sm:$0xf]
      %v8163 = vld [vmem:[#allocation2 + $0x2c] sm:$0xf]
      %v8164 = vld [vmem:[#allocation2 + $0x38] sm:$0xf]
      %v8165 = vld [vmem:[#allocation2 + $0x3c] sm:$0xf]
      %v8166 = vld [vmem:[#allocation2 + $0x48] sm:$0xf]
      %v8167 = vld [vmem:[#allocation2 + $0x4c] sm:$0xf]
      %v8168 = vld [vmem:[#allocation2 + $0x58] sm:$0xf]
      %v8169 = vld [vmem:[#allocation2 + $0x5c] sm:$0xf]
      %v8170 = vld [vmem:[#allocation2 + $0x68] sm:$0xf]
      %v8171 = vld [vmem:[#allocation2 + $0x6c] sm:$0xf]
      %v8172 = vld [vmem:[#allocation2 + $0x78] sm:$0xf]
      %v8173 = vld [vmem:[#allocation2 + $0x7c] sm:$0xf]
      %v8174 = vld [vmem:[#allocation3] sm:$0xff]
      %v8175 = vld [vmem:[#allocation3 + $0x8] sm:$0xff]
      %v8176 = vld [vmem:[#allocation3 + $0x10] sm:$0xff]
      %v8177 = vld [vmem:[#allocation3 + $0x18] sm:$0xff]
      %v8178 = vld [vmem:[#allocation3 + $0x20] sm:$0xff]
      %v8179 = vld [vmem:[#allocation3 + $0x28] sm:$0xff]
      %v8180 = vld [vmem:[#allocation3 + $0x30] sm:$0xff]
      %v8181 = vld [vmem:[#allocation3 + $0x38] sm:$0xff]
      %v8182 = vld [vmem:[#allocation3 + $0x40] sm:$0xff]
      %v8183 = vld [vmem:[#allocation3 + $0x48] sm:$0xff]
      %v8184 = vld [vmem:[#allocation3 + $0x50] sm:$0xff]
      %v8185 = vld [vmem:[#allocation3 + $0x58] sm:$0xff]
      %v8186 = vld [vmem:[#allocation3 + $0x60] sm:$0xff]
      %v8187 = vld [vmem:[#allocation3 + $0x68] sm:$0xff]
      %v8188 = vld [vmem:[#allocation3 + $0x70] sm:$0xff]
      %v8189 = vld [vmem:[#allocation3 + $0x78] sm:$0xff]
      %s8190 = scalar_lea.vmem %s1, 1856
      %v8191 = vld [vmem:[%s8190] sm:$0xf]
      %v8192 = vld [vmem:[%s8190 + $0x4] sm:$0xf]
      %v8193 = vld [vmem:[%s8190 + $0x8] sm:$0xf]
      %v8194 = vld [vmem:[%s8190 + $0xc] sm:$0xf]
      %v8195 = vld [vmem:[%s8190 + $0x10] sm:$0xf]
      %v8196 = vld [vmem:[%s8190 + $0x14] sm:$0xf]
      %v8197 = vld [vmem:[%s8190 + $0x18] sm:$0xf]
      %v8198 = vld [vmem:[%s8190 + $0x1c] sm:$0xf]
      %v8199 = vld [vmem:[%s8190 + $0x20] sm:$0xf]
      %v8200 = vld [vmem:[%s8190 + $0x24] sm:$0xf]
      %v8201 = vld [vmem:[%s8190 + $0x28] sm:$0xf]
      %v8202 = vld [vmem:[%s8190 + $0x2c] sm:$0xf]
      %v8203 = vld [vmem:[%s8190 + $0x30] sm:$0xf]
      %v8204 = vld [vmem:[%s8190 + $0x34] sm:$0xf]
      %v8205 = vld [vmem:[%s8190 + $0x38] sm:$0xf]
      %v8206 = vld [vmem:[%s8190 + $0x3c] sm:$0xf]
      %v8223 = vunpack.c.l.b16 %v8158
      %v8224 = vunpack.c.l.b16 %v8159
      %v8225 = vunpack.c.l.b16 %v8160
      %v8226 = vunpack.c.l.b16 %v8161
      %v8227 = vunpack.c.l.b16 %v8162
      %v8228 = vunpack.c.l.b16 %v8163
      %v8229 = vunpack.c.l.b16 %v8164
      %v8230 = vunpack.c.l.b16 %v8165
      %v8231 = vunpack.c.l.b16 %v8166
      %v8232 = vunpack.c.l.b16 %v8167
      %v8233 = vunpack.c.l.b16 %v8168
      %v8234 = vunpack.c.l.b16 %v8169
      %v8235 = vunpack.c.l.b16 %v8170
      %v8236 = vunpack.c.l.b16 %v8171
      %v8237 = vunpack.c.l.b16 %v8172
      %v8238 = vunpack.c.l.b16 %v8173
      %v8239 = vpack.c.b16 %v8224, %v8223
      %v8240 = vpack.c.b16 %v8226, %v8225
      %v8241 = vpack.c.b16 %v8228, %v8227
      %v8242 = vpack.c.b16 %v8230, %v8229
      %v8243 = vpack.c.b16 %v8232, %v8231
      %v8244 = vpack.c.b16 %v8234, %v8233
      %v8245 = vpack.c.b16 %v8236, %v8235
      %v8246 = vpack.c.b16 %v8238, %v8237
      %v8271 = vunpack.c.l.b16 %v8191
      %v8272 = vunpack.c.l.b16 %v8192
      %v8273 = vunpack.c.l.b16 %v8193
      %v8274 = vunpack.c.l.b16 %v8194
      %v8275 = vunpack.c.l.b16 %v8195
      %v8276 = vunpack.c.l.b16 %v8196
      %v8277 = vunpack.c.l.b16 %v8197
      %v8278 = vunpack.c.l.b16 %v8198
      %v8279 = vunpack.c.l.b16 %v8199
      %v8280 = vunpack.c.l.b16 %v8200
      %v8281 = vunpack.c.l.b16 %v8201
      %v8282 = vunpack.c.l.b16 %v8202
      %v8283 = vunpack.c.l.b16 %v8203
      %v8284 = vunpack.c.l.b16 %v8204
      %v8285 = vunpack.c.l.b16 %v8205
      %v8286 = vunpack.c.l.b16 %v8206
      %v8287 = vpack.c.b16 %v8272, %v8271
      %v8288 = vpack.c.b16 %v8274, %v8273
      %v8289 = vpack.c.b16 %v8276, %v8275
      %v8290 = vpack.c.b16 %v8278, %v8277
      %v8291 = vpack.c.b16 %v8280, %v8279
      %v8292 = vpack.c.b16 %v8282, %v8281
      %v8293 = vpack.c.b16 %v8284, %v8283
      %v8294 = vpack.c.b16 %v8286, %v8285
      %8303 = vmatpush.bf16.msra.mxu0 %v8294
      %8304 = vmatpush.bf16.msra.mxu0 %v8293
      %8305 = vmatpush.bf16.msra.mxu0 %v8292
      %8306 = vmatpush.bf16.msra.mxu0 %v8291
      %8307 = vmatpush.bf16.msra.mxu0 %v8290
      %8308 = vmatpush.bf16.msra.mxu0 %v8289
      %8309 = vmatpush.bf16.msra.mxu0 %v8288
      %8310 = vmatpush.bf16.msra.mxu0 %v8287
      %8311 = vmatmul.bf16.gmra.mxu0 %v8239
      %v8312 = vpop.f32.mrf.mxu0
      %v8313 = vadd.f32 0.0, %v8312
      %v8314 = vpop.f32.mrf.mxu0
      %v8315 = vadd.f32 0.0, %v8314
      %8316 = vmatmul.bf16.gmra.mxu0 %v8240
      %v8317 = vpop.f32.mrf.mxu0
      %v8318 = vadd.f32 0.0, %v8317
      %v8319 = vpop.f32.mrf.mxu0
      %v8320 = vadd.f32 0.0, %v8319
      %8321 = vmatmul.bf16.gmra.mxu0 %v8241
      %v8322 = vpop.f32.mrf.mxu0
      %v8323 = vadd.f32 0.0, %v8322
      %v8324 = vpop.f32.mrf.mxu0
      %v8325 = vadd.f32 0.0, %v8324
      %8326 = vmatmul.bf16.gmra.mxu0 %v8242
      %v8327 = vpop.f32.mrf.mxu0
      %v8328 = vadd.f32 0.0, %v8327
      %v8329 = vpop.f32.mrf.mxu0
      %v8330 = vadd.f32 0.0, %v8329
      %8331 = vmatmul.bf16.gmra.mxu0 %v8243
      %v8332 = vpop.f32.mrf.mxu0
      %v8333 = vadd.f32 0.0, %v8332
      %v8334 = vpop.f32.mrf.mxu0
      %v8335 = vadd.f32 0.0, %v8334
      %8336 = vmatmul.bf16.gmra.mxu0 %v8244
      %v8337 = vpop.f32.mrf.mxu0
      %v8338 = vadd.f32 0.0, %v8337
      %v8339 = vpop.f32.mrf.mxu0
      %v8340 = vadd.f32 0.0, %v8339
      %8341 = vmatmul.bf16.gmra.mxu0 %v8245
      %v8342 = vpop.f32.mrf.mxu0
      %v8343 = vadd.f32 0.0, %v8342
      %v8344 = vpop.f32.mrf.mxu0
      %v8345 = vadd.f32 0.0, %v8344
      %8346 = vmatmul.bf16.gmra.mxu0 %v8246
      %v8347 = vpop.f32.mrf.mxu0
      %v8348 = vadd.f32 0.0, %v8347
      %v8349 = vpop.f32.mrf.mxu0
      %v8350 = vadd.f32 0.0, %v8349
      %8351 = vdwg.mxu0
      %v8352 = vadd.f32 %v8174, %v8313
      %v8353 = vadd.f32 %v8175, %v8315
      %v8354 = vadd.f32 %v8176, %v8318
      %v8355 = vadd.f32 %v8177, %v8320
      %v8356 = vadd.f32 %v8178, %v8323
      %v8357 = vadd.f32 %v8179, %v8325
      %v8358 = vadd.f32 %v8180, %v8328
      %v8359 = vadd.f32 %v8181, %v8330
      %v8360 = vadd.f32 %v8182, %v8333
      %v8361 = vadd.f32 %v8183, %v8335
      %v8362 = vadd.f32 %v8184, %v8338
      %v8363 = vadd.f32 %v8185, %v8340
      %v8364 = vadd.f32 %v8186, %v8343
      %v8365 = vadd.f32 %v8187, %v8345
      %v8366 = vadd.f32 %v8188, %v8348
      %v8367 = vadd.f32 %v8189, %v8350
      %8368 = vst [vmem:[#allocation3] sm:$0xff] %v8352
      %8369 = vst [vmem:[#allocation3 + $0x8] sm:$0xff] %v8353
      %8370 = vst [vmem:[#allocation3 + $0x10] sm:$0xff] %v8354
      %8371 = vst [vmem:[#allocation3 + $0x18] sm:$0xff] %v8355
      %8372 = vst [vmem:[#allocation3 + $0x20] sm:$0xff] %v8356
      %8373 = vst [vmem:[#allocation3 + $0x28] sm:$0xff] %v8357
      %8374 = vst [vmem:[#allocation3 + $0x30] sm:$0xff] %v8358
      %8375 = vst [vmem:[#allocation3 + $0x38] sm:$0xff] %v8359
      %8376 = vst [vmem:[#allocation3 + $0x40] sm:$0xff] %v8360
      %8377 = vst [vmem:[#allocation3 + $0x48] sm:$0xff] %v8361
      %8378 = vst [vmem:[#allocation3 + $0x50] sm:$0xff] %v8362
      %8379 = vst [vmem:[#allocation3 + $0x58] sm:$0xff] %v8363
      %8380 = vst [vmem:[#allocation3 + $0x60] sm:$0xff] %v8364
      %8381 = vst [vmem:[#allocation3 + $0x68] sm:$0xff] %v8365
      %8382 = vst [vmem:[#allocation3 + $0x70] sm:$0xff] %v8366
      %8383 = vst [vmem:[#allocation3 + $0x78] sm:$0xff] %v8367
      %v8384 = vld [vmem:[%s1121] sm:$0xf]
      %v8385 = vld [vmem:[%s1121 + $0x4] sm:$0xf]
      %v8386 = vld [vmem:[%s1121 + $0x10] sm:$0xf]
      %v8387 = vld [vmem:[%s1121 + $0x14] sm:$0xf]
      %v8388 = vld [vmem:[%s1121 + $0x20] sm:$0xf]
      %v8389 = vld [vmem:[%s1121 + $0x24] sm:$0xf]
      %v8390 = vld [vmem:[%s1121 + $0x30] sm:$0xf]
      %v8391 = vld [vmem:[%s1121 + $0x34] sm:$0xf]
      %v8392 = vld [vmem:[%s1121 + $0x40] sm:$0xf]
      %v8393 = vld [vmem:[%s1121 + $0x44] sm:$0xf]
      %v8394 = vld [vmem:[%s1121 + $0x50] sm:$0xf]
      %v8395 = vld [vmem:[%s1121 + $0x54] sm:$0xf]
      %v8396 = vld [vmem:[%s1121 + $0x60] sm:$0xf]
      %v8397 = vld [vmem:[%s1121 + $0x64] sm:$0xf]
      %v8398 = vld [vmem:[%s1121 + $0x70] sm:$0xf]
      %v8399 = vld [vmem:[%s1121 + $0x74] sm:$0xf]
      %v8400 = vld [vmem:[#allocation3] sm:$0xff]
      %v8401 = vld [vmem:[#allocation3 + $0x8] sm:$0xff]
      %v8402 = vld [vmem:[#allocation3 + $0x10] sm:$0xff]
      %v8403 = vld [vmem:[#allocation3 + $0x18] sm:$0xff]
      %v8404 = vld [vmem:[#allocation3 + $0x20] sm:$0xff]
      %v8405 = vld [vmem:[#allocation3 + $0x28] sm:$0xff]
      %v8406 = vld [vmem:[#allocation3 + $0x30] sm:$0xff]
      %v8407 = vld [vmem:[#allocation3 + $0x38] sm:$0xff]
      %v8408 = vld [vmem:[#allocation3 + $0x40] sm:$0xff]
      %v8409 = vld [vmem:[#allocation3 + $0x48] sm:$0xff]
      %v8410 = vld [vmem:[#allocation3 + $0x50] sm:$0xff]
      %v8411 = vld [vmem:[#allocation3 + $0x58] sm:$0xff]
      %v8412 = vld [vmem:[#allocation3 + $0x60] sm:$0xff]
      %v8413 = vld [vmem:[#allocation3 + $0x68] sm:$0xff]
      %v8414 = vld [vmem:[#allocation3 + $0x70] sm:$0xff]
      %v8415 = vld [vmem:[#allocation3 + $0x78] sm:$0xff]
      %s8416 = scalar_lea.vmem %s1, 1920
      %v8417 = vld [vmem:[%s8416] sm:$0xf]
      %v8418 = vld [vmem:[%s8416 + $0x4] sm:$0xf]
      %v8419 = vld [vmem:[%s8416 + $0x8] sm:$0xf]
      %v8420 = vld [vmem:[%s8416 + $0xc] sm:$0xf]
      %v8421 = vld [vmem:[%s8416 + $0x10] sm:$0xf]
      %v8422 = vld [vmem:[%s8416 + $0x14] sm:$0xf]
      %v8423 = vld [vmem:[%s8416 + $0x18] sm:$0xf]
      %v8424 = vld [vmem:[%s8416 + $0x1c] sm:$0xf]
      %v8425 = vld [vmem:[%s8416 + $0x20] sm:$0xf]
      %v8426 = vld [vmem:[%s8416 + $0x24] sm:$0xf]
      %v8427 = vld [vmem:[%s8416 + $0x28] sm:$0xf]
      %v8428 = vld [vmem:[%s8416 + $0x2c] sm:$0xf]
      %v8429 = vld [vmem:[%s8416 + $0x30] sm:$0xf]
      %v8430 = vld [vmem:[%s8416 + $0x34] sm:$0xf]
      %v8431 = vld [vmem:[%s8416 + $0x38] sm:$0xf]
      %v8432 = vld [vmem:[%s8416 + $0x3c] sm:$0xf]
      %v8449 = vunpack.c.l.b16 %v8384
      %v8450 = vunpack.c.l.b16 %v8385
      %v8451 = vunpack.c.l.b16 %v8386
      %v8452 = vunpack.c.l.b16 %v8387
      %v8453 = vunpack.c.l.b16 %v8388
      %v8454 = vunpack.c.l.b16 %v8389
      %v8455 = vunpack.c.l.b16 %v8390
      %v8456 = vunpack.c.l.b16 %v8391
      %v8457 = vunpack.c.l.b16 %v8392
      %v8458 = vunpack.c.l.b16 %v8393
      %v8459 = vunpack.c.l.b16 %v8394
      %v8460 = vunpack.c.l.b16 %v8395
      %v8461 = vunpack.c.l.b16 %v8396
      %v8462 = vunpack.c.l.b16 %v8397
      %v8463 = vunpack.c.l.b16 %v8398
      %v8464 = vunpack.c.l.b16 %v8399
      %v8465 = vpack.c.b16 %v8450, %v8449
      %v8466 = vpack.c.b16 %v8452, %v8451
      %v8467 = vpack.c.b16 %v8454, %v8453
      %v8468 = vpack.c.b16 %v8456, %v8455
      %v8469 = vpack.c.b16 %v8458, %v8457
      %v8470 = vpack.c.b16 %v8460, %v8459
      %v8471 = vpack.c.b16 %v8462, %v8461
      %v8472 = vpack.c.b16 %v8464, %v8463
      %v8497 = vunpack.c.l.b16 %v8417
      %v8498 = vunpack.c.l.b16 %v8418
      %v8499 = vunpack.c.l.b16 %v8419
      %v8500 = vunpack.c.l.b16 %v8420
      %v8501 = vunpack.c.l.b16 %v8421
      %v8502 = vunpack.c.l.b16 %v8422
      %v8503 = vunpack.c.l.b16 %v8423
      %v8504 = vunpack.c.l.b16 %v8424
      %v8505 = vunpack.c.l.b16 %v8425
      %v8506 = vunpack.c.l.b16 %v8426
      %v8507 = vunpack.c.l.b16 %v8427
      %v8508 = vunpack.c.l.b16 %v8428
      %v8509 = vunpack.c.l.b16 %v8429
      %v8510 = vunpack.c.l.b16 %v8430
      %v8511 = vunpack.c.l.b16 %v8431
      %v8512 = vunpack.c.l.b16 %v8432
      %v8513 = vpack.c.b16 %v8498, %v8497
      %v8514 = vpack.c.b16 %v8500, %v8499
      %v8515 = vpack.c.b16 %v8502, %v8501
      %v8516 = vpack.c.b16 %v8504, %v8503
      %v8517 = vpack.c.b16 %v8506, %v8505
      %v8518 = vpack.c.b16 %v8508, %v8507
      %v8519 = vpack.c.b16 %v8510, %v8509
      %v8520 = vpack.c.b16 %v8512, %v8511
      %8529 = vmatpush.bf16.msra.mxu0 %v8520
      %8530 = vmatpush.bf16.msra.mxu0 %v8519
      %8531 = vmatpush.bf16.msra.mxu0 %v8518
      %8532 = vmatpush.bf16.msra.mxu0 %v8517
      %8533 = vmatpush.bf16.msra.mxu0 %v8516
      %8534 = vmatpush.bf16.msra.mxu0 %v8515
      %8535 = vmatpush.bf16.msra.mxu0 %v8514
      %8536 = vmatpush.bf16.msra.mxu0 %v8513
      %8537 = vmatmul.bf16.gmra.mxu0 %v8465
      %v8538 = vpop.f32.mrf.mxu0
      %v8539 = vadd.f32 0.0, %v8538
      %v8540 = vpop.f32.mrf.mxu0
      %v8541 = vadd.f32 0.0, %v8540
      %8542 = vmatmul.bf16.gmra.mxu0 %v8466
      %v8543 = vpop.f32.mrf.mxu0
      %v8544 = vadd.f32 0.0, %v8543
      %v8545 = vpop.f32.mrf.mxu0
      %v8546 = vadd.f32 0.0, %v8545
      %8547 = vmatmul.bf16.gmra.mxu0 %v8467
      %v8548 = vpop.f32.mrf.mxu0
      %v8549 = vadd.f32 0.0, %v8548
      %v8550 = vpop.f32.mrf.mxu0
      %v8551 = vadd.f32 0.0, %v8550
      %8552 = vmatmul.bf16.gmra.mxu0 %v8468
      %v8553 = vpop.f32.mrf.mxu0
      %v8554 = vadd.f32 0.0, %v8553
      %v8555 = vpop.f32.mrf.mxu0
      %v8556 = vadd.f32 0.0, %v8555
      %8557 = vmatmul.bf16.gmra.mxu0 %v8469
      %v8558 = vpop.f32.mrf.mxu0
      %v8559 = vadd.f32 0.0, %v8558
      %v8560 = vpop.f32.mrf.mxu0
      %v8561 = vadd.f32 0.0, %v8560
      %8562 = vmatmul.bf16.gmra.mxu0 %v8470
      %v8563 = vpop.f32.mrf.mxu0
      %v8564 = vadd.f32 0.0, %v8563
      %v8565 = vpop.f32.mrf.mxu0
      %v8566 = vadd.f32 0.0, %v8565
      %8567 = vmatmul.bf16.gmra.mxu0 %v8471
      %v8568 = vpop.f32.mrf.mxu0
      %v8569 = vadd.f32 0.0, %v8568
      %v8570 = vpop.f32.mrf.mxu0
      %v8571 = vadd.f32 0.0, %v8570
      %8572 = vmatmul.bf16.gmra.mxu0 %v8472
      %v8573 = vpop.f32.mrf.mxu0
      %v8574 = vadd.f32 0.0, %v8573
      %v8575 = vpop.f32.mrf.mxu0
      %v8576 = vadd.f32 0.0, %v8575
      %8577 = vdwg.mxu0
      %v8578 = vadd.f32 %v8400, %v8539
      %v8579 = vadd.f32 %v8401, %v8541
      %v8580 = vadd.f32 %v8402, %v8544
      %v8581 = vadd.f32 %v8403, %v8546
      %v8582 = vadd.f32 %v8404, %v8549
      %v8583 = vadd.f32 %v8405, %v8551
      %v8584 = vadd.f32 %v8406, %v8554
      %v8585 = vadd.f32 %v8407, %v8556
      %v8586 = vadd.f32 %v8408, %v8559
      %v8587 = vadd.f32 %v8409, %v8561
      %v8588 = vadd.f32 %v8410, %v8564
      %v8589 = vadd.f32 %v8411, %v8566
      %v8590 = vadd.f32 %v8412, %v8569
      %v8591 = vadd.f32 %v8413, %v8571
      %v8592 = vadd.f32 %v8414, %v8574
      %v8593 = vadd.f32 %v8415, %v8576
      %8594 = vst [vmem:[#allocation3] sm:$0xff] %v8578
      %8595 = vst [vmem:[#allocation3 + $0x8] sm:$0xff] %v8579
      %8596 = vst [vmem:[#allocation3 + $0x10] sm:$0xff] %v8580
      %8597 = vst [vmem:[#allocation3 + $0x18] sm:$0xff] %v8581
      %8598 = vst [vmem:[#allocation3 + $0x20] sm:$0xff] %v8582
      %8599 = vst [vmem:[#allocation3 + $0x28] sm:$0xff] %v8583
      %8600 = vst [vmem:[#allocation3 + $0x30] sm:$0xff] %v8584
      %8601 = vst [vmem:[#allocation3 + $0x38] sm:$0xff] %v8585
      %8602 = vst [vmem:[#allocation3 + $0x40] sm:$0xff] %v8586
      %8603 = vst [vmem:[#allocation3 + $0x48] sm:$0xff] %v8587
      %8604 = vst [vmem:[#allocation3 + $0x50] sm:$0xff] %v8588
      %8605 = vst [vmem:[#allocation3 + $0x58] sm:$0xff] %v8589
      %8606 = vst [vmem:[#allocation3 + $0x60] sm:$0xff] %v8590
      %8607 = vst [vmem:[#allocation3 + $0x68] sm:$0xff] %v8591
      %8608 = vst [vmem:[#allocation3 + $0x70] sm:$0xff] %v8592
      %8609 = vst [vmem:[#allocation3 + $0x78] sm:$0xff] %v8593
      %v8610 = vld [vmem:[%s1121 + $0x4] sm:$0xf]
      %v8611 = vld [vmem:[%s1121 + $0x8] sm:$0xf]
      %v8612 = vld [vmem:[%s1121 + $0x14] sm:$0xf]
      %v8613 = vld [vmem:[%s1121 + $0x18] sm:$0xf]
      %v8614 = vld [vmem:[%s1121 + $0x24] sm:$0xf]
      %v8615 = vld [vmem:[%s1121 + $0x28] sm:$0xf]
      %v8616 = vld [vmem:[%s1121 + $0x34] sm:$0xf]
      %v8617 = vld [vmem:[%s1121 + $0x38] sm:$0xf]
      %v8618 = vld [vmem:[%s1121 + $0x44] sm:$0xf]
      %v8619 = vld [vmem:[%s1121 + $0x48] sm:$0xf]
      %v8620 = vld [vmem:[%s1121 + $0x54] sm:$0xf]
      %v8621 = vld [vmem:[%s1121 + $0x58] sm:$0xf]
      %v8622 = vld [vmem:[%s1121 + $0x64] sm:$0xf]
      %v8623 = vld [vmem:[%s1121 + $0x68] sm:$0xf]
      %v8624 = vld [vmem:[%s1121 + $0x74] sm:$0xf]
      %v8625 = vld [vmem:[%s1121 + $0x78] sm:$0xf]
      %v8626 = vld [vmem:[#allocation3] sm:$0xff]
      %v8627 = vld [vmem:[#allocation3 + $0x8] sm:$0xff]
      %v8628 = vld [vmem:[#allocation3 + $0x10] sm:$0xff]
      %v8629 = vld [vmem:[#allocation3 + $0x18] sm:$0xff]
      %v8630 = vld [vmem:[#allocation3 + $0x20] sm:$0xff]
      %v8631 = vld [vmem:[#allocation3 + $0x28] sm:$0xff]
      %v8632 = vld [vmem:[#allocation3 + $0x30] sm:$0xff]
      %v8633 = vld [vmem:[#allocation3 + $0x38] sm:$0xff]
      %v8634 = vld [vmem:[#allocation3 + $0x40] sm:$0xff]
      %v8635 = vld [vmem:[#allocation3 + $0x48] sm:$0xff]
      %v8636 = vld [vmem:[#allocation3 + $0x50] sm:$0xff]
      %v8637 = vld [vmem:[#allocation3 + $0x58] sm:$0xff]
      %v8638 = vld [vmem:[#allocation3 + $0x60] sm:$0xff]
      %v8639 = vld [vmem:[#allocation3 + $0x68] sm:$0xff]
      %v8640 = vld [vmem:[#allocation3 + $0x70] sm:$0xff]
      %v8641 = vld [vmem:[#allocation3 + $0x78] sm:$0xff]
      %s8642 = scalar_lea.vmem %s1, 1984
      %v8643 = vld [vmem:[%s8642] sm:$0xf]
      %v8644 = vld [vmem:[%s8642 + $0x4] sm:$0xf]
      %v8645 = vld [vmem:[%s8642 + $0x8] sm:$0xf]
      %v8646 = vld [vmem:[%s8642 + $0xc] sm:$0xf]
      %v8647 = vld [vmem:[%s8642 + $0x10] sm:$0xf]
      %v8648 = vld [vmem:[%s8642 + $0x14] sm:$0xf]
      %v8649 = vld [vmem:[%s8642 + $0x18] sm:$0xf]
      %v8650 = vld [vmem:[%s8642 + $0x1c] sm:$0xf]
      %v8651 = vld [vmem:[%s8642 + $0x20] sm:$0xf]
      %v8652 = vld [vmem:[%s8642 + $0x24] sm:$0xf]
      %v8653 = vld [vmem:[%s8642 + $0x28] sm:$0xf]
      %v8654 = vld [vmem:[%s8642 + $0x2c] sm:$0xf]
      %v8655 = vld [vmem:[%s8642 + $0x30] sm:$0xf]
      %v8656 = vld [vmem:[%s8642 + $0x34] sm:$0xf]
      %v8657 = vld [vmem:[%s8642 + $0x38] sm:$0xf]
      %v8658 = vld [vmem:[%s8642 + $0x3c] sm:$0xf]
      %v8675 = vunpack.c.l.b16 %v8610
      %v8676 = vunpack.c.l.b16 %v8611
      %v8677 = vunpack.c.l.b16 %v8612
      %v8678 = vunpack.c.l.b16 %v8613
      %v8679 = vunpack.c.l.b16 %v8614
      %v8680 = vunpack.c.l.b16 %v8615
      %v8681 = vunpack.c.l.b16 %v8616
      %v8682 = vunpack.c.l.b16 %v8617
      %v8683 = vunpack.c.l.b16 %v8618
      %v8684 = vunpack.c.l.b16 %v8619
      %v8685 = vunpack.c.l.b16 %v8620
      %v8686 = vunpack.c.l.b16 %v8621
      %v8687 = vunpack.c.l.b16 %v8622
      %v8688 = vunpack.c.l.b16 %v8623
      %v8689 = vunpack.c.l.b16 %v8624
      %v8690 = vunpack.c.l.b16 %v8625
      %v8691 = vpack.c.b16 %v8676, %v8675
      %v8692 = vpack.c.b16 %v8678, %v8677
      %v8693 = vpack.c.b16 %v8680, %v8679
      %v8694 = vpack.c.b16 %v8682, %v8681
      %v8695 = vpack.c.b16 %v8684, %v8683
      %v8696 = vpack.c.b16 %v8686, %v8685
      %v8697 = vpack.c.b16 %v8688, %v8687
      %v8698 = vpack.c.b16 %v8690, %v8689
      %v8723 = vunpack.c.l.b16 %v8643
      %v8724 = vunpack.c.l.b16 %v8644
      %v8725 = vunpack.c.l.b16 %v8645
      %v8726 = vunpack.c.l.b16 %v8646
      %v8727 = vunpack.c.l.b16 %v8647
      %v8728 = vunpack.c.l.b16 %v8648
      %v8729 = vunpack.c.l.b16 %v8649
      %v8730 = vunpack.c.l.b16 %v8650
      %v8731 = vunpack.c.l.b16 %v8651
      %v8732 = vunpack.c.l.b16 %v8652
      %v8733 = vunpack.c.l.b16 %v8653
      %v8734 = vunpack.c.l.b16 %v8654
      %v8735 = vunpack.c.l.b16 %v8655
      %v8736 = vunpack.c.l.b16 %v8656
      %v8737 = vunpack.c.l.b16 %v8657
      %v8738 = vunpack.c.l.b16 %v8658
      %v8739 = vpack.c.b16 %v8724, %v8723
      %v8740 = vpack.c.b16 %v8726, %v8725
      %v8741 = vpack.c.b16 %v8728, %v8727
      %v8742 = vpack.c.b16 %v8730, %v8729
      %v8743 = vpack.c.b16 %v8732, %v8731
      %v8744 = vpack.c.b16 %v8734, %v8733
      %v8745 = vpack.c.b16 %v8736, %v8735
      %v8746 = vpack.c.b16 %v8738, %v8737
      %8755 = vmatpush.bf16.msra.mxu0 %v8746
      %8756 = vmatpush.bf16.msra.mxu0 %v8745
      %8757 = vmatpush.bf16.msra.mxu0 %v8744
      %8758 = vmatpush.bf16.msra.mxu0 %v8743
      %8759 = vmatpush.bf16.msra.mxu0 %v8742
      %8760 = vmatpush.bf16.msra.mxu0 %v8741
      %8761 = vmatpush.bf16.msra.mxu0 %v8740
      %8762 = vmatpush.bf16.msra.mxu0 %v8739
      %8763 = vmatmul.bf16.gmra.mxu0 %v8691
      %v8764 = vpop.f32.mrf.mxu0
      %v8765 = vadd.f32 0.0, %v8764
      %v8766 = vpop.f32.mrf.mxu0
      %v8767 = vadd.f32 0.0, %v8766
      %8768 = vmatmul.bf16.gmra.mxu0 %v8692
      %v8769 = vpop.f32.mrf.mxu0
      %v8770 = vadd.f32 0.0, %v8769
      %v8771 = vpop.f32.mrf.mxu0
      %v8772 = vadd.f32 0.0, %v8771
      %8773 = vmatmul.bf16.gmra.mxu0 %v8693
      %v8774 = vpop.f32.mrf.mxu0
      %v8775 = vadd.f32 0.0, %v8774
      %v8776 = vpop.f32.mrf.mxu0
      %v8777 = vadd.f32 0.0, %v8776
      %8778 = vmatmul.bf16.gmra.mxu0 %v8694
      %v8779 = vpop.f32.mrf.mxu0
      %v8780 = vadd.f32 0.0, %v8779
      %v8781 = vpop.f32.mrf.mxu0
      %v8782 = vadd.f32 0.0, %v8781
      %8783 = vmatmul.bf16.gmra.mxu0 %v8695
      %v8784 = vpop.f32.mrf.mxu0
      %v8785 = vadd.f32 0.0, %v8784
      %v8786 = vpop.f32.mrf.mxu0
      %v8787 = vadd.f32 0.0, %v8786
      %8788 = vmatmul.bf16.gmra.mxu0 %v8696
      %v8789 = vpop.f32.mrf.mxu0
      %v8790 = vadd.f32 0.0, %v8789
      %v8791 = vpop.f32.mrf.mxu0
      %v8792 = vadd.f32 0.0, %v8791
      %8793 = vmatmul.bf16.gmra.mxu0 %v8697
      %v8794 = vpop.f32.mrf.mxu0
      %v8795 = vadd.f32 0.0, %v8794
      %v8796 = vpop.f32.mrf.mxu0
      %v8797 = vadd.f32 0.0, %v8796
      %8798 = vmatmul.bf16.gmra.mxu0 %v8698
      %v8799 = vpop.f32.mrf.mxu0
      %v8800 = vadd.f32 0.0, %v8799
      %v8801 = vpop.f32.mrf.mxu0
      %v8802 = vadd.f32 0.0, %v8801
      %8803 = vdwg.mxu0
      %v8804 = vadd.f32 %v8626, %v8765
      %v8805 = vadd.f32 %v8627, %v8767
      %v8806 = vadd.f32 %v8628, %v8770
      %v8807 = vadd.f32 %v8629, %v8772
      %v8808 = vadd.f32 %v8630, %v8775
      %v8809 = vadd.f32 %v8631, %v8777
      %v8810 = vadd.f32 %v8632, %v8780
      %v8811 = vadd.f32 %v8633, %v8782
      %v8812 = vadd.f32 %v8634, %v8785
      %v8813 = vadd.f32 %v8635, %v8787
      %v8814 = vadd.f32 %v8636, %v8790
      %v8815 = vadd.f32 %v8637, %v8792
      %v8816 = vadd.f32 %v8638, %v8795
      %v8817 = vadd.f32 %v8639, %v8797
      %v8818 = vadd.f32 %v8640, %v8800
      %v8819 = vadd.f32 %v8641, %v8802
      %8820 = vst [vmem:[#allocation3] sm:$0xff] %v8804
      %8821 = vst [vmem:[#allocation3 + $0x8] sm:$0xff] %v8805
      %8822 = vst [vmem:[#allocation3 + $0x10] sm:$0xff] %v8806
      %8823 = vst [vmem:[#allocation3 + $0x18] sm:$0xff] %v8807
      %8824 = vst [vmem:[#allocation3 + $0x20] sm:$0xff] %v8808
      %8825 = vst [vmem:[#allocation3 + $0x28] sm:$0xff] %v8809
      %8826 = vst [vmem:[#allocation3 + $0x30] sm:$0xff] %v8810
      %8827 = vst [vmem:[#allocation3 + $0x38] sm:$0xff] %v8811
      %8828 = vst [vmem:[#allocation3 + $0x40] sm:$0xff] %v8812
      %8829 = vst [vmem:[#allocation3 + $0x48] sm:$0xff] %v8813
      %8830 = vst [vmem:[#allocation3 + $0x50] sm:$0xff] %v8814
      %8831 = vst [vmem:[#allocation3 + $0x58] sm:$0xff] %v8815
      %8832 = vst [vmem:[#allocation3 + $0x60] sm:$0xff] %v8816
      %8833 = vst [vmem:[#allocation3 + $0x68] sm:$0xff] %v8817
      %8834 = vst [vmem:[#allocation3 + $0x70] sm:$0xff] %v8818
      %8835 = vst [vmem:[#allocation3 + $0x78] sm:$0xff] %v8819
      %v8836 = vld [vmem:[%s1121 + $0x8] sm:$0xf]
      %v8837 = vld [vmem:[%s1121 + $0xc] sm:$0xf]
      %v8838 = vld [vmem:[%s1121 + $0x18] sm:$0xf]
      %v8839 = vld [vmem:[%s1121 + $0x1c] sm:$0xf]
      %v8840 = vld [vmem:[%s1121 + $0x28] sm:$0xf]
      %v8841 = vld [vmem:[%s1121 + $0x2c] sm:$0xf]
      %v8842 = vld [vmem:[%s1121 + $0x38] sm:$0xf]
      %v8843 = vld [vmem:[%s1121 + $0x3c] sm:$0xf]
      %v8844 = vld [vmem:[%s1121 + $0x48] sm:$0xf]
      %v8845 = vld [vmem:[%s1121 + $0x4c] sm:$0xf]
      %v8846 = vld [vmem:[%s1121 + $0x58] sm:$0xf]
      %v8847 = vld [vmem:[%s1121 + $0x5c] sm:$0xf]
      %v8848 = vld [vmem:[%s1121 + $0x68] sm:$0xf]
      %v8849 = vld [vmem:[%s1121 + $0x6c] sm:$0xf]
      %v8850 = vld [vmem:[%s1121 + $0x78] sm:$0xf]
      %v8851 = vld [vmem:[%s1121 + $0x7c] sm:$0xf]
      %v8852 = vld [vmem:[#allocation3] sm:$0xff]
      %v8853 = vld [vmem:[#allocation3 + $0x8] sm:$0xff]
      %v8854 = vld [vmem:[#allocation3 + $0x10] sm:$0xff]
      %v8855 = vld [vmem:[#allocation3 + $0x18] sm:$0xff]
      %v8856 = vld [vmem:[#allocation3 + $0x20] sm:$0xff]
      %v8857 = vld [vmem:[#allocation3 + $0x28] sm:$0xff]
      %v8858 = vld [vmem:[#allocation3 + $0x30] sm:$0xff]
      %v8859 = vld [vmem:[#allocation3 + $0x38] sm:$0xff]
      %v8860 = vld [vmem:[#allocation3 + $0x40] sm:$0xff]
      %v8861 = vld [vmem:[#allocation3 + $0x48] sm:$0xff]
      %v8862 = vld [vmem:[#allocation3 + $0x50] sm:$0xff]
      %v8863 = vld [vmem:[#allocation3 + $0x58] sm:$0xff]
      %v8864 = vld [vmem:[#allocation3 + $0x60] sm:$0xff]
      %v8865 = vld [vmem:[#allocation3 + $0x68] sm:$0xff]
      %v8866 = vld [vmem:[#allocation3 + $0x70] sm:$0xff]
      %v8867 = vld [vmem:[#allocation3 + $0x78] sm:$0xff]
      %s8868 = scalar_lea.vmem %s1, 2048
      %v8869 = vld [vmem:[%s8868] sm:$0xf]
      %v8870 = vld [vmem:[%s8868 + $0x4] sm:$0xf]
      %v8871 = vld [vmem:[%s8868 + $0x8] sm:$0xf]
      %v8872 = vld [vmem:[%s8868 + $0xc] sm:$0xf]
      %v8873 = vld [vmem:[%s8868 + $0x10] sm:$0xf]
      %v8874 = vld [vmem:[%s8868 + $0x14] sm:$0xf]
      %v8875 = vld [vmem:[%s8868 + $0x18] sm:$0xf]
      %v8876 = vld [vmem:[%s8868 + $0x1c] sm:$0xf]
      %v8877 = vld [vmem:[%s8868 + $0x20] sm:$0xf]
      %v8878 = vld [vmem:[%s8868 + $0x24] sm:$0xf]
      %v8879 = vld [vmem:[%s8868 + $0x28] sm:$0xf]
      %v8880 = vld [vmem:[%s8868 + $0x2c] sm:$0xf]
      %v8881 = vld [vmem:[%s8868 + $0x30] sm:$0xf]
      %v8882 = vld [vmem:[%s8868 + $0x34] sm:$0xf]
      %v8883 = vld [vmem:[%s8868 + $0x38] sm:$0xf]
      %v8884 = vld [vmem:[%s8868 + $0x3c] sm:$0xf]
      %v8901 = vunpack.c.l.b16 %v8836
      %v8902 = vunpack.c.l.b16 %v8837
      %v8903 = vunpack.c.l.b16 %v8838
      %v8904 = vunpack.c.l.b16 %v8839
      %v8905 = vunpack.c.l.b16 %v8840
      %v8906 = vunpack.c.l.b16 %v8841
      %v8907 = vunpack.c.l.b16 %v8842
      %v8908 = vunpack.c.l.b16 %v8843
      %v8909 = vunpack.c.l.b16 %v8844
      %v8910 = vunpack.c.l.b16 %v8845
      %v8911 = vunpack.c.l.b16 %v8846
      %v8912 = vunpack.c.l.b16 %v8847
      %v8913 = vunpack.c.l.b16 %v8848
      %v8914 = vunpack.c.l.b16 %v8849
      %v8915 = vunpack.c.l.b16 %v8850
      %v8916 = vunpack.c.l.b16 %v8851
      %v8917 = vpack.c.b16 %v8902, %v8901
      %v8918 = vpack.c.b16 %v8904, %v8903
      %v8919 = vpack.c.b16 %v8906, %v8905
      %v8920 = vpack.c.b16 %v8908, %v8907
      %v8921 = vpack.c.b16 %v8910, %v8909
      %v8922 = vpack.c.b16 %v8912, %v8911
      %v8923 = vpack.c.b16 %v8914, %v8913
      %v8924 = vpack.c.b16 %v8916, %v8915
      %v8949 = vunpack.c.l.b16 %v8869
      %v8950 = vunpack.c.l.b16 %v8870
      %v8951 = vunpack.c.l.b16 %v8871
      %v8952 = vunpack.c.l.b16 %v8872
      %v8953 = vunpack.c.l.b16 %v8873
      %v8954 = vunpack.c.l.b16 %v8874
      %v8955 = vunpack.c.l.b16 %v8875
      %v8956 = vunpack.c.l.b16 %v8876
      %v8957 = vunpack.c.l.b16 %v8877
      %v8958 = vunpack.c.l.b16 %v8878
      %v8959 = vunpack.c.l.b16 %v8879
      %v8960 = vunpack.c.l.b16 %v8880
      %v8961 = vunpack.c.l.b16 %v8881
      %v8962 = vunpack.c.l.b16 %v8882
      %v8963 = vunpack.c.l.b16 %v8883
      %v8964 = vunpack.c.l.b16 %v8884
      %v8965 = vpack.c.b16 %v8950, %v8949
      %v8966 = vpack.c.b16 %v8952, %v8951
      %v8967 = vpack.c.b16 %v8954, %v8953
      %v8968 = vpack.c.b16 %v8956, %v8955
      %v8969 = vpack.c.b16 %v8958, %v8957
      %v8970 = vpack.c.b16 %v8960, %v8959
      %v8971 = vpack.c.b16 %v8962, %v8961
      %v8972 = vpack.c.b16 %v8964, %v8963
      %8981 = vmatpush.bf16.msra.mxu0 %v8972
      %8982 = vmatpush.bf16.msra.mxu0 %v8971
      %8983 = vmatpush.bf16.msra.mxu0 %v8970
      %8984 = vmatpush.bf16.msra.mxu0 %v8969
      %8985 = vmatpush.bf16.msra.mxu0 %v8968
      %8986 = vmatpush.bf16.msra.mxu0 %v8967
      %8987 = vmatpush.bf16.msra.mxu0 %v8966
      %8988 = vmatpush.bf16.msra.mxu0 %v8965
      %8989 = vmatmul.bf16.gmra.mxu0 %v8917
      %v8990 = vpop.f32.mrf.mxu0
      %v8991 = vadd.f32 0.0, %v8990
      %v8992 = vpop.f32.mrf.mxu0
      %v8993 = vadd.f32 0.0, %v8992
      %8994 = vmatmul.bf16.gmra.mxu0 %v8918
      %v8995 = vpop.f32.mrf.mxu0
      %v8996 = vadd.f32 0.0, %v8995
      %v8997 = vpop.f32.mrf.mxu0
      %v8998 = vadd.f32 0.0, %v8997
      %8999 = vmatmul.bf16.gmra.mxu0 %v8919
      %v9000 = vpop.f32.mrf.mxu0
      %v9001 = vadd.f32 0.0, %v9000
      %v9002 = vpop.f32.mrf.mxu0
      %v9003 = vadd.f32 0.0, %v9002
      %9004 = vmatmul.bf16.gmra.mxu0 %v8920
      %v9005 = vpop.f32.mrf.mxu0
      %v9006 = vadd.f32 0.0, %v9005
      %v9007 = vpop.f32.mrf.mxu0
      %v9008 = vadd.f32 0.0, %v9007
      %9009 = vmatmul.bf16.gmra.mxu0 %v8921
      %v9010 = vpop.f32.mrf.mxu0
      %v9011 = vadd.f32 0.0, %v9010
      %v9012 = vpop.f32.mrf.mxu0
      %v9013 = vadd.f32 0.0, %v9012
      %9014 = vmatmul.bf16.gmra.mxu0 %v8922
      %v9015 = vpop.f32.mrf.mxu0
      %v9016 = vadd.f32 0.0, %v9015
      %v9017 = vpop.f32.mrf.mxu0
      %v9018 = vadd.f32 0.0, %v9017
      %9019 = vmatmul.bf16.gmra.mxu0 %v8923
      %v9020 = vpop.f32.mrf.mxu0
      %v9021 = vadd.f32 0.0, %v9020
      %v9022 = vpop.f32.mrf.mxu0
      %v9023 = vadd.f32 0.0, %v9022
      %9024 = vmatmul.bf16.gmra.mxu0 %v8924
      %v9025 = vpop.f32.mrf.mxu0
      %v9026 = vadd.f32 0.0, %v9025
      %v9027 = vpop.f32.mrf.mxu0
      %v9028 = vadd.f32 0.0, %v9027
      %9029 = vdwg.mxu0
      %v9030 = vadd.f32 %v8852, %v8991
      %v9031 = vadd.f32 %v8853, %v8993
      %v9032 = vadd.f32 %v8854, %v8996
      %v9033 = vadd.f32 %v8855, %v8998
      %v9034 = vadd.f32 %v8856, %v9001
      %v9035 = vadd.f32 %v8857, %v9003
      %v9036 = vadd.f32 %v8858, %v9006
      %v9037 = vadd.f32 %v8859, %v9008
      %v9038 = vadd.f32 %v8860, %v9011
      %v9039 = vadd.f32 %v8861, %v9013
      %v9040 = vadd.f32 %v8862, %v9016
      %v9041 = vadd.f32 %v8863, %v9018
      %v9042 = vadd.f32 %v8864, %v9021
      %v9043 = vadd.f32 %v8865, %v9023
      %v9044 = vadd.f32 %v8866, %v9026
      %v9045 = vadd.f32 %v8867, %v9028
      %9046 = vst [vmem:[#allocation3] sm:$0xff] %v9030
      %9047 = vst [vmem:[#allocation3 + $0x8] sm:$0xff] %v9031
      %9048 = vst [vmem:[#allocation3 + $0x10] sm:$0xff] %v9032
      %9049 = vst [vmem:[#allocation3 + $0x18] sm:$0xff] %v9033
      %9050 = vst [vmem:[#allocation3 + $0x20] sm:$0xff] %v9034
      %9051 = vst [vmem:[#allocation3 + $0x28] sm:$0xff] %v9035
      %9052 = vst [vmem:[#allocation3 + $0x30] sm:$0xff] %v9036
      %9053 = vst [vmem:[#allocation3 + $0x38] sm:$0xff] %v9037
      %9054 = vst [vmem:[#allocation3 + $0x40] sm:$0xff] %v9038
      %9055 = vst [vmem:[#allocation3 + $0x48] sm:$0xff] %v9039
      %9056 = vst [vmem:[#allocation3 + $0x50] sm:$0xff] %v9040
      %9057 = vst [vmem:[#allocation3 + $0x58] sm:$0xff] %v9041
      %9058 = vst [vmem:[#allocation3 + $0x60] sm:$0xff] %v9042
      %9059 = vst [vmem:[#allocation3 + $0x68] sm:$0xff] %v9043
      %9060 = vst [vmem:[#allocation3 + $0x70] sm:$0xff] %v9044
      %9061 = vst [vmem:[#allocation3 + $0x78] sm:$0xff] %v9045
      %s9062 = scalar_lea.vmem [#allocation2], 256
      %v9063 = vld [vmem:[%s9062] sm:$0xf]
      %v9064 = vld [vmem:[%s9062 + $0x4] sm:$0xf]
      %v9065 = vld [vmem:[%s9062 + $0x10] sm:$0xf]
      %v9066 = vld [vmem:[%s9062 + $0x14] sm:$0xf]
      %v9067 = vld [vmem:[%s9062 + $0x20] sm:$0xf]
      %v9068 = vld [vmem:[%s9062 + $0x24] sm:$0xf]
      %v9069 = vld [vmem:[%s9062 + $0x30] sm:$0xf]
      %v9070 = vld [vmem:[%s9062 + $0x34] sm:$0xf]
      %v9071 = vld [vmem:[%s9062 + $0x40] sm:$0xf]
      %v9072 = vld [vmem:[%s9062 + $0x44] sm:$0xf]
      %v9073 = vld [vmem:[%s9062 + $0x50] sm:$0xf]
      %v9074 = vld [vmem:[%s9062 + $0x54] sm:$0xf]
      %v9075 = vld [vmem:[%s9062 + $0x60] sm:$0xf]
      %v9076 = vld [vmem:[%s9062 + $0x64] sm:$0xf]
      %v9077 = vld [vmem:[%s9062 + $0x70] sm:$0xf]
      %v9078 = vld [vmem:[%s9062 + $0x74] sm:$0xf]
      %v9079 = vld [vmem:[#allocation3] sm:$0xff]
      %v9080 = vld [vmem:[#allocation3 + $0x8] sm:$0xff]
      %v9081 = vld [vmem:[#allocation3 + $0x10] sm:$0xff]
      %v9082 = vld [vmem:[#allocation3 + $0x18] sm:$0xff]
      %v9083 = vld [vmem:[#allocation3 + $0x20] sm:$0xff]
      %v9084 = vld [vmem:[#allocation3 + $0x28] sm:$0xff]
      %v9085 = vld [vmem:[#allocation3 + $0x30] sm:$0xff]
      %v9086 = vld [vmem:[#allocation3 + $0x38] sm:$0xff]
      %v9087 = vld [vmem:[#allocation3 + $0x40] sm:$0xff]
      %v9088 = vld [vmem:[#allocation3 + $0x48] sm:$0xff]
      %v9089 = vld [vmem:[#allocation3 + $0x50] sm:$0xff]
      %v9090 = vld [vmem:[#allocation3 + $0x58] sm:$0xff]
      %v9091 = vld [vmem:[#allocation3 + $0x60] sm:$0xff]
      %v9092 = vld [vmem:[#allocation3 + $0x68] sm:$0xff]
      %v9093 = vld [vmem:[#allocation3 + $0x70] sm:$0xff]
      %v9094 = vld [vmem:[#allocation3 + $0x78] sm:$0xff]
      %s9095 = scalar_lea.vmem %s1, 2112
      %v9096 = vld [vmem:[%s9095] sm:$0xf]
      %v9097 = vld [vmem:[%s9095 + $0x4] sm:$0xf]
      %v9098 = vld [vmem:[%s9095 + $0x8] sm:$0xf]
      %v9099 = vld [vmem:[%s9095 + $0xc] sm:$0xf]
      %v9100 = vld [vmem:[%s9095 + $0x10] sm:$0xf]
      %v9101 = vld [vmem:[%s9095 + $0x14] sm:$0xf]
      %v9102 = vld [vmem:[%s9095 + $0x18] sm:$0xf]
      %v9103 = vld [vmem:[%s9095 + $0x1c] sm:$0xf]
      %v9104 = vld [vmem:[%s9095 + $0x20] sm:$0xf]
      %v9105 = vld [vmem:[%s9095 + $0x24] sm:$0xf]
      %v9106 = vld [vmem:[%s9095 + $0x28] sm:$0xf]
      %v9107 = vld [vmem:[%s9095 + $0x2c] sm:$0xf]
      %v9108 = vld [vmem:[%s9095 + $0x30] sm:$0xf]
      %v9109 = vld [vmem:[%s9095 + $0x34] sm:$0xf]
      %v9110 = vld [vmem:[%s9095 + $0x38] sm:$0xf]
      %v9111 = vld [vmem:[%s9095 + $0x3c] sm:$0xf]
      %v9128 = vunpack.c.l.b16 %v9063
      %v9129 = vunpack.c.l.b16 %v9064
      %v9130 = vunpack.c.l.b16 %v9065
      %v9131 = vunpack.c.l.b16 %v9066
      %v9132 = vunpack.c.l.b16 %v9067
      %v9133 = vunpack.c.l.b16 %v9068
      %v9134 = vunpack.c.l.b16 %v9069
      %v9135 = vunpack.c.l.b16 %v9070
      %v9136 = vunpack.c.l.b16 %v9071
      %v9137 = vunpack.c.l.b16 %v9072
      %v9138 = vunpack.c.l.b16 %v9073
      %v9139 = vunpack.c.l.b16 %v9074
      %v9140 = vunpack.c.l.b16 %v9075
      %v9141 = vunpack.c.l.b16 %v9076
      %v9142 = vunpack.c.l.b16 %v9077
      %v9143 = vunpack.c.l.b16 %v9078
      %v9144 = vpack.c.b16 %v9129, %v9128
      %v9145 = vpack.c.b16 %v9131, %v9130
      %v9146 = vpack.c.b16 %v9133, %v9132
      %v9147 = vpack.c.b16 %v9135, %v9134
      %v9148 = vpack.c.b16 %v9137, %v9136
      %v9149 = vpack.c.b16 %v9139, %v9138
      %v9150 = vpack.c.b16 %v9141, %v9140
      %v9151 = vpack.c.b16 %v9143, %v9142
      %v9176 = vunpack.c.l.b16 %v9096
      %v9177 = vunpack.c.l.b16 %v9097
      %v9178 = vunpack.c.l.b16 %v9098
      %v9179 = vunpack.c.l.b16 %v9099
      %v9180 = vunpack.c.l.b16 %v9100
      %v9181 = vunpack.c.l.b16 %v9101
      %v9182 = vunpack.c.l.b16 %v9102
      %v9183 = vunpack.c.l.b16 %v9103
      %v9184 = vunpack.c.l.b16 %v9104
      %v9185 = vunpack.c.l.b16 %v9105
      %v9186 = vunpack.c.l.b16 %v9106
      %v9187 = vunpack.c.l.b16 %v9107
      %v9188 = vunpack.c.l.b16 %v9108
      %v9189 = vunpack.c.l.b16 %v9109
      %v9190 = vunpack.c.l.b16 %v9110
      %v9191 = vunpack.c.l.b16 %v9111
      %v9192 = vpack.c.b16 %v9177, %v9176
      %v9193 = vpack.c.b16 %v9179, %v9178
      %v9194 = vpack.c.b16 %v9181, %v9180
      %v9195 = vpack.c.b16 %v9183, %v9182
      %v9196 = vpack.c.b16 %v9185, %v9184
      %v9197 = vpack.c.b16 %v9187, %v9186
      %v9198 = vpack.c.b16 %v9189, %v9188
      %v9199 = vpack.c.b16 %v9191, %v9190
      %9208 = vmatpush.bf16.msra.mxu0 %v9199
      %9209 = vmatpush.bf16.msra.mxu0 %v9198
      %9210 = vmatpush.bf16.msra.mxu0 %v9197
      %9211 = vmatpush.bf16.msra.mxu0 %v9196
      %9212 = vmatpush.bf16.msra.mxu0 %v9195
      %9213 = vmatpush.bf16.msra.mxu0 %v9194
      %9214 = vmatpush.bf16.msra.mxu0 %v9193
      %9215 = vmatpush.bf16.msra.mxu0 %v9192
      %9216 = vmatmul.bf16.gmra.mxu0 %v9144
      %v9217 = vpop.f32.mrf.mxu0
      %v9218 = vadd.f32 0.0, %v9217
      %v9219 = vpop.f32.mrf.mxu0
      %v9220 = vadd.f32 0.0, %v9219
      %9221 = vmatmul.bf16.gmra.mxu0 %v9145
      %v9222 = vpop.f32.mrf.mxu0
      %v9223 = vadd.f32 0.0, %v9222
      %v9224 = vpop.f32.mrf.mxu0
      %v9225 = vadd.f32 0.0, %v9224
      %9226 = vmatmul.bf16.gmra.mxu0 %v9146
      %v9227 = vpop.f32.mrf.mxu0
      %v9228 = vadd.f32 0.0, %v9227
      %v9229 = vpop.f32.mrf.mxu0
      %v9230 = vadd.f32 0.0, %v9229
      %9231 = vmatmul.bf16.gmra.mxu0 %v9147
      %v9232 = vpop.f32.mrf.mxu0
      %v9233 = vadd.f32 0.0, %v9232
      %v9234 = vpop.f32.mrf.mxu0
      %v9235 = vadd.f32 0.0, %v9234
      %9236 = vmatmul.bf16.gmra.mxu0 %v9148
      %v9237 = vpop.f32.mrf.mxu0
      %v9238 = vadd.f32 0.0, %v9237
      %v9239 = vpop.f32.mrf.mxu0
      %v9240 = vadd.f32 0.0, %v9239
      %9241 = vmatmul.bf16.gmra.mxu0 %v9149
      %v9242 = vpop.f32.mrf.mxu0
      %v9243 = vadd.f32 0.0, %v9242
      %v9244 = vpop.f32.mrf.mxu0
      %v9245 = vadd.f32 0.0, %v9244
      %9246 = vmatmul.bf16.gmra.mxu0 %v9150
      %v9247 = vpop.f32.mrf.mxu0
      %v9248 = vadd.f32 0.0, %v9247
      %v9249 = vpop.f32.mrf.mxu0
      %v9250 = vadd.f32 0.0, %v9249
      %9251 = vmatmul.bf16.gmra.mxu0 %v9151
      %v9252 = vpop.f32.mrf.mxu0
      %v9253 = vadd.f32 0.0, %v9252
      %v9254 = vpop.f32.mrf.mxu0
      %v9255 = vadd.f32 0.0, %v9254
      %9256 = vdwg.mxu0
      %v9257 = vadd.f32 %v9079, %v9218
      %v9258 = vadd.f32 %v9080, %v9220
      %v9259 = vadd.f32 %v9081, %v9223
      %v9260 = vadd.f32 %v9082, %v9225
      %v9261 = vadd.f32 %v9083, %v9228
      %v9262 = vadd.f32 %v9084, %v9230
      %v9263 = vadd.f32 %v9085, %v9233
      %v9264 = vadd.f32 %v9086, %v9235
      %v9265 = vadd.f32 %v9087, %v9238
      %v9266 = vadd.f32 %v9088, %v9240
      %v9267 = vadd.f32 %v9089, %v9243
      %v9268 = vadd.f32 %v9090, %v9245
      %v9269 = vadd.f32 %v9091, %v9248
      %v9270 = vadd.f32 %v9092, %v9250
      %v9271 = vadd.f32 %v9093, %v9253
      %v9272 = vadd.f32 %v9094, %v9255
      %9273 = vst [vmem:[#allocation3] sm:$0xff] %v9257
      %9274 = vst [vmem:[#allocation3 + $0x8] sm:$0xff] %v9258
      %9275 = vst [vmem:[#allocation3 + $0x10] sm:$0xff] %v9259
      %9276 = vst [vmem:[#allocation3 + $0x18] sm:$0xff] %v9260
      %9277 = vst [vmem:[#allocation3 + $0x20] sm:$0xff] %v9261
      %9278 = vst [vmem:[#allocation3 + $0x28] sm:$0xff] %v9262
      %9279 = vst [vmem:[#allocation3 + $0x30] sm:$0xff] %v9263
      %9280 = vst [vmem:[#allocation3 + $0x38] sm:$0xff] %v9264
      %9281 = vst [vmem:[#allocation3 + $0x40] sm:$0xff] %v9265
      %9282 = vst [vmem:[#allocation3 + $0x48] sm:$0xff] %v9266
      %9283 = vst [vmem:[#allocation3 + $0x50] sm:$0xff] %v9267
      %9284 = vst [vmem:[#allocation3 + $0x58] sm:$0xff] %v9268
      %9285 = vst [vmem:[#allocation3 + $0x60] sm:$0xff] %v9269
      %9286 = vst [vmem:[#allocation3 + $0x68] sm:$0xff] %v9270
      %9287 = vst [vmem:[#allocation3 + $0x70] sm:$0xff] %v9271
      %9288 = vst [vmem:[#allocation3 + $0x78] sm:$0xff] %v9272
      %v9289 = vld [vmem:[%s9062 + $0x4] sm:$0xf]
      %v9290 = vld [vmem:[%s9062 + $0x8] sm:$0xf]
      %v9291 = vld [vmem:[%s9062 + $0x14] sm:$0xf]
      %v9292 = vld [vmem:[%s9062 + $0x18] sm:$0xf]
      %v9293 = vld [vmem:[%s9062 + $0x24] sm:$0xf]
      %v9294 = vld [vmem:[%s9062 + $0x28] sm:$0xf]
      %v9295 = vld [vmem:[%s9062 + $0x34] sm:$0xf]
      %v9296 = vld [vmem:[%s9062 + $0x38] sm:$0xf]
      %v9297 = vld [vmem:[%s9062 + $0x44] sm:$0xf]
      %v9298 = vld [vmem:[%s9062 + $0x48] sm:$0xf]
      %v9299 = vld [vmem:[%s9062 + $0x54] sm:$0xf]
      %v9300 = vld [vmem:[%s9062 + $0x58] sm:$0xf]
      %v9301 = vld [vmem:[%s9062 + $0x64] sm:$0xf]
      %v9302 = vld [vmem:[%s9062 + $0x68] sm:$0xf]
      %v9303 = vld [vmem:[%s9062 + $0x74] sm:$0xf]
      %v9304 = vld [vmem:[%s9062 + $0x78] sm:$0xf]
      %v9305 = vld [vmem:[#allocation3] sm:$0xff]
      %v9306 = vld [vmem:[#allocation3 + $0x8] sm:$0xff]
      %v9307 = vld [vmem:[#allocation3 + $0x10] sm:$0xff]
      %v9308 = vld [vmem:[#allocation3 + $0x18] sm:$0xff]
      %v9309 = vld [vmem:[#allocation3 + $0x20] sm:$0xff]
      %v9310 = vld [vmem:[#allocation3 + $0x28] sm:$0xff]
      %v9311 = vld [vmem:[#allocation3 + $0x30] sm:$0xff]
      %v9312 = vld [vmem:[#allocation3 + $0x38] sm:$0xff]
      %v9313 = vld [vmem:[#allocation3 + $0x40] sm:$0xff]
      %v9314 = vld [vmem:[#allocation3 + $0x48] sm:$0xff]
      %v9315 = vld [vmem:[#allocation3 + $0x50] sm:$0xff]
      %v9316 = vld [vmem:[#allocation3 + $0x58] sm:$0xff]
      %v9317 = vld [vmem:[#allocation3 + $0x60] sm:$0xff]
      %v9318 = vld [vmem:[#allocation3 + $0x68] sm:$0xff]
      %v9319 = vld [vmem:[#allocation3 + $0x70] sm:$0xff]
      %v9320 = vld [vmem:[#allocation3 + $0x78] sm:$0xff]
      %s9321 = scalar_lea.vmem %s1, 2176
      %v9322 = vld [vmem:[%s9321] sm:$0xf]
      %v9323 = vld [vmem:[%s9321 + $0x4] sm:$0xf]
      %v9324 = vld [vmem:[%s9321 + $0x8] sm:$0xf]
      %v9325 = vld [vmem:[%s9321 + $0xc] sm:$0xf]
      %v9326 = vld [vmem:[%s9321 + $0x10] sm:$0xf]
      %v9327 = vld [vmem:[%s9321 + $0x14] sm:$0xf]
      %v9328 = vld [vmem:[%s9321 + $0x18] sm:$0xf]
      %v9329 = vld [vmem:[%s9321 + $0x1c] sm:$0xf]
      %v9330 = vld [vmem:[%s9321 + $0x20] sm:$0xf]
      %v9331 = vld [vmem:[%s9321 + $0x24] sm:$0xf]
      %v9332 = vld [vmem:[%s9321 + $0x28] sm:$0xf]
      %v9333 = vld [vmem:[%s9321 + $0x2c] sm:$0xf]
      %v9334 = vld [vmem:[%s9321 + $0x30] sm:$0xf]
      %v9335 = vld [vmem:[%s9321 + $0x34] sm:$0xf]
      %v9336 = vld [vmem:[%s9321 + $0x38] sm:$0xf]
      %v9337 = vld [vmem:[%s9321 + $0x3c] sm:$0xf]
      %v9354 = vunpack.c.l.b16 %v9289
      %v9355 = vunpack.c.l.b16 %v9290
      %v9356 = vunpack.c.l.b16 %v9291
      %v9357 = vunpack.c.l.b16 %v9292
      %v9358 = vunpack.c.l.b16 %v9293
      %v9359 = vunpack.c.l.b16 %v9294
      %v9360 = vunpack.c.l.b16 %v9295
      %v9361 = vunpack.c.l.b16 %v9296
      %v9362 = vunpack.c.l.b16 %v9297
      %v9363 = vunpack.c.l.b16 %v9298
      %v9364 = vunpack.c.l.b16 %v9299
      %v9365 = vunpack.c.l.b16 %v9300
      %v9366 = vunpack.c.l.b16 %v9301
      %v9367 = vunpack.c.l.b16 %v9302
      %v9368 = vunpack.c.l.b16 %v9303
      %v9369 = vunpack.c.l.b16 %v9304
      %v9370 = vpack.c.b16 %v9355, %v9354
      %v9371 = vpack.c.b16 %v9357, %v9356
      %v9372 = vpack.c.b16 %v9359, %v9358
      %v9373 = vpack.c.b16 %v9361, %v9360
      %v9374 = vpack.c.b16 %v9363, %v9362
      %v9375 = vpack.c.b16 %v9365, %v9364
      %v9376 = vpack.c.b16 %v9367, %v9366
      %v9377 = vpack.c.b16 %v9369, %v9368
      %v9402 = vunpack.c.l.b16 %v9322
      %v9403 = vunpack.c.l.b16 %v9323
      %v9404 = vunpack.c.l.b16 %v9324
      %v9405 = vunpack.c.l.b16 %v9325
      %v9406 = vunpack.c.l.b16 %v9326
      %v9407 = vunpack.c.l.b16 %v9327
      %v9408 = vunpack.c.l.b16 %v9328
      %v9409 = vunpack.c.l.b16 %v9329
      %v9410 = vunpack.c.l.b16 %v9330
      %v9411 = vunpack.c.l.b16 %v9331
      %v9412 = vunpack.c.l.b16 %v9332
      %v9413 = vunpack.c.l.b16 %v9333
      %v9414 = vunpack.c.l.b16 %v9334
      %v9415 = vunpack.c.l.b16 %v9335
      %v9416 = vunpack.c.l.b16 %v9336
      %v9417 = vunpack.c.l.b16 %v9337
      %v9418 = vpack.c.b16 %v9403, %v9402
      %v9419 = vpack.c.b16 %v9405, %v9404
      %v9420 = vpack.c.b16 %v9407, %v9406
      %v9421 = vpack.c.b16 %v9409, %v9408
      %v9422 = vpack.c.b16 %v9411, %v9410
      %v9423 = vpack.c.b16 %v9413, %v9412
      %v9424 = vpack.c.b16 %v9415, %v9414
      %v9425 = vpack.c.b16 %v9417, %v9416
      %9434 = vmatpush.bf16.msra.mxu0 %v9425
      %9435 = vmatpush.bf16.msra.mxu0 %v9424
      %9436 = vmatpush.bf16.msra.mxu0 %v9423
      %9437 = vmatpush.bf16.msra.mxu0 %v9422
      %9438 = vmatpush.bf16.msra.mxu0 %v9421
      %9439 = vmatpush.bf16.msra.mxu0 %v9420
      %9440 = vmatpush.bf16.msra.mxu0 %v9419
      %9441 = vmatpush.bf16.msra.mxu0 %v9418
      %9442 = vmatmul.bf16.gmra.mxu0 %v9370
      %v9443 = vpop.f32.mrf.mxu0
      %v9444 = vadd.f32 0.0, %v9443
      %v9445 = vpop.f32.mrf.mxu0
      %v9446 = vadd.f32 0.0, %v9445
      %9447 = vmatmul.bf16.gmra.mxu0 %v9371
      %v9448 = vpop.f32.mrf.mxu0
      %v9449 = vadd.f32 0.0, %v9448
      %v9450 = vpop.f32.mrf.mxu0
      %v9451 = vadd.f32 0.0, %v9450
      %9452 = vmatmul.bf16.gmra.mxu0 %v9372
      %v9453 = vpop.f32.mrf.mxu0
      %v9454 = vadd.f32 0.0, %v9453
      %v9455 = vpop.f32.mrf.mxu0
      %v9456 = vadd.f32 0.0, %v9455
      %9457 = vmatmul.bf16.gmra.mxu0 %v9373
      %v9458 = vpop.f32.mrf.mxu0
      %v9459 = vadd.f32 0.0, %v9458
      %v9460 = vpop.f32.mrf.mxu0
      %v9461 = vadd.f32 0.0, %v9460
      %9462 = vmatmul.bf16.gmra.mxu0 %v9374
      %v9463 = vpop.f32.mrf.mxu0
      %v9464 = vadd.f32 0.0, %v9463
      %v9465 = vpop.f32.mrf.mxu0
      %v9466 = vadd.f32 0.0, %v9465
      %9467 = vmatmul.bf16.gmra.mxu0 %v9375
      %v9468 = vpop.f32.mrf.mxu0
      %v9469 = vadd.f32 0.0, %v9468
      %v9470 = vpop.f32.mrf.mxu0
      %v9471 = vadd.f32 0.0, %v9470
      %9472 = vmatmul.bf16.gmra.mxu0 %v9376
      %v9473 = vpop.f32.mrf.mxu0
      %v9474 = vadd.f32 0.0, %v9473
      %v9475 = vpop.f32.mrf.mxu0
      %v9476 = vadd.f32 0.0, %v9475
      %9477 = vmatmul.bf16.gmra.mxu0 %v9377
      %v9478 = vpop.f32.mrf.mxu0
      %v9479 = vadd.f32 0.0, %v9478
      %v9480 = vpop.f32.mrf.mxu0
      %v9481 = vadd.f32 0.0, %v9480
      %9482 = vdwg.mxu0
      %v9483 = vadd.f32 %v9305, %v9444
      %v9484 = vadd.f32 %v9306, %v9446
      %v9485 = vadd.f32 %v9307, %v9449
      %v9486 = vadd.f32 %v9308, %v9451
      %v9487 = vadd.f32 %v9309, %v9454
      %v9488 = vadd.f32 %v9310, %v9456
      %v9489 = vadd.f32 %v9311, %v9459
      %v9490 = vadd.f32 %v9312, %v9461
      %v9491 = vadd.f32 %v9313, %v9464
      %v9492 = vadd.f32 %v9314, %v9466
      %v9493 = vadd.f32 %v9315, %v9469
      %v9494 = vadd.f32 %v9316, %v9471
      %v9495 = vadd.f32 %v9317, %v9474
      %v9496 = vadd.f32 %v9318, %v9476
      %v9497 = vadd.f32 %v9319, %v9479
      %v9498 = vadd.f32 %v9320, %v9481
      %9499 = vst [vmem:[#allocation3] sm:$0xff] %v9483
      %9500 = vst [vmem:[#allocation3 + $0x8] sm:$0xff] %v9484
      %9501 = vst [vmem:[#allocation3 + $0x10] sm:$0xff] %v9485
      %9502 = vst [vmem:[#allocation3 + $0x18] sm:$0xff] %v9486
      %9503 = vst [vmem:[#allocation3 + $0x20] sm:$0xff] %v9487
      %9504 = vst [vmem:[#allocation3 + $0x28] sm:$0xff] %v9488
      %9505 = vst [vmem:[#allocation3 + $0x30] sm:$0xff] %v9489
      %9506 = vst [vmem:[#allocation3 + $0x38] sm:$0xff] %v9490
      %9507 = vst [vmem:[#allocation3 + $0x40] sm:$0xff] %v9491
      %9508 = vst [vmem:[#allocation3 + $0x48] sm:$0xff] %v9492
      %9509 = vst [vmem:[#allocation3 + $0x50] sm:$0xff] %v9493
      %9510 = vst [vmem:[#allocation3 + $0x58] sm:$0xff] %v9494
      %9511 = vst [vmem:[#allocation3 + $0x60] sm:$0xff] %v9495
      %9512 = vst [vmem:[#allocation3 + $0x68] sm:$0xff] %v9496
      %9513 = vst [vmem:[#allocation3 + $0x70] sm:$0xff] %v9497
      %9514 = vst [vmem:[#allocation3 + $0x78] sm:$0xff] %v9498
      %v9515 = vld [vmem:[%s9062 + $0x8] sm:$0xf]
      %v9516 = vld [vmem:[%s9062 + $0xc] sm:$0xf]
      %v9517 = vld [vmem:[%s9062 + $0x18] sm:$0xf]
      %v9518 = vld [vmem:[%s9062 + $0x1c] sm:$0xf]
      %v9519 = vld [vmem:[%s9062 + $0x28] sm:$0xf]
      %v9520 = vld [vmem:[%s9062 + $0x2c] sm:$0xf]
      %v9521 = vld [vmem:[%s9062 + $0x38] sm:$0xf]
      %v9522 = vld [vmem:[%s9062 + $0x3c] sm:$0xf]
      %v9523 = vld [vmem:[%s9062 + $0x48] sm:$0xf]
      %v9524 = vld [vmem:[%s9062 + $0x4c] sm:$0xf]
      %v9525 = vld [vmem:[%s9062 + $0x58] sm:$0xf]
      %v9526 = vld [vmem:[%s9062 + $0x5c] sm:$0xf]
      %v9527 = vld [vmem:[%s9062 + $0x68] sm:$0xf]
      %v9528 = vld [vmem:[%s9062 + $0x6c] sm:$0xf]
      %v9529 = vld [vmem:[%s9062 + $0x78] sm:$0xf]
      %v9530 = vld [vmem:[%s9062 + $0x7c] sm:$0xf]
      %v9531 = vld [vmem:[#allocation3] sm:$0xff]
      %v9532 = vld [vmem:[#allocation3 + $0x8] sm:$0xff]
      %v9533 = vld [vmem:[#allocation3 + $0x10] sm:$0xff]
      %v9534 = vld [vmem:[#allocation3 + $0x18] sm:$0xff]
      %v9535 = vld [vmem:[#allocation3 + $0x20] sm:$0xff]
      %v9536 = vld [vmem:[#allocation3 + $0x28] sm:$0xff]
      %v9537 = vld [vmem:[#allocation3 + $0x30] sm:$0xff]
      %v9538 = vld [vmem:[#allocation3 + $0x38] sm:$0xff]
      %v9539 = vld [vmem:[#allocation3 + $0x40] sm:$0xff]
      %v9540 = vld [vmem:[#allocation3 + $0x48] sm:$0xff]
      %v9541 = vld [vmem:[#allocation3 + $0x50] sm:$0xff]
      %v9542 = vld [vmem:[#allocation3 + $0x58] sm:$0xff]
      %v9543 = vld [vmem:[#allocation3 + $0x60] sm:$0xff]
      %v9544 = vld [vmem:[#allocation3 + $0x68] sm:$0xff]
      %v9545 = vld [vmem:[#allocation3 + $0x70] sm:$0xff]
      %v9546 = vld [vmem:[#allocation3 + $0x78] sm:$0xff]
      %s9547 = scalar_lea.vmem %s1, 2240
      %v9548 = vld [vmem:[%s9547] sm:$0xf]
      %v9549 = vld [vmem:[%s9547 + $0x4] sm:$0xf]
      %v9550 = vld [vmem:[%s9547 + $0x8] sm:$0xf]
      %v9551 = vld [vmem:[%s9547 + $0xc] sm:$0xf]
      %v9552 = vld [vmem:[%s9547 + $0x10] sm:$0xf]
      %v9553 = vld [vmem:[%s9547 + $0x14] sm:$0xf]
      %v9554 = vld [vmem:[%s9547 + $0x18] sm:$0xf]
      %v9555 = vld [vmem:[%s9547 + $0x1c] sm:$0xf]
      %v9556 = vld [vmem:[%s9547 + $0x20] sm:$0xf]
      %v9557 = vld [vmem:[%s9547 + $0x24] sm:$0xf]
      %v9558 = vld [vmem:[%s9547 + $0x28] sm:$0xf]
      %v9559 = vld [vmem:[%s9547 + $0x2c] sm:$0xf]
      %v9560 = vld [vmem:[%s9547 + $0x30] sm:$0xf]
      %v9561 = vld [vmem:[%s9547 + $0x34] sm:$0xf]
      %v9562 = vld [vmem:[%s9547 + $0x38] sm:$0xf]
      %v9563 = vld [vmem:[%s9547 + $0x3c] sm:$0xf]
      %v9580 = vunpack.c.l.b16 %v9515
      %v9581 = vunpack.c.l.b16 %v9516
      %v9582 = vunpack.c.l.b16 %v9517
      %v9583 = vunpack.c.l.b16 %v9518
      %v9584 = vunpack.c.l.b16 %v9519
      %v9585 = vunpack.c.l.b16 %v9520
      %v9586 = vunpack.c.l.b16 %v9521
      %v9587 = vunpack.c.l.b16 %v9522
      %v9588 = vunpack.c.l.b16 %v9523
      %v9589 = vunpack.c.l.b16 %v9524
      %v9590 = vunpack.c.l.b16 %v9525
      %v9591 = vunpack.c.l.b16 %v9526
      %v9592 = vunpack.c.l.b16 %v9527
      %v9593 = vunpack.c.l.b16 %v9528
      %v9594 = vunpack.c.l.b16 %v9529
      %v9595 = vunpack.c.l.b16 %v9530
      %v9596 = vpack.c.b16 %v9581, %v9580
      %v9597 = vpack.c.b16 %v9583, %v9582
      %v9598 = vpack.c.b16 %v9585, %v9584
      %v9599 = vpack.c.b16 %v9587, %v9586
      %v9600 = vpack.c.b16 %v9589, %v9588
      %v9601 = vpack.c.b16 %v9591, %v9590
      %v9602 = vpack.c.b16 %v9593, %v9592
      %v9603 = vpack.c.b16 %v9595, %v9594
      %v9628 = vunpack.c.l.b16 %v9548
      %v9629 = vunpack.c.l.b16 %v9549
      %v9630 = vunpack.c.l.b16 %v9550
      %v9631 = vunpack.c.l.b16 %v9551
      %v9632 = vunpack.c.l.b16 %v9552
      %v9633 = vunpack.c.l.b16 %v9553
      %v9634 = vunpack.c.l.b16 %v9554
      %v9635 = vunpack.c.l.b16 %v9555
      %v9636 = vunpack.c.l.b16 %v9556
      %v9637 = vunpack.c.l.b16 %v9557
      %v9638 = vunpack.c.l.b16 %v9558
      %v9639 = vunpack.c.l.b16 %v9559
      %v9640 = vunpack.c.l.b16 %v9560
      %v9641 = vunpack.c.l.b16 %v9561
      %v9642 = vunpack.c.l.b16 %v9562
      %v9643 = vunpack.c.l.b16 %v9563
      %v9644 = vpack.c.b16 %v9629, %v9628
      %v9645 = vpack.c.b16 %v9631, %v9630
      %v9646 = vpack.c.b16 %v9633, %v9632
      %v9647 = vpack.c.b16 %v9635, %v9634
      %v9648 = vpack.c.b16 %v9637, %v9636
      %v9649 = vpack.c.b16 %v9639, %v9638
      %v9650 = vpack.c.b16 %v9641, %v9640
      %v9651 = vpack.c.b16 %v9643, %v9642
      %9660 = vmatpush.bf16.msra.mxu0 %v9651
      %9661 = vmatpush.bf16.msra.mxu0 %v9650
      %9662 = vmatpush.bf16.msra.mxu0 %v9649
      %9663 = vmatpush.bf16.msra.mxu0 %v9648
      %9664 = vmatpush.bf16.msra.mxu0 %v9647
      %9665 = vmatpush.bf16.msra.mxu0 %v9646
      %9666 = vmatpush.bf16.msra.mxu0 %v9645
      %9667 = vmatpush.bf16.msra.mxu0 %v9644
      %9668 = vmatmul.bf16.gmra.mxu0 %v9596
      %v9669 = vpop.f32.mrf.mxu0
      %v9670 = vadd.f32 0.0, %v9669
      %v9671 = vpop.f32.mrf.mxu0
      %v9672 = vadd.f32 0.0, %v9671
      %9673 = vmatmul.bf16.gmra.mxu0 %v9597
      %v9674 = vpop.f32.mrf.mxu0
      %v9675 = vadd.f32 0.0, %v9674
      %v9676 = vpop.f32.mrf.mxu0
      %v9677 = vadd.f32 0.0, %v9676
      %9678 = vmatmul.bf16.gmra.mxu0 %v9598
      %v9679 = vpop.f32.mrf.mxu0
      %v9680 = vadd.f32 0.0, %v9679
      %v9681 = vpop.f32.mrf.mxu0
      %v9682 = vadd.f32 0.0, %v9681
      %9683 = vmatmul.bf16.gmra.mxu0 %v9599
      %v9684 = vpop.f32.mrf.mxu0
      %v9685 = vadd.f32 0.0, %v9684
      %v9686 = vpop.f32.mrf.mxu0
      %v9687 = vadd.f32 0.0, %v9686
      %9688 = vmatmul.bf16.gmra.mxu0 %v9600
      %v9689 = vpop.f32.mrf.mxu0
      %v9690 = vadd.f32 0.0, %v9689
      %v9691 = vpop.f32.mrf.mxu0
      %v9692 = vadd.f32 0.0, %v9691
      %9693 = vmatmul.bf16.gmra.mxu0 %v9601
      %v9694 = vpop.f32.mrf.mxu0
      %v9695 = vadd.f32 0.0, %v9694
      %v9696 = vpop.f32.mrf.mxu0
      %v9697 = vadd.f32 0.0, %v9696
      %9698 = vmatmul.bf16.gmra.mxu0 %v9602
      %v9699 = vpop.f32.mrf.mxu0
      %v9700 = vadd.f32 0.0, %v9699
      %v9701 = vpop.f32.mrf.mxu0
      %v9702 = vadd.f32 0.0, %v9701
      %9703 = vmatmul.bf16.gmra.mxu0 %v9603
      %v9704 = vpop.f32.mrf.mxu0
      %v9705 = vadd.f32 0.0, %v9704
      %v9706 = vpop.f32.mrf.mxu0
      %v9707 = vadd.f32 0.0, %v9706
      %9708 = vdwg.mxu0
      %v9709 = vadd.f32 %v9531, %v9670
      %v9710 = vadd.f32 %v9532, %v9672
      %v9711 = vadd.f32 %v9533, %v9675
      %v9712 = vadd.f32 %v9534, %v9677
      %v9713 = vadd.f32 %v9535, %v9680
      %v9714 = vadd.f32 %v9536, %v9682
      %v9715 = vadd.f32 %v9537, %v9685
      %v9716 = vadd.f32 %v9538, %v9687
      %v9717 = vadd.f32 %v9539, %v9690
      %v9718 = vadd.f32 %v9540, %v9692
      %v9719 = vadd.f32 %v9541, %v9695
      %v9720 = vadd.f32 %v9542, %v9697
      %v9721 = vadd.f32 %v9543, %v9700
      %v9722 = vadd.f32 %v9544, %v9702
      %v9723 = vadd.f32 %v9545, %v9705
      %v9724 = vadd.f32 %v9546, %v9707
      %9725 = vst [vmem:[#allocation3] sm:$0xff] %v9709
      %9726 = vst [vmem:[#allocation3 + $0x8] sm:$0xff] %v9710
      %9727 = vst [vmem:[#allocation3 + $0x10] sm:$0xff] %v9711
      %9728 = vst [vmem:[#allocation3 + $0x18] sm:$0xff] %v9712
      %9729 = vst [vmem:[#allocation3 + $0x20] sm:$0xff] %v9713
      %9730 = vst [vmem:[#allocation3 + $0x28] sm:$0xff] %v9714
      %9731 = vst [vmem:[#allocation3 + $0x30] sm:$0xff] %v9715
      %9732 = vst [vmem:[#allocation3 + $0x38] sm:$0xff] %v9716
      %9733 = vst [vmem:[#allocation3 + $0x40] sm:$0xff] %v9717
      %9734 = vst [vmem:[#allocation3 + $0x48] sm:$0xff] %v9718
      %9735 = vst [vmem:[#allocation3 + $0x50] sm:$0xff] %v9719
      %9736 = vst [vmem:[#allocation3 + $0x58] sm:$0xff] %v9720
      %9737 = vst [vmem:[#allocation3 + $0x60] sm:$0xff] %v9721
      %9738 = vst [vmem:[#allocation3 + $0x68] sm:$0xff] %v9722
      %9739 = vst [vmem:[#allocation3 + $0x70] sm:$0xff] %v9723
      %9740 = vst [vmem:[#allocation3 + $0x78] sm:$0xff] %v9724
      %v9741 = vld [vmem:[#allocation3] sm:$0xff]
      %v9742 = vld [vmem:[#allocation3 + $0x8] sm:$0xff]
      %v9743 = vld [vmem:[#allocation3 + $0x10] sm:$0xff]
      %v9744 = vld [vmem:[#allocation3 + $0x18] sm:$0xff]
      %v9745 = vld [vmem:[#allocation3 + $0x20] sm:$0xff]
      %v9746 = vld [vmem:[#allocation3 + $0x28] sm:$0xff]
      %v9747 = vld [vmem:[#allocation3 + $0x30] sm:$0xff]
      %v9748 = vld [vmem:[#allocation3 + $0x38] sm:$0xff]
      %v9749 = vld [vmem:[#allocation3 + $0x40] sm:$0xff]
      %v9750 = vld [vmem:[#allocation3 + $0x48] sm:$0xff]
      %v9751 = vld [vmem:[#allocation3 + $0x50] sm:$0xff]
      %v9752 = vld [vmem:[#allocation3 + $0x58] sm:$0xff]
      %v9753 = vld [vmem:[#allocation3 + $0x60] sm:$0xff]
      %v9754 = vld [vmem:[#allocation3 + $0x68] sm:$0xff]
      %v9755 = vld [vmem:[#allocation3 + $0x70] sm:$0xff]
      %v9756 = vld [vmem:[#allocation3 + $0x78] sm:$0xff]
      %9757 = vst [vmem:[%s148] sm:$0xff] %v9741
      %9758 = vst [vmem:[%s148 + $0x8] sm:$0xff] %v9742
      %9759 = vst [vmem:[%s148 + $0x10] sm:$0xff] %v9743
      %9760 = vst [vmem:[%s148 + $0x18] sm:$0xff] %v9744
      %9761 = vst [vmem:[%s148 + $0x20] sm:$0xff] %v9745
      %9762 = vst [vmem:[%s148 + $0x28] sm:$0xff] %v9746
      %9763 = vst [vmem:[%s148 + $0x30] sm:$0xff] %v9747
      %9764 = vst [vmem:[%s148 + $0x38] sm:$0xff] %v9748
      %9765 = vst [vmem:[%s148 + $0x40] sm:$0xff] %v9749
      %9766 = vst [vmem:[%s148 + $0x48] sm:$0xff] %v9750
      %9767 = vst [vmem:[%s148 + $0x50] sm:$0xff] %v9751
      %9768 = vst [vmem:[%s148 + $0x58] sm:$0xff] %v9752
      %9769 = vst [vmem:[%s148 + $0x60] sm:$0xff] %v9753
      %9770 = vst [vmem:[%s148 + $0x68] sm:$0xff] %v9754
      %9771 = vst [vmem:[%s148 + $0x70] sm:$0xff] %v9755
      %9772 = vst [vmem:[%s148 + $0x78] sm:$0xff] %v9756
      %s9773 = smul.u32 8, %s19
      %p9774 = scmp.lt.s32.totalorder %s18, 1
      %s9775 = scalar_select %p9774, %s18, 1
      %p9776 = scmp.lt.s32.totalorder %s9773, 15
      %s9777 = scalar_select %p9776, %s9773, 15
      %s9778 = smul.addr %s9777, 2
      %s9779 = smul.addr %s9775, 32
      %s9780 = sadd.s32 %s9778, %s9779
      %s9781 = smul.addr %s9780, 8
      %s9782 = scalar_lea.vmem %s3, %s9781
      // Predicated region
      $region48: #{classifier_module_forward.1} parent=27 // pred_check
        %p9783 = pneg %p88
      $region49: #{classifier_module_forward.1} parent=27 // pred_check_branch
        %9785 = sbr.rel (%p9783) target = $region51
      $region50: #{classifier_module_forward.1} parent=27 // pred_region
        %s9786 = smul.u32 8, %s19
      $region51: #{classifier_module_forward.1} parent=27 // pred_fallthru
        _
    $region28: #{classifier_module_forward.1} parent=5 // pred_fallthru
      _
    %p9787 = scmp.le.s32.totalorder 2, %s9
    // Predicated region
    $region52: #{classifier_module_forward.1} parent=5 // pred_check
      %p9788 = pneg %p9787
    $region53: #{classifier_module_forward.1} parent=5 // pred_check_branch
      %9790 = sbr.rel (%p9788) target = $region55
    $region54: #{classifier_module_forward.1} parent=5 // pred_region
      %s9791 = ssub.s32 %s9, 2
      // Predicated region
      $region56: #{classifier_module_forward.1} parent=54 // pred_check
        %p9792 = pneg %p94
      $region57: #{classifier_module_forward.1} parent=54 // pred_check_branch
        %9794 = sbr.rel (%p9792) target = $region59
      $region58: #{classifier_module_forward.1} parent=54 // pred_region
        %s9795 = smul.u32 8, %s21
        %p9796 = scmp.lt.s32.totalorder %s20, 1
        %s9797 = scalar_select %p9796, %s20, 1
        %p9798 = scmp.lt.s32.totalorder %s9795, 15
        %s9799 = scalar_select %p9798, %s9795, 15
        %s9800 = smul.addr %s9799, 2
        %s9801 = smul.addr %s9797, 32
        %s9802 = sadd.s32 %s9800, %s9801
        %s9803 = smul.addr %s9802, 8
        %s9804 = scalar_lea.vmem %s3, %s9803
      $region59: #{classifier_module_forward.1} parent=54 // pred_fallthru
        _
    $region55: #{classifier_module_forward.1} parent=5 // pred_fallthru
      _
  $region6: #{classifier_module_forward.1} parent=0 // loop_footer
    %s13 = sadd.s32 1, %s9
  $region7: #{classifier_module_forward.1} parent=0 // loop_footer_branch
    %8 = sbr.rel target = $region3
  $region8: #{classifier_module_forward.1} parent=0 // loop_exit
    _
  %9805 = vsyncmov [#allocation4]
  %s9806 = vpop.sfrf %9805
  %p9807 = scmp.eq.s32.totalorder %s9806, 0
  %p9808 = pneg %p9807
  %9810 = shalt.err (%p9808)

</llo_original>
